<compile_context>
chip_gen: v7x
topology: tpu7x:2x2x1
jax: 0.10.0
libtpu: 0.0.40
codegen_flags: <defaults>
</compile_context>

<pallas_src>
import functools
import math

import jax
import jax.numpy as jnp
import numpy as np
from jax.experimental import pallas as pl
from jax.experimental.pallas import tpu as pltpu

NEG_INF = -1e9
LN_EPS = 1e-5


# ---------------------------------------------------------------------------
# In-kernel helpers
# ---------------------------------------------------------------------------
def _layer_norm(x, gamma, beta):
  mean = jnp.mean(x, axis=-1, keepdims=True)
  var = jnp.mean((x - mean) ** 2, axis=-1, keepdims=True)
  return (x - mean) * jax.lax.rsqrt(var + LN_EPS) * gamma + beta


def _attention(q_in, k_in, v_in, mask_add,
               wq_ref, wk_ref, wv_ref, wo_ref,
               bq, bk, bv, bo, ctx_scratch, n_heads, head_dim):
  """Multi-head attention for one batch element.

  q_in/k_in/v_in: (Sq,D)/(Sk,D)/(Sk,D) f32.  mask_add: (1,Sk) f32 additive.
  Weights: bf16, pre-transposed to (in,out); 1/sqrt(hd) already folded into
  wq/bq.  Returns (Sq, D) f32 attention output (out_proj applied once).
  """
  # Full-width projections: one MXU matmul each, bf16 in / f32 accumulate.
  Q = jnp.dot(q_in.astype(jnp.bfloat16), wq_ref[...],
              preferred_element_type=jnp.float32) + bq          # (Sq, D) f32
  K = jnp.dot(k_in.astype(jnp.bfloat16), wk_ref[...],
              preferred_element_type=jnp.float32) + bk          # (Sk, D) f32
  V = jnp.dot(v_in.astype(jnp.bfloat16), wv_ref[...],
              preferred_element_type=jnp.float32) + bv          # (Sk, D) f32

  K_T = K.T                                                     # single (Sk,D)->(D,Sk)

  # Per-head scores / softmax / PV (unrolled); context written full-width into
  # VMEM scratch so the out_proj below is a single (Sq,D)@(D,D) matmul.
  for h in range(n_heads):
    lo = h * head_dim
    hi = lo + head_dim
    qh = Q[:, lo:hi].astype(jnp.bfloat16)                       # (Sq, hd)
    kh_t = K_T[lo:hi, :].astype(jnp.bfloat16)                   # (hd, Sk)
    vh = V[:, lo:hi].astype(jnp.bfloat16)                       # (Sk, hd)

    s = jnp.dot(qh, kh_t, preferred_element_type=jnp.float32)   # scale pre-folded
    s = s + mask_add                                            # (1,Sk)->(Sq,Sk), f32
    s = s - jnp.max(s, axis=-1, keepdims=True)                  # stable softmax (f32)
    p = jnp.exp(s)
    p = p * pl.reciprocal(jnp.sum(p, axis=-1, keepdims=True), approx=True)
    ctx_scratch[:, lo:hi] = jnp.dot(p.astype(jnp.bfloat16), vh,
                                    preferred_element_type=jnp.float32)

  # Single full-width out_proj over the concatenated heads.
  return jnp.dot(ctx_scratch[...].astype(jnp.bfloat16), wo_ref[...],
                 preferred_element_type=jnp.float32) + bo


# ---------------------------------------------------------------------------
# Pallas kernels
# ---------------------------------------------------------------------------
def _self_attn_ln_kernel(seq_ref, pos_ref, mask_ref,
                         wq_ref, wk_ref, wv_ref, wo_ref, vecs_ref,
                         o_ref, ctx_scratch, *, n_heads, head_dim):
  """One batch element: LayerNorm(seq + MHA(seq+pos, seq+pos, seq))."""
  seq = seq_ref[0]                       # (S, D) f32
  qk_in = seq + pos_ref[0]               # query == key input (pos-add fused)
  mask_add = mask_ref[0]                 # (1, S) additive f32

  bq = vecs_ref[0:1]
  bk = vecs_ref[1:2]
  bv = vecs_ref[2:3]
  bo = vecs_ref[3:4]
  gamma = vecs_ref[4:5]
  beta = vecs_ref[5:6]

  attn = _attention(qk_in, qk_in, seq, mask_add,
                    wq_ref, wk_ref, wv_ref, wo_ref,
                    bq, bk, bv, bo, ctx_scratch, n_heads, head_dim)
  o_ref[0] = _layer_norm(seq + attn, gamma, beta)


def _cross_attn_ffn_ln_kernel(seqq_ref, posq_ref, seqk_ref, posk_ref, mask_ref,
                              wq_ref, wk_ref, wv_ref, wo_ref,
                              w1_ref, w2_ref, b1_ref, vecs_ref,
                              o_ref, ctx_scratch, *, n_heads, head_dim):
  """Fused cross-attention block for one batch element:
     norm1 = LN1(seqq + MHA(seqq+posq, seqk+posk, seqk))
     out   = LN2(norm1 + Linear2(ReLU(Linear1(norm1))))
  """
  seqq = seqq_ref[0]                     # (Sq, D)
  seqk = seqk_ref[0]                     # (Sk, D)
  q_in = seqq + posq_ref[0]
  k_in = seqk + posk_ref[0]
  mask_add = mask_ref[0]                 # (1, Sk)

  bq = vecs_ref[0:1]
  bk = vecs_ref[1:2]
  bv = vecs_ref[2:3]
  bo = vecs_ref[3:4]
  g1 = vecs_ref[4:5]
  be1 = vecs_ref[5:6]
  b2 = vecs_ref[6:7]
  g2 = vecs_ref[7:8]
  be2 = vecs_ref[8:9]

  attn = _attention(q_in, k_in, seqk, mask_add,
                    wq_ref, wk_ref, wv_ref, wo_ref,
                    bq, bk, bv, bo, ctx_scratch, n_heads, head_dim)
  norm1 = _layer_norm(seqq + attn, g1, be1)                    # f32

  h = jnp.dot(norm1.astype(jnp.bfloat16), w1_ref[...],
              preferred_element_type=jnp.float32) + b1_ref[...]
  h = jnp.maximum(h, 0.0)
  ffn = jnp.dot(h.astype(jnp.bfloat16), w2_ref[...],
                preferred_element_type=jnp.float32) + b2
  o_ref[0] = _layer_norm(norm1 + ffn, g2, be2)


# ---------------------------------------------------------------------------
# pallas_call wrappers
# ---------------------------------------------------------------------------
def _prep_attn_weights(p, head_dim):
  """Pre-transpose to (in,out), cast to bf16, fold 1/sqrt(hd) into wq/bq."""
  scale = 1.0 / math.sqrt(head_dim)
  return ((p["wq"].T * scale).astype(jnp.bfloat16),
          p["wk"].T.astype(jnp.bfloat16),
          p["wv"].T.astype(jnp.bfloat16),
          p["wo"].T.astype(jnp.bfloat16),
          p["bq"].astype(jnp.float32) * scale,
          p["bk"].astype(jnp.float32),
          p["bv"].astype(jnp.float32),
          p["bo"].astype(jnp.float32))


def self_attn_ln_block(seq, pos, mask_add, attn_p, ln_p, n_heads):
  B, S, D = seq.shape
  head_dim = D // n_heads
  wq_t, wk_t, wv_t, wo_t, bq, bk, bv, bo = _prep_attn_weights(attn_p, head_dim)
  # Pack the small (1,D) operands into one array to avoid 6 tiny DMAs.
  vecs = jnp.concatenate([bq, bk, bv, bo, ln_p["gamma"], ln_p["beta"]],
                         axis=0).astype(jnp.float32)            # (6, D)

  kernel = functools.partial(_self_attn_ln_kernel,
                             n_heads=n_heads, head_dim=head_dim)
  seq_spec = pl.BlockSpec((1, S, D), lambda b: (b, 0, 0))
  mask_spec = pl.BlockSpec((1, 1, S), lambda b: (b, 0, 0))
  mat_spec = pl.BlockSpec((D, D), lambda b: (0, 0))
  vecs_spec = pl.BlockSpec((6, D), lambda b: (0, 0))

  return pl.pallas_call(
      kernel,
      out_shape=jax.ShapeDtypeStruct((B, S, D), jnp.float32),
      grid=(B,),
      in_specs=[seq_spec, seq_spec, mask_spec,
                mat_spec, mat_spec, mat_spec, mat_spec, vecs_spec],
      out_specs=seq_spec,
      scratch_shapes=[pltpu.VMEM((S, D), jnp.float32)],
      compiler_params=pltpu.CompilerParams(dimension_semantics=("parallel",)),
  )(seq, pos, mask_add, wq_t, wk_t, wv_t, wo_t, vecs)


def cross_attn_ffn_ln_block(seqq, posq, seqk, posk, mask_add,
                            attn_p, ln1_p, ffn_p, ln2_p, n_heads):
  B, Sq, D = seqq.shape
  Sk = seqk.shape[1]
  Dff = ffn_p["w1"].shape[0]
  head_dim = D // n_heads
  wq_t, wk_t, wv_t, wo_t, bq, bk, bv, bo = _prep_attn_weights(attn_p, head_dim)
  w1_t = ffn_p["w1"].T.astype(jnp.bfloat16)                     # (D, Dff)
  w2_t = ffn_p["w2"].T.astype(jnp.bfloat16)                     # (Dff, D)
  b1 = ffn_p["b1"].astype(jnp.float32)                          # (1, Dff)
  vecs = jnp.concatenate(
      [bq, bk, bv, bo, ln1_p["gamma"], ln1_p["beta"],
       ffn_p["b2"].astype(jnp.float32), ln2_p["gamma"], ln2_p["beta"]],
      axis=0).astype(jnp.float32)                               # (9, D)

  kernel = functools.partial(_cross_attn_ffn_ln_kernel,
                             n_heads=n_heads, head_dim=head_dim)
  seqq_spec = pl.BlockSpec((1, Sq, D), lambda b: (b, 0, 0))
  seqk_spec = pl.BlockSpec((1, Sk, D), lambda b: (b, 0, 0))
  mask_spec = pl.BlockSpec((1, 1, Sk), lambda b: (b, 0, 0))
  mat_spec = pl.BlockSpec((D, D), lambda b: (0, 0))
  w1_spec = pl.BlockSpec((D, Dff), lambda b: (0, 0))
  w2_spec = pl.BlockSpec((Dff, D), lambda b: (0, 0))
  b1_spec = pl.BlockSpec((1, Dff), lambda b: (0, 0))
  vecs_spec = pl.BlockSpec((9, D), lambda b: (0, 0))

  return pl.pallas_call(
      kernel,
      out_shape=jax.ShapeDtypeStruct((B, Sq, D), jnp.float32),
      grid=(B,),
      in_specs=[seqq_spec, seqq_spec, seqk_spec, seqk_spec, mask_spec,
                mat_spec, mat_spec, mat_spec, mat_spec,
                w1_spec, w2_spec, b1_spec, vecs_spec],
      out_specs=seqq_spec,
      scratch_shapes=[pltpu.VMEM((Sq, D), jnp.float32)],
      compiler_params=pltpu.CompilerParams(dimension_semantics=("parallel",)),
  )(seqq, posq, seqk, posk, mask_add,
    wq_t, wk_t, wv_t, wo_t, w1_t, w2_t, b1, vecs)


# ---------------------------------------------------------------------------
# Full CrossAttentionLayer forward (Pallas version)
# ---------------------------------------------------------------------------
def cross_attention_forward(params, seq1, seq1_kpm, seq2, seq2_kpm,
                            seq1_pos, seq2_pos, n_heads):
  if seq1_pos is None:
    seq1_pos = jnp.zeros_like(seq1)
  if seq2_pos is None:
    seq2_pos = jnp.zeros_like(seq2)

  mask1_add = jnp.where(seq1_kpm, NEG_INF, 0.0).astype(jnp.float32)[:, None, :]
  mask2_add = jnp.where(seq2_kpm, NEG_INF, 0.0).astype(jnp.float32)[:, None, :]

  # Self-attention + LN on each sequence (pos-add fused in-kernel).
  seq1 = self_attn_ln_block(seq1, seq1_pos, mask1_add,
                            params["sa1"], params["norm_1"], n_heads)
  seq2 = self_attn_ln_block(seq2, seq2_pos, mask2_add,
                            params["sa2"], params["norm_2"], n_heads)

  # Cross 1<-2: attention + LN + FFN + LN fused in one kernel.
  final1 = cross_attn_ffn_ln_block(seq1, seq1_pos, seq2, seq2_pos, mask2_add,
                                   params["cross_12"], params["norm_12"],
                                   params["ffn_12"], params["norm_122"], n_heads)
  # Cross 2<-1.
  final2 = cross_attn_ffn_ln_block(seq2, seq2_pos, seq1, seq1_pos, mask1_add,
                                   params["cross_21"], params["norm_21"],
                                   params["ffn_21"], params["norm_212"], n_heads)
  return final1, final2


# ---------------------------------------------------------------------------
# Pure-JAX f32 reference (same math, no Pallas) for correctness check
# ---------------------------------------------------------------------------
def _mha_ref(q, k, v, mask_add, p, n_heads):
  B, Sq, D = q.shape
  hd = D // n_heads
  Q = (q @ p["wq"].T + p["bq"]).reshape(B, Sq, n_heads, hd)
  K = (k @ p["wk"].T + p["bk"]).reshape(B, -1, n_heads, hd)
  V = (v @ p["wv"].T + p["bv"]).reshape(B, -1, n_heads, hd)
  s = jnp.einsum("bqhd,bkhd->bhqk", Q, K) / math.sqrt(hd)
  s = s + mask_add[:, None, :, :]
  a = jax.nn.softmax(s, axis=-1)
  o = jnp.einsum("bhqk,bkhd->bqhd", a, V).reshape(B, Sq, D)
  return o @ p["wo"].T + p["bo"]


def _ln_ref(x, p):
  mean = jnp.mean(x, axis=-1, keepdims=True)
  var = jnp.mean((x - mean) ** 2, axis=-1, keepdims=True)
  return (x - mean) * jax.lax.rsqrt(var + LN_EPS) * p["gamma"] + p["beta"]


def _ffn_ref(x, p):
  h = jnp.maximum(x @ p["w1"].T + p["b1"], 0.0)
  return h @ p["w2"].T + p["b2"]


def cross_attention_reference(params, seq1, seq1_kpm, seq2, seq2_kpm,
                              seq1_pos, seq2_pos, n_heads):
  mask1_add = jnp.where(seq1_kpm, NEG_INF, 0.0).astype(jnp.float32)[:, None, :]
  mask2_add = jnp.where(seq2_kpm, NEG_INF, 0.0).astype(jnp.float32)[:, None, :]

  q1 = seq1 + seq1_pos
  seq1 = _ln_ref(seq1 + _mha_ref(q1, q1, seq1, mask1_add, params["sa1"], n_heads),
                 params["norm_1"])
  q2 = seq2 + seq2_pos
  seq2 = _ln_ref(seq2 + _mha_ref(q2, q2, seq2, mask2_add, params["sa2"], n_heads),
                 params["norm_2"])

  q1 = seq1 + seq1_pos
  q2 = seq2 + seq2_pos

  norm1 = _ln_ref(seq1 + _mha_ref(q1, q2, seq2, mask2_add, params["cross_12"], n_heads),
                  params["norm_12"])
  final1 = _ln_ref(norm1 + _ffn_ref(norm1, params["ffn_12"]), params["norm_122"])

  norm2 = _ln_ref(seq2 + _mha_ref(q2, q1, seq1, mask1_add, params["cross_21"], n_heads),
                  params["norm_21"])
  final2 = _ln_ref(norm2 + _ffn_ref(norm2, params["ffn_21"]), params["norm_212"])
  return final1, final2


# ---------------------------------------------------------------------------
# Deterministic parameter init (PyTorch weight conventions, f32)
# ---------------------------------------------------------------------------
def init_params(key, d_model, d_ff):
  keys = jax.random.split(key, 64)
  it = iter(keys)

  def w(shape):
    return (0.02 * jax.random.normal(next(it), shape)).astype(jnp.float32)

  def attn():
    return dict(wq=w((d_model, d_model)), wk=w((d_model, d_model)),
                wv=w((d_model, d_model)),
                bq=w((1, d_model)), bk=w((1, d_model)), bv=w((1, d_model)),
                wo=w((d_model, d_model)), bo=w((1, d_model)))

  def ln():
    return dict(gamma=jnp.ones((1, d_model), jnp.float32),
                beta=jnp.zeros((1, d_model), jnp.float32))

  def ffn():
    return dict(w1=w((d_ff, d_model)), b1=w((1, d_ff)),
                w2=w((d_model, d_ff)), b2=w((1, d_model)))

  return dict(sa1=attn(), norm_1=ln(), sa2=attn(), norm_2=ln(),
              cross_12=attn(), norm_12=ln(), ffn_12=ffn(), norm_122=ln(),
              cross_21=attn(), norm_21=ln(), ffn_21=ffn(), norm_212=ln())


# ---------------------------------------------------------------------------
if __name__ == "__main__":
  B, S1, S2 = 2, 8, 16
  D_MODEL, N_HEADS, D_FF = 32, 4, 1024   # small d_model for test; head_dim = 8

  root = jax.random.PRNGKey(0)
  k_params, k_s1, k_s2, k_p1, k_p2 = jax.random.split(root, 5)
  params = init_params(k_params, D_MODEL, D_FF)

  seq1 = jax.random.normal(k_s1, (B, S1, D_MODEL), jnp.float32)
  seq2 = jax.random.normal(k_s2, (B, S2, D_MODEL), jnp.float32)
  seq1_pos = 0.1 * jax.random.normal(k_p1, (B, S1, D_MODEL), jnp.float32)
  seq2_pos = 0.1 * jax.random.normal(k_p2, (B, S2, D_MODEL), jnp.float32)

  # key_padding_mask: True = padded (ignored) position
  len1 = jnp.array([S1, S1 - 2])
  len2 = jnp.array([S2, S2 - 4])
  seq1_kpm = jnp.arange(S1)[None, :] >= len1[:, None]   # (B, S1) bool
  seq2_kpm = jnp.arange(S2)[None, :] >= len2[:, None]   # (B, S2) bool

  fwd = jax.jit(functools.partial(cross_attention_forward, n_heads=N_HEADS))
  out1, out2 = fwd(params, seq1, seq1_kpm, seq2, seq2_kpm, seq1_pos, seq2_pos)
  jax.block_until_ready((out1, out2))

  ref_fn = jax.jit(functools.partial(cross_attention_reference, n_heads=N_HEADS))
  ref1, ref2 = ref_fn(params, seq1, seq1_kpm, seq2, seq2_kpm, seq1_pos, seq2_pos)
  jax.block_until_ready((ref1, ref2))

  assert out1.shape == (B, S1, D_MODEL) and out2.shape == (B, S2, D_MODEL)
  # Kernel uses bf16 matmul inputs (f32 accumulate) -> slightly looser tolerance
  # vs the pure-f32 reference.
  np.testing.assert_allclose(np.asarray(out1), np.asarray(ref1), rtol=2e-2, atol=2e-2)
  np.testing.assert_allclose(np.asarray(out2), np.asarray(ref2), rtol=2e-2, atol=2e-2)
  print("KERNEL_OK")
</pallas_src>

<mosaic_0001>
module attributes {stable_mosaic.version = 11 : i64} {
  func.func @_self_attn_ln_kernel(%arg0: i32, %arg1: memref<1x8x32xf32, #tpu.memory_space<vmem>>, %arg2: memref<1x8x32xf32, #tpu.memory_space<vmem>>, %arg3: memref<1x1x8xf32, #tpu.memory_space<vmem>>, %arg4: memref<32x32xbf16, #tpu.memory_space<vmem>>, %arg5: memref<32x32xbf16, #tpu.memory_space<vmem>>, %arg6: memref<32x32xbf16, #tpu.memory_space<vmem>>, %arg7: memref<32x32xbf16, #tpu.memory_space<vmem>>, %arg8: memref<6x32xf32, #tpu.memory_space<vmem>>, %arg9: memref<1x8x32xf32, #tpu.memory_space<vmem>>, %arg10: memref<8x32xf32, #tpu.memory_space<vmem>>) attributes {dimension_semantics = [#tpu.dimension_semantics<parallel>], iteration_bounds = array<i64: 2>, scalar_prefetch = 0 : i64, scratch_operands = 1 : i64, tpu.core_type = #tpu.core_type<tc>, window_params = [{transform_indices = @transform_0, window_bounds = array<i64: 1, 8, 32>}, {transform_indices = @transform_1, window_bounds = array<i64: 1, 8, 32>}, {transform_indices = @transform_2, window_bounds = array<i64: 1, 1, 8>}, {pipeline_mode = #tpu.pipeline_mode<synchronous>, transform_indices = @transform_3, window_bounds = array<i64: 32, 32>}, {pipeline_mode = #tpu.pipeline_mode<synchronous>, transform_indices = @transform_4, window_bounds = array<i64: 32, 32>}, {pipeline_mode = #tpu.pipeline_mode<synchronous>, transform_indices = @transform_5, window_bounds = array<i64: 32, 32>}, {pipeline_mode = #tpu.pipeline_mode<synchronous>, transform_indices = @transform_6, window_bounds = array<i64: 32, 32>}, {pipeline_mode = #tpu.pipeline_mode<synchronous>, transform_indices = @transform_7, window_bounds = array<i64: 6, 32>}, {transform_indices = @transform_8, window_bounds = array<i64: 1, 8, 32>}]} {
    %c0 = arith.constant 0 : index
    %c0_0 = arith.constant 0 : index
    %c0_1 = arith.constant 0 : index
    %0 = vector.load %arg1[%c0, %c0_0, %c0_1] : memref<1x8x32xf32, #tpu.memory_space<vmem>>, vector<1x8x32xf32>
    %1 = vector.shape_cast %0 : vector<1x8x32xf32> to vector<8x32xf32>
    %c0_2 = arith.constant 0 : index
    %c0_3 = arith.constant 0 : index
    %c0_4 = arith.constant 0 : index
    %2 = vector.load %arg2[%c0_2, %c0_3, %c0_4] : memref<1x8x32xf32, #tpu.memory_space<vmem>>, vector<1x8x32xf32>
    %3 = vector.shape_cast %2 : vector<1x8x32xf32> to vector<8x32xf32>
    %4 = arith.addf %1, %3 : vector<8x32xf32>
    %c0_5 = arith.constant 0 : index
    %c0_6 = arith.constant 0 : index
    %c0_7 = arith.constant 0 : index
    %5 = vector.load %arg3[%c0_5, %c0_6, %c0_7] : memref<1x1x8xf32, #tpu.memory_space<vmem>>, vector<1x1x8xf32>
    %6 = vector.shape_cast %5 : vector<1x1x8xf32> to vector<1x8xf32>
    %c0_8 = arith.constant 0 : index
    %c0_9 = arith.constant 0 : index
    %7 = vector.load %arg8[%c0_8, %c0_9] : memref<6x32xf32, #tpu.memory_space<vmem>>, vector<1x32xf32>
    %c1 = arith.constant 1 : index
    %c0_10 = arith.constant 0 : index
    %8 = vector.load %arg8[%c1, %c0_10] : memref<6x32xf32, #tpu.memory_space<vmem>>, vector<1x32xf32>
    %c2 = arith.constant 2 : index
    %c0_11 = arith.constant 0 : index
    %9 = vector.load %arg8[%c2, %c0_11] : memref<6x32xf32, #tpu.memory_space<vmem>>, vector<1x32xf32>
    %c3 = arith.constant 3 : index
    %c0_12 = arith.constant 0 : index
    %10 = vector.load %arg8[%c3, %c0_12] : memref<6x32xf32, #tpu.memory_space<vmem>>, vector<1x32xf32>
    %c4 = arith.constant 4 : index
    %c0_13 = arith.constant 0 : index
    %11 = vector.load %arg8[%c4, %c0_13] : memref<6x32xf32, #tpu.memory_space<vmem>>, vector<1x32xf32>
    %c5 = arith.constant 5 : index
    %c0_14 = arith.constant 0 : index
    %12 = vector.load %arg8[%c5, %c0_14] : memref<6x32xf32, #tpu.memory_space<vmem>>, vector<1x32xf32>
    %13 = arith.truncf %4 : vector<8x32xf32> to vector<8x32xbf16>
    %c0_15 = arith.constant 0 : index
    %c0_16 = arith.constant 0 : index
    %14 = vector.load %arg4[%c0_15, %c0_16] : memref<32x32xbf16, #tpu.memory_space<vmem>>, vector<32x32xbf16>
    %cst = arith.constant dense<0.000000e+00> : vector<8x32xf32>
    %15 = tpu.matmul %13, %14, %cst {dimension_numbers = #tpu.dot_dimension_numbers<[1], [0], [0], [1], [0, 0, 1, 1], [], []>} : vector<8x32xbf16>, vector<32x32xbf16>, vector<8x32xf32> -> vector<8x32xf32>
    %16 = vector.broadcast %7 : vector<1x32xf32> to vector<8x32xf32>
    %17 = arith.addf %15, %16 : vector<8x32xf32>
    %18 = arith.truncf %4 : vector<8x32xf32> to vector<8x32xbf16>
    %c0_17 = arith.constant 0 : index
    %c0_18 = arith.constant 0 : index
    %19 = vector.load %arg5[%c0_17, %c0_18] : memref<32x32xbf16, #tpu.memory_space<vmem>>, vector<32x32xbf16>
    %cst_19 = arith.constant dense<0.000000e+00> : vector<8x32xf32>
    %20 = tpu.matmul %18, %19, %cst_19 {dimension_numbers = #tpu.dot_dimension_numbers<[1], [0], [0], [1], [0, 0, 1, 1], [], []>} : vector<8x32xbf16>, vector<32x32xbf16>, vector<8x32xf32> -> vector<8x32xf32>
    %21 = vector.broadcast %8 : vector<1x32xf32> to vector<8x32xf32>
    %22 = arith.addf %20, %21 : vector<8x32xf32>
    %23 = arith.truncf %1 : vector<8x32xf32> to vector<8x32xbf16>
    %c0_20 = arith.constant 0 : index
    %c0_21 = arith.constant 0 : index
    %24 = vector.load %arg6[%c0_20, %c0_21] : memref<32x32xbf16, #tpu.memory_space<vmem>>, vector<32x32xbf16>
    %cst_22 = arith.constant dense<0.000000e+00> : vector<8x32xf32>
    %25 = tpu.matmul %23, %24, %cst_22 {dimension_numbers = #tpu.dot_dimension_numbers<[1], [0], [0], [1], [0, 0, 1, 1], [], []>} : vector<8x32xbf16>, vector<32x32xbf16>, vector<8x32xf32> -> vector<8x32xf32>
    %26 = vector.broadcast %9 : vector<1x32xf32> to vector<8x32xf32>
    %27 = arith.addf %25, %26 : vector<8x32xf32>
    %28 = tpu.transpose %22, [1, 0] : vector<8x32xf32> -> vector<32x8xf32>
    %29 = vector.extract_strided_slice %17 {offsets = [0, 0], sizes = [8, 8], strides = [1, 1]} : vector<8x32xf32> to vector<8x8xf32>
    %30 = arith.truncf %29 : vector<8x8xf32> to vector<8x8xbf16>
    %31 = vector.extract_strided_slice %28 {offsets = [0, 0], sizes = [8, 8], strides = [1, 1]} : vector<32x8xf32> to vector<8x8xf32>
    %32 = arith.truncf %31 : vector<8x8xf32> to vector<8x8xbf16>
    %33 = vector.extract_strided_slice %27 {offsets = [0, 0], sizes = [8, 8], strides = [1, 1]} : vector<8x32xf32> to vector<8x8xf32>
    %34 = arith.truncf %33 : vector<8x8xf32> to vector<8x8xbf16>
    %cst_23 = arith.constant dense<0.000000e+00> : vector<8x8xf32>
    %35 = tpu.matmul %30, %32, %cst_23 {dimension_numbers = #tpu.dot_dimension_numbers<[1], [0], [0], [1], [0, 0, 1, 1], [], []>} : vector<8x8xbf16>, vector<8x8xbf16>, vector<8x8xf32> -> vector<8x8xf32>
    %36 = vector.broadcast %6 : vector<1x8xf32> to vector<8x8xf32>
    %37 = arith.addf %35, %36 : vector<8x8xf32>
    %cst_24 = arith.constant dense<0xFF800000> : vector<8xf32>
    %38 = vector.multi_reduction <maximumf>, %37, %cst_24 [1] : vector<8x8xf32> to vector<8xf32>
    %39 = vector.shape_cast %38 : vector<8xf32> to vector<8x1xf32>
    %40 = vector.broadcast %39 : vector<8x1xf32> to vector<8x8xf32>
    %41 = arith.subf %37, %40 : vector<8x8xf32>
    %42 = math.exp %41 : vector<8x8xf32>
    %cst_25 = arith.constant dense<0.000000e+00> : vector<8xf32>
    %43 = vector.multi_reduction <add>, %42, %cst_25 [1] : vector<8x8xf32> to vector<8xf32>
    %44 = vector.shape_cast %43 : vector<8xf32> to vector<8x1xf32>
    %45 = tpu.reciprocal %44 {approx = true} : vector<8x1xf32> -> vector<8x1xf32>
    %46 = vector.broadcast %45 : vector<8x1xf32> to vector<8x8xf32>
    %47 = arith.mulf %42, %46 : vector<8x8xf32>
    %48 = arith.truncf %47 : vector<8x8xf32> to vector<8x8xbf16>
    %cst_26 = arith.constant dense<0.000000e+00> : vector<8x8xf32>
    %49 = tpu.matmul %48, %34, %cst_26 {dimension_numbers = #tpu.dot_dimension_numbers<[1], [0], [0], [1], [0, 0, 1, 1], [], []>} : vector<8x8xbf16>, vector<8x8xbf16>, vector<8x8xf32> -> vector<8x8xf32>
    %c0_27 = arith.constant 0 : index
    %c0_28 = arith.constant 0 : index
    %50 = vector.load %arg10[%c0_27, %c0_28] : memref<8x32xf32, #tpu.memory_space<vmem>>, vector<8x8xf32>
    tpu.vector_store %arg10[%c0_27, %c0_28], %49 {strides = array<i32>} : memref<8x32xf32, #tpu.memory_space<vmem>>, vector<8x8xf32>,
    %51 = vector.extract_strided_slice %17 {offsets = [0, 8], sizes = [8, 8], strides = [1, 1]} : vector<8x32xf32> to vector<8x8xf32>
    %52 = arith.truncf %51 : vector<8x8xf32> to vector<8x8xbf16>
    %53 = vector.extract_strided_slice %28 {offsets = [8, 0], sizes = [8, 8], strides = [1, 1]} : vector<32x8xf32> to vector<8x8xf32>
    %54 = arith.truncf %53 : vector<8x8xf32> to vector<8x8xbf16>
    %55 = vector.extract_strided_slice %27 {offsets = [0, 8], sizes = [8, 8], strides = [1, 1]} : vector<8x32xf32> to vector<8x8xf32>
    %56 = arith.truncf %55 : vector<8x8xf32> to vector<8x8xbf16>
    %cst_29 = arith.constant dense<0.000000e+00> : vector<8x8xf32>
    %57 = tpu.matmul %52, %54, %cst_29 {dimension_numbers = #tpu.dot_dimension_numbers<[1], [0], [0], [1], [0, 0, 1, 1], [], []>} : vector<8x8xbf16>, vector<8x8xbf16>, vector<8x8xf32> -> vector<8x8xf32>
    %58 = vector.broadcast %6 : vector<1x8xf32> to vector<8x8xf32>
    %59 = arith.addf %57, %58 : vector<8x8xf32>
    %cst_30 = arith.constant dense<0xFF800000> : vector<8xf32>
    %60 = vector.multi_reduction <maximumf>, %59, %cst_30 [1] : vector<8x8xf32> to vector<8xf32>
    %61 = vector.shape_cast %60 : vector<8xf32> to vector<8x1xf32>
    %62 = vector.broadcast %61 : vector<8x1xf32> to vector<8x8xf32>
    %63 = arith.subf %59, %62 : vector<8x8xf32>
    %64 = math.exp %63 : vector<8x8xf32>
    %cst_31 = arith.constant dense<0.000000e+00> : vector<8xf32>
    %65 = vector.multi_reduction <add>, %64, %cst_31 [1] : vector<8x8xf32> to vector<8xf32>
    %66 = vector.shape_cast %65 : vector<8xf32> to vector<8x1xf32>
    %67 = tpu.reciprocal %66 {approx = true} : vector<8x1xf32> -> vector<8x1xf32>
    %68 = vector.broadcast %67 : vector<8x1xf32> to vector<8x8xf32>
    %69 = arith.mulf %64, %68 : vector<8x8xf32>
    %70 = arith.truncf %69 : vector<8x8xf32> to vector<8x8xbf16>
    %cst_32 = arith.constant dense<0.000000e+00> : vector<8x8xf32>
    %71 = tpu.matmul %70, %56, %cst_32 {dimension_numbers = #tpu.dot_dimension_numbers<[1], [0], [0], [1], [0, 0, 1, 1], [], []>} : vector<8x8xbf16>, vector<8x8xbf16>, vector<8x8xf32> -> vector<8x8xf32>
    %c0_33 = arith.constant 0 : index
    %c8 = arith.constant 8 : index
    %72 = vector.load %arg10[%c0_33, %c8] : memref<8x32xf32, #tpu.memory_space<vmem>>, vector<8x8xf32>
    tpu.vector_store %arg10[%c0_33, %c8], %71 {strides = array<i32>} : memref<8x32xf32, #tpu.memory_space<vmem>>, vector<8x8xf32>,
    %73 = vector.extract_strided_slice %17 {offsets = [0, 16], sizes = [8, 8], strides = [1, 1]} : vector<8x32xf32> to vector<8x8xf32>
    %74 = arith.truncf %73 : vector<8x8xf32> to vector<8x8xbf16>
    %75 = vector.extract_strided_slice %28 {offsets = [16, 0], sizes = [8, 8], strides = [1, 1]} : vector<32x8xf32> to vector<8x8xf32>
    %76 = arith.truncf %75 : vector<8x8xf32> to vector<8x8xbf16>
    %77 = vector.extract_strided_slice %27 {offsets = [0, 16], sizes = [8, 8], strides = [1, 1]} : vector<8x32xf32> to vector<8x8xf32>
    %78 = arith.truncf %77 : vector<8x8xf32> to vector<8x8xbf16>
    %cst_34 = arith.constant dense<0.000000e+00> : vector<8x8xf32>
    %79 = tpu.matmul %74, %76, %cst_34 {dimension_numbers = #tpu.dot_dimension_numbers<[1], [0], [0], [1], [0, 0, 1, 1], [], []>} : vector<8x8xbf16>, vector<8x8xbf16>, vector<8x8xf32> -> vector<8x8xf32>
    %80 = vector.broadcast %6 : vector<1x8xf32> to vector<8x8xf32>
    %81 = arith.addf %79, %80 : vector<8x8xf32>
    %cst_35 = arith.constant dense<0xFF800000> : vector<8xf32>
    %82 = vector.multi_reduction <maximumf>, %81, %cst_35 [1] : vector<8x8xf32> to vector<8xf32>
    %83 = vector.shape_cast %82 : vector<8xf32> to vector<8x1xf32>
    %84 = vector.broadcast %83 : vector<8x1xf32> to vector<8x8xf32>
    %85 = arith.subf %81, %84 : vector<8x8xf32>
    %86 = math.exp %85 : vector<8x8xf32>
    %cst_36 = arith.constant dense<0.000000e+00> : vector<8xf32>
    %87 = vector.multi_reduction <add>, %86, %cst_36 [1] : vector<8x8xf32> to vector<8xf32>
    %88 = vector.shape_cast %87 : vector<8xf32> to vector<8x1xf32>
    %89 = tpu.reciprocal %88 {approx = true} : vector<8x1xf32> -> vector<8x1xf32>
    %90 = vector.broadcast %89 : vector<8x1xf32> to vector<8x8xf32>
    %91 = arith.mulf %86, %90 : vector<8x8xf32>
    %92 = arith.truncf %91 : vector<8x8xf32> to vector<8x8xbf16>
    %cst_37 = arith.constant dense<0.000000e+00> : vector<8x8xf32>
    %93 = tpu.matmul %92, %78, %cst_37 {dimension_numbers = #tpu.dot_dimension_numbers<[1], [0], [0], [1], [0, 0, 1, 1], [], []>} : vector<8x8xbf16>, vector<8x8xbf16>, vector<8x8xf32> -> vector<8x8xf32>
    %c0_38 = arith.constant 0 : index
    %c16 = arith.constant 16 : index
    %94 = vector.load %arg10[%c0_38, %c16] : memref<8x32xf32, #tpu.memory_space<vmem>>, vector<8x8xf32>
    tpu.vector_store %arg10[%c0_38, %c16], %93 {strides = array<i32>} : memref<8x32xf32, #tpu.memory_space<vmem>>, vector<8x8xf32>,
    %95 = vector.extract_strided_slice %17 {offsets = [0, 24], sizes = [8, 8], strides = [1, 1]} : vector<8x32xf32> to vector<8x8xf32>
    %96 = arith.truncf %95 : vector<8x8xf32> to vector<8x8xbf16>
    %97 = vector.extract_strided_slice %28 {offsets = [24, 0], sizes = [8, 8], strides = [1, 1]} : vector<32x8xf32> to vector<8x8xf32>
    %98 = arith.truncf %97 : vector<8x8xf32> to vector<8x8xbf16>
    %99 = vector.extract_strided_slice %27 {offsets = [0, 24], sizes = [8, 8], strides = [1, 1]} : vector<8x32xf32> to vector<8x8xf32>
    %100 = arith.truncf %99 : vector<8x8xf32> to vector<8x8xbf16>
    %cst_39 = arith.constant dense<0.000000e+00> : vector<8x8xf32>
    %101 = tpu.matmul %96, %98, %cst_39 {dimension_numbers = #tpu.dot_dimension_numbers<[1], [0], [0], [1], [0, 0, 1, 1], [], []>} : vector<8x8xbf16>, vector<8x8xbf16>, vector<8x8xf32> -> vector<8x8xf32>
    %102 = vector.broadcast %6 : vector<1x8xf32> to vector<8x8xf32>
    %103 = arith.addf %101, %102 : vector<8x8xf32>
    %cst_40 = arith.constant dense<0xFF800000> : vector<8xf32>
    %104 = vector.multi_reduction <maximumf>, %103, %cst_40 [1] : vector<8x8xf32> to vector<8xf32>
    %105 = vector.shape_cast %104 : vector<8xf32> to vector<8x1xf32>
    %106 = vector.broadcast %105 : vector<8x1xf32> to vector<8x8xf32>
    %107 = arith.subf %103, %106 : vector<8x8xf32>
    %108 = math.exp %107 : vector<8x8xf32>
    %cst_41 = arith.constant dense<0.000000e+00> : vector<8xf32>
    %109 = vector.multi_reduction <add>, %108, %cst_41 [1] : vector<8x8xf32> to vector<8xf32>
    %110 = vector.shape_cast %109 : vector<8xf32> to vector<8x1xf32>
    %111 = tpu.reciprocal %110 {approx = true} : vector<8x1xf32> -> vector<8x1xf32>
    %112 = vector.broadcast %111 : vector<8x1xf32> to vector<8x8xf32>
    %113 = arith.mulf %108, %112 : vector<8x8xf32>
    %114 = arith.truncf %113 : vector<8x8xf32> to vector<8x8xbf16>
    %cst_42 = arith.constant dense<0.000000e+00> : vector<8x8xf32>
    %115 = tpu.matmul %114, %100, %cst_42 {dimension_numbers = #tpu.dot_dimension_numbers<[1], [0], [0], [1], [0, 0, 1, 1], [], []>} : vector<8x8xbf16>, vector<8x8xbf16>, vector<8x8xf32> -> vector<8x8xf32>
    %c0_43 = arith.constant 0 : index
    %c24 = arith.constant 24 : index
    %116 = vector.load %arg10[%c0_43, %c24] : memref<8x32xf32, #tpu.memory_space<vmem>>, vector<8x8xf32>
    tpu.vector_store %arg10[%c0_43, %c24], %115 {strides = array<i32>} : memref<8x32xf32, #tpu.memory_space<vmem>>, vector<8x8xf32>,
    %c0_44 = arith.constant 0 : index
    %c0_45 = arith.constant 0 : index
    %117 = vector.load %arg10[%c0_44, %c0_45] : memref<8x32xf32, #tpu.memory_space<vmem>>, vector<8x32xf32>
    %118 = arith.truncf %117 : vector<8x32xf32> to vector<8x32xbf16>
    %c0_46 = arith.constant 0 : index
    %c0_47 = arith.constant 0 : index
    %119 = vector.load %arg7[%c0_46, %c0_47] : memref<32x32xbf16, #tpu.memory_space<vmem>>, vector<32x32xbf16>
    %cst_48 = arith.constant dense<0.000000e+00> : vector<8x32xf32>
    %120 = tpu.matmul %118, %119, %cst_48 {dimension_numbers = #tpu.dot_dimension_numbers<[1], [0], [0], [1], [0, 0, 1, 1], [], []>} : vector<8x32xbf16>, vector<32x32xbf16>, vector<8x32xf32> -> vector<8x32xf32>
    %121 = vector.broadcast %10 : vector<1x32xf32> to vector<8x32xf32>
    %122 = arith.addf %120, %121 : vector<8x32xf32>
    %123 = arith.addf %1, %122 : vector<8x32xf32>
    %cst_49 = arith.constant dense<0.000000e+00> : vector<8xf32>
    %124 = vector.multi_reduction <add>, %123, %cst_49 [1] : vector<8x32xf32> to vector<8xf32>
    %125 = vector.shape_cast %124 : vector<8xf32> to vector<8x1xf32>
    %cst_50 = arith.constant 3.200000e+01 : f32
    %126 = vector.broadcast %cst_50 : f32 to vector<8x1xf32>
    %127 = arith.divf %125, %126 : vector<8x1xf32>
    %128 = vector.broadcast %127 : vector<8x1xf32> to vector<8x32xf32>
    %129 = arith.subf %123, %128 : vector<8x32xf32>
    %130 = arith.mulf %129, %129 : vector<8x32xf32>
    %cst_51 = arith.constant dense<0.000000e+00> : vector<8xf32>
    %131 = vector.multi_reduction <add>, %130, %cst_51 [1] : vector<8x32xf32> to vector<8xf32>
    %132 = vector.shape_cast %131 : vector<8xf32> to vector<8x1xf32>
    %cst_52 = arith.constant 3.200000e+01 : f32
    %133 = vector.broadcast %cst_52 : f32 to vector<8x1xf32>
    %134 = arith.divf %132, %133 : vector<8x1xf32>
    %135 = vector.broadcast %127 : vector<8x1xf32> to vector<8x32xf32>
    %136 = arith.subf %123, %135 : vector<8x32xf32>
    %cst_53 = arith.constant 9.99999974E-6 : f32
    %137 = vector.broadcast %cst_53 : f32 to vector<8x1xf32>
    %138 = arith.addf %134, %137 : vector<8x1xf32>
    %139 = math.rsqrt %138 : vector<8x1xf32>
    %140 = vector.broadcast %139 : vector<8x1xf32> to vector<8x32xf32>
    %141 = arith.mulf %136, %140 : vector<8x32xf32>
    %142 = vector.broadcast %11 : vector<1x32xf32> to vector<8x32xf32>
    %143 = arith.mulf %141, %142 : vector<8x32xf32>
    %144 = vector.broadcast %12 : vector<1x32xf32> to vector<8x32xf32>
    %145 = arith.addf %143, %144 : vector<8x32xf32>
    %c0_54 = arith.constant 0 : index
    %c0_55 = arith.constant 0 : index
    %c0_56 = arith.constant 0 : index
    %146 = vector.load %arg9[%c0_54, %c0_55, %c0_56] : memref<1x8x32xf32, #tpu.memory_space<vmem>>, vector<1x8x32xf32>
    %147 = vector.shape_cast %146 : vector<1x8x32xf32> to vector<8x32xf32>
    %148 = vector.shape_cast %145 : vector<8x32xf32> to vector<1x8x32xf32>
    tpu.vector_store %arg9[%c0_54, %c0_55, %c0_56], %148 {strides = array<i32>} : memref<1x8x32xf32, #tpu.memory_space<vmem>>, vector<1x8x32xf32>,
    return
  }
  func.func @transform_0(%arg0: i32) -> (i32, i32, i32) {
    %c0_i32 = arith.constant 0 : i32
    %c0_i32_0 = arith.constant 0 : i32
    %c0_i32_1 = arith.constant 0 : i32
    return %arg0, %c0_i32, %c0_i32_0 : i32, i32, i32
  }
  func.func @transform_1(%arg0: i32) -> (i32, i32, i32) {
    %c0_i32 = arith.constant 0 : i32
    %c0_i32_0 = arith.constant 0 : i32
    %c0_i32_1 = arith.constant 0 : i32
    return %arg0, %c0_i32, %c0_i32_0 : i32, i32, i32
  }
  func.func @transform_2(%arg0: i32) -> (i32, i32, i32) {
    %c0_i32 = arith.constant 0 : i32
    %c0_i32_0 = arith.constant 0 : i32
    %c0_i32_1 = arith.constant 0 : i32
    return %arg0, %c0_i32, %c0_i32_0 : i32, i32, i32
  }
  func.func @transform_3(%arg0: i32) -> (i32, i32) {
    %c0_i32 = arith.constant 0 : i32
    %c0_i32_0 = arith.constant 0 : i32
    %c0_i32_1 = arith.constant 0 : i32
    return %c0_i32, %c0_i32_0 : i32, i32
  }
  func.func @transform_4(%arg0: i32) -> (i32, i32) {
    %c0_i32 = arith.constant 0 : i32
    %c0_i32_0 = arith.constant 0 : i32
    %c0_i32_1 = arith.constant 0 : i32
    return %c0_i32, %c0_i32_0 : i32, i32
  }
  func.func @transform_5(%arg0: i32) -> (i32, i32) {
    %c0_i32 = arith.constant 0 : i32
    %c0_i32_0 = arith.constant 0 : i32
    %c0_i32_1 = arith.constant 0 : i32
    return %c0_i32, %c0_i32_0 : i32, i32
  }
  func.func @transform_6(%arg0: i32) -> (i32, i32) {
    %c0_i32 = arith.constant 0 : i32
    %c0_i32_0 = arith.constant 0 : i32
    %c0_i32_1 = arith.constant 0 : i32
    return %c0_i32, %c0_i32_0 : i32, i32
  }
  func.func @transform_7(%arg0: i32) -> (i32, i32) {
    %c0_i32 = arith.constant 0 : i32
    %c0_i32_0 = arith.constant 0 : i32
    %c0_i32_1 = arith.constant 0 : i32
    return %c0_i32, %c0_i32_0 : i32, i32
  }
  func.func @transform_8(%arg0: i32) -> (i32, i32, i32) {
    %c0_i32 = arith.constant 0 : i32
    %c0_i32_0 = arith.constant 0 : i32
    %c0_i32_1 = arith.constant 0 : i32
    return %arg0, %c0_i32, %c0_i32_0 : i32, i32, i32
  }
}

module attributes {stable_mosaic.version = 11 : i64} {
  func.func @_self_attn_ln_kernel(%arg0: i32, %arg1: memref<1x16x32xf32, #tpu.memory_space<vmem>>, %arg2: memref<1x16x32xf32, #tpu.memory_space<vmem>>, %arg3: memref<1x1x16xf32, #tpu.memory_space<vmem>>, %arg4: memref<32x32xbf16, #tpu.memory_space<vmem>>, %arg5: memref<32x32xbf16, #tpu.memory_space<vmem>>, %arg6: memref<32x32xbf16, #tpu.memory_space<vmem>>, %arg7: memref<32x32xbf16, #tpu.memory_space<vmem>>, %arg8: memref<6x32xf32, #tpu.memory_space<vmem>>, %arg9: memref<1x16x32xf32, #tpu.memory_space<vmem>>, %arg10: memref<16x32xf32, #tpu.memory_space<vmem>>) attributes {dimension_semantics = [#tpu.dimension_semantics<parallel>], iteration_bounds = array<i64: 2>, scalar_prefetch = 0 : i64, scratch_operands = 1 : i64, tpu.core_type = #tpu.core_type<tc>, window_params = [{transform_indices = @transform_0, window_bounds = array<i64: 1, 16, 32>}, {transform_indices = @transform_1, window_bounds = array<i64: 1, 16, 32>}, {transform_indices = @transform_2, window_bounds = array<i64: 1, 1, 16>}, {pipeline_mode = #tpu.pipeline_mode<synchronous>, transform_indices = @transform_3, window_bounds = array<i64: 32, 32>}, {pipeline_mode = #tpu.pipeline_mode<synchronous>, transform_indices = @transform_4, window_bounds = array<i64: 32, 32>}, {pipeline_mode = #tpu.pipeline_mode<synchronous>, transform_indices = @transform_5, window_bounds = array<i64: 32, 32>}, {pipeline_mode = #tpu.pipeline_mode<synchronous>, transform_indices = @transform_6, window_bounds = array<i64: 32, 32>}, {pipeline_mode = #tpu.pipeline_mode<synchronous>, transform_indices = @transform_7, window_bounds = array<i64: 6, 32>}, {transform_indices = @transform_8, window_bounds = array<i64: 1, 16, 32>}]} {
    %c0 = arith.constant 0 : index
    %c0_0 = arith.constant 0 : index
    %c0_1 = arith.constant 0 : index
    %0 = vector.load %arg1[%c0, %c0_0, %c0_1] : memref<1x16x32xf32, #tpu.memory_space<vmem>>, vector<1x16x32xf32>
    %1 = vector.shape_cast %0 : vector<1x16x32xf32> to vector<16x32xf32>
    %c0_2 = arith.constant 0 : index
    %c0_3 = arith.constant 0 : index
    %c0_4 = arith.constant 0 : index
    %2 = vector.load %arg2[%c0_2, %c0_3, %c0_4] : memref<1x16x32xf32, #tpu.memory_space<vmem>>, vector<1x16x32xf32>
    %3 = vector.shape_cast %2 : vector<1x16x32xf32> to vector<16x32xf32>
    %4 = arith.addf %1, %3 : vector<16x32xf32>
    %c0_5 = arith.constant 0 : index
    %c0_6 = arith.constant 0 : index
    %c0_7 = arith.constant 0 : index
    %5 = vector.load %arg3[%c0_5, %c0_6, %c0_7] : memref<1x1x16xf32, #tpu.memory_space<vmem>>, vector<1x1x16xf32>
    %6 = vector.shape_cast %5 : vector<1x1x16xf32> to vector<1x16xf32>
    %c0_8 = arith.constant 0 : index
    %c0_9 = arith.constant 0 : index
    %7 = vector.load %arg8[%c0_8, %c0_9] : memref<6x32xf32, #tpu.memory_space<vmem>>, vector<1x32xf32>
    %c1 = arith.constant 1 : index
    %c0_10 = arith.constant 0 : index
    %8 = vector.load %arg8[%c1, %c0_10] : memref<6x32xf32, #tpu.memory_space<vmem>>, vector<1x32xf32>
    %c2 = arith.constant 2 : index
    %c0_11 = arith.constant 0 : index
    %9 = vector.load %arg8[%c2, %c0_11] : memref<6x32xf32, #tpu.memory_space<vmem>>, vector<1x32xf32>
    %c3 = arith.constant 3 : index
    %c0_12 = arith.constant 0 : index
    %10 = vector.load %arg8[%c3, %c0_12] : memref<6x32xf32, #tpu.memory_space<vmem>>, vector<1x32xf32>
    %c4 = arith.constant 4 : index
    %c0_13 = arith.constant 0 : index
    %11 = vector.load %arg8[%c4, %c0_13] : memref<6x32xf32, #tpu.memory_space<vmem>>, vector<1x32xf32>
    %c5 = arith.constant 5 : index
    %c0_14 = arith.constant 0 : index
    %12 = vector.load %arg8[%c5, %c0_14] : memref<6x32xf32, #tpu.memory_space<vmem>>, vector<1x32xf32>
    %13 = arith.truncf %4 : vector<16x32xf32> to vector<16x32xbf16>
    %c0_15 = arith.constant 0 : index
    %c0_16 = arith.constant 0 : index
    %14 = vector.load %arg4[%c0_15, %c0_16] : memref<32x32xbf16, #tpu.memory_space<vmem>>, vector<32x32xbf16>
    %cst = arith.constant dense<0.000000e+00> : vector<16x32xf32>
    %15 = tpu.matmul %13, %14, %cst {dimension_numbers = #tpu.dot_dimension_numbers<[1], [0], [0], [1], [0, 0, 1, 1], [], []>} : vector<16x32xbf16>, vector<32x32xbf16>, vector<16x32xf32> -> vector<16x32xf32>
    %16 = vector.broadcast %7 : vector<1x32xf32> to vector<16x32xf32>
    %17 = arith.addf %15, %16 : vector<16x32xf32>
    %18 = arith.truncf %4 : vector<16x32xf32> to vector<16x32xbf16>
    %c0_17 = arith.constant 0 : index
    %c0_18 = arith.constant 0 : index
    %19 = vector.load %arg5[%c0_17, %c0_18] : memref<32x32xbf16, #tpu.memory_space<vmem>>, vector<32x32xbf16>
    %cst_19 = arith.constant dense<0.000000e+00> : vector<16x32xf32>
    %20 = tpu.matmul %18, %19, %cst_19 {dimension_numbers = #tpu.dot_dimension_numbers<[1], [0], [0], [1], [0, 0, 1, 1], [], []>} : vector<16x32xbf16>, vector<32x32xbf16>, vector<16x32xf32> -> vector<16x32xf32>
    %21 = vector.broadcast %8 : vector<1x32xf32> to vector<16x32xf32>
    %22 = arith.addf %20, %21 : vector<16x32xf32>
    %23 = arith.truncf %1 : vector<16x32xf32> to vector<16x32xbf16>
    %c0_20 = arith.constant 0 : index
    %c0_21 = arith.constant 0 : index
    %24 = vector.load %arg6[%c0_20, %c0_21] : memref<32x32xbf16, #tpu.memory_space<vmem>>, vector<32x32xbf16>
    %cst_22 = arith.constant dense<0.000000e+00> : vector<16x32xf32>
    %25 = tpu.matmul %23, %24, %cst_22 {dimension_numbers = #tpu.dot_dimension_numbers<[1], [0], [0], [1], [0, 0, 1, 1], [], []>} : vector<16x32xbf16>, vector<32x32xbf16>, vector<16x32xf32> -> vector<16x32xf32>
    %26 = vector.broadcast %9 : vector<1x32xf32> to vector<16x32xf32>
    %27 = arith.addf %25, %26 : vector<16x32xf32>
    %28 = tpu.transpose %22, [1, 0] : vector<16x32xf32> -> vector<32x16xf32>
    %29 = vector.extract_strided_slice %17 {offsets = [0, 0], sizes = [16, 8], strides = [1, 1]} : vector<16x32xf32> to vector<16x8xf32>
    %30 = arith.truncf %29 : vector<16x8xf32> to vector<16x8xbf16>
    %31 = vector.extract_strided_slice %28 {offsets = [0, 0], sizes = [8, 16], strides = [1, 1]} : vector<32x16xf32> to vector<8x16xf32>
    %32 = arith.truncf %31 : vector<8x16xf32> to vector<8x16xbf16>
    %33 = vector.extract_strided_slice %27 {offsets = [0, 0], sizes = [16, 8], strides = [1, 1]} : vector<16x32xf32> to vector<16x8xf32>
    %34 = arith.truncf %33 : vector<16x8xf32> to vector<16x8xbf16>
    %cst_23 = arith.constant dense<0.000000e+00> : vector<16x16xf32>
    %35 = tpu.matmul %30, %32, %cst_23 {dimension_numbers = #tpu.dot_dimension_numbers<[1], [0], [0], [1], [0, 0, 1, 1], [], []>} : vector<16x8xbf16>, vector<8x16xbf16>, vector<16x16xf32> -> vector<16x16xf32>
    %36 = vector.broadcast %6 : vector<1x16xf32> to vector<16x16xf32>
    %37 = arith.addf %35, %36 : vector<16x16xf32>
    %cst_24 = arith.constant dense<0xFF800000> : vector<16xf32>
    %38 = vector.multi_reduction <maximumf>, %37, %cst_24 [1] : vector<16x16xf32> to vector<16xf32>
    %39 = vector.shape_cast %38 : vector<16xf32> to vector<16x1xf32>
    %40 = vector.broadcast %39 : vector<16x1xf32> to vector<16x16xf32>
    %41 = arith.subf %37, %40 : vector<16x16xf32>
    %42 = math.exp %41 : vector<16x16xf32>
    %cst_25 = arith.constant dense<0.000000e+00> : vector<16xf32>
    %43 = vector.multi_reduction <add>, %42, %cst_25 [1] : vector<16x16xf32> to vector<16xf32>
    %44 = vector.shape_cast %43 : vector<16xf32> to vector<16x1xf32>
    %45 = tpu.reciprocal %44 {approx = true} : vector<16x1xf32> -> vector<16x1xf32>
    %46 = vector.broadcast %45 : vector<16x1xf32> to vector<16x16xf32>
    %47 = arith.mulf %42, %46 : vector<16x16xf32>
    %48 = arith.truncf %47 : vector<16x16xf32> to vector<16x16xbf16>
    %cst_26 = arith.constant dense<0.000000e+00> : vector<16x8xf32>
    %49 = tpu.matmul %48, %34, %cst_26 {dimension_numbers = #tpu.dot_dimension_numbers<[1], [0], [0], [1], [0, 0, 1, 1], [], []>} : vector<16x16xbf16>, vector<16x8xbf16>, vector<16x8xf32> -> vector<16x8xf32>
    %c0_27 = arith.constant 0 : index
    %c0_28 = arith.constant 0 : index
    %50 = vector.load %arg10[%c0_27, %c0_28] : memref<16x32xf32, #tpu.memory_space<vmem>>, vector<16x8xf32>
    tpu.vector_store %arg10[%c0_27, %c0_28], %49 {strides = array<i32>} : memref<16x32xf32, #tpu.memory_space<vmem>>, vector<16x8xf32>,
    %51 = vector.extract_strided_slice %17 {offsets = [0, 8], sizes = [16, 8], strides = [1, 1]} : vector<16x32xf32> to vector<16x8xf32>
    %52 = arith.truncf %51 : vector<16x8xf32> to vector<16x8xbf16>
    %53 = vector.extract_strided_slice %28 {offsets = [8, 0], sizes = [8, 16], strides = [1, 1]} : vector<32x16xf32> to vector<8x16xf32>
    %54 = arith.truncf %53 : vector<8x16xf32> to vector<8x16xbf16>
    %55 = vector.extract_strided_slice %27 {offsets = [0, 8], sizes = [16, 8], strides = [1, 1]} : vector<16x32xf32> to vector<16x8xf32>
    %56 = arith.truncf %55 : vector<16x8xf32> to vector<16x8xbf16>
    %cst_29 = arith.constant dense<0.000000e+00> : vector<16x16xf32>
    %57 = tpu.matmul %52, %54, %cst_29 {dimension_numbers = #tpu.dot_dimension_numbers<[1], [0], [0], [1], [0, 0, 1, 1], [], []>} : vector<16x8xbf16>, vector<8x16xbf16>, vector<16x16xf32> -> vector<16x16xf32>
    %58 = vector.broadcast %6 : vector<1x16xf32> to vector<16x16xf32>
    %59 = arith.addf %57, %58 : vector<16x16xf32>
    %cst_30 = arith.constant dense<0xFF800000> : vector<16xf32>
    %60 = vector.multi_reduction <maximumf>, %59, %cst_30 [1] : vector<16x16xf32> to vector<16xf32>
    %61 = vector.shape_cast %60 : vector<16xf32> to vector<16x1xf32>
    %62 = vector.broadcast %61 : vector<16x1xf32> to vector<16x16xf32>
    %63 = arith.subf %59, %62 : vector<16x16xf32>
    %64 = math.exp %63 : vector<16x16xf32>
    %cst_31 = arith.constant dense<0.000000e+00> : vector<16xf32>
    %65 = vector.multi_reduction <add>, %64, %cst_31 [1] : vector<16x16xf32> to vector<16xf32>
    %66 = vector.shape_cast %65 : vector<16xf32> to vector<16x1xf32>
    %67 = tpu.reciprocal %66 {approx = true} : vector<16x1xf32> -> vector<16x1xf32>
    %68 = vector.broadcast %67 : vector<16x1xf32> to vector<16x16xf32>
    %69 = arith.mulf %64, %68 : vector<16x16xf32>
    %70 = arith.truncf %69 : vector<16x16xf32> to vector<16x16xbf16>
    %cst_32 = arith.constant dense<0.000000e+00> : vector<16x8xf32>
    %71 = tpu.matmul %70, %56, %cst_32 {dimension_numbers = #tpu.dot_dimension_numbers<[1], [0], [0], [1], [0, 0, 1, 1], [], []>} : vector<16x16xbf16>, vector<16x8xbf16>, vector<16x8xf32> -> vector<16x8xf32>
    %c0_33 = arith.constant 0 : index
    %c8 = arith.constant 8 : index
    %72 = vector.load %arg10[%c0_33, %c8] : memref<16x32xf32, #tpu.memory_space<vmem>>, vector<16x8xf32>
    tpu.vector_store %arg10[%c0_33, %c8], %71 {strides = array<i32>} : memref<16x32xf32, #tpu.memory_space<vmem>>, vector<16x8xf32>,
    %73 = vector.extract_strided_slice %17 {offsets = [0, 16], sizes = [16, 8], strides = [1, 1]} : vector<16x32xf32> to vector<16x8xf32>
    %74 = arith.truncf %73 : vector<16x8xf32> to vector<16x8xbf16>
    %75 = vector.extract_strided_slice %28 {offsets = [16, 0], sizes = [8, 16], strides = [1, 1]} : vector<32x16xf32> to vector<8x16xf32>
    %76 = arith.truncf %75 : vector<8x16xf32> to vector<8x16xbf16>
    %77 = vector.extract_strided_slice %27 {offsets = [0, 16], sizes = [16, 8], strides = [1, 1]} : vector<16x32xf32> to vector<16x8xf32>
    %78 = arith.truncf %77 : vector<16x8xf32> to vector<16x8xbf16>
    %cst_34 = arith.constant dense<0.000000e+00> : vector<16x16xf32>
    %79 = tpu.matmul %74, %76, %cst_34 {dimension_numbers = #tpu.dot_dimension_numbers<[1], [0], [0], [1], [0, 0, 1, 1], [], []>} : vector<16x8xbf16>, vector<8x16xbf16>, vector<16x16xf32> -> vector<16x16xf32>
    %80 = vector.broadcast %6 : vector<1x16xf32> to vector<16x16xf32>
    %81 = arith.addf %79, %80 : vector<16x16xf32>
    %cst_35 = arith.constant dense<0xFF800000> : vector<16xf32>
    %82 = vector.multi_reduction <maximumf>, %81, %cst_35 [1] : vector<16x16xf32> to vector<16xf32>
    %83 = vector.shape_cast %82 : vector<16xf32> to vector<16x1xf32>
    %84 = vector.broadcast %83 : vector<16x1xf32> to vector<16x16xf32>
    %85 = arith.subf %81, %84 : vector<16x16xf32>
    %86 = math.exp %85 : vector<16x16xf32>
    %cst_36 = arith.constant dense<0.000000e+00> : vector<16xf32>
    %87 = vector.multi_reduction <add>, %86, %cst_36 [1] : vector<16x16xf32> to vector<16xf32>
    %88 = vector.shape_cast %87 : vector<16xf32> to vector<16x1xf32>
    %89 = tpu.reciprocal %88 {approx = true} : vector<16x1xf32> -> vector<16x1xf32>
    %90 = vector.broadcast %89 : vector<16x1xf32> to vector<16x16xf32>
    %91 = arith.mulf %86, %90 : vector<16x16xf32>
    %92 = arith.truncf %91 : vector<16x16xf32> to vector<16x16xbf16>
    %cst_37 = arith.constant dense<0.000000e+00> : vector<16x8xf32>
    %93 = tpu.matmul %92, %78, %cst_37 {dimension_numbers = #tpu.dot_dimension_numbers<[1], [0], [0], [1], [0, 0, 1, 1], [], []>} : vector<16x16xbf16>, vector<16x8xbf16>, vector<16x8xf32> -> vector<16x8xf32>
    %c0_38 = arith.constant 0 : index
    %c16 = arith.constant 16 : index
    %94 = vector.load %arg10[%c0_38, %c16] : memref<16x32xf32, #tpu.memory_space<vmem>>, vector<16x8xf32>
    tpu.vector_store %arg10[%c0_38, %c16], %93 {strides = array<i32>} : memref<16x32xf32, #tpu.memory_space<vmem>>, vector<16x8xf32>,
    %95 = vector.extract_strided_slice %17 {offsets = [0, 24], sizes = [16, 8], strides = [1, 1]} : vector<16x32xf32> to vector<16x8xf32>
    %96 = arith.truncf %95 : vector<16x8xf32> to vector<16x8xbf16>
    %97 = vector.extract_strided_slice %28 {offsets = [24, 0], sizes = [8, 16], strides = [1, 1]} : vector<32x16xf32> to vector<8x16xf32>
    %98 = arith.truncf %97 : vector<8x16xf32> to vector<8x16xbf16>
    %99 = vector.extract_strided_slice %27 {offsets = [0, 24], sizes = [16, 8], strides = [1, 1]} : vector<16x32xf32> to vector<16x8xf32>
    %100 = arith.truncf %99 : vector<16x8xf32> to vector<16x8xbf16>
    %cst_39 = arith.constant dense<0.000000e+00> : vector<16x16xf32>
    %101 = tpu.matmul %96, %98, %cst_39 {dimension_numbers = #tpu.dot_dimension_numbers<[1], [0], [0], [1], [0, 0, 1, 1], [], []>} : vector<16x8xbf16>, vector<8x16xbf16>, vector<16x16xf32> -> vector<16x16xf32>
    %102 = vector.broadcast %6 : vector<1x16xf32> to vector<16x16xf32>
    %103 = arith.addf %101, %102 : vector<16x16xf32>
    %cst_40 = arith.constant dense<0xFF800000> : vector<16xf32>
    %104 = vector.multi_reduction <maximumf>, %103, %cst_40 [1] : vector<16x16xf32> to vector<16xf32>
    %105 = vector.shape_cast %104 : vector<16xf32> to vector<16x1xf32>
    %106 = vector.broadcast %105 : vector<16x1xf32> to vector<16x16xf32>
    %107 = arith.subf %103, %106 : vector<16x16xf32>
    %108 = math.exp %107 : vector<16x16xf32>
    %cst_41 = arith.constant dense<0.000000e+00> : vector<16xf32>
    %109 = vector.multi_reduction <add>, %108, %cst_41 [1] : vector<16x16xf32> to vector<16xf32>
    %110 = vector.shape_cast %109 : vector<16xf32> to vector<16x1xf32>
    %111 = tpu.reciprocal %110 {approx = true} : vector<16x1xf32> -> vector<16x1xf32>
    %112 = vector.broadcast %111 : vector<16x1xf32> to vector<16x16xf32>
    %113 = arith.mulf %108, %112 : vector<16x16xf32>
    %114 = arith.truncf %113 : vector<16x16xf32> to vector<16x16xbf16>
    %cst_42 = arith.constant dense<0.000000e+00> : vector<16x8xf32>
    %115 = tpu.matmul %114, %100, %cst_42 {dimension_numbers = #tpu.dot_dimension_numbers<[1], [0], [0], [1], [0, 0, 1, 1], [], []>} : vector<16x16xbf16>, vector<16x8xbf16>, vector<16x8xf32> -> vector<16x8xf32>
    %c0_43 = arith.constant 0 : index
    %c24 = arith.constant 24 : index
    %116 = vector.load %arg10[%c0_43, %c24] : memref<16x32xf32, #tpu.memory_space<vmem>>, vector<16x8xf32>
    tpu.vector_store %arg10[%c0_43, %c24], %115 {strides = array<i32>} : memref<16x32xf32, #tpu.memory_space<vmem>>, vector<16x8xf32>,
    %c0_44 = arith.constant 0 : index
    %c0_45 = arith.constant 0 : index
    %117 = vector.load %arg10[%c0_44, %c0_45] : memref<16x32xf32, #tpu.memory_space<vmem>>, vector<16x32xf32>
    %118 = arith.truncf %117 : vector<16x32xf32> to vector<16x32xbf16>
    %c0_46 = arith.constant 0 : index
    %c0_47 = arith.constant 0 : index
    %119 = vector.load %arg7[%c0_46, %c0_47] : memref<32x32xbf16, #tpu.memory_space<vmem>>, vector<32x32xbf16>
    %cst_48 = arith.constant dense<0.000000e+00> : vector<16x32xf32>
    %120 = tpu.matmul %118, %119, %cst_48 {dimension_numbers = #tpu.dot_dimension_numbers<[1], [0], [0], [1], [0, 0, 1, 1], [], []>} : vector<16x32xbf16>, vector<32x32xbf16>, vector<16x32xf32> -> vector<16x32xf32>
    %121 = vector.broadcast %10 : vector<1x32xf32> to vector<16x32xf32>
    %122 = arith.addf %120, %121 : vector<16x32xf32>
    %123 = arith.addf %1, %122 : vector<16x32xf32>
    %cst_49 = arith.constant dense<0.000000e+00> : vector<16xf32>
    %124 = vector.multi_reduction <add>, %123, %cst_49 [1] : vector<16x32xf32> to vector<16xf32>
    %125 = vector.shape_cast %124 : vector<16xf32> to vector<16x1xf32>
    %cst_50 = arith.constant 3.200000e+01 : f32
    %126 = vector.broadcast %cst_50 : f32 to vector<16x1xf32>
    %127 = arith.divf %125, %126 : vector<16x1xf32>
    %128 = vector.broadcast %127 : vector<16x1xf32> to vector<16x32xf32>
    %129 = arith.subf %123, %128 : vector<16x32xf32>
    %130 = arith.mulf %129, %129 : vector<16x32xf32>
    %cst_51 = arith.constant dense<0.000000e+00> : vector<16xf32>
    %131 = vector.multi_reduction <add>, %130, %cst_51 [1] : vector<16x32xf32> to vector<16xf32>
    %132 = vector.shape_cast %131 : vector<16xf32> to vector<16x1xf32>
    %cst_52 = arith.constant 3.200000e+01 : f32
    %133 = vector.broadcast %cst_52 : f32 to vector<16x1xf32>
    %134 = arith.divf %132, %133 : vector<16x1xf32>
    %135 = vector.broadcast %127 : vector<16x1xf32> to vector<16x32xf32>
    %136 = arith.subf %123, %135 : vector<16x32xf32>
    %cst_53 = arith.constant 9.99999974E-6 : f32
    %137 = vector.broadcast %cst_53 : f32 to vector<16x1xf32>
    %138 = arith.addf %134, %137 : vector<16x1xf32>
    %139 = math.rsqrt %138 : vector<16x1xf32>
    %140 = vector.broadcast %139 : vector<16x1xf32> to vector<16x32xf32>
    %141 = arith.mulf %136, %140 : vector<16x32xf32>
    %142 = vector.broadcast %11 : vector<1x32xf32> to vector<16x32xf32>
    %143 = arith.mulf %141, %142 : vector<16x32xf32>
    %144 = vector.broadcast %12 : vector<1x32xf32> to vector<16x32xf32>
    %145 = arith.addf %143, %144 : vector<16x32xf32>
    %c0_54 = arith.constant 0 : index
    %c0_55 = arith.constant 0 : index
    %c0_56 = arith.constant 0 : index
    %146 = vector.load %arg9[%c0_54, %c0_55, %c0_56] : memref<1x16x32xf32, #tpu.memory_space<vmem>>, vector<1x16x32xf32>
    %147 = vector.shape_cast %146 : vector<1x16x32xf32> to vector<16x32xf32>
    %148 = vector.shape_cast %145 : vector<16x32xf32> to vector<1x16x32xf32>
    tpu.vector_store %arg9[%c0_54, %c0_55, %c0_56], %148 {strides = array<i32>} : memref<1x16x32xf32, #tpu.memory_space<vmem>>, vector<1x16x32xf32>,
    return
  }
  func.func @transform_0(%arg0: i32) -> (i32, i32, i32) {
    %c0_i32 = arith.constant 0 : i32
    %c0_i32_0 = arith.constant 0 : i32
    %c0_i32_1 = arith.constant 0 : i32
    return %arg0, %c0_i32, %c0_i32_0 : i32, i32, i32
  }
  func.func @transform_1(%arg0: i32) -> (i32, i32, i32) {
    %c0_i32 = arith.constant 0 : i32
    %c0_i32_0 = arith.constant 0 : i32
    %c0_i32_1 = arith.constant 0 : i32
    return %arg0, %c0_i32, %c0_i32_0 : i32, i32, i32
  }
  func.func @transform_2(%arg0: i32) -> (i32, i32, i32) {
    %c0_i32 = arith.constant 0 : i32
    %c0_i32_0 = arith.constant 0 : i32
    %c0_i32_1 = arith.constant 0 : i32
    return %arg0, %c0_i32, %c0_i32_0 : i32, i32, i32
  }
  func.func @transform_3(%arg0: i32) -> (i32, i32) {
    %c0_i32 = arith.constant 0 : i32
    %c0_i32_0 = arith.constant 0 : i32
    %c0_i32_1 = arith.constant 0 : i32
    return %c0_i32, %c0_i32_0 : i32, i32
  }
  func.func @transform_4(%arg0: i32) -> (i32, i32) {
    %c0_i32 = arith.constant 0 : i32
    %c0_i32_0 = arith.constant 0 : i32
    %c0_i32_1 = arith.constant 0 : i32
    return %c0_i32, %c0_i32_0 : i32, i32
  }
  func.func @transform_5(%arg0: i32) -> (i32, i32) {
    %c0_i32 = arith.constant 0 : i32
    %c0_i32_0 = arith.constant 0 : i32
    %c0_i32_1 = arith.constant 0 : i32
    return %c0_i32, %c0_i32_0 : i32, i32
  }
  func.func @transform_6(%arg0: i32) -> (i32, i32) {
    %c0_i32 = arith.constant 0 : i32
    %c0_i32_0 = arith.constant 0 : i32
    %c0_i32_1 = arith.constant 0 : i32
    return %c0_i32, %c0_i32_0 : i32, i32
  }
  func.func @transform_7(%arg0: i32) -> (i32, i32) {
    %c0_i32 = arith.constant 0 : i32
    %c0_i32_0 = arith.constant 0 : i32
    %c0_i32_1 = arith.constant 0 : i32
    return %c0_i32, %c0_i32_0 : i32, i32
  }
  func.func @transform_8(%arg0: i32) -> (i32, i32, i32) {
    %c0_i32 = arith.constant 0 : i32
    %c0_i32_0 = arith.constant 0 : i32
    %c0_i32_1 = arith.constant 0 : i32
    return %arg0, %c0_i32, %c0_i32_0 : i32, i32, i32
  }
}

module attributes {stable_mosaic.version = 11 : i64} {
  func.func @_cross_attn_ffn_ln_kernel(%arg0: i32, %arg1: memref<1x16x32xf32, #tpu.memory_space<vmem>>, %arg2: memref<1x16x32xf32, #tpu.memory_space<vmem>>, %arg3: memref<1x8x32xf32, #tpu.memory_space<vmem>>, %arg4: memref<1x8x32xf32, #tpu.memory_space<vmem>>, %arg5: memref<1x1x8xf32, #tpu.memory_space<vmem>>, %arg6: memref<32x32xbf16, #tpu.memory_space<vmem>>, %arg7: memref<32x32xbf16, #tpu.memory_space<vmem>>, %arg8: memref<32x32xbf16, #tpu.memory_space<vmem>>, %arg9: memref<32x32xbf16, #tpu.memory_space<vmem>>, %arg10: memref<32x1024xbf16, #tpu.memory_space<vmem>>, %arg11: memref<1024x32xbf16, #tpu.memory_space<vmem>>, %arg12: memref<1x1024xf32, #tpu.memory_space<vmem>>, %arg13: memref<9x32xf32, #tpu.memory_space<vmem>>, %arg14: memref<1x16x32xf32, #tpu.memory_space<vmem>>, %arg15: memref<16x32xf32, #tpu.memory_space<vmem>>) attributes {dimension_semantics = [#tpu.dimension_semantics<parallel>], iteration_bounds = array<i64: 2>, scalar_prefetch = 0 : i64, scratch_operands = 1 : i64, tpu.core_type = #tpu.core_type<tc>, window_params = [{transform_indices = @transform_0, window_bounds = array<i64: 1, 16, 32>}, {transform_indices = @transform_1, window_bounds = array<i64: 1, 16, 32>}, {transform_indices = @transform_2, window_bounds = array<i64: 1, 8, 32>}, {transform_indices = @transform_3, window_bounds = array<i64: 1, 8, 32>}, {transform_indices = @transform_4, window_bounds = array<i64: 1, 1, 8>}, {pipeline_mode = #tpu.pipeline_mode<synchronous>, transform_indices = @transform_5, window_bounds = array<i64: 32, 32>}, {pipeline_mode = #tpu.pipeline_mode<synchronous>, transform_indices = @transform_6, window_bounds = array<i64: 32, 32>}, {pipeline_mode = #tpu.pipeline_mode<synchronous>, transform_indices = @transform_7, window_bounds = array<i64: 32, 32>}, {pipeline_mode = #tpu.pipeline_mode<synchronous>, transform_indices = @transform_8, window_bounds = array<i64: 32, 32>}, {pipeline_mode = #tpu.pipeline_mode<synchronous>, transform_indices = @transform_9, window_bounds = array<i64: 32, 1024>}, {pipeline_mode = #tpu.pipeline_mode<synchronous>, transform_indices = @transform_10, window_bounds = array<i64: 1024, 32>}, {pipeline_mode = #tpu.pipeline_mode<synchronous>, transform_indices = @transform_11, window_bounds = array<i64: 1, 1024>}, {pipeline_mode = #tpu.pipeline_mode<synchronous>, transform_indices = @transform_12, window_bounds = array<i64: 9, 32>}, {transform_indices = @transform_13, window_bounds = array<i64: 1, 16, 32>}]} {
    %c0 = arith.constant 0 : index
    %c0_0 = arith.constant 0 : index
    %c0_1 = arith.constant 0 : index
    %0 = vector.load %arg1[%c0, %c0_0, %c0_1] : memref<1x16x32xf32, #tpu.memory_space<vmem>>, vector<1x16x32xf32>
    %1 = vector.shape_cast %0 : vector<1x16x32xf32> to vector<16x32xf32>
    %c0_2 = arith.constant 0 : index
    %c0_3 = arith.constant 0 : index
    %c0_4 = arith.constant 0 : index
    %2 = vector.load %arg3[%c0_2, %c0_3, %c0_4] : memref<1x8x32xf32, #tpu.memory_space<vmem>>, vector<1x8x32xf32>
    %3 = vector.shape_cast %2 : vector<1x8x32xf32> to vector<8x32xf32>
    %c0_5 = arith.constant 0 : index
    %c0_6 = arith.constant 0 : index
    %c0_7 = arith.constant 0 : index
    %4 = vector.load %arg2[%c0_5, %c0_6, %c0_7] : memref<1x16x32xf32, #tpu.memory_space<vmem>>, vector<1x16x32xf32>
    %5 = vector.shape_cast %4 : vector<1x16x32xf32> to vector<16x32xf32>
    %6 = arith.addf %1, %5 : vector<16x32xf32>
    %c0_8 = arith.constant 0 : index
    %c0_9 = arith.constant 0 : index
    %c0_10 = arith.constant 0 : index
    %7 = vector.load %arg4[%c0_8, %c0_9, %c0_10] : memref<1x8x32xf32, #tpu.memory_space<vmem>>, vector<1x8x32xf32>
    %8 = vector.shape_cast %7 : vector<1x8x32xf32> to vector<8x32xf32>
    %9 = arith.addf %3, %8 : vector<8x32xf32>
    %c0_11 = arith.constant 0 : index
    %c0_12 = arith.constant 0 : index
    %c0_13 = arith.constant 0 : index
    %10 = vector.load %arg5[%c0_11, %c0_12, %c0_13] : memref<1x1x8xf32, #tpu.memory_space<vmem>>, vector<1x1x8xf32>
    %11 = vector.shape_cast %10 : vector<1x1x8xf32> to vector<1x8xf32>
    %c0_14 = arith.constant 0 : index
    %c0_15 = arith.constant 0 : index
    %12 = vector.load %arg13[%c0_14, %c0_15] : memref<9x32xf32, #tpu.memory_space<vmem>>, vector<1x32xf32>
    %c1 = arith.constant 1 : index
    %c0_16 = arith.constant 0 : index
    %13 = vector.load %arg13[%c1, %c0_16] : memref<9x32xf32, #tpu.memory_space<vmem>>, vector<1x32xf32>
    %c2 = arith.constant 2 : index
    %c0_17 = arith.constant 0 : index
    %14 = vector.load %arg13[%c2, %c0_17] : memref<9x32xf32, #tpu.memory_space<vmem>>, vector<1x32xf32>
    %c3 = arith.constant 3 : index
    %c0_18 = arith.constant 0 : index
    %15 = vector.load %arg13[%c3, %c0_18] : memref<9x32xf32, #tpu.memory_space<vmem>>, vector<1x32xf32>
    %c4 = arith.constant 4 : index
    %c0_19 = arith.constant 0 : index
    %16 = vector.load %arg13[%c4, %c0_19] : memref<9x32xf32, #tpu.memory_space<vmem>>, vector<1x32xf32>
    %c5 = arith.constant 5 : index
    %c0_20 = arith.constant 0 : index
    %17 = vector.load %arg13[%c5, %c0_20] : memref<9x32xf32, #tpu.memory_space<vmem>>, vector<1x32xf32>
    %c6 = arith.constant 6 : index
    %c0_21 = arith.constant 0 : index
    %18 = vector.load %arg13[%c6, %c0_21] : memref<9x32xf32, #tpu.memory_space<vmem>>, vector<1x32xf32>
    %c7 = arith.constant 7 : index
    %c0_22 = arith.constant 0 : index
    %19 = vector.load %arg13[%c7, %c0_22] : memref<9x32xf32, #tpu.memory_space<vmem>>, vector<1x32xf32>
    %c8 = arith.constant 8 : index
    %c0_23 = arith.constant 0 : index
    %20 = vector.load %arg13[%c8, %c0_23] : memref<9x32xf32, #tpu.memory_space<vmem>>, vector<1x32xf32>
    %21 = arith.truncf %6 : vector<16x32xf32> to vector<16x32xbf16>
    %c0_24 = arith.constant 0 : index
    %c0_25 = arith.constant 0 : index
    %22 = vector.load %arg6[%c0_24, %c0_25] : memref<32x32xbf16, #tpu.memory_space<vmem>>, vector<32x32xbf16>
    %cst = arith.constant dense<0.000000e+00> : vector<16x32xf32>
    %23 = tpu.matmul %21, %22, %cst {dimension_numbers = #tpu.dot_dimension_numbers<[1], [0], [0], [1], [0, 0, 1, 1], [], []>} : vector<16x32xbf16>, vector<32x32xbf16>, vector<16x32xf32> -> vector<16x32xf32>
    %24 = vector.broadcast %12 : vector<1x32xf32> to vector<16x32xf32>
    %25 = arith.addf %23, %24 : vector<16x32xf32>
    %26 = arith.truncf %9 : vector<8x32xf32> to vector<8x32xbf16>
    %c0_26 = arith.constant 0 : index
    %c0_27 = arith.constant 0 : index
    %27 = vector.load %arg7[%c0_26, %c0_27] : memref<32x32xbf16, #tpu.memory_space<vmem>>, vector<32x32xbf16>
    %cst_28 = arith.constant dense<0.000000e+00> : vector<8x32xf32>
    %28 = tpu.matmul %26, %27, %cst_28 {dimension_numbers = #tpu.dot_dimension_numbers<[1], [0], [0], [1], [0, 0, 1, 1], [], []>} : vector<8x32xbf16>, vector<32x32xbf16>, vector<8x32xf32> -> vector<8x32xf32>
    %29 = vector.broadcast %13 : vector<1x32xf32> to vector<8x32xf32>
    %30 = arith.addf %28, %29 : vector<8x32xf32>
    %31 = arith.truncf %3 : vector<8x32xf32> to vector<8x32xbf16>
    %c0_29 = arith.constant 0 : index
    %c0_30 = arith.constant 0 : index
    %32 = vector.load %arg8[%c0_29, %c0_30] : memref<32x32xbf16, #tpu.memory_space<vmem>>, vector<32x32xbf16>
    %cst_31 = arith.constant dense<0.000000e+00> : vector<8x32xf32>
    %33 = tpu.matmul %31, %32, %cst_31 {dimension_numbers = #tpu.dot_dimension_numbers<[1], [0], [0], [1], [0, 0, 1, 1], [], []>} : vector<8x32xbf16>, vector<32x32xbf16>, vector<8x32xf32> -> vector<8x32xf32>
    %34 = vector.broadcast %14 : vector<1x32xf32> to vector<8x32xf32>
    %35 = arith.addf %33, %34 : vector<8x32xf32>
    %36 = tpu.transpose %30, [1, 0] : vector<8x32xf32> -> vector<32x8xf32>
    %37 = vector.extract_strided_slice %25 {offsets = [0, 0], sizes = [16, 8], strides = [1, 1]} : vector<16x32xf32> to vector<16x8xf32>
    %38 = arith.truncf %37 : vector<16x8xf32> to vector<16x8xbf16>
    %39 = vector.extract_strided_slice %36 {offsets = [0, 0], sizes = [8, 8], strides = [1, 1]} : vector<32x8xf32> to vector<8x8xf32>
    %40 = arith.truncf %39 : vector<8x8xf32> to vector<8x8xbf16>
    %41 = vector.extract_strided_slice %35 {offsets = [0, 0], sizes = [8, 8], strides = [1, 1]} : vector<8x32xf32> to vector<8x8xf32>
    %42 = arith.truncf %41 : vector<8x8xf32> to vector<8x8xbf16>
    %cst_32 = arith.constant dense<0.000000e+00> : vector<16x8xf32>
    %43 = tpu.matmul %38, %40, %cst_32 {dimension_numbers = #tpu.dot_dimension_numbers<[1], [0], [0], [1], [0, 0, 1, 1], [], []>} : vector<16x8xbf16>, vector<8x8xbf16>, vector<16x8xf32> -> vector<16x8xf32>
    %44 = vector.broadcast %11 : vector<1x8xf32> to vector<16x8xf32>
    %45 = arith.addf %43, %44 : vector<16x8xf32>
    %cst_33 = arith.constant dense<0xFF800000> : vector<16xf32>
    %46 = vector.multi_reduction <maximumf>, %45, %cst_33 [1] : vector<16x8xf32> to vector<16xf32>
    %47 = vector.shape_cast %46 : vector<16xf32> to vector<16x1xf32>
    %48 = vector.broadcast %47 : vector<16x1xf32> to vector<16x8xf32>
    %49 = arith.subf %45, %48 : vector<16x8xf32>
    %50 = math.exp %49 : vector<16x8xf32>
    %cst_34 = arith.constant dense<0.000000e+00> : vector<16xf32>
    %51 = vector.multi_reduction <add>, %50, %cst_34 [1] : vector<16x8xf32> to vector<16xf32>
    %52 = vector.shape_cast %51 : vector<16xf32> to vector<16x1xf32>
    %53 = tpu.reciprocal %52 {approx = true} : vector<16x1xf32> -> vector<16x1xf32>
    %54 = vector.broadcast %53 : vector<16x1xf32> to vector<16x8xf32>
    %55 = arith.mulf %50, %54 : vector<16x8xf32>
    %56 = arith.truncf %55 : vector<16x8xf32> to vector<16x8xbf16>
    %cst_35 = arith.constant dense<0.000000e+00> : vector<16x8xf32>
    %57 = tpu.matmul %56, %42, %cst_35 {dimension_numbers = #tpu.dot_dimension_numbers<[1], [0], [0], [1], [0, 0, 1, 1], [], []>} : vector<16x8xbf16>, vector<8x8xbf16>, vector<16x8xf32> -> vector<16x8xf32>
    %c0_36 = arith.constant 0 : index
    %c0_37 = arith.constant 0 : index
    %58 = vector.load %arg15[%c0_36, %c0_37] : memref<16x32xf32, #tpu.memory_space<vmem>>, vector<16x8xf32>
    tpu.vector_store %arg15[%c0_36, %c0_37], %57 {strides = array<i32>} : memref<16x32xf32, #tpu.memory_space<vmem>>, vector<16x8xf32>,
    %59 = vector.extract_strided_slice %25 {offsets = [0, 8], sizes = [16, 8], strides = [1, 1]} : vector<16x32xf32> to vector<16x8xf32>
    %60 = arith.truncf %59 : vector<16x8xf32> to vector<16x8xbf16>
    %61 = vector.extract_strided_slice %36 {offsets = [8, 0], sizes = [8, 8], strides = [1, 1]} : vector<32x8xf32> to vector<8x8xf32>
    %62 = arith.truncf %61 : vector<8x8xf32> to vector<8x8xbf16>
    %63 = vector.extract_strided_slice %35 {offsets = [0, 8], sizes = [8, 8], strides = [1, 1]} : vector<8x32xf32> to vector<8x8xf32>
    %64 = arith.truncf %63 : vector<8x8xf32> to vector<8x8xbf16>
    %cst_38 = arith.constant dense<0.000000e+00> : vector<16x8xf32>
    %65 = tpu.matmul %60, %62, %cst_38 {dimension_numbers = #tpu.dot_dimension_numbers<[1], [0], [0], [1], [0, 0, 1, 1], [], []>} : vector<16x8xbf16>, vector<8x8xbf16>, vector<16x8xf32> -> vector<16x8xf32>
    %66 = vector.broadcast %11 : vector<1x8xf32> to vector<16x8xf32>
    %67 = arith.addf %65, %66 : vector<16x8xf32>
    %cst_39 = arith.constant dense<0xFF800000> : vector<16xf32>
    %68 = vector.multi_reduction <maximumf>, %67, %cst_39 [1] : vector<16x8xf32> to vector<16xf32>
    %69 = vector.shape_cast %68 : vector<16xf32> to vector<16x1xf32>
    %70 = vector.broadcast %69 : vector<16x1xf32> to vector<16x8xf32>
    %71 = arith.subf %67, %70 : vector<16x8xf32>
    %72 = math.exp %71 : vector<16x8xf32>
    %cst_40 = arith.constant dense<0.000000e+00> : vector<16xf32>
    %73 = vector.multi_reduction <add>, %72, %cst_40 [1] : vector<16x8xf32> to vector<16xf32>
    %74 = vector.shape_cast %73 : vector<16xf32> to vector<16x1xf32>
    %75 = tpu.reciprocal %74 {approx = true} : vector<16x1xf32> -> vector<16x1xf32>
    %76 = vector.broadcast %75 : vector<16x1xf32> to vector<16x8xf32>
    %77 = arith.mulf %72, %76 : vector<16x8xf32>
    %78 = arith.truncf %77 : vector<16x8xf32> to vector<16x8xbf16>
    %cst_41 = arith.constant dense<0.000000e+00> : vector<16x8xf32>
    %79 = tpu.matmul %78, %64, %cst_41 {dimension_numbers = #tpu.dot_dimension_numbers<[1], [0], [0], [1], [0, 0, 1, 1], [], []>} : vector<16x8xbf16>, vector<8x8xbf16>, vector<16x8xf32> -> vector<16x8xf32>
    %c0_42 = arith.constant 0 : index
    %c8_43 = arith.constant 8 : index
    %80 = vector.load %arg15[%c0_42, %c8_43] : memref<16x32xf32, #tpu.memory_space<vmem>>, vector<16x8xf32>
    tpu.vector_store %arg15[%c0_42, %c8_43], %79 {strides = array<i32>} : memref<16x32xf32, #tpu.memory_space<vmem>>, vector<16x8xf32>,
    %81 = vector.extract_strided_slice %25 {offsets = [0, 16], sizes = [16, 8], strides = [1, 1]} : vector<16x32xf32> to vector<16x8xf32>
    %82 = arith.truncf %81 : vector<16x8xf32> to vector<16x8xbf16>
    %83 = vector.extract_strided_slice %36 {offsets = [16, 0], sizes = [8, 8], strides = [1, 1]} : vector<32x8xf32> to vector<8x8xf32>
    %84 = arith.truncf %83 : vector<8x8xf32> to vector<8x8xbf16>
    %85 = vector.extract_strided_slice %35 {offsets = [0, 16], sizes = [8, 8], strides = [1, 1]} : vector<8x32xf32> to vector<8x8xf32>
    %86 = arith.truncf %85 : vector<8x8xf32> to vector<8x8xbf16>
    %cst_44 = arith.constant dense<0.000000e+00> : vector<16x8xf32>
    %87 = tpu.matmul %82, %84, %cst_44 {dimension_numbers = #tpu.dot_dimension_numbers<[1], [0], [0], [1], [0, 0, 1, 1], [], []>} : vector<16x8xbf16>, vector<8x8xbf16>, vector<16x8xf32> -> vector<16x8xf32>
    %88 = vector.broadcast %11 : vector<1x8xf32> to vector<16x8xf32>
    %89 = arith.addf %87, %88 : vector<16x8xf32>
    %cst_45 = arith.constant dense<0xFF800000> : vector<16xf32>
    %90 = vector.multi_reduction <maximumf>, %89, %cst_45 [1] : vector<16x8xf32> to vector<16xf32>
    %91 = vector.shape_cast %90 : vector<16xf32> to vector<16x1xf32>
    %92 = vector.broadcast %91 : vector<16x1xf32> to vector<16x8xf32>
    %93 = arith.subf %89, %92 : vector<16x8xf32>
    %94 = math.exp %93 : vector<16x8xf32>
    %cst_46 = arith.constant dense<0.000000e+00> : vector<16xf32>
    %95 = vector.multi_reduction <add>, %94, %cst_46 [1] : vector<16x8xf32> to vector<16xf32>
    %96 = vector.shape_cast %95 : vector<16xf32> to vector<16x1xf32>
    %97 = tpu.reciprocal %96 {approx = true} : vector<16x1xf32> -> vector<16x1xf32>
    %98 = vector.broadcast %97 : vector<16x1xf32> to vector<16x8xf32>
    %99 = arith.mulf %94, %98 : vector<16x8xf32>
    %100 = arith.truncf %99 : vector<16x8xf32> to vector<16x8xbf16>
    %cst_47 = arith.constant dense<0.000000e+00> : vector<16x8xf32>
    %101 = tpu.matmul %100, %86, %cst_47 {dimension_numbers = #tpu.dot_dimension_numbers<[1], [0], [0], [1], [0, 0, 1, 1], [], []>} : vector<16x8xbf16>, vector<8x8xbf16>, vector<16x8xf32> -> vector<16x8xf32>
    %c0_48 = arith.constant 0 : index
    %c16 = arith.constant 16 : index
    %102 = vector.load %arg15[%c0_48, %c16] : memref<16x32xf32, #tpu.memory_space<vmem>>, vector<16x8xf32>
    tpu.vector_store %arg15[%c0_48, %c16], %101 {strides = array<i32>} : memref<16x32xf32, #tpu.memory_space<vmem>>, vector<16x8xf32>,
    %103 = vector.extract_strided_slice %25 {offsets = [0, 24], sizes = [16, 8], strides = [1, 1]} : vector<16x32xf32> to vector<16x8xf32>
    %104 = arith.truncf %103 : vector<16x8xf32> to vector<16x8xbf16>
    %105 = vector.extract_strided_slice %36 {offsets = [24, 0], sizes = [8, 8], strides = [1, 1]} : vector<32x8xf32> to vector<8x8xf32>
    %106 = arith.truncf %105 : vector<8x8xf32> to vector<8x8xbf16>
    %107 = vector.extract_strided_slice %35 {offsets = [0, 24], sizes = [8, 8], strides = [1, 1]} : vector<8x32xf32> to vector<8x8xf32>
    %108 = arith.truncf %107 : vector<8x8xf32> to vector<8x8xbf16>
    %cst_49 = arith.constant dense<0.000000e+00> : vector<16x8xf32>
    %109 = tpu.matmul %104, %106, %cst_49 {dimension_numbers = #tpu.dot_dimension_numbers<[1], [0], [0], [1], [0, 0, 1, 1], [], []>} : vector<16x8xbf16>, vector<8x8xbf16>, vector<16x8xf32> -> vector<16x8xf32>
    %110 = vector.broadcast %11 : vector<1x8xf32> to vector<16x8xf32>
    %111 = arith.addf %109, %110 : vector<16x8xf32>
    %cst_50 = arith.constant dense<0xFF800000> : vector<16xf32>
    %112 = vector.multi_reduction <maximumf>, %111, %cst_50 [1] : vector<16x8xf32> to vector<16xf32>
    %113 = vector.shape_cast %112 : vector<16xf32> to vector<16x1xf32>
    %114 = vector.broadcast %113 : vector<16x1xf32> to vector<16x8xf32>
    %115 = arith.subf %111, %114 : vector<16x8xf32>
    %116 = math.exp %115 : vector<16x8xf32>
    %cst_51 = arith.constant dense<0.000000e+00> : vector<16xf32>
    %117 = vector.multi_reduction <add>, %116, %cst_51 [1] : vector<16x8xf32> to vector<16xf32>
    %118 = vector.shape_cast %117 : vector<16xf32> to vector<16x1xf32>
    %119 = tpu.reciprocal %118 {approx = true} : vector<16x1xf32> -> vector<16x1xf32>
    %120 = vector.broadcast %119 : vector<16x1xf32> to vector<16x8xf32>
    %121 = arith.mulf %116, %120 : vector<16x8xf32>
    %122 = arith.truncf %121 : vector<16x8xf32> to vector<16x8xbf16>
    %cst_52 = arith.constant dense<0.000000e+00> : vector<16x8xf32>
    %123 = tpu.matmul %122, %108, %cst_52 {dimension_numbers = #tpu.dot_dimension_numbers<[1], [0], [0], [1], [0, 0, 1, 1], [], []>} : vector<16x8xbf16>, vector<8x8xbf16>, vector<16x8xf32> -> vector<16x8xf32>
    %c0_53 = arith.constant 0 : index
    %c24 = arith.constant 24 : index
    %124 = vector.load %arg15[%c0_53, %c24] : memref<16x32xf32, #tpu.memory_space<vmem>>, vector<16x8xf32>
    tpu.vector_store %arg15[%c0_53, %c24], %123 {strides = array<i32>} : memref<16x32xf32, #tpu.memory_space<vmem>>, vector<16x8xf32>,
    %c0_54 = arith.constant 0 : index
    %c0_55 = arith.constant 0 : index
    %125 = vector.load %arg15[%c0_54, %c0_55] : memref<16x32xf32, #tpu.memory_space<vmem>>, vector<16x32xf32>
    %126 = arith.truncf %125 : vector<16x32xf32> to vector<16x32xbf16>
    %c0_56 = arith.constant 0 : index
    %c0_57 = arith.constant 0 : index
    %127 = vector.load %arg9[%c0_56, %c0_57] : memref<32x32xbf16, #tpu.memory_space<vmem>>, vector<32x32xbf16>
    %cst_58 = arith.constant dense<0.000000e+00> : vector<16x32xf32>
    %128 = tpu.matmul %126, %127, %cst_58 {dimension_numbers = #tpu.dot_dimension_numbers<[1], [0], [0], [1], [0, 0, 1, 1], [], []>} : vector<16x32xbf16>, vector<32x32xbf16>, vector<16x32xf32> -> vector<16x32xf32>
    %129 = vector.broadcast %15 : vector<1x32xf32> to vector<16x32xf32>
    %130 = arith.addf %128, %129 : vector<16x32xf32>
    %131 = arith.addf %1, %130 : vector<16x32xf32>
    %cst_59 = arith.constant dense<0.000000e+00> : vector<16xf32>
    %132 = vector.multi_reduction <add>, %131, %cst_59 [1] : vector<16x32xf32> to vector<16xf32>
    %133 = vector.shape_cast %132 : vector<16xf32> to vector<16x1xf32>
    %cst_60 = arith.constant 3.200000e+01 : f32
    %134 = vector.broadcast %cst_60 : f32 to vector<16x1xf32>
    %135 = arith.divf %133, %134 : vector<16x1xf32>
    %136 = vector.broadcast %135 : vector<16x1xf32> to vector<16x32xf32>
    %137 = arith.subf %131, %136 : vector<16x32xf32>
    %138 = arith.mulf %137, %137 : vector<16x32xf32>
    %cst_61 = arith.constant dense<0.000000e+00> : vector<16xf32>
    %139 = vector.multi_reduction <add>, %138, %cst_61 [1] : vector<16x32xf32> to vector<16xf32>
    %140 = vector.shape_cast %139 : vector<16xf32> to vector<16x1xf32>
    %cst_62 = arith.constant 3.200000e+01 : f32
    %141 = vector.broadcast %cst_62 : f32 to vector<16x1xf32>
    %142 = arith.divf %140, %141 : vector<16x1xf32>
    %143 = vector.broadcast %135 : vector<16x1xf32> to vector<16x32xf32>
    %144 = arith.subf %131, %143 : vector<16x32xf32>
    %cst_63 = arith.constant 9.99999974E-6 : f32
    %145 = vector.broadcast %cst_63 : f32 to vector<16x1xf32>
    %146 = arith.addf %142, %145 : vector<16x1xf32>
    %147 = math.rsqrt %146 : vector<16x1xf32>
    %148 = vector.broadcast %147 : vector<16x1xf32> to vector<16x32xf32>
    %149 = arith.mulf %144, %148 : vector<16x32xf32>
    %150 = vector.broadcast %16 : vector<1x32xf32> to vector<16x32xf32>
    %151 = arith.mulf %149, %150 : vector<16x32xf32>
    %152 = vector.broadcast %17 : vector<1x32xf32> to vector<16x32xf32>
    %153 = arith.addf %151, %152 : vector<16x32xf32>
    %154 = arith.truncf %153 : vector<16x32xf32> to vector<16x32xbf16>
    %c0_64 = arith.constant 0 : index
    %c0_65 = arith.constant 0 : index
    %155 = vector.load %arg10[%c0_64, %c0_65] : memref<32x1024xbf16, #tpu.memory_space<vmem>>, vector<32x1024xbf16>
    %cst_66 = arith.constant dense<0.000000e+00> : vector<16x1024xf32>
    %156 = tpu.matmul %154, %155, %cst_66 {dimension_numbers = #tpu.dot_dimension_numbers<[1], [0], [0], [1], [0, 0, 1, 1], [], []>} : vector<16x32xbf16>, vector<32x1024xbf16>, vector<16x1024xf32> -> vector<16x1024xf32>
    %c0_67 = arith.constant 0 : index
    %c0_68 = arith.constant 0 : index
    %157 = vector.load %arg12[%c0_67, %c0_68] : memref<1x1024xf32, #tpu.memory_space<vmem>>, vector<1x1024xf32>
    %158 = vector.broadcast %157 : vector<1x1024xf32> to vector<16x1024xf32>
    %159 = arith.addf %156, %158 : vector<16x1024xf32>
    %cst_69 = arith.constant 0.000000e+00 : f32
    %160 = vector.broadcast %cst_69 : f32 to vector<16x1024xf32>
    %161 = arith.maximumf %159, %160 : vector<16x1024xf32>
    %162 = arith.truncf %161 : vector<16x1024xf32> to vector<16x1024xbf16>
    %c0_70 = arith.constant 0 : index
    %c0_71 = arith.constant 0 : index
    %163 = vector.load %arg11[%c0_70, %c0_71] : memref<1024x32xbf16, #tpu.memory_space<vmem>>, vector<1024x32xbf16>
    %cst_72 = arith.constant dense<0.000000e+00> : vector<16x32xf32>
    %164 = tpu.matmul %162, %163, %cst_72 {dimension_numbers = #tpu.dot_dimension_numbers<[1], [0], [0], [1], [0, 0, 1, 1], [], []>} : vector<16x1024xbf16>, vector<1024x32xbf16>, vector<16x32xf32> -> vector<16x32xf32>
    %165 = vector.broadcast %18 : vector<1x32xf32> to vector<16x32xf32>
    %166 = arith.addf %164, %165 : vector<16x32xf32>
    %167 = arith.addf %153, %166 : vector<16x32xf32>
    %cst_73 = arith.constant dense<0.000000e+00> : vector<16xf32>
    %168 = vector.multi_reduction <add>, %167, %cst_73 [1] : vector<16x32xf32> to vector<16xf32>
    %169 = vector.shape_cast %168 : vector<16xf32> to vector<16x1xf32>
    %cst_74 = arith.constant 3.200000e+01 : f32
    %170 = vector.broadcast %cst_74 : f32 to vector<16x1xf32>
    %171 = arith.divf %169, %170 : vector<16x1xf32>
    %172 = vector.broadcast %171 : vector<16x1xf32> to vector<16x32xf32>
    %173 = arith.subf %167, %172 : vector<16x32xf32>
    %174 = arith.mulf %173, %173 : vector<16x32xf32>
    %cst_75 = arith.constant dense<0.000000e+00> : vector<16xf32>
    %175 = vector.multi_reduction <add>, %174, %cst_75 [1] : vector<16x32xf32> to vector<16xf32>
    %176 = vector.shape_cast %175 : vector<16xf32> to vector<16x1xf32>
    %cst_76 = arith.constant 3.200000e+01 : f32
    %177 = vector.broadcast %cst_76 : f32 to vector<16x1xf32>
    %178 = arith.divf %176, %177 : vector<16x1xf32>
    %179 = vector.broadcast %171 : vector<16x1xf32> to vector<16x32xf32>
    %180 = arith.subf %167, %179 : vector<16x32xf32>
    %cst_77 = arith.constant 9.99999974E-6 : f32
    %181 = vector.broadcast %cst_77 : f32 to vector<16x1xf32>
    %182 = arith.addf %178, %181 : vector<16x1xf32>
    %183 = math.rsqrt %182 : vector<16x1xf32>
    %184 = vector.broadcast %183 : vector<16x1xf32> to vector<16x32xf32>
    %185 = arith.mulf %180, %184 : vector<16x32xf32>
    %186 = vector.broadcast %19 : vector<1x32xf32> to vector<16x32xf32>
    %187 = arith.mulf %185, %186 : vector<16x32xf32>
    %188 = vector.broadcast %20 : vector<1x32xf32> to vector<16x32xf32>
    %189 = arith.addf %187, %188 : vector<16x32xf32>
    %c0_78 = arith.constant 0 : index
    %c0_79 = arith.constant 0 : index
    %c0_80 = arith.constant 0 : index
    %190 = vector.load %arg14[%c0_78, %c0_79, %c0_80] : memref<1x16x32xf32, #tpu.memory_space<vmem>>, vector<1x16x32xf32>
    %191 = vector.shape_cast %190 : vector<1x16x32xf32> to vector<16x32xf32>
    %192 = vector.shape_cast %189 : vector<16x32xf32> to vector<1x16x32xf32>
    tpu.vector_store %arg14[%c0_78, %c0_79, %c0_80], %192 {strides = array<i32>} : memref<1x16x32xf32, #tpu.memory_space<vmem>>, vector<1x16x32xf32>,
    return
  }
  func.func @transform_0(%arg0: i32) -> (i32, i32, i32) {
    %c0_i32 = arith.constant 0 : i32
    %c0_i32_0 = arith.constant 0 : i32
    %c0_i32_1 = arith.constant 0 : i32
    return %arg0, %c0_i32, %c0_i32_0 : i32, i32, i32
  }
  func.func @transform_1(%arg0: i32) -> (i32, i32, i32) {
    %c0_i32 = arith.constant 0 : i32
    %c0_i32_0 = arith.constant 0 : i32
    %c0_i32_1 = arith.constant 0 : i32
    return %arg0, %c0_i32, %c0_i32_0 : i32, i32, i32
  }
  func.func @transform_2(%arg0: i32) -> (i32, i32, i32) {
    %c0_i32 = arith.constant 0 : i32
    %c0_i32_0 = arith.constant 0 : i32
    %c0_i32_1 = arith.constant 0 : i32
    return %arg0, %c0_i32, %c0_i32_0 : i32, i32, i32
  }
  func.func @transform_3(%arg0: i32) -> (i32, i32, i32) {
    %c0_i32 = arith.constant 0 : i32
    %c0_i32_0 = arith.constant 0 : i32
    %c0_i32_1 = arith.constant 0 : i32
    return %arg0, %c0_i32, %c0_i32_0 : i32, i32, i32
  }
  func.func @transform_4(%arg0: i32) -> (i32, i32, i32) {
    %c0_i32 = arith.constant 0 : i32
    %c0_i32_0 = arith.constant 0 : i32
    %c0_i32_1 = arith.constant 0 : i32
    return %arg0, %c0_i32, %c0_i32_0 : i32, i32, i32
  }
  func.func @transform_5(%arg0: i32) -> (i32, i32) {
    %c0_i32 = arith.constant 0 : i32
    %c0_i32_0 = arith.constant 0 : i32
    %c0_i32_1 = arith.constant 0 : i32
    return %c0_i32, %c0_i32_0 : i32, i32
  }
  func.func @transform_6(%arg0: i32) -> (i32, i32) {
    %c0_i32 = arith.constant 0 : i32
    %c0_i32_0 = arith.constant 0 : i32
    %c0_i32_1 = arith.constant 0 : i32
    return %c0_i32, %c0_i32_0 : i32, i32
  }
  func.func @transform_7(%arg0: i32) -> (i32, i32) {
    %c0_i32 = arith.constant 0 : i32
    %c0_i32_0 = arith.constant 0 : i32
    %c0_i32_1 = arith.constant 0 : i32
    return %c0_i32, %c0_i32_0 : i32, i32
  }
  func.func @transform_8(%arg0: i32) -> (i32, i32) {
    %c0_i32 = arith.constant 0 : i32
    %c0_i32_0 = arith.constant 0 : i32
    %c0_i32_1 = arith.constant 0 : i32
    return %c0_i32, %c0_i32_0 : i32, i32
  }
  func.func @transform_9(%arg0: i32) -> (i32, i32) {
    %c0_i32 = arith.constant 0 : i32
    %c0_i32_0 = arith.constant 0 : i32
    %c0_i32_1 = arith.constant 0 : i32
    return %c0_i32, %c0_i32_0 : i32, i32
  }
  func.func @transform_10(%arg0: i32) -> (i32, i32) {
    %c0_i32 = arith.constant 0 : i32
    %c0_i32_0 = arith.constant 0 : i32
    %c0_i32_1 = arith.constant 0 : i32
    return %c0_i32, %c0_i32_0 : i32, i32
  }
  func.func @transform_11(%arg0: i32) -> (i32, i32) {
    %c0_i32 = arith.constant 0 : i32
    %c0_i32_0 = arith.constant 0 : i32
    %c0_i32_1 = arith.constant 0 : i32
    return %c0_i32, %c0_i32_0 : i32, i32
  }
  func.func @transform_12(%arg0: i32) -> (i32, i32) {
    %c0_i32 = arith.constant 0 : i32
    %c0_i32_0 = arith.constant 0 : i32
    %c0_i32_1 = arith.constant 0 : i32
    return %c0_i32, %c0_i32_0 : i32, i32
  }
  func.func @transform_13(%arg0: i32) -> (i32, i32, i32) {
    %c0_i32 = arith.constant 0 : i32
    %c0_i32_0 = arith.constant 0 : i32
    %c0_i32_1 = arith.constant 0 : i32
    return %arg0, %c0_i32, %c0_i32_0 : i32, i32, i32
  }
}

module attributes {stable_mosaic.version = 11 : i64} {
  func.func @_cross_attn_ffn_ln_kernel(%arg0: i32, %arg1: memref<1x8x32xf32, #tpu.memory_space<vmem>>, %arg2: memref<1x8x32xf32, #tpu.memory_space<vmem>>, %arg3: memref<1x16x32xf32, #tpu.memory_space<vmem>>, %arg4: memref<1x16x32xf32, #tpu.memory_space<vmem>>, %arg5: memref<1x1x16xf32, #tpu.memory_space<vmem>>, %arg6: memref<32x32xbf16, #tpu.memory_space<vmem>>, %arg7: memref<32x32xbf16, #tpu.memory_space<vmem>>, %arg8: memref<32x32xbf16, #tpu.memory_space<vmem>>, %arg9: memref<32x32xbf16, #tpu.memory_space<vmem>>, %arg10: memref<32x1024xbf16, #tpu.memory_space<vmem>>, %arg11: memref<1024x32xbf16, #tpu.memory_space<vmem>>, %arg12: memref<1x1024xf32, #tpu.memory_space<vmem>>, %arg13: memref<9x32xf32, #tpu.memory_space<vmem>>, %arg14: memref<1x8x32xf32, #tpu.memory_space<vmem>>, %arg15: memref<8x32xf32, #tpu.memory_space<vmem>>) attributes {dimension_semantics = [#tpu.dimension_semantics<parallel>], iteration_bounds = array<i64: 2>, scalar_prefetch = 0 : i64, scratch_operands = 1 : i64, tpu.core_type = #tpu.core_type<tc>, window_params = [{transform_indices = @transform_0, window_bounds = array<i64: 1, 8, 32>}, {transform_indices = @transform_1, window_bounds = array<i64: 1, 8, 32>}, {transform_indices = @transform_2, window_bounds = array<i64: 1, 16, 32>}, {transform_indices = @transform_3, window_bounds = array<i64: 1, 16, 32>}, {transform_indices = @transform_4, window_bounds = array<i64: 1, 1, 16>}, {pipeline_mode = #tpu.pipeline_mode<synchronous>, transform_indices = @transform_5, window_bounds = array<i64: 32, 32>}, {pipeline_mode = #tpu.pipeline_mode<synchronous>, transform_indices = @transform_6, window_bounds = array<i64: 32, 32>}, {pipeline_mode = #tpu.pipeline_mode<synchronous>, transform_indices = @transform_7, window_bounds = array<i64: 32, 32>}, {pipeline_mode = #tpu.pipeline_mode<synchronous>, transform_indices = @transform_8, window_bounds = array<i64: 32, 32>}, {pipeline_mode = #tpu.pipeline_mode<synchronous>, transform_indices = @transform_9, window_bounds = array<i64: 32, 1024>}, {pipeline_mode = #tpu.pipeline_mode<synchronous>, transform_indices = @transform_10, window_bounds = array<i64: 1024, 32>}, {pipeline_mode = #tpu.pipeline_mode<synchronous>, transform_indices = @transform_11, window_bounds = array<i64: 1, 1024>}, {pipeline_mode = #tpu.pipeline_mode<synchronous>, transform_indices = @transform_12, window_bounds = array<i64: 9, 32>}, {transform_indices = @transform_13, window_bounds = array<i64: 1, 8, 32>}]} {
    %c0 = arith.constant 0 : index
    %c0_0 = arith.constant 0 : index
    %c0_1 = arith.constant 0 : index
    %0 = vector.load %arg1[%c0, %c0_0, %c0_1] : memref<1x8x32xf32, #tpu.memory_space<vmem>>, vector<1x8x32xf32>
    %1 = vector.shape_cast %0 : vector<1x8x32xf32> to vector<8x32xf32>
    %c0_2 = arith.constant 0 : index
    %c0_3 = arith.constant 0 : index
    %c0_4 = arith.constant 0 : index
    %2 = vector.load %arg3[%c0_2, %c0_3, %c0_4] : memref<1x16x32xf32, #tpu.memory_space<vmem>>, vector<1x16x32xf32>
    %3 = vector.shape_cast %2 : vector<1x16x32xf32> to vector<16x32xf32>
    %c0_5 = arith.constant 0 : index
    %c0_6 = arith.constant 0 : index
    %c0_7 = arith.constant 0 : index
    %4 = vector.load %arg2[%c0_5, %c0_6, %c0_7] : memref<1x8x32xf32, #tpu.memory_space<vmem>>, vector<1x8x32xf32>
    %5 = vector.shape_cast %4 : vector<1x8x32xf32> to vector<8x32xf32>
    %6 = arith.addf %1, %5 : vector<8x32xf32>
    %c0_8 = arith.constant 0 : index
    %c0_9 = arith.constant 0 : index
    %c0_10 = arith.constant 0 : index
    %7 = vector.load %arg4[%c0_8, %c0_9, %c0_10] : memref<1x16x32xf32, #tpu.memory_space<vmem>>, vector<1x16x32xf32>
    %8 = vector.shape_cast %7 : vector<1x16x32xf32> to vector<16x32xf32>
    %9 = arith.addf %3, %8 : vector<16x32xf32>
    %c0_11 = arith.constant 0 : index
    %c0_12 = arith.constant 0 : index
    %c0_13 = arith.constant 0 : index
    %10 = vector.load %arg5[%c0_11, %c0_12, %c0_13] : memref<1x1x16xf32, #tpu.memory_space<vmem>>, vector<1x1x16xf32>
    %11 = vector.shape_cast %10 : vector<1x1x16xf32> to vector<1x16xf32>
    %c0_14 = arith.constant 0 : index
    %c0_15 = arith.constant 0 : index
    %12 = vector.load %arg13[%c0_14, %c0_15] : memref<9x32xf32, #tpu.memory_space<vmem>>, vector<1x32xf32>
    %c1 = arith.constant 1 : index
    %c0_16 = arith.constant 0 : index
    %13 = vector.load %arg13[%c1, %c0_16] : memref<9x32xf32, #tpu.memory_space<vmem>>, vector<1x32xf32>
    %c2 = arith.constant 2 : index
    %c0_17 = arith.constant 0 : index
    %14 = vector.load %arg13[%c2, %c0_17] : memref<9x32xf32, #tpu.memory_space<vmem>>, vector<1x32xf32>
    %c3 = arith.constant 3 : index
    %c0_18 = arith.constant 0 : index
    %15 = vector.load %arg13[%c3, %c0_18] : memref<9x32xf32, #tpu.memory_space<vmem>>, vector<1x32xf32>
    %c4 = arith.constant 4 : index
    %c0_19 = arith.constant 0 : index
    %16 = vector.load %arg13[%c4, %c0_19] : memref<9x32xf32, #tpu.memory_space<vmem>>, vector<1x32xf32>
    %c5 = arith.constant 5 : index
    %c0_20 = arith.constant 0 : index
    %17 = vector.load %arg13[%c5, %c0_20] : memref<9x32xf32, #tpu.memory_space<vmem>>, vector<1x32xf32>
    %c6 = arith.constant 6 : index
    %c0_21 = arith.constant 0 : index
    %18 = vector.load %arg13[%c6, %c0_21] : memref<9x32xf32, #tpu.memory_space<vmem>>, vector<1x32xf32>
    %c7 = arith.constant 7 : index
    %c0_22 = arith.constant 0 : index
    %19 = vector.load %arg13[%c7, %c0_22] : memref<9x32xf32, #tpu.memory_space<vmem>>, vector<1x32xf32>
    %c8 = arith.constant 8 : index
    %c0_23 = arith.constant 0 : index
    %20 = vector.load %arg13[%c8, %c0_23] : memref<9x32xf32, #tpu.memory_space<vmem>>, vector<1x32xf32>
    %21 = arith.truncf %6 : vector<8x32xf32> to vector<8x32xbf16>
    %c0_24 = arith.constant 0 : index
    %c0_25 = arith.constant 0 : index
    %22 = vector.load %arg6[%c0_24, %c0_25] : memref<32x32xbf16, #tpu.memory_space<vmem>>, vector<32x32xbf16>
    %cst = arith.constant dense<0.000000e+00> : vector<8x32xf32>
    %23 = tpu.matmul %21, %22, %cst {dimension_numbers = #tpu.dot_dimension_numbers<[1], [0], [0], [1], [0, 0, 1, 1], [], []>} : vector<8x32xbf16>, vector<32x32xbf16>, vector<8x32xf32> -> vector<8x32xf32>
    %24 = vector.broadcast %12 : vector<1x32xf32> to vector<8x32xf32>
    %25 = arith.addf %23, %24 : vector<8x32xf32>
    %26 = arith.truncf %9 : vector<16x32xf32> to vector<16x32xbf16>
    %c0_26 = arith.constant 0 : index
    %c0_27 = arith.constant 0 : index
    %27 = vector.load %arg7[%c0_26, %c0_27] : memref<32x32xbf16, #tpu.memory_space<vmem>>, vector<32x32xbf16>
    %cst_28 = arith.constant dense<0.000000e+00> : vector<16x32xf32>
    %28 = tpu.matmul %26, %27, %cst_28 {dimension_numbers = #tpu.dot_dimension_numbers<[1], [0], [0], [1], [0, 0, 1, 1], [], []>} : vector<16x32xbf16>, vector<32x32xbf16>, vector<16x32xf32> -> vector<16x32xf32>
    %29 = vector.broadcast %13 : vector<1x32xf32> to vector<16x32xf32>
    %30 = arith.addf %28, %29 : vector<16x32xf32>
    %31 = arith.truncf %3 : vector<16x32xf32> to vector<16x32xbf16>
    %c0_29 = arith.constant 0 : index
    %c0_30 = arith.constant 0 : index
    %32 = vector.load %arg8[%c0_29, %c0_30] : memref<32x32xbf16, #tpu.memory_space<vmem>>, vector<32x32xbf16>
    %cst_31 = arith.constant dense<0.000000e+00> : vector<16x32xf32>
    %33 = tpu.matmul %31, %32, %cst_31 {dimension_numbers = #tpu.dot_dimension_numbers<[1], [0], [0], [1], [0, 0, 1, 1], [], []>} : vector<16x32xbf16>, vector<32x32xbf16>, vector<16x32xf32> -> vector<16x32xf32>
    %34 = vector.broadcast %14 : vector<1x32xf32> to vector<16x32xf32>
    %35 = arith.addf %33, %34 : vector<16x32xf32>
    %36 = tpu.transpose %30, [1, 0] : vector<16x32xf32> -> vector<32x16xf32>
    %37 = vector.extract_strided_slice %25 {offsets = [0, 0], sizes = [8, 8], strides = [1, 1]} : vector<8x32xf32> to vector<8x8xf32>
    %38 = arith.truncf %37 : vector<8x8xf32> to vector<8x8xbf16>
    %39 = vector.extract_strided_slice %36 {offsets = [0, 0], sizes = [8, 16], strides = [1, 1]} : vector<32x16xf32> to vector<8x16xf32>
    %40 = arith.truncf %39 : vector<8x16xf32> to vector<8x16xbf16>
    %41 = vector.extract_strided_slice %35 {offsets = [0, 0], sizes = [16, 8], strides = [1, 1]} : vector<16x32xf32> to vector<16x8xf32>
    %42 = arith.truncf %41 : vector<16x8xf32> to vector<16x8xbf16>
    %cst_32 = arith.constant dense<0.000000e+00> : vector<8x16xf32>
    %43 = tpu.matmul %38, %40, %cst_32 {dimension_numbers = #tpu.dot_dimension_numbers<[1], [0], [0], [1], [0, 0, 1, 1], [], []>} : vector<8x8xbf16>, vector<8x16xbf16>, vector<8x16xf32> -> vector<8x16xf32>
    %44 = vector.broadcast %11 : vector<1x16xf32> to vector<8x16xf32>
    %45 = arith.addf %43, %44 : vector<8x16xf32>
    %cst_33 = arith.constant dense<0xFF800000> : vector<8xf32>
    %46 = vector.multi_reduction <maximumf>, %45, %cst_33 [1] : vector<8x16xf32> to vector<8xf32>
    %47 = vector.shape_cast %46 : vector<8xf32> to vector<8x1xf32>
    %48 = vector.broadcast %47 : vector<8x1xf32> to vector<8x16xf32>
    %49 = arith.subf %45, %48 : vector<8x16xf32>
    %50 = math.exp %49 : vector<8x16xf32>
    %cst_34 = arith.constant dense<0.000000e+00> : vector<8xf32>
    %51 = vector.multi_reduction <add>, %50, %cst_34 [1] : vector<8x16xf32> to vector<8xf32>
    %52 = vector.shape_cast %51 : vector<8xf32> to vector<8x1xf32>
    %53 = tpu.reciprocal %52 {approx = true} : vector<8x1xf32> -> vector<8x1xf32>
    %54 = vector.broadcast %53 : vector<8x1xf32> to vector<8x16xf32>
    %55 = arith.mulf %50, %54 : vector<8x16xf32>
    %56 = arith.truncf %55 : vector<8x16xf32> to vector<8x16xbf16>
    %cst_35 = arith.constant dense<0.000000e+00> : vector<8x8xf32>
    %57 = tpu.matmul %56, %42, %cst_35 {dimension_numbers = #tpu.dot_dimension_numbers<[1], [0], [0], [1], [0, 0, 1, 1], [], []>} : vector<8x16xbf16>, vector<16x8xbf16>, vector<8x8xf32> -> vector<8x8xf32>
    %c0_36 = arith.constant 0 : index
    %c0_37 = arith.constant 0 : index
    %58 = vector.load %arg15[%c0_36, %c0_37] : memref<8x32xf32, #tpu.memory_space<vmem>>, vector<8x8xf32>
    tpu.vector_store %arg15[%c0_36, %c0_37], %57 {strides = array<i32>} : memref<8x32xf32, #tpu.memory_space<vmem>>, vector<8x8xf32>,
    %59 = vector.extract_strided_slice %25 {offsets = [0, 8], sizes = [8, 8], strides = [1, 1]} : vector<8x32xf32> to vector<8x8xf32>
    %60 = arith.truncf %59 : vector<8x8xf32> to vector<8x8xbf16>
    %61 = vector.extract_strided_slice %36 {offsets = [8, 0], sizes = [8, 16], strides = [1, 1]} : vector<32x16xf32> to vector<8x16xf32>
    %62 = arith.truncf %61 : vector<8x16xf32> to vector<8x16xbf16>
    %63 = vector.extract_strided_slice %35 {offsets = [0, 8], sizes = [16, 8], strides = [1, 1]} : vector<16x32xf32> to vector<16x8xf32>
    %64 = arith.truncf %63 : vector<16x8xf32> to vector<16x8xbf16>
    %cst_38 = arith.constant dense<0.000000e+00> : vector<8x16xf32>
    %65 = tpu.matmul %60, %62, %cst_38 {dimension_numbers = #tpu.dot_dimension_numbers<[1], [0], [0], [1], [0, 0, 1, 1], [], []>} : vector<8x8xbf16>, vector<8x16xbf16>, vector<8x16xf32> -> vector<8x16xf32>
    %66 = vector.broadcast %11 : vector<1x16xf32> to vector<8x16xf32>
    %67 = arith.addf %65, %66 : vector<8x16xf32>
    %cst_39 = arith.constant dense<0xFF800000> : vector<8xf32>
    %68 = vector.multi_reduction <maximumf>, %67, %cst_39 [1] : vector<8x16xf32> to vector<8xf32>
    %69 = vector.shape_cast %68 : vector<8xf32> to vector<8x1xf32>
    %70 = vector.broadcast %69 : vector<8x1xf32> to vector<8x16xf32>
    %71 = arith.subf %67, %70 : vector<8x16xf32>
    %72 = math.exp %71 : vector<8x16xf32>
    %cst_40 = arith.constant dense<0.000000e+00> : vector<8xf32>
    %73 = vector.multi_reduction <add>, %72, %cst_40 [1] : vector<8x16xf32> to vector<8xf32>
    %74 = vector.shape_cast %73 : vector<8xf32> to vector<8x1xf32>
    %75 = tpu.reciprocal %74 {approx = true} : vector<8x1xf32> -> vector<8x1xf32>
    %76 = vector.broadcast %75 : vector<8x1xf32> to vector<8x16xf32>
    %77 = arith.mulf %72, %76 : vector<8x16xf32>
    %78 = arith.truncf %77 : vector<8x16xf32> to vector<8x16xbf16>
    %cst_41 = arith.constant dense<0.000000e+00> : vector<8x8xf32>
    %79 = tpu.matmul %78, %64, %cst_41 {dimension_numbers = #tpu.dot_dimension_numbers<[1], [0], [0], [1], [0, 0, 1, 1], [], []>} : vector<8x16xbf16>, vector<16x8xbf16>, vector<8x8xf32> -> vector<8x8xf32>
    %c0_42 = arith.constant 0 : index
    %c8_43 = arith.constant 8 : index
    %80 = vector.load %arg15[%c0_42, %c8_43] : memref<8x32xf32, #tpu.memory_space<vmem>>, vector<8x8xf32>
    tpu.vector_store %arg15[%c0_42, %c8_43], %79 {strides = array<i32>} : memref<8x32xf32, #tpu.memory_space<vmem>>, vector<8x8xf32>,
    %81 = vector.extract_strided_slice %25 {offsets = [0, 16], sizes = [8, 8], strides = [1, 1]} : vector<8x32xf32> to vector<8x8xf32>
    %82 = arith.truncf %81 : vector<8x8xf32> to vector<8x8xbf16>
    %83 = vector.extract_strided_slice %36 {offsets = [16, 0], sizes = [8, 16], strides = [1, 1]} : vector<32x16xf32> to vector<8x16xf32>
    %84 = arith.truncf %83 : vector<8x16xf32> to vector<8x16xbf16>
    %85 = vector.extract_strided_slice %35 {offsets = [0, 16], sizes = [16, 8], strides = [1, 1]} : vector<16x32xf32> to vector<16x8xf32>
    %86 = arith.truncf %85 : vector<16x8xf32> to vector<16x8xbf16>
    %cst_44 = arith.constant dense<0.000000e+00> : vector<8x16xf32>
    %87 = tpu.matmul %82, %84, %cst_44 {dimension_numbers = #tpu.dot_dimension_numbers<[1], [0], [0], [1], [0, 0, 1, 1], [], []>} : vector<8x8xbf16>, vector<8x16xbf16>, vector<8x16xf32> -> vector<8x16xf32>
    %88 = vector.broadcast %11 : vector<1x16xf32> to vector<8x16xf32>
    %89 = arith.addf %87, %88 : vector<8x16xf32>
    %cst_45 = arith.constant dense<0xFF800000> : vector<8xf32>
    %90 = vector.multi_reduction <maximumf>, %89, %cst_45 [1] : vector<8x16xf32> to vector<8xf32>
    %91 = vector.shape_cast %90 : vector<8xf32> to vector<8x1xf32>
    %92 = vector.broadcast %91 : vector<8x1xf32> to vector<8x16xf32>
    %93 = arith.subf %89, %92 : vector<8x16xf32>
    %94 = math.exp %93 : vector<8x16xf32>
    %cst_46 = arith.constant dense<0.000000e+00> : vector<8xf32>
    %95 = vector.multi_reduction <add>, %94, %cst_46 [1] : vector<8x16xf32> to vector<8xf32>
    %96 = vector.shape_cast %95 : vector<8xf32> to vector<8x1xf32>
    %97 = tpu.reciprocal %96 {approx = true} : vector<8x1xf32> -> vector<8x1xf32>
    %98 = vector.broadcast %97 : vector<8x1xf32> to vector<8x16xf32>
    %99 = arith.mulf %94, %98 : vector<8x16xf32>
    %100 = arith.truncf %99 : vector<8x16xf32> to vector<8x16xbf16>
    %cst_47 = arith.constant dense<0.000000e+00> : vector<8x8xf32>
    %101 = tpu.matmul %100, %86, %cst_47 {dimension_numbers = #tpu.dot_dimension_numbers<[1], [0], [0], [1], [0, 0, 1, 1], [], []>} : vector<8x16xbf16>, vector<16x8xbf16>, vector<8x8xf32> -> vector<8x8xf32>
    %c0_48 = arith.constant 0 : index
    %c16 = arith.constant 16 : index
    %102 = vector.load %arg15[%c0_48, %c16] : memref<8x32xf32, #tpu.memory_space<vmem>>, vector<8x8xf32>
    tpu.vector_store %arg15[%c0_48, %c16], %101 {strides = array<i32>} : memref<8x32xf32, #tpu.memory_space<vmem>>, vector<8x8xf32>,
    %103 = vector.extract_strided_slice %25 {offsets = [0, 24], sizes = [8, 8], strides = [1, 1]} : vector<8x32xf32> to vector<8x8xf32>
    %104 = arith.truncf %103 : vector<8x8xf32> to vector<8x8xbf16>
    %105 = vector.extract_strided_slice %36 {offsets = [24, 0], sizes = [8, 16], strides = [1, 1]} : vector<32x16xf32> to vector<8x16xf32>
    %106 = arith.truncf %105 : vector<8x16xf32> to vector<8x16xbf16>
    %107 = vector.extract_strided_slice %35 {offsets = [0, 24], sizes = [16, 8], strides = [1, 1]} : vector<16x32xf32> to vector<16x8xf32>
    %108 = arith.truncf %107 : vector<16x8xf32> to vector<16x8xbf16>
    %cst_49 = arith.constant dense<0.000000e+00> : vector<8x16xf32>
    %109 = tpu.matmul %104, %106, %cst_49 {dimension_numbers = #tpu.dot_dimension_numbers<[1], [0], [0], [1], [0, 0, 1, 1], [], []>} : vector<8x8xbf16>, vector<8x16xbf16>, vector<8x16xf32> -> vector<8x16xf32>
    %110 = vector.broadcast %11 : vector<1x16xf32> to vector<8x16xf32>
    %111 = arith.addf %109, %110 : vector<8x16xf32>
    %cst_50 = arith.constant dense<0xFF800000> : vector<8xf32>
    %112 = vector.multi_reduction <maximumf>, %111, %cst_50 [1] : vector<8x16xf32> to vector<8xf32>
    %113 = vector.shape_cast %112 : vector<8xf32> to vector<8x1xf32>
    %114 = vector.broadcast %113 : vector<8x1xf32> to vector<8x16xf32>
    %115 = arith.subf %111, %114 : vector<8x16xf32>
    %116 = math.exp %115 : vector<8x16xf32>
    %cst_51 = arith.constant dense<0.000000e+00> : vector<8xf32>
    %117 = vector.multi_reduction <add>, %116, %cst_51 [1] : vector<8x16xf32> to vector<8xf32>
    %118 = vector.shape_cast %117 : vector<8xf32> to vector<8x1xf32>
    %119 = tpu.reciprocal %118 {approx = true} : vector<8x1xf32> -> vector<8x1xf32>
    %120 = vector.broadcast %119 : vector<8x1xf32> to vector<8x16xf32>
    %121 = arith.mulf %116, %120 : vector<8x16xf32>
    %122 = arith.truncf %121 : vector<8x16xf32> to vector<8x16xbf16>
    %cst_52 = arith.constant dense<0.000000e+00> : vector<8x8xf32>
    %123 = tpu.matmul %122, %108, %cst_52 {dimension_numbers = #tpu.dot_dimension_numbers<[1], [0], [0], [1], [0, 0, 1, 1], [], []>} : vector<8x16xbf16>, vector<16x8xbf16>, vector<8x8xf32> -> vector<8x8xf32>
    %c0_53 = arith.constant 0 : index
    %c24 = arith.constant 24 : index
    %124 = vector.load %arg15[%c0_53, %c24] : memref<8x32xf32, #tpu.memory_space<vmem>>, vector<8x8xf32>
    tpu.vector_store %arg15[%c0_53, %c24], %123 {strides = array<i32>} : memref<8x32xf32, #tpu.memory_space<vmem>>, vector<8x8xf32>,
    %c0_54 = arith.constant 0 : index
    %c0_55 = arith.constant 0 : index
    %125 = vector.load %arg15[%c0_54, %c0_55] : memref<8x32xf32, #tpu.memory_space<vmem>>, vector<8x32xf32>
    %126 = arith.truncf %125 : vector<8x32xf32> to vector<8x32xbf16>
    %c0_56 = arith.constant 0 : index
    %c0_57 = arith.constant 0 : index
    %127 = vector.load %arg9[%c0_56, %c0_57] : memref<32x32xbf16, #tpu.memory_space<vmem>>, vector<32x32xbf16>
    %cst_58 = arith.constant dense<0.000000e+00> : vector<8x32xf32>
    %128 = tpu.matmul %126, %127, %cst_58 {dimension_numbers = #tpu.dot_dimension_numbers<[1], [0], [0], [1], [0, 0, 1, 1], [], []>} : vector<8x32xbf16>, vector<32x32xbf16>, vector<8x32xf32> -> vector<8x32xf32>
    %129 = vector.broadcast %15 : vector<1x32xf32> to vector<8x32xf32>
    %130 = arith.addf %128, %129 : vector<8x32xf32>
    %131 = arith.addf %1, %130 : vector<8x32xf32>
    %cst_59 = arith.constant dense<0.000000e+00> : vector<8xf32>
    %132 = vector.multi_reduction <add>, %131, %cst_59 [1] : vector<8x32xf32> to vector<8xf32>
    %133 = vector.shape_cast %132 : vector<8xf32> to vector<8x1xf32>
    %cst_60 = arith.constant 3.200000e+01 : f32
    %134 = vector.broadcast %cst_60 : f32 to vector<8x1xf32>
    %135 = arith.divf %133, %134 : vector<8x1xf32>
    %136 = vector.broadcast %135 : vector<8x1xf32> to vector<8x32xf32>
    %137 = arith.subf %131, %136 : vector<8x32xf32>
    %138 = arith.mulf %137, %137 : vector<8x32xf32>
    %cst_61 = arith.constant dense<0.000000e+00> : vector<8xf32>
    %139 = vector.multi_reduction <add>, %138, %cst_61 [1] : vector<8x32xf32> to vector<8xf32>
    %140 = vector.shape_cast %139 : vector<8xf32> to vector<8x1xf32>
    %cst_62 = arith.constant 3.200000e+01 : f32
    %141 = vector.broadcast %cst_62 : f32 to vector<8x1xf32>
    %142 = arith.divf %140, %141 : vector<8x1xf32>
    %143 = vector.broadcast %135 : vector<8x1xf32> to vector<8x32xf32>
    %144 = arith.subf %131, %143 : vector<8x32xf32>
    %cst_63 = arith.constant 9.99999974E-6 : f32
    %145 = vector.broadcast %cst_63 : f32 to vector<8x1xf32>
    %146 = arith.addf %142, %145 : vector<8x1xf32>
    %147 = math.rsqrt %146 : vector<8x1xf32>
    %148 = vector.broadcast %147 : vector<8x1xf32> to vector<8x32xf32>
    %149 = arith.mulf %144, %148 : vector<8x32xf32>
    %150 = vector.broadcast %16 : vector<1x32xf32> to vector<8x32xf32>
    %151 = arith.mulf %149, %150 : vector<8x32xf32>
    %152 = vector.broadcast %17 : vector<1x32xf32> to vector<8x32xf32>
    %153 = arith.addf %151, %152 : vector<8x32xf32>
    %154 = arith.truncf %153 : vector<8x32xf32> to vector<8x32xbf16>
    %c0_64 = arith.constant 0 : index
    %c0_65 = arith.constant 0 : index
    %155 = vector.load %arg10[%c0_64, %c0_65] : memref<32x1024xbf16, #tpu.memory_space<vmem>>, vector<32x1024xbf16>
    %cst_66 = arith.constant dense<0.000000e+00> : vector<8x1024xf32>
    %156 = tpu.matmul %154, %155, %cst_66 {dimension_numbers = #tpu.dot_dimension_numbers<[1], [0], [0], [1], [0, 0, 1, 1], [], []>} : vector<8x32xbf16>, vector<32x1024xbf16>, vector<8x1024xf32> -> vector<8x1024xf32>
    %c0_67 = arith.constant 0 : index
    %c0_68 = arith.constant 0 : index
    %157 = vector.load %arg12[%c0_67, %c0_68] : memref<1x1024xf32, #tpu.memory_space<vmem>>, vector<1x1024xf32>
    %158 = vector.broadcast %157 : vector<1x1024xf32> to vector<8x1024xf32>
    %159 = arith.addf %156, %158 : vector<8x1024xf32>
    %cst_69 = arith.constant 0.000000e+00 : f32
    %160 = vector.broadcast %cst_69 : f32 to vector<8x1024xf32>
    %161 = arith.maximumf %159, %160 : vector<8x1024xf32>
    %162 = arith.truncf %161 : vector<8x1024xf32> to vector<8x1024xbf16>
    %c0_70 = arith.constant 0 : index
    %c0_71 = arith.constant 0 : index
    %163 = vector.load %arg11[%c0_70, %c0_71] : memref<1024x32xbf16, #tpu.memory_space<vmem>>, vector<1024x32xbf16>
    %cst_72 = arith.constant dense<0.000000e+00> : vector<8x32xf32>
    %164 = tpu.matmul %162, %163, %cst_72 {dimension_numbers = #tpu.dot_dimension_numbers<[1], [0], [0], [1], [0, 0, 1, 1], [], []>} : vector<8x1024xbf16>, vector<1024x32xbf16>, vector<8x32xf32> -> vector<8x32xf32>
    %165 = vector.broadcast %18 : vector<1x32xf32> to vector<8x32xf32>
    %166 = arith.addf %164, %165 : vector<8x32xf32>
    %167 = arith.addf %153, %166 : vector<8x32xf32>
    %cst_73 = arith.constant dense<0.000000e+00> : vector<8xf32>
    %168 = vector.multi_reduction <add>, %167, %cst_73 [1] : vector<8x32xf32> to vector<8xf32>
    %169 = vector.shape_cast %168 : vector<8xf32> to vector<8x1xf32>
    %cst_74 = arith.constant 3.200000e+01 : f32
    %170 = vector.broadcast %cst_74 : f32 to vector<8x1xf32>
    %171 = arith.divf %169, %170 : vector<8x1xf32>
    %172 = vector.broadcast %171 : vector<8x1xf32> to vector<8x32xf32>
    %173 = arith.subf %167, %172 : vector<8x32xf32>
    %174 = arith.mulf %173, %173 : vector<8x32xf32>
    %cst_75 = arith.constant dense<0.000000e+00> : vector<8xf32>
    %175 = vector.multi_reduction <add>, %174, %cst_75 [1] : vector<8x32xf32> to vector<8xf32>
    %176 = vector.shape_cast %175 : vector<8xf32> to vector<8x1xf32>
    %cst_76 = arith.constant 3.200000e+01 : f32
    %177 = vector.broadcast %cst_76 : f32 to vector<8x1xf32>
    %178 = arith.divf %176, %177 : vector<8x1xf32>
    %179 = vector.broadcast %171 : vector<8x1xf32> to vector<8x32xf32>
    %180 = arith.subf %167, %179 : vector<8x32xf32>
    %cst_77 = arith.constant 9.99999974E-6 : f32
    %181 = vector.broadcast %cst_77 : f32 to vector<8x1xf32>
    %182 = arith.addf %178, %181 : vector<8x1xf32>
    %183 = math.rsqrt %182 : vector<8x1xf32>
    %184 = vector.broadcast %183 : vector<8x1xf32> to vector<8x32xf32>
    %185 = arith.mulf %180, %184 : vector<8x32xf32>
    %186 = vector.broadcast %19 : vector<1x32xf32> to vector<8x32xf32>
    %187 = arith.mulf %185, %186 : vector<8x32xf32>
    %188 = vector.broadcast %20 : vector<1x32xf32> to vector<8x32xf32>
    %189 = arith.addf %187, %188 : vector<8x32xf32>
    %c0_78 = arith.constant 0 : index
    %c0_79 = arith.constant 0 : index
    %c0_80 = arith.constant 0 : index
    %190 = vector.load %arg14[%c0_78, %c0_79, %c0_80] : memref<1x8x32xf32, #tpu.memory_space<vmem>>, vector<1x8x32xf32>
    %191 = vector.shape_cast %190 : vector<1x8x32xf32> to vector<8x32xf32>
    %192 = vector.shape_cast %189 : vector<8x32xf32> to vector<1x8x32xf32>
    tpu.vector_store %arg14[%c0_78, %c0_79, %c0_80], %192 {strides = array<i32>} : memref<1x8x32xf32, #tpu.memory_space<vmem>>, vector<1x8x32xf32>,
    return
  }
  func.func @transform_0(%arg0: i32) -> (i32, i32, i32) {
    %c0_i32 = arith.constant 0 : i32
    %c0_i32_0 = arith.constant 0 : i32
    %c0_i32_1 = arith.constant 0 : i32
    return %arg0, %c0_i32, %c0_i32_0 : i32, i32, i32
  }
  func.func @transform_1(%arg0: i32) -> (i32, i32, i32) {
    %c0_i32 = arith.constant 0 : i32
    %c0_i32_0 = arith.constant 0 : i32
    %c0_i32_1 = arith.constant 0 : i32
    return %arg0, %c0_i32, %c0_i32_0 : i32, i32, i32
  }
  func.func @transform_2(%arg0: i32) -> (i32, i32, i32) {
    %c0_i32 = arith.constant 0 : i32
    %c0_i32_0 = arith.constant 0 : i32
    %c0_i32_1 = arith.constant 0 : i32
    return %arg0, %c0_i32, %c0_i32_0 : i32, i32, i32
  }
  func.func @transform_3(%arg0: i32) -> (i32, i32, i32) {
    %c0_i32 = arith.constant 0 : i32
    %c0_i32_0 = arith.constant 0 : i32
    %c0_i32_1 = arith.constant 0 : i32
    return %arg0, %c0_i32, %c0_i32_0 : i32, i32, i32
  }
  func.func @transform_4(%arg0: i32) -> (i32, i32, i32) {
    %c0_i32 = arith.constant 0 : i32
    %c0_i32_0 = arith.constant 0 : i32
    %c0_i32_1 = arith.constant 0 : i32
    return %arg0, %c0_i32, %c0_i32_0 : i32, i32, i32
  }
  func.func @transform_5(%arg0: i32) -> (i32, i32) {
    %c0_i32 = arith.constant 0 : i32
    %c0_i32_0 = arith.constant 0 : i32
    %c0_i32_1 = arith.constant 0 : i32
    return %c0_i32, %c0_i32_0 : i32, i32
  }
  func.func @transform_6(%arg0: i32) -> (i32, i32) {
    %c0_i32 = arith.constant 0 : i32
    %c0_i32_0 = arith.constant 0 : i32
    %c0_i32_1 = arith.constant 0 : i32
    return %c0_i32, %c0_i32_0 : i32, i32
  }
  func.func @transform_7(%arg0: i32) -> (i32, i32) {
    %c0_i32 = arith.constant 0 : i32
    %c0_i32_0 = arith.constant 0 : i32
    %c0_i32_1 = arith.constant 0 : i32
    return %c0_i32, %c0_i32_0 : i32, i32
  }
  func.func @transform_8(%arg0: i32) -> (i32, i32) {
    %c0_i32 = arith.constant 0 : i32
    %c0_i32_0 = arith.constant 0 : i32
    %c0_i32_1 = arith.constant 0 : i32
    return %c0_i32, %c0_i32_0 : i32, i32
  }
  func.func @transform_9(%arg0: i32) -> (i32, i32) {
    %c0_i32 = arith.constant 0 : i32
    %c0_i32_0 = arith.constant 0 : i32
    %c0_i32_1 = arith.constant 0 : i32
    return %c0_i32, %c0_i32_0 : i32, i32
  }
  func.func @transform_10(%arg0: i32) -> (i32, i32) {
    %c0_i32 = arith.constant 0 : i32
    %c0_i32_0 = arith.constant 0 : i32
    %c0_i32_1 = arith.constant 0 : i32
    return %c0_i32, %c0_i32_0 : i32, i32
  }
  func.func @transform_11(%arg0: i32) -> (i32, i32) {
    %c0_i32 = arith.constant 0 : i32
    %c0_i32_0 = arith.constant 0 : i32
    %c0_i32_1 = arith.constant 0 : i32
    return %c0_i32, %c0_i32_0 : i32, i32
  }
  func.func @transform_12(%arg0: i32) -> (i32, i32) {
    %c0_i32 = arith.constant 0 : i32
    %c0_i32_0 = arith.constant 0 : i32
    %c0_i32_1 = arith.constant 0 : i32
    return %c0_i32, %c0_i32_0 : i32, i32
  }
  func.func @transform_13(%arg0: i32) -> (i32, i32, i32) {
    %c0_i32 = arith.constant 0 : i32
    %c0_i32_0 = arith.constant 0 : i32
    %c0_i32_1 = arith.constant 0 : i32
    return %arg0, %c0_i32, %c0_i32_0 : i32, i32, i32
  }
}

</mosaic_0001>

<llo_original>
// kernel: cross_attention_forward.5
$region0: #{cross_attention_forward.5}
  #allocation0 [shape = 'u32[]', space=smem, size = 0x4, offset = 0x4, fixed_abs, tag = 'smem constant byte address 0x4 - core index']
  #allocation1 [shape = 'u32[144,128]{1,0:T(1,128)}', space=vmem, size = 0x12000, scoped, tag = 'internal scratch']
  #allocation2 [shape = 'f32[16,32]{1,0:T(8,128)}', space=vmem, size = 0x2000, scoped, tag = 'scratch operand']
  %s0 = inlined_call_operand.vmem [shape: f32[2,16,32], index: 0, kind: input, shape index: {}]
  %s1 = inlined_call_operand.vmem [shape: f32[2,16,32], index: 1, kind: input, shape index: {}]
  %s2 = inlined_call_operand.vmem [shape: f32[2,1,16], index: 2, kind: input, shape index: {}]
  %s3 = inlined_call_operand.vmem [shape: bf16[32,32], index: 3, kind: input, shape index: {}]
  %s4 = inlined_call_operand.vmem [shape: bf16[32,32], index: 4, kind: input, shape index: {}]
  %s5 = inlined_call_operand.vmem [shape: bf16[32,32], index: 5, kind: input, shape index: {}]
  %s6 = inlined_call_operand.vmem [shape: bf16[32,32], index: 6, kind: input, shape index: {}]
  %s7 = inlined_call_operand.vmem [shape: f32[6,32], index: 7, kind: input, shape index: {}]
  %s8 = inlined_call_operand.vmem [shape: f32[2,16,32], index: 8, kind: output, shape index: {}]
  %s9 = sld [smem:[#allocation0]]
  $region65: #{cross_attention_forward.5} parent=0
    _
  %s11 = ssub.s32 1, %s9
  %s12 = scalar_select 0, %s11, %s9
  loop: start=0, step=1, limit=4
  $region2: #{cross_attention_forward.5} parent=0 // loop_pre_header
    _
  $region3: #{cross_attention_forward.5} parent=0 // loop_header
    %s14 = sphi 0, %s18
    %p15 = scmp.ge.s32.totalorder %s14, 4
    %s24 = sphi 0, %s26
    %s27 = sphi 0, %s24
    %s28 = sphi 0, %s27
    %s44 = sphi 0, %s28
    %s50 = sphi 0, %s52
    %s53 = sphi 0, %s50
    %s54 = sphi 0, %s53
    %s70 = sphi 0, %s54
    %s76 = sphi 0, %s78
    %s79 = sphi 0, %s76
    %s80 = sphi 0, %s79
    %s96 = sphi 0, %s80
    %s100 = sphi 0, %s100
    %s102 = sphi 0, %s100
    %s103 = sphi 0, %s102
    %s117 = sphi 0, %s103
    %s121 = sphi 0, %s121
    %s123 = sphi 0, %s121
    %s124 = sphi 0, %s123
    %s138 = sphi 0, %s124
    %s142 = sphi 0, %s142
    %s144 = sphi 0, %s142
    %s145 = sphi 0, %s144
    %s159 = sphi 0, %s145
    %s163 = sphi 0, %s163
    %s165 = sphi 0, %s163
    %s166 = sphi 0, %s165
    %s180 = sphi 0, %s166
    %s184 = sphi 0, %s184
    %s186 = sphi 0, %s184
    %s187 = sphi 0, %s186
    %s201 = sphi 0, %s187
    %s207 = sphi 0, %s209
    %s210 = sphi 0, %s207
    %s211 = sphi 0, %s210
    %s227 = sphi 0, %s211
  $region4: #{cross_attention_forward.5} parent=0 // loop_header_branch
    %17 = sbr.rel (%p15) target = $region8
  $region5: #{cross_attention_forward.5} parent=0 // loop_body
    %s19 = ssub.s32 %s14, 1
    %s20 = ssub.s32 %s14, 2
    %s21 = sadd.s32 %s14, 1
    %s22 = ssub.s32 %s14, %s21
    %p23 = scmp.eq.s32.totalorder %s22, 0
    %s25 = sadd.s32 %s24, 1
    %s26 = scalar_select %p23, %s24, %s25
    %p29 = pneg %p23
    %p30 = scmp.eq.s32.totalorder %s14, 1
    %p31 = por %p29, %p30
    %p32 = scmp.ne.s32.totalorder %s24, %s27
    %p33 = scmp.eq.s32.totalorder %s14, 0
    %p34 = por %p32, %p33
    %p35 = scmp.ne.s32.totalorder %s24, %s27
    %p36 = scmp.eq.s32.totalorder %s19, 1
    %p37 = por %p35, %p36
    %p38 = scmp.ne.s32.totalorder %s27, %s28
    %p39 = scmp.eq.s32.totalorder %s19, 0
    %p40 = por %p38, %p39
    %p41 = scmp.ne.s32.totalorder %s27, %s28
    %p42 = scmp.eq.s32.totalorder %s20, 1
    %p43 = por %p41, %p42
    %p45 = scmp.ne.s32.totalorder %s28, %s44
    %p46 = scmp.eq.s32.totalorder %s20, 0
    %p47 = por %p45, %p46
    %s48 = ssub.s32 %s14, %s21
    %p49 = scmp.eq.s32.totalorder %s48, 0
    %s51 = sadd.s32 %s50, 1
    %s52 = scalar_select %p49, %s50, %s51
    %p55 = pneg %p49
    %p56 = scmp.eq.s32.totalorder %s14, 1
    %p57 = por %p55, %p56
    %p58 = scmp.ne.s32.totalorder %s50, %s53
    %p59 = scmp.eq.s32.totalorder %s14, 0
    %p60 = por %p58, %p59
    %p61 = scmp.ne.s32.totalorder %s50, %s53
    %p62 = scmp.eq.s32.totalorder %s19, 1
    %p63 = por %p61, %p62
    %p64 = scmp.ne.s32.totalorder %s53, %s54
    %p65 = scmp.eq.s32.totalorder %s19, 0
    %p66 = por %p64, %p65
    %p67 = scmp.ne.s32.totalorder %s53, %s54
    %p68 = scmp.eq.s32.totalorder %s20, 1
    %p69 = por %p67, %p68
    %p71 = scmp.ne.s32.totalorder %s54, %s70
    %p72 = scmp.eq.s32.totalorder %s20, 0
    %p73 = por %p71, %p72
    %s74 = ssub.s32 %s14, %s21
    %p75 = scmp.eq.s32.totalorder %s74, 0
    %s77 = sadd.s32 %s76, 1
    %s78 = scalar_select %p75, %s76, %s77
    %p81 = pneg %p75
    %p82 = scmp.eq.s32.totalorder %s14, 1
    %p83 = por %p81, %p82
    %p84 = scmp.ne.s32.totalorder %s76, %s79
    %p85 = scmp.eq.s32.totalorder %s14, 0
    %p86 = por %p84, %p85
    %p87 = scmp.ne.s32.totalorder %s76, %s79
    %p88 = scmp.eq.s32.totalorder %s19, 1
    %p89 = por %p87, %p88
    %p90 = scmp.ne.s32.totalorder %s79, %s80
    %p91 = scmp.eq.s32.totalorder %s19, 0
    %p92 = por %p90, %p91
    %p93 = scmp.ne.s32.totalorder %s79, %s80
    %p94 = scmp.eq.s32.totalorder %s20, 1
    %p95 = por %p93, %p94
    %p97 = scmp.ne.s32.totalorder %s80, %s96
    %p98 = scmp.eq.s32.totalorder %s20, 0
    %p99 = por %p97, %p98
    %s101 = sadd.s32 %s100, 1
    %p104 = scmp.eq.s32.totalorder %s14, 1
    %p105 = scmp.ne.s32.totalorder %s100, %s102
    %p106 = scmp.eq.s32.totalorder %s14, 0
    %p107 = por %p105, %p106
    %p108 = scmp.ne.s32.totalorder %s100, %s102
    %p109 = scmp.eq.s32.totalorder %s19, 1
    %p110 = por %p108, %p109
    %p111 = scmp.ne.s32.totalorder %s102, %s103
    %p112 = scmp.eq.s32.totalorder %s19, 0
    %p113 = por %p111, %p112
    %p114 = scmp.ne.s32.totalorder %s102, %s103
    %p115 = scmp.eq.s32.totalorder %s20, 1
    %p116 = por %p114, %p115
    %p118 = scmp.ne.s32.totalorder %s103, %s117
    %p119 = scmp.eq.s32.totalorder %s20, 0
    %p120 = por %p118, %p119
    %s122 = sadd.s32 %s121, 1
    %p125 = scmp.eq.s32.totalorder %s14, 1
    %p126 = scmp.ne.s32.totalorder %s121, %s123
    %p127 = scmp.eq.s32.totalorder %s14, 0
    %p128 = por %p126, %p127
    %p129 = scmp.ne.s32.totalorder %s121, %s123
    %p130 = scmp.eq.s32.totalorder %s19, 1
    %p131 = por %p129, %p130
    %p132 = scmp.ne.s32.totalorder %s123, %s124
    %p133 = scmp.eq.s32.totalorder %s19, 0
    %p134 = por %p132, %p133
    %p135 = scmp.ne.s32.totalorder %s123, %s124
    %p136 = scmp.eq.s32.totalorder %s20, 1
    %p137 = por %p135, %p136
    %p139 = scmp.ne.s32.totalorder %s124, %s138
    %p140 = scmp.eq.s32.totalorder %s20, 0
    %p141 = por %p139, %p140
    %s143 = sadd.s32 %s142, 1
    %p146 = scmp.eq.s32.totalorder %s14, 1
    %p147 = scmp.ne.s32.totalorder %s142, %s144
    %p148 = scmp.eq.s32.totalorder %s14, 0
    %p149 = por %p147, %p148
    %p150 = scmp.ne.s32.totalorder %s142, %s144
    %p151 = scmp.eq.s32.totalorder %s19, 1
    %p152 = por %p150, %p151
    %p153 = scmp.ne.s32.totalorder %s144, %s145
    %p154 = scmp.eq.s32.totalorder %s19, 0
    %p155 = por %p153, %p154
    %p156 = scmp.ne.s32.totalorder %s144, %s145
    %p157 = scmp.eq.s32.totalorder %s20, 1
    %p158 = por %p156, %p157
    %p160 = scmp.ne.s32.totalorder %s145, %s159
    %p161 = scmp.eq.s32.totalorder %s20, 0
    %p162 = por %p160, %p161
    %s164 = sadd.s32 %s163, 1
    %p167 = scmp.eq.s32.totalorder %s14, 1
    %p168 = scmp.ne.s32.totalorder %s163, %s165
    %p169 = scmp.eq.s32.totalorder %s14, 0
    %p170 = por %p168, %p169
    %p171 = scmp.ne.s32.totalorder %s163, %s165
    %p172 = scmp.eq.s32.totalorder %s19, 1
    %p173 = por %p171, %p172
    %p174 = scmp.ne.s32.totalorder %s165, %s166
    %p175 = scmp.eq.s32.totalorder %s19, 0
    %p176 = por %p174, %p175
    %p177 = scmp.ne.s32.totalorder %s165, %s166
    %p178 = scmp.eq.s32.totalorder %s20, 1
    %p179 = por %p177, %p178
    %p181 = scmp.ne.s32.totalorder %s166, %s180
    %p182 = scmp.eq.s32.totalorder %s20, 0
    %p183 = por %p181, %p182
    %s185 = sadd.s32 %s184, 1
    %p188 = scmp.eq.s32.totalorder %s14, 1
    %p189 = scmp.ne.s32.totalorder %s184, %s186
    %p190 = scmp.eq.s32.totalorder %s14, 0
    %p191 = por %p189, %p190
    %p192 = scmp.ne.s32.totalorder %s184, %s186
    %p193 = scmp.eq.s32.totalorder %s19, 1
    %p194 = por %p192, %p193
    %p195 = scmp.ne.s32.totalorder %s186, %s187
    %p196 = scmp.eq.s32.totalorder %s19, 0
    %p197 = por %p195, %p196
    %p198 = scmp.ne.s32.totalorder %s186, %s187
    %p199 = scmp.eq.s32.totalorder %s20, 1
    %p200 = por %p198, %p199
    %p202 = scmp.ne.s32.totalorder %s187, %s201
    %p203 = scmp.eq.s32.totalorder %s20, 0
    %p204 = por %p202, %p203
    %s205 = ssub.s32 %s14, %s21
    %p206 = scmp.eq.s32.totalorder %s205, 0
    %s208 = sadd.s32 %s207, 1
    %s209 = scalar_select %p206, %s207, %s208
    %p212 = pneg %p206
    %p213 = scmp.eq.s32.totalorder %s14, 1
    %p214 = por %p212, %p213
    %p215 = scmp.ne.s32.totalorder %s207, %s210
    %p216 = scmp.eq.s32.totalorder %s14, 0
    %p217 = por %p215, %p216
    %p218 = scmp.ne.s32.totalorder %s207, %s210
    %p219 = scmp.eq.s32.totalorder %s19, 1
    %p220 = por %p218, %p219
    %p221 = scmp.ne.s32.totalorder %s210, %s211
    %p222 = scmp.eq.s32.totalorder %s19, 0
    %p223 = por %p221, %p222
    %p224 = scmp.ne.s32.totalorder %s210, %s211
    %p225 = scmp.eq.s32.totalorder %s20, 1
    %p226 = por %p224, %p225
    %p228 = scmp.ne.s32.totalorder %s211, %s227
    %p229 = scmp.eq.s32.totalorder %s20, 0
    %p230 = por %p228, %p229
    %p231 = scmp.le.s32.totalorder 1, %s14
    %p232 = scmp.lt.s32.totalorder %s14, 3
    %p233 = pnand %p231, %p232
    %p234 = pneg %p233
    // Predicated region
    $region9: #{cross_attention_forward.5} parent=5 // pred_check
      _
    $region10: #{cross_attention_forward.5} parent=5 // pred_check_branch
      %236 = sbr.rel (%p233) target = $region12
    $region11: #{cross_attention_forward.5} parent=5 // pred_region
      %s237 = ssub.s32 %s14, 1
      // Predicated region
      $region13: #{cross_attention_forward.5} parent=11 // pred_check
        %p238 = pneg %p113
      $region14: #{cross_attention_forward.5} parent=11 // pred_check_branch
        %240 = sbr.rel (%p238) target = $region16
      $region15: #{cross_attention_forward.5} parent=11 // pred_region
        _
      $region16: #{cross_attention_forward.5} parent=11 // pred_fallthru
        _
      // Predicated region
      $region17: #{cross_attention_forward.5} parent=11 // pred_check
        %p241 = pneg %p134
      $region18: #{cross_attention_forward.5} parent=11 // pred_check_branch
        %243 = sbr.rel (%p241) target = $region20
      $region19: #{cross_attention_forward.5} parent=11 // pred_region
        _
      $region20: #{cross_attention_forward.5} parent=11 // pred_fallthru
        _
      // Predicated region
      $region21: #{cross_attention_forward.5} parent=11 // pred_check
        %p244 = pneg %p155
      $region22: #{cross_attention_forward.5} parent=11 // pred_check_branch
        %246 = sbr.rel (%p244) target = $region24
      $region23: #{cross_attention_forward.5} parent=11 // pred_region
        _
      $region24: #{cross_attention_forward.5} parent=11 // pred_fallthru
        _
      // Predicated region
      $region25: #{cross_attention_forward.5} parent=11 // pred_check
        %p247 = pneg %p176
      $region26: #{cross_attention_forward.5} parent=11 // pred_check_branch
        %249 = sbr.rel (%p247) target = $region28
      $region27: #{cross_attention_forward.5} parent=11 // pred_region
        _
      $region28: #{cross_attention_forward.5} parent=11 // pred_fallthru
        _
      // Predicated region
      $region29: #{cross_attention_forward.5} parent=11 // pred_check
        %p250 = pneg %p197
      $region30: #{cross_attention_forward.5} parent=11 // pred_check_branch
        %252 = sbr.rel (%p250) target = $region32
      $region31: #{cross_attention_forward.5} parent=11 // pred_region
        _
      $region32: #{cross_attention_forward.5} parent=11 // pred_fallthru
        _
    $region12: #{cross_attention_forward.5} parent=5 // pred_fallthru
      _
    %p253 = scmp.lt.s32.totalorder %s14, 2
    // Predicated region
    $region33: #{cross_attention_forward.5} parent=5 // pred_check
      %p254 = pneg %p253
    $region34: #{cross_attention_forward.5} parent=5 // pred_check_branch
      %256 = sbr.rel (%p254) target = $region36
    $region35: #{cross_attention_forward.5} parent=5 // pred_region
      // Predicated region
      $region37: #{cross_attention_forward.5} parent=35 // pred_check
        %p257 = pneg %p34
      $region38: #{cross_attention_forward.5} parent=35 // pred_check_branch
        %259 = sbr.rel (%p257) target = $region40
      $region39: #{cross_attention_forward.5} parent=35 // pred_region
        %p260 = scmp.lt.s32.totalorder %s14, 1
        %s261 = scalar_select %p260, %s14, 1
        %s262 = smul.addr %s261, 2
        %s263 = smul.addr %s262, 8
        %s264 = scalar_lea.vmem %s0, %s263
      $region40: #{cross_attention_forward.5} parent=35 // pred_fallthru
        _
      // Predicated region
      $region41: #{cross_attention_forward.5} parent=35 // pred_check
        %p265 = pneg %p60
      $region42: #{cross_attention_forward.5} parent=35 // pred_check_branch
        %267 = sbr.rel (%p265) target = $region44
      $region43: #{cross_attention_forward.5} parent=35 // pred_region
        %p268 = scmp.lt.s32.totalorder %s14, 1
        %s269 = scalar_select %p268, %s14, 1
        %s270 = smul.addr %s269, 2
        %s271 = smul.addr %s270, 8
        %s272 = scalar_lea.vmem %s1, %s271
      $region44: #{cross_attention_forward.5} parent=35 // pred_fallthru
        _
      // Predicated region
      $region45: #{cross_attention_forward.5} parent=35 // pred_check
        %p273 = pneg %p86
      $region46: #{cross_attention_forward.5} parent=35 // pred_check_branch
        %275 = sbr.rel (%p273) target = $region48
      $region47: #{cross_attention_forward.5} parent=35 // pred_region
        %p276 = scmp.lt.s32.totalorder %s14, 1
        %s277 = scalar_select %p276, %s14, 1
        %s278 = scalar_lea.vmem %s2, %s277
      $region48: #{cross_attention_forward.5} parent=35 // pred_fallthru
        _
    $region36: #{cross_attention_forward.5} parent=5 // pred_fallthru
      _
    %p279 = scmp.le.s32.totalorder 1, %s14
    %p280 = scmp.lt.s32.totalorder %s14, 3
    %p281 = pnand %p279, %p280
    %p282 = pneg %p281
    // Predicated region
    $region49: #{cross_attention_forward.5} parent=5 // pred_check
      _
    $region50: #{cross_attention_forward.5} parent=5 // pred_check_branch
      %284 = sbr.rel (%p281) target = $region52
    $region51: #{cross_attention_forward.5} parent=5 // pred_region
      %s285 = ssub.s32 %s14, 1
      %p286 = scmp.lt.s32.totalorder %s19, 1
      %s287 = scalar_select %p286, %s19, 1
      %s288 = smul.addr %s287, 2
      %s289 = smul.addr %s288, 8
      %s290 = scalar_lea.vmem %s0, %s289
      %p291 = pneg %p40
      %p292 = pneg %p37
      %p293 = scmp.lt.s32.totalorder %s19, 1
      %s294 = scalar_select %p293, %s19, 1
      %s295 = smul.addr %s294, 2
      %s296 = smul.addr %s295, 8
      %s297 = scalar_lea.vmem %s1, %s296
      %p298 = pneg %p66
      %p299 = pneg %p63
      %p300 = scmp.lt.s32.totalorder %s19, 1
      %s301 = scalar_select %p300, %s19, 1
      %s302 = scalar_lea.vmem %s2, %s301
      %p303 = pneg %p92
      %p304 = pneg %p89
      %p305 = pneg %p113
      %p306 = pneg %p110
      %p307 = pneg %p134
      %p308 = pneg %p131
      %p309 = pneg %p155
      %p310 = pneg %p152
      %p311 = pneg %p176
      %p312 = pneg %p173
      %p313 = pneg %p197
      %p314 = pneg %p194
      %p315 = pneg %p223
      %p316 = pneg %p220
      %p317 = scmp.lt.s32.totalorder %s19, 1
      %s318 = scalar_select %p317, %s19, 1
      %s319 = smul.addr %s318, 2
      %s320 = smul.addr %s319, 8
      %s321 = scalar_lea.vmem %s8, %s320
      %p322 = scmp.lt.s32.totalorder %s19, 1
      %s323 = scalar_select %p322, %s19, 1
      %s324 = smul.addr %s323, 2
      %s325 = smul.addr %s324, 8
      %s326 = scalar_lea.vmem %s0, %s325
      %p327 = scmp.lt.s32.totalorder %s19, 1
      %s328 = scalar_select %p327, %s19, 1
      %s329 = smul.addr %s328, 2
      %s330 = smul.addr %s329, 8
      %s331 = scalar_lea.vmem %s1, %s330
      %p332 = scmp.lt.s32.totalorder %s19, 1
      %s333 = scalar_select %p332, %s19, 1
      %s334 = scalar_lea.vmem %s2, %s333
      %p335 = scmp.lt.s32.totalorder %s19, 1
      %s336 = scalar_select %p335, %s19, 1
      %s337 = smul.addr %s336, 2
      %s338 = smul.addr %s337, 8
      %s339 = scalar_lea.vmem %s8, %s338
      %v341 = vld [vmem:[%s326] sm:$0xff]
      %v342 = vld [vmem:[%s326 + $0x8] sm:$0xff]
      %v343 = vld [vmem:[%s331] sm:$0xff]
      %v344 = vld [vmem:[%s331 + $0x8] sm:$0xff]
      %v345 = vadd.f32 %v341, %v343
      %v346 = vadd.f32 %v342, %v344
      %v347 = vld [vmem:[%s334] sm:$0x1]
      %v348 = vld [vmem:[%s7] sm:$0x1]
      %v349 = vld [vmem:[%s7 + $0x1] sm:$0x1]
      %v350 = vld [vmem:[%s7 + $0x2] sm:$0x1]
      %v351 = vld [vmem:[%s7 + $0x3] sm:$0x1]
      %v352 = vld [vmem:[%s7 + $0x4] sm:$0x1]
      %v353 = vld [vmem:[%s7 + $0x5] sm:$0x1]
      %v354 = vpack.c.bf16 %v346, %v345
      %v355 = vld [vmem:[%s3] sm:$0xf]
      %v356 = vld [vmem:[%s3 + $0x4] sm:$0xf]
      %v357 = vld [vmem:[%s3 + $0x8] sm:$0xf]
      %v358 = vld [vmem:[%s3 + $0xc] sm:$0xf]
      %v359 = vlaneseq
      %v360 = vshrl.u32 %v359, 7
      %v361 = vsub.s32 0, %v360
      %v362 = vrot.slane %v348, %v361
      %v367 = vunpack.c.l.b16 %v355
      %v368 = vunpack.c.l.b16 %v356
      %v369 = vunpack.c.l.b16 %v357
      %v370 = vunpack.c.l.b16 %v358
      %v371 = vpack.c.b16 %v368, %v367
      %v372 = vpack.c.b16 %v370, %v369
      %vm375 = vcmask 261120
      %v377 = vsel %vm375, %v354, 0
      %379 = vmatprep.subr.bf16.mxu0 0
      %380 = vmatpush1.bf16.msra.mxu0 %v371
      %381 = vmatprep.subr.bf16.mxu0 0
      %382 = vmatpush1.bf16.msra.mxu0 %v372
      %383 = vmatprep.subr.bf16.mxu0 0
      %384 = vmatpush1.bf16.msra.mxu0 0
      %385 = vmatprep.subr.bf16.mxu0 0
      %386 = vmatpush1.bf16.msra.mxu0 0
      %387 = vmatprep.subr.bf16.mxu0 0
      %388 = vmatpush1.bf16.msra.mxu0 0
      %389 = vmatprep.subr.bf16.mxu0 0
      %390 = vmatpush1.bf16.msra.mxu0 0
      %391 = vmatprep.subr.bf16.mxu0 0
      %392 = vmatpush1.bf16.msra.mxu0 0
      %393 = vmatprep.subr.bf16.mxu0 0
      %394 = vmatpush1.bf16.msra.mxu0 0
      %395 = vmatprep.subr.bf16.mxu0 0
      %396 = vmatpush1.bf16.msra.mxu0 0
      %397 = vmatprep.subr.bf16.mxu0 0
      %398 = vmatpush1.bf16.msra.mxu0 0
      %399 = vmatprep.subr.bf16.mxu0 0
      %400 = vmatpush1.bf16.msra.mxu0 0
      %401 = vmatprep.subr.bf16.mxu0 0
      %402 = vmatpush1.bf16.msra.mxu0 0
      %403 = vmatprep.subr.bf16.mxu0 0
      %404 = vmatpush1.bf16.msra.mxu0 0
      %405 = vmatprep.subr.bf16.mxu0 0
      %406 = vmatpush1.bf16.msra.mxu0 0
      %407 = vmatprep.subr.bf16.mxu0 0
      %408 = vmatpush1.bf16.msra.mxu0 0
      %409 = vmatprep.subr.bf16.mxu0 0
      %410 = vmatpush1.bf16.msra.mxu0 0
      %411 = vmatprep.mubr.bf16.mxu0 0
      %412 = vmatmul.mubr.bf16.gmra.mrb[0].mxu0 %v377
      %v413 = vpop.f32.mrb[0].mxu0
      %v414 = vadd.f32 %v362, %v413
      %v415 = vpop.f32.mrb[0].mxu0
      %v416 = vpop.f32.mrb[0].mxu0
      %v417 = vadd.f32 %v362, %v416
      %v418 = vpop.f32.mrb[0].mxu0
      %419 = vdwg.mxu0
      %v420 = vld [vmem:[%s4] sm:$0xf]
      %v421 = vld [vmem:[%s4 + $0x4] sm:$0xf]
      %v422 = vld [vmem:[%s4 + $0x8] sm:$0xf]
      %v423 = vld [vmem:[%s4 + $0xc] sm:$0xf]
      %v424 = vlaneseq
      %v425 = vshrl.u32 %v424, 7
      %v426 = vsub.s32 0, %v425
      %v427 = vrot.slane %v349, %v426
      %v432 = vunpack.c.l.b16 %v420
      %v433 = vunpack.c.l.b16 %v421
      %v434 = vunpack.c.l.b16 %v422
      %v435 = vunpack.c.l.b16 %v423
      %v436 = vpack.c.b16 %v433, %v432
      %v437 = vpack.c.b16 %v435, %v434
      %440 = vmatprep.subr.bf16.mxu0 0
      %441 = vmatpush1.bf16.msra.mxu0 %v436
      %442 = vmatprep.subr.bf16.mxu0 0
      %443 = vmatpush1.bf16.msra.mxu0 %v437
      %444 = vmatprep.subr.bf16.mxu0 0
      %445 = vmatpush1.bf16.msra.mxu0 0
      %446 = vmatprep.subr.bf16.mxu0 0
      %447 = vmatpush1.bf16.msra.mxu0 0
      %448 = vmatprep.subr.bf16.mxu0 0
      %449 = vmatpush1.bf16.msra.mxu0 0
      %450 = vmatprep.subr.bf16.mxu0 0
      %451 = vmatpush1.bf16.msra.mxu0 0
      %452 = vmatprep.subr.bf16.mxu0 0
      %453 = vmatpush1.bf16.msra.mxu0 0
      %454 = vmatprep.subr.bf16.mxu0 0
      %455 = vmatpush1.bf16.msra.mxu0 0
      %456 = vmatprep.subr.bf16.mxu0 0
      %457 = vmatpush1.bf16.msra.mxu0 0
      %458 = vmatprep.subr.bf16.mxu0 0
      %459 = vmatpush1.bf16.msra.mxu0 0
      %460 = vmatprep.subr.bf16.mxu0 0
      %461 = vmatpush1.bf16.msra.mxu0 0
      %462 = vmatprep.subr.bf16.mxu0 0
      %463 = vmatpush1.bf16.msra.mxu0 0
      %464 = vmatprep.subr.bf16.mxu0 0
      %465 = vmatpush1.bf16.msra.mxu0 0
      %466 = vmatprep.subr.bf16.mxu0 0
      %467 = vmatpush1.bf16.msra.mxu0 0
      %468 = vmatprep.subr.bf16.mxu0 0
      %469 = vmatpush1.bf16.msra.mxu0 0
      %470 = vmatprep.subr.bf16.mxu0 0
      %471 = vmatpush1.bf16.msra.mxu0 0
      %472 = vmatprep.mubr.bf16.mxu0 0
      %473 = vmatmul.mubr.bf16.gmra.mrb[0].mxu0 %v377
      %v474 = vpop.f32.mrb[0].mxu0
      %v475 = vadd.f32 %v427, %v474
      %v476 = vpop.f32.mrb[0].mxu0
      %v477 = vpop.f32.mrb[0].mxu0
      %v478 = vadd.f32 %v427, %v477
      %v479 = vpop.f32.mrb[0].mxu0
      %480 = vdwg.mxu0
      %v481 = vpack.c.bf16 %v342, %v341
      %v482 = vld [vmem:[%s5] sm:$0xf]
      %v483 = vld [vmem:[%s5 + $0x4] sm:$0xf]
      %v484 = vld [vmem:[%s5 + $0x8] sm:$0xf]
      %v485 = vld [vmem:[%s5 + $0xc] sm:$0xf]
      %v486 = vlaneseq
      %v487 = vshrl.u32 %v486, 7
      %v488 = vsub.s32 0, %v487
      %v489 = vrot.slane %v350, %v488
      %v494 = vunpack.c.l.b16 %v482
      %v495 = vunpack.c.l.b16 %v483
      %v496 = vunpack.c.l.b16 %v484
      %v497 = vunpack.c.l.b16 %v485
      %v498 = vpack.c.b16 %v495, %v494
      %v499 = vpack.c.b16 %v497, %v496
      %v503 = vsel %vm375, %v481, 0
      %505 = vmatprep.subr.bf16.mxu0 0
      %506 = vmatpush1.bf16.msra.mxu0 %v498
      %507 = vmatprep.subr.bf16.mxu0 0
      %508 = vmatpush1.bf16.msra.mxu0 %v499
      %509 = vmatprep.subr.bf16.mxu0 0
      %510 = vmatpush1.bf16.msra.mxu0 0
      %511 = vmatprep.subr.bf16.mxu0 0
      %512 = vmatpush1.bf16.msra.mxu0 0
      %513 = vmatprep.subr.bf16.mxu0 0
      %514 = vmatpush1.bf16.msra.mxu0 0
      %515 = vmatprep.subr.bf16.mxu0 0
      %516 = vmatpush1.bf16.msra.mxu0 0
      %517 = vmatprep.subr.bf16.mxu0 0
      %518 = vmatpush1.bf16.msra.mxu0 0
      %519 = vmatprep.subr.bf16.mxu0 0
      %520 = vmatpush1.bf16.msra.mxu0 0
      %521 = vmatprep.subr.bf16.mxu0 0
      %522 = vmatpush1.bf16.msra.mxu0 0
      %523 = vmatprep.subr.bf16.mxu0 0
      %524 = vmatpush1.bf16.msra.mxu0 0
      %525 = vmatprep.subr.bf16.mxu0 0
      %526 = vmatpush1.bf16.msra.mxu0 0
      %527 = vmatprep.subr.bf16.mxu0 0
      %528 = vmatpush1.bf16.msra.mxu0 0
      %529 = vmatprep.subr.bf16.mxu0 0
      %530 = vmatpush1.bf16.msra.mxu0 0
      %531 = vmatprep.subr.bf16.mxu0 0
      %532 = vmatpush1.bf16.msra.mxu0 0
      %533 = vmatprep.subr.bf16.mxu0 0
      %534 = vmatpush1.bf16.msra.mxu0 0
      %535 = vmatprep.subr.bf16.mxu0 0
      %536 = vmatpush1.bf16.msra.mxu0 0
      %537 = vmatprep.mubr.bf16.mxu0 0
      %538 = vmatmul.mubr.bf16.gmra.mrb[0].mxu0 %v503
      %v539 = vpop.f32.mrb[0].mxu0
      %v540 = vadd.f32 %v489, %v539
      %v541 = vpop.f32.mrb[0].mxu0
      %v542 = vpop.f32.mrb[0].mxu0
      %v543 = vadd.f32 %v489, %v542
      %v544 = vpop.f32.mrb[0].mxu0
      %545 = vdwg.mxu0
      %546 = vxpose.xlu0.b32.start [1/16] %v475, 128
      %547 = vxpose.xlu0.b32.cont [2/16] %v478, 128
      %548 = vxpose.xlu0.b32.cont [3/16] 0.0, 128
      %549 = vxpose.xlu0.b32.cont [4/16] 0.0, 128
      %550 = vxpose.xlu0.b32.cont [5/16] 0.0, 128
      %551 = vxpose.xlu0.b32.cont [6/16] 0.0, 128
      %552 = vxpose.xlu0.b32.cont [7/16] 0.0, 128
      %553 = vxpose.xlu0.b32.cont [8/16] 0.0, 128
      %554 = vxpose.xlu0.b32.cont [9/16] 0.0, 128
      %555 = vxpose.xlu0.b32.cont [10/16] 0.0, 128
      %556 = vxpose.xlu0.b32.cont [11/16] 0.0, 128
      %557 = vxpose.xlu0.b32.cont [12/16] 0.0, 128
      %558 = vxpose.xlu0.b32.cont [13/16] 0.0, 128
      %559 = vxpose.xlu0.b32.cont [14/16] 0.0, 128
      %560 = vxpose.xlu0.b32.cont [15/16] 0.0, 128
      %561 = vxpose.xlu0.b32.end [16/16] 0.0, 128
      %v562 = vpop.trf.xlu0
      %v563 = vpop.trf.xlu0
      %v564 = vpop.trf.xlu0
      %v565 = vpop.trf.xlu0
      %v566 = vpop.trf.xlu0
      %v567 = vpop.trf.xlu0
      %v568 = vpop.trf.xlu0
      %v569 = vpop.trf.xlu0
      %v570 = vpop.trf.xlu0
      %v571 = vpop.trf.xlu0
      %v572 = vpop.trf.xlu0
      %v573 = vpop.trf.xlu0
      %v574 = vpop.trf.xlu0
      %v575 = vpop.trf.xlu0
      %v576 = vpop.trf.xlu0
      %v577 = vpop.trf.xlu0
      %v578 = vpack.c.bf16 %v417, %v414
      %v579 = vpack.c.bf16 %v562, %v562
      %v580 = vpack.c.bf16 %v543, %v540
      %v582 = vlaneseq
      %v583 = vshrl.u32 %v582, 7
      %v584 = vsub.s32 0, %v583
      %v585 = vrot.slane %v347, %v584
      %vm587 = vcmask 64512
      %v589 = vsel %vm587, %v578, 0
      %vm591 = vcmask 1043456
      %v593 = vsel %vm591, %v579, 0
      %595 = vmatprep.subr.bf16.mxu0 0
      %596 = vmatpush1.bf16.msra.mxu0 %v593
      %597 = vmatprep.subr.bf16.mxu0 0
      %598 = vmatpush1.bf16.msra.mxu0 0
      %599 = vmatprep.subr.bf16.mxu0 0
      %600 = vmatpush1.bf16.msra.mxu0 0
      %601 = vmatprep.subr.bf16.mxu0 0
      %602 = vmatpush1.bf16.msra.mxu0 0
      %603 = vmatprep.subr.bf16.mxu0 0
      %604 = vmatpush1.bf16.msra.mxu0 0
      %605 = vmatprep.subr.bf16.mxu0 0
      %606 = vmatpush1.bf16.msra.mxu0 0
      %607 = vmatprep.subr.bf16.mxu0 0
      %608 = vmatpush1.bf16.msra.mxu0 0
      %609 = vmatprep.subr.bf16.mxu0 0
      %610 = vmatpush1.bf16.msra.mxu0 0
      %611 = vmatprep.subr.bf16.mxu0 0
      %612 = vmatpush1.bf16.msra.mxu0 0
      %613 = vmatprep.subr.bf16.mxu0 0
      %614 = vmatpush1.bf16.msra.mxu0 0
      %615 = vmatprep.subr.bf16.mxu0 0
      %616 = vmatpush1.bf16.msra.mxu0 0
      %617 = vmatprep.subr.bf16.mxu0 0
      %618 = vmatpush1.bf16.msra.mxu0 0
      %619 = vmatprep.subr.bf16.mxu0 0
      %620 = vmatpush1.bf16.msra.mxu0 0
      %621 = vmatprep.subr.bf16.mxu0 0
      %622 = vmatpush1.bf16.msra.mxu0 0
      %623 = vmatprep.subr.bf16.mxu0 0
      %624 = vmatpush1.bf16.msra.mxu0 0
      %625 = vmatprep.subr.bf16.mxu0 0
      %626 = vmatpush1.bf16.msra.mxu0 0
      %627 = vmatprep.mubr.bf16.mxu0 0
      %628 = vmatmul.mubr.bf16.gmra.mrb[0].mxu0 %v589
      %v629 = vpop.f32.mrb[0].mxu0
      %v630 = vadd.f32 %v585, %v629
      %v631 = vpop.f32.mrb[0].mxu0
      %v632 = vpop.f32.mrb[0].mxu0
      %v633 = vadd.f32 %v585, %v632
      %v634 = vpop.f32.mrb[0].mxu0
      %635 = vdwg.mxu0
      %vm636 = vcmask 130048
      %v637 = vsel %vm636, %v630, -inf
      %638 = vmax.xlane.f32.xlu0 %v637
      %v639 = vpop.xlane.xlu0 %638
      %v640 = vsel %vm636, %v633, -inf
      %641 = vmax.xlane.f32.xlu0 %v640
      %v642 = vpop.xlane.xlu0 %641
      %v643 = vsub.f32 %v630, %v639
      %v644 = vsub.f32 %v633, %v642
      %v645 = vmul.f32 %v643, 1.442695
      %v646 = vpow.pop %v645
      %v647 = vmul.f32 %v644, 1.442695
      %v648 = vpow.pop %v647
      %v649 = vsel %vm636, %v646, 0.0
      %650 = vadd.xlane.f32.xlu0 %v649
      %v651 = vpop.xlane.xlu0 %650
      %v652 = vsel %vm636, %v648, 0.0
      %653 = vadd.xlane.f32.xlu0 %v652
      %v654 = vpop.xlane.xlu0 %653
      %v655 = vrcp.pop %v651
      %v656 = vrcp.pop %v654
      %v657 = vmul.f32 %v646, %v655
      %v658 = vmul.f32 %v648, %v656
      %v659 = vpack.c.bf16 %v658, %v657
      %v661 = vsel %vm636, %v659, 0
      %663 = vmatprep.subr.bf16.mxu0 0
      %664 = vmatpush1.bf16.msra.mxu0 %v580
      %665 = vmatprep.subr.bf16.mxu0 0
      %666 = vmatpush1.bf16.msra.mxu0 0
      %667 = vmatprep.subr.bf16.mxu0 0
      %668 = vmatpush1.bf16.msra.mxu0 0
      %669 = vmatprep.subr.bf16.mxu0 0
      %670 = vmatpush1.bf16.msra.mxu0 0
      %671 = vmatprep.subr.bf16.mxu0 0
      %672 = vmatpush1.bf16.msra.mxu0 0
      %673 = vmatprep.subr.bf16.mxu0 0
      %674 = vmatpush1.bf16.msra.mxu0 0
      %675 = vmatprep.subr.bf16.mxu0 0
      %676 = vmatpush1.bf16.msra.mxu0 0
      %677 = vmatprep.subr.bf16.mxu0 0
      %678 = vmatpush1.bf16.msra.mxu0 0
      %679 = vmatprep.subr.bf16.mxu0 0
      %680 = vmatpush1.bf16.msra.mxu0 0
      %681 = vmatprep.subr.bf16.mxu0 0
      %682 = vmatpush1.bf16.msra.mxu0 0
      %683 = vmatprep.subr.bf16.mxu0 0
      %684 = vmatpush1.bf16.msra.mxu0 0
      %685 = vmatprep.subr.bf16.mxu0 0
      %686 = vmatpush1.bf16.msra.mxu0 0
      %687 = vmatprep.subr.bf16.mxu0 0
      %688 = vmatpush1.bf16.msra.mxu0 0
      %689 = vmatprep.subr.bf16.mxu0 0
      %690 = vmatpush1.bf16.msra.mxu0 0
      %691 = vmatprep.subr.bf16.mxu0 0
      %692 = vmatpush1.bf16.msra.mxu0 0
      %693 = vmatprep.subr.bf16.mxu0 0
      %694 = vmatpush1.bf16.msra.mxu0 0
      %695 = vmatprep.mubr.bf16.mxu0 0
      %696 = vmatmul.mubr.bf16.gmra.mrb[0].mxu0 %v661
      %v697 = vpop.f32.mrb[0].mxu0
      %v698 = vadd.f32 0.0, %v697
      %v699 = vpop.f32.mrb[0].mxu0
      %v700 = vpop.f32.mrb[0].mxu0
      %v701 = vadd.f32 0.0, %v700
      %v702 = vpop.f32.mrb[0].mxu0
      %703 = vdwg.mxu0
      %704 = vst.msk [vmem:[#allocation2] sm:$0xff] %vm587, %v698
      %705 = vst.msk [vmem:[#allocation2 + $0x8] sm:$0xff] %vm587, %v701
      %v706 = vpack.c.bf16 %v563, %v563
      %708 = vrot.lane.b32.xlu0 %v578, 120
      %v709 = vpop.permute.xlu0 %708
      %v711 = vsel %vm587, %v709, 0
      %v714 = vsel %vm591, %v706, 0
      %716 = vmatprep.subr.bf16.mxu0 0
      %717 = vmatpush1.bf16.msra.mxu0 %v714
      %718 = vmatprep.subr.bf16.mxu0 0
      %719 = vmatpush1.bf16.msra.mxu0 0
      %720 = vmatprep.subr.bf16.mxu0 0
      %721 = vmatpush1.bf16.msra.mxu0 0
      %722 = vmatprep.subr.bf16.mxu0 0
      %723 = vmatpush1.bf16.msra.mxu0 0
      %724 = vmatprep.subr.bf16.mxu0 0
      %725 = vmatpush1.bf16.msra.mxu0 0
      %726 = vmatprep.subr.bf16.mxu0 0
      %727 = vmatpush1.bf16.msra.mxu0 0
      %728 = vmatprep.subr.bf16.mxu0 0
      %729 = vmatpush1.bf16.msra.mxu0 0
      %730 = vmatprep.subr.bf16.mxu0 0
      %731 = vmatpush1.bf16.msra.mxu0 0
      %732 = vmatprep.subr.bf16.mxu0 0
      %733 = vmatpush1.bf16.msra.mxu0 0
      %734 = vmatprep.subr.bf16.mxu0 0
      %735 = vmatpush1.bf16.msra.mxu0 0
      %736 = vmatprep.subr.bf16.mxu0 0
      %737 = vmatpush1.bf16.msra.mxu0 0
      %738 = vmatprep.subr.bf16.mxu0 0
      %739 = vmatpush1.bf16.msra.mxu0 0
      %740 = vmatprep.subr.bf16.mxu0 0
      %741 = vmatpush1.bf16.msra.mxu0 0
      %742 = vmatprep.subr.bf16.mxu0 0
      %743 = vmatpush1.bf16.msra.mxu0 0
      %744 = vmatprep.subr.bf16.mxu0 0
      %745 = vmatpush1.bf16.msra.mxu0 0
      %746 = vmatprep.subr.bf16.mxu0 0
      %747 = vmatpush1.bf16.msra.mxu0 0
      %748 = vmatprep.mubr.bf16.mxu0 0
      %749 = vmatmul.mubr.bf16.gmra.mrb[0].mxu0 %v711
      %v750 = vpop.f32.mrb[0].mxu0
      %v751 = vadd.f32 %v585, %v750
      %v752 = vpop.f32.mrb[0].mxu0
      %v753 = vpop.f32.mrb[0].mxu0
      %v754 = vadd.f32 %v585, %v753
      %v755 = vpop.f32.mrb[0].mxu0
      %756 = vdwg.mxu0
      %v757 = vsel %vm636, %v751, -inf
      %758 = vmax.xlane.f32.xlu0 %v757
      %v759 = vpop.xlane.xlu0 %758
      %v760 = vsel %vm636, %v754, -inf
      %761 = vmax.xlane.f32.xlu0 %v760
      %v762 = vpop.xlane.xlu0 %761
      %v763 = vsub.f32 %v751, %v759
      %v764 = vsub.f32 %v754, %v762
      %v765 = vmul.f32 %v763, 1.442695
      %v766 = vpow.pop %v765
      %v767 = vmul.f32 %v764, 1.442695
      %v768 = vpow.pop %v767
      %v769 = vsel %vm636, %v766, 0.0
      %770 = vadd.xlane.f32.xlu0 %v769
      %v771 = vpop.xlane.xlu0 %770
      %v772 = vsel %vm636, %v768, 0.0
      %773 = vadd.xlane.f32.xlu0 %v772
      %v774 = vpop.xlane.xlu0 %773
      %v775 = vrcp.pop %v771
      %v776 = vrcp.pop %v774
      %v777 = vmul.f32 %v766, %v775
      %v778 = vmul.f32 %v768, %v776
      %v779 = vpack.c.bf16 %v778, %v777
      %781 = vrot.lane.b32.xlu0 %v580, 120
      %v782 = vpop.permute.xlu0 %781
      %v785 = vsel %vm636, %v779, 0
      %787 = vmatprep.subr.bf16.mxu0 0
      %788 = vmatpush1.bf16.msra.mxu0 %v782
      %789 = vmatprep.subr.bf16.mxu0 0
      %790 = vmatpush1.bf16.msra.mxu0 0
      %791 = vmatprep.subr.bf16.mxu0 0
      %792 = vmatpush1.bf16.msra.mxu0 0
      %793 = vmatprep.subr.bf16.mxu0 0
      %794 = vmatpush1.bf16.msra.mxu0 0
      %795 = vmatprep.subr.bf16.mxu0 0
      %796 = vmatpush1.bf16.msra.mxu0 0
      %797 = vmatprep.subr.bf16.mxu0 0
      %798 = vmatpush1.bf16.msra.mxu0 0
      %799 = vmatprep.subr.bf16.mxu0 0
      %800 = vmatpush1.bf16.msra.mxu0 0
      %801 = vmatprep.subr.bf16.mxu0 0
      %802 = vmatpush1.bf16.msra.mxu0 0
      %803 = vmatprep.subr.bf16.mxu0 0
      %804 = vmatpush1.bf16.msra.mxu0 0
      %805 = vmatprep.subr.bf16.mxu0 0
      %806 = vmatpush1.bf16.msra.mxu0 0
      %807 = vmatprep.subr.bf16.mxu0 0
      %808 = vmatpush1.bf16.msra.mxu0 0
      %809 = vmatprep.subr.bf16.mxu0 0
      %810 = vmatpush1.bf16.msra.mxu0 0
      %811 = vmatprep.subr.bf16.mxu0 0
      %812 = vmatpush1.bf16.msra.mxu0 0
      %813 = vmatprep.subr.bf16.mxu0 0
      %814 = vmatpush1.bf16.msra.mxu0 0
      %815 = vmatprep.subr.bf16.mxu0 0
      %816 = vmatpush1.bf16.msra.mxu0 0
      %817 = vmatprep.subr.bf16.mxu0 0
      %818 = vmatpush1.bf16.msra.mxu0 0
      %819 = vmatprep.mubr.bf16.mxu0 0
      %820 = vmatmul.mubr.bf16.gmra.mrb[0].mxu0 %v785
      %v821 = vpop.f32.mrb[0].mxu0
      %v822 = vadd.f32 0.0, %v821
      %v823 = vpop.f32.mrb[0].mxu0
      %v824 = vpop.f32.mrb[0].mxu0
      %v825 = vadd.f32 0.0, %v824
      %v826 = vpop.f32.mrb[0].mxu0
      %827 = vdwg.mxu0
      %830 = vrot.lane.b32.xlu0 %v822, 8
      %v831 = vpop.permute.xlu0 %830
      %832 = vrot.lane.b32.xlu0 %v825, 8
      %v833 = vpop.permute.xlu0 %832
      %vm836 = vcmask 130112
      %837 = vst.msk [vmem:[#allocation2] sm:$0xff] %vm836, %v831
      %838 = vst.msk [vmem:[#allocation2 + $0x8] sm:$0xff] %vm836, %v833
      %v839 = vpack.c.bf16 %v564, %v564
      %840 = vrot.lane.b32.xlu0 %v578, 112
      %v841 = vpop.permute.xlu0 %840
      %v843 = vsel %vm587, %v841, 0
      %v846 = vsel %vm591, %v839, 0
      %848 = vmatprep.subr.bf16.mxu0 0
      %849 = vmatpush1.bf16.msra.mxu0 %v846
      %850 = vmatprep.subr.bf16.mxu0 0
      %851 = vmatpush1.bf16.msra.mxu0 0
      %852 = vmatprep.subr.bf16.mxu0 0
      %853 = vmatpush1.bf16.msra.mxu0 0
      %854 = vmatprep.subr.bf16.mxu0 0
      %855 = vmatpush1.bf16.msra.mxu0 0
      %856 = vmatprep.subr.bf16.mxu0 0
      %857 = vmatpush1.bf16.msra.mxu0 0
      %858 = vmatprep.subr.bf16.mxu0 0
      %859 = vmatpush1.bf16.msra.mxu0 0
      %860 = vmatprep.subr.bf16.mxu0 0
      %861 = vmatpush1.bf16.msra.mxu0 0
      %862 = vmatprep.subr.bf16.mxu0 0
      %863 = vmatpush1.bf16.msra.mxu0 0
      %864 = vmatprep.subr.bf16.mxu0 0
      %865 = vmatpush1.bf16.msra.mxu0 0
      %866 = vmatprep.subr.bf16.mxu0 0
      %867 = vmatpush1.bf16.msra.mxu0 0
      %868 = vmatprep.subr.bf16.mxu0 0
      %869 = vmatpush1.bf16.msra.mxu0 0
      %870 = vmatprep.subr.bf16.mxu0 0
      %871 = vmatpush1.bf16.msra.mxu0 0
      %872 = vmatprep.subr.bf16.mxu0 0
      %873 = vmatpush1.bf16.msra.mxu0 0
      %874 = vmatprep.subr.bf16.mxu0 0
      %875 = vmatpush1.bf16.msra.mxu0 0
      %876 = vmatprep.subr.bf16.mxu0 0
      %877 = vmatpush1.bf16.msra.mxu0 0
      %878 = vmatprep.subr.bf16.mxu0 0
      %879 = vmatpush1.bf16.msra.mxu0 0
      %880 = vmatprep.mubr.bf16.mxu0 0
      %881 = vmatmul.mubr.bf16.gmra.mrb[0].mxu0 %v843
      %v882 = vpop.f32.mrb[0].mxu0
      %v883 = vadd.f32 %v585, %v882
      %v884 = vpop.f32.mrb[0].mxu0
      %v885 = vpop.f32.mrb[0].mxu0
      %v886 = vadd.f32 %v585, %v885
      %v887 = vpop.f32.mrb[0].mxu0
      %888 = vdwg.mxu0
      %v889 = vsel %vm636, %v883, -inf
      %890 = vmax.xlane.f32.xlu0 %v889
      %v891 = vpop.xlane.xlu0 %890
      %v892 = vsel %vm636, %v886, -inf
      %893 = vmax.xlane.f32.xlu0 %v892
      %v894 = vpop.xlane.xlu0 %893
      %v895 = vsub.f32 %v883, %v891
      %v896 = vsub.f32 %v886, %v894
      %v897 = vmul.f32 %v895, 1.442695
      %v898 = vpow.pop %v897
      %v899 = vmul.f32 %v896, 1.442695
      %v900 = vpow.pop %v899
      %v901 = vsel %vm636, %v898, 0.0
      %902 = vadd.xlane.f32.xlu0 %v901
      %v903 = vpop.xlane.xlu0 %902
      %v904 = vsel %vm636, %v900, 0.0
      %905 = vadd.xlane.f32.xlu0 %v904
      %v906 = vpop.xlane.xlu0 %905
      %v907 = vrcp.pop %v903
      %v908 = vrcp.pop %v906
      %v909 = vmul.f32 %v898, %v907
      %v910 = vmul.f32 %v900, %v908
      %v911 = vpack.c.bf16 %v910, %v909
      %912 = vrot.lane.b32.xlu0 %v580, 112
      %v913 = vpop.permute.xlu0 %912
      %v916 = vsel %vm636, %v911, 0
      %918 = vmatprep.subr.bf16.mxu0 0
      %919 = vmatpush1.bf16.msra.mxu0 %v913
      %920 = vmatprep.subr.bf16.mxu0 0
      %921 = vmatpush1.bf16.msra.mxu0 0
      %922 = vmatprep.subr.bf16.mxu0 0
      %923 = vmatpush1.bf16.msra.mxu0 0
      %924 = vmatprep.subr.bf16.mxu0 0
      %925 = vmatpush1.bf16.msra.mxu0 0
      %926 = vmatprep.subr.bf16.mxu0 0
      %927 = vmatpush1.bf16.msra.mxu0 0
      %928 = vmatprep.subr.bf16.mxu0 0
      %929 = vmatpush1.bf16.msra.mxu0 0
      %930 = vmatprep.subr.bf16.mxu0 0
      %931 = vmatpush1.bf16.msra.mxu0 0
      %932 = vmatprep.subr.bf16.mxu0 0
      %933 = vmatpush1.bf16.msra.mxu0 0
      %934 = vmatprep.subr.bf16.mxu0 0
      %935 = vmatpush1.bf16.msra.mxu0 0
      %936 = vmatprep.subr.bf16.mxu0 0
      %937 = vmatpush1.bf16.msra.mxu0 0
      %938 = vmatprep.subr.bf16.mxu0 0
      %939 = vmatpush1.bf16.msra.mxu0 0
      %940 = vmatprep.subr.bf16.mxu0 0
      %941 = vmatpush1.bf16.msra.mxu0 0
      %942 = vmatprep.subr.bf16.mxu0 0
      %943 = vmatpush1.bf16.msra.mxu0 0
      %944 = vmatprep.subr.bf16.mxu0 0
      %945 = vmatpush1.bf16.msra.mxu0 0
      %946 = vmatprep.subr.bf16.mxu0 0
      %947 = vmatpush1.bf16.msra.mxu0 0
      %948 = vmatprep.subr.bf16.mxu0 0
      %949 = vmatpush1.bf16.msra.mxu0 0
      %950 = vmatprep.mubr.bf16.mxu0 0
      %951 = vmatmul.mubr.bf16.gmra.mrb[0].mxu0 %v916
      %v952 = vpop.f32.mrb[0].mxu0
      %v953 = vadd.f32 0.0, %v952
      %v954 = vpop.f32.mrb[0].mxu0
      %v955 = vpop.f32.mrb[0].mxu0
      %v956 = vadd.f32 0.0, %v955
      %v957 = vpop.f32.mrb[0].mxu0
      %958 = vdwg.mxu0
      %961 = vrot.lane.b32.xlu0 %v953, 16
      %v962 = vpop.permute.xlu0 %961
      %963 = vrot.lane.b32.xlu0 %v956, 16
      %v964 = vpop.permute.xlu0 %963
      %vm967 = vcmask 195712
      %968 = vst.msk [vmem:[#allocation2] sm:$0xff] %vm967, %v962
      %969 = vst.msk [vmem:[#allocation2 + $0x8] sm:$0xff] %vm967, %v964
      %v970 = vpack.c.bf16 %v565, %v565
      %971 = vrot.lane.b32.xlu0 %v578, 104
      %v972 = vpop.permute.xlu0 %971
      %v974 = vsel %vm587, %v972, 0
      %v977 = vsel %vm591, %v970, 0
      %979 = vmatprep.subr.bf16.mxu0 0
      %980 = vmatpush1.bf16.msra.mxu0 %v977
      %981 = vmatprep.subr.bf16.mxu0 0
      %982 = vmatpush1.bf16.msra.mxu0 0
      %983 = vmatprep.subr.bf16.mxu0 0
      %984 = vmatpush1.bf16.msra.mxu0 0
      %985 = vmatprep.subr.bf16.mxu0 0
      %986 = vmatpush1.bf16.msra.mxu0 0
      %987 = vmatprep.subr.bf16.mxu0 0
      %988 = vmatpush1.bf16.msra.mxu0 0
      %989 = vmatprep.subr.bf16.mxu0 0
      %990 = vmatpush1.bf16.msra.mxu0 0
      %991 = vmatprep.subr.bf16.mxu0 0
      %992 = vmatpush1.bf16.msra.mxu0 0
      %993 = vmatprep.subr.bf16.mxu0 0
      %994 = vmatpush1.bf16.msra.mxu0 0
      %995 = vmatprep.subr.bf16.mxu0 0
      %996 = vmatpush1.bf16.msra.mxu0 0
      %997 = vmatprep.subr.bf16.mxu0 0
      %998 = vmatpush1.bf16.msra.mxu0 0
      %999 = vmatprep.subr.bf16.mxu0 0
      %1000 = vmatpush1.bf16.msra.mxu0 0
      %1001 = vmatprep.subr.bf16.mxu0 0
      %1002 = vmatpush1.bf16.msra.mxu0 0
      %1003 = vmatprep.subr.bf16.mxu0 0
      %1004 = vmatpush1.bf16.msra.mxu0 0
      %1005 = vmatprep.subr.bf16.mxu0 0
      %1006 = vmatpush1.bf16.msra.mxu0 0
      %1007 = vmatprep.subr.bf16.mxu0 0
      %1008 = vmatpush1.bf16.msra.mxu0 0
      %1009 = vmatprep.subr.bf16.mxu0 0
      %1010 = vmatpush1.bf16.msra.mxu0 0
      %1011 = vmatprep.mubr.bf16.mxu0 0
      %1012 = vmatmul.mubr.bf16.gmra.mrb[0].mxu0 %v974
      %v1013 = vpop.f32.mrb[0].mxu0
      %v1014 = vadd.f32 %v585, %v1013
      %v1015 = vpop.f32.mrb[0].mxu0
      %v1016 = vpop.f32.mrb[0].mxu0
      %v1017 = vadd.f32 %v585, %v1016
      %v1018 = vpop.f32.mrb[0].mxu0
      %1019 = vdwg.mxu0
      %v1020 = vsel %vm636, %v1014, -inf
      %1021 = vmax.xlane.f32.xlu0 %v1020
      %v1022 = vpop.xlane.xlu0 %1021
      %v1023 = vsel %vm636, %v1017, -inf
      %1024 = vmax.xlane.f32.xlu0 %v1023
      %v1025 = vpop.xlane.xlu0 %1024
      %v1026 = vsub.f32 %v1014, %v1022
      %v1027 = vsub.f32 %v1017, %v1025
      %v1028 = vmul.f32 %v1026, 1.442695
      %v1029 = vpow.pop %v1028
      %v1030 = vmul.f32 %v1027, 1.442695
      %v1031 = vpow.pop %v1030
      %v1032 = vsel %vm636, %v1029, 0.0
      %1033 = vadd.xlane.f32.xlu0 %v1032
      %v1034 = vpop.xlane.xlu0 %1033
      %v1035 = vsel %vm636, %v1031, 0.0
      %1036 = vadd.xlane.f32.xlu0 %v1035
      %v1037 = vpop.xlane.xlu0 %1036
      %v1038 = vrcp.pop %v1034
      %v1039 = vrcp.pop %v1037
      %v1040 = vmul.f32 %v1029, %v1038
      %v1041 = vmul.f32 %v1031, %v1039
      %v1042 = vpack.c.bf16 %v1041, %v1040
      %1043 = vrot.lane.b32.xlu0 %v580, 104
      %v1044 = vpop.permute.xlu0 %1043
      %v1047 = vsel %vm636, %v1042, 0
      %1049 = vmatprep.subr.bf16.mxu0 0
      %1050 = vmatpush1.bf16.msra.mxu0 %v1044
      %1051 = vmatprep.subr.bf16.mxu0 0
      %1052 = vmatpush1.bf16.msra.mxu0 0
      %1053 = vmatprep.subr.bf16.mxu0 0
      %1054 = vmatpush1.bf16.msra.mxu0 0
      %1055 = vmatprep.subr.bf16.mxu0 0
      %1056 = vmatpush1.bf16.msra.mxu0 0
      %1057 = vmatprep.subr.bf16.mxu0 0
      %1058 = vmatpush1.bf16.msra.mxu0 0
      %1059 = vmatprep.subr.bf16.mxu0 0
      %1060 = vmatpush1.bf16.msra.mxu0 0
      %1061 = vmatprep.subr.bf16.mxu0 0
      %1062 = vmatpush1.bf16.msra.mxu0 0
      %1063 = vmatprep.subr.bf16.mxu0 0
      %1064 = vmatpush1.bf16.msra.mxu0 0
      %1065 = vmatprep.subr.bf16.mxu0 0
      %1066 = vmatpush1.bf16.msra.mxu0 0
      %1067 = vmatprep.subr.bf16.mxu0 0
      %1068 = vmatpush1.bf16.msra.mxu0 0
      %1069 = vmatprep.subr.bf16.mxu0 0
      %1070 = vmatpush1.bf16.msra.mxu0 0
      %1071 = vmatprep.subr.bf16.mxu0 0
      %1072 = vmatpush1.bf16.msra.mxu0 0
      %1073 = vmatprep.subr.bf16.mxu0 0
      %1074 = vmatpush1.bf16.msra.mxu0 0
      %1075 = vmatprep.subr.bf16.mxu0 0
      %1076 = vmatpush1.bf16.msra.mxu0 0
      %1077 = vmatprep.subr.bf16.mxu0 0
      %1078 = vmatpush1.bf16.msra.mxu0 0
      %1079 = vmatprep.subr.bf16.mxu0 0
      %1080 = vmatpush1.bf16.msra.mxu0 0
      %1081 = vmatprep.mubr.bf16.mxu0 0
      %1082 = vmatmul.mubr.bf16.gmra.mrb[0].mxu0 %v1047
      %v1083 = vpop.f32.mrb[0].mxu0
      %v1084 = vadd.f32 0.0, %v1083
      %v1085 = vpop.f32.mrb[0].mxu0
      %v1086 = vpop.f32.mrb[0].mxu0
      %v1087 = vadd.f32 0.0, %v1086
      %v1088 = vpop.f32.mrb[0].mxu0
      %1089 = vdwg.mxu0
      %1092 = vrot.lane.b32.xlu0 %v1084, 24
      %v1093 = vpop.permute.xlu0 %1092
      %1094 = vrot.lane.b32.xlu0 %v1087, 24
      %v1095 = vpop.permute.xlu0 %1094
      %vm1098 = vcmask 261312
      %1099 = vst.msk [vmem:[#allocation2] sm:$0xff] %vm1098, %v1093
      %1100 = vst.msk [vmem:[#allocation2 + $0x8] sm:$0xff] %vm1098, %v1095
      %v1101 = vld [vmem:[#allocation2] sm:$0xff]
      %v1102 = vld [vmem:[#allocation2 + $0x8] sm:$0xff]
      %v1103 = vpack.c.bf16 %v1102, %v1101
      %v1104 = vld [vmem:[%s6] sm:$0xf]
      %v1105 = vld [vmem:[%s6 + $0x4] sm:$0xf]
      %v1106 = vld [vmem:[%s6 + $0x8] sm:$0xf]
      %v1107 = vld [vmem:[%s6 + $0xc] sm:$0xf]
      %v1108 = vlaneseq
      %v1109 = vshrl.u32 %v1108, 7
      %v1110 = vsub.s32 0, %v1109
      %v1111 = vrot.slane %v351, %v1110
      %v1116 = vunpack.c.l.b16 %v1104
      %v1117 = vunpack.c.l.b16 %v1105
      %v1118 = vunpack.c.l.b16 %v1106
      %v1119 = vunpack.c.l.b16 %v1107
      %v1120 = vpack.c.b16 %v1117, %v1116
      %v1121 = vpack.c.b16 %v1119, %v1118
      %v1125 = vsel %vm375, %v1103, 0
      %1127 = vmatprep.subr.bf16.mxu0 0
      %1128 = vmatpush1.bf16.msra.mxu0 %v1120
      %1129 = vmatprep.subr.bf16.mxu0 0
      %1130 = vmatpush1.bf16.msra.mxu0 %v1121
      %1131 = vmatprep.subr.bf16.mxu0 0
      %1132 = vmatpush1.bf16.msra.mxu0 0
      %1133 = vmatprep.subr.bf16.mxu0 0
      %1134 = vmatpush1.bf16.msra.mxu0 0
      %1135 = vmatprep.subr.bf16.mxu0 0
      %1136 = vmatpush1.bf16.msra.mxu0 0
      %1137 = vmatprep.subr.bf16.mxu0 0
      %1138 = vmatpush1.bf16.msra.mxu0 0
      %1139 = vmatprep.subr.bf16.mxu0 0
      %1140 = vmatpush1.bf16.msra.mxu0 0
      %1141 = vmatprep.subr.bf16.mxu0 0
      %1142 = vmatpush1.bf16.msra.mxu0 0
      %1143 = vmatprep.subr.bf16.mxu0 0
      %1144 = vmatpush1.bf16.msra.mxu0 0
      %1145 = vmatprep.subr.bf16.mxu0 0
      %1146 = vmatpush1.bf16.msra.mxu0 0
      %1147 = vmatprep.subr.bf16.mxu0 0
      %1148 = vmatpush1.bf16.msra.mxu0 0
      %1149 = vmatprep.subr.bf16.mxu0 0
      %1150 = vmatpush1.bf16.msra.mxu0 0
      %1151 = vmatprep.subr.bf16.mxu0 0
      %1152 = vmatpush1.bf16.msra.mxu0 0
      %1153 = vmatprep.subr.bf16.mxu0 0
      %1154 = vmatpush1.bf16.msra.mxu0 0
      %1155 = vmatprep.subr.bf16.mxu0 0
      %1156 = vmatpush1.bf16.msra.mxu0 0
      %1157 = vmatprep.subr.bf16.mxu0 0
      %1158 = vmatpush1.bf16.msra.mxu0 0
      %1159 = vmatprep.mubr.bf16.mxu0 0
      %1160 = vmatmul.mubr.bf16.gmra.mrb[0].mxu0 %v1125
      %v1161 = vpop.f32.mrb[0].mxu0
      %v1162 = vadd.f32 %v1111, %v1161
      %v1163 = vpop.f32.mrb[0].mxu0
      %v1164 = vpop.f32.mrb[0].mxu0
      %v1165 = vadd.f32 %v1111, %v1164
      %v1166 = vpop.f32.mrb[0].mxu0
      %1167 = vdwg.mxu0
      %v1168 = vadd.f32 %v341, %v1162
      %v1169 = vadd.f32 %v342, %v1165
      %v1170 = vsel %vm375, %v1168, 0.0
      %1171 = vadd.xlane.f32.xlu0 %v1170
      %v1172 = vpop.xlane.xlu0 %1171
      %v1173 = vsel %vm375, %v1169, 0.0
      %1174 = vadd.xlane.f32.xlu0 %v1173
      %v1175 = vpop.xlane.xlu0 %1174
      %v1176 = vrcp.pop 32.0
      %v1177 = vmul.f32 %v1172, %v1176
      %v1178 = vmul.f32 %v1175, %v1176
      %v1179 = vsub.f32 %v1168, %v1177
      %v1180 = vsub.f32 %v1169, %v1178
      %v1181 = vmul.f32 %v1179, %v1179
      %v1182 = vmul.f32 %v1180, %v1180
      %v1183 = vsel %vm375, %v1181, 0.0
      %1184 = vadd.xlane.f32.xlu0 %v1183
      %v1185 = vpop.xlane.xlu0 %1184
      %v1186 = vsel %vm375, %v1182, 0.0
      %1187 = vadd.xlane.f32.xlu0 %v1186
      %v1188 = vpop.xlane.xlu0 %1187
      %v1189 = vmul.f32 %v1185, %v1176
      %v1190 = vmul.f32 %v1188, %v1176
      %v1191 = vadd.f32 %v1189, 1e-05
      %v1192 = vadd.f32 %v1190, 1e-05
      %v1193 = vrsqrt.pop %v1191
      %v1194 = vrsqrt.pop %v1192
      %v1195 = vmul.f32 %v1179, %v1193
      %v1196 = vmul.f32 %v1180, %v1194
      %v1197 = vlaneseq
      %v1198 = vshrl.u32 %v1197, 7
      %v1199 = vsub.s32 0, %v1198
      %v1200 = vrot.slane %v352, %v1199
      %v1201 = vmul.f32 %v1195, %v1200
      %v1202 = vmul.f32 %v1196, %v1200
      %v1203 = vlaneseq
      %v1204 = vshrl.u32 %v1203, 7
      %v1205 = vsub.s32 0, %v1204
      %v1206 = vrot.slane %v353, %v1205
      %v1207 = vadd.f32 %v1201, %v1206
      %v1208 = vadd.f32 %v1202, %v1206
      %1209 = vst.msk [vmem:[%s339] sm:$0xff] %vm375, %v1207
      %1210 = vst.msk [vmem:[%s339 + $0x8] sm:$0xff] %vm375, %v1208
      %p1211 = scmp.lt.s32.totalorder %s19, 1
      %s1212 = scalar_select %p1211, %s19, 1
      %s1213 = smul.addr %s1212, 2
      %s1214 = smul.addr %s1213, 8
      %s1215 = scalar_lea.vmem %s8, %s1214
      // Predicated region
      $region53: #{cross_attention_forward.5} parent=51 // pred_check
        %p1216 = pneg %p220
      $region54: #{cross_attention_forward.5} parent=51 // pred_check_branch
        %1218 = sbr.rel (%p1216) target = $region56
      $region55: #{cross_attention_forward.5} parent=51 // pred_region
        _
      $region56: #{cross_attention_forward.5} parent=51 // pred_fallthru
        _
    $region52: #{cross_attention_forward.5} parent=5 // pred_fallthru
      _
    %p1219 = scmp.le.s32.totalorder 2, %s14
    // Predicated region
    $region57: #{cross_attention_forward.5} parent=5 // pred_check
      %p1220 = pneg %p1219
    $region58: #{cross_attention_forward.5} parent=5 // pred_check_branch
      %1222 = sbr.rel (%p1220) target = $region60
    $region59: #{cross_attention_forward.5} parent=5 // pred_region
      %s1223 = ssub.s32 %s14, 2
      // Predicated region
      $region61: #{cross_attention_forward.5} parent=59 // pred_check
        %p1224 = pneg %p226
      $region62: #{cross_attention_forward.5} parent=59 // pred_check_branch
        %1226 = sbr.rel (%p1224) target = $region64
      $region63: #{cross_attention_forward.5} parent=59 // pred_region
        %p1227 = scmp.lt.s32.totalorder %s20, 1
        %s1228 = scalar_select %p1227, %s20, 1
        %s1229 = smul.addr %s1228, 2
        %s1230 = smul.addr %s1229, 8
        %s1231 = scalar_lea.vmem %s8, %s1230
      $region64: #{cross_attention_forward.5} parent=59 // pred_fallthru
        _
    $region60: #{cross_attention_forward.5} parent=5 // pred_fallthru
      _
  $region6: #{cross_attention_forward.5} parent=0 // loop_footer
    %s18 = sadd.s32 1, %s14
  $region7: #{cross_attention_forward.5} parent=0 // loop_footer_branch
    %13 = sbr.rel target = $region3
  $region8: #{cross_attention_forward.5} parent=0 // loop_exit
    _

// kernel: cross_attention_forward.4
$region0: #{cross_attention_forward.4}
  #allocation0 [shape = 'u32[]', space=smem, size = 0x4, offset = 0x4, fixed_abs, tag = 'smem constant byte address 0x4 - core index']
  #allocation1 [shape = 'u32[144,128]{1,0:T(1,128)}', space=vmem, size = 0x12000, scoped, tag = 'internal scratch']
  #allocation2 [shape = 'f32[8,32]{1,0:T(8,128)}', space=vmem, size = 0x1000, scoped, tag = 'scratch operand']
  %s0 = inlined_call_operand.vmem [shape: f32[2,8,32], index: 0, kind: input, shape index: {}]
  %s1 = inlined_call_operand.vmem [shape: f32[2,8,32], index: 1, kind: input, shape index: {}]
  %s2 = inlined_call_operand.vmem [shape: f32[2,1,8], index: 2, kind: input, shape index: {}]
  %s3 = inlined_call_operand.vmem [shape: bf16[32,32], index: 3, kind: input, shape index: {}]
  %s4 = inlined_call_operand.vmem [shape: bf16[32,32], index: 4, kind: input, shape index: {}]
  %s5 = inlined_call_operand.vmem [shape: bf16[32,32], index: 5, kind: input, shape index: {}]
  %s6 = inlined_call_operand.vmem [shape: bf16[32,32], index: 6, kind: input, shape index: {}]
  %s7 = inlined_call_operand.vmem [shape: f32[6,32], index: 7, kind: input, shape index: {}]
  %s8 = inlined_call_operand.vmem [shape: f32[2,8,32], index: 8, kind: output, shape index: {}]
  %s9 = sld [smem:[#allocation0]]
  $region65: #{cross_attention_forward.4} parent=0
    _
  %s11 = ssub.s32 1, %s9
  %s12 = scalar_select 0, %s11, %s9
  loop: start=0, step=1, limit=4
  $region2: #{cross_attention_forward.4} parent=0 // loop_pre_header
    _
  $region3: #{cross_attention_forward.4} parent=0 // loop_header
    %s14 = sphi 0, %s18
    %p15 = scmp.ge.s32.totalorder %s14, 4
    %s24 = sphi 0, %s26
    %s27 = sphi 0, %s24
    %s28 = sphi 0, %s27
    %s44 = sphi 0, %s28
    %s50 = sphi 0, %s52
    %s53 = sphi 0, %s50
    %s54 = sphi 0, %s53
    %s70 = sphi 0, %s54
    %s76 = sphi 0, %s78
    %s79 = sphi 0, %s76
    %s80 = sphi 0, %s79
    %s96 = sphi 0, %s80
    %s100 = sphi 0, %s100
    %s102 = sphi 0, %s100
    %s103 = sphi 0, %s102
    %s117 = sphi 0, %s103
    %s121 = sphi 0, %s121
    %s123 = sphi 0, %s121
    %s124 = sphi 0, %s123
    %s138 = sphi 0, %s124
    %s142 = sphi 0, %s142
    %s144 = sphi 0, %s142
    %s145 = sphi 0, %s144
    %s159 = sphi 0, %s145
    %s163 = sphi 0, %s163
    %s165 = sphi 0, %s163
    %s166 = sphi 0, %s165
    %s180 = sphi 0, %s166
    %s184 = sphi 0, %s184
    %s186 = sphi 0, %s184
    %s187 = sphi 0, %s186
    %s201 = sphi 0, %s187
    %s207 = sphi 0, %s209
    %s210 = sphi 0, %s207
    %s211 = sphi 0, %s210
    %s227 = sphi 0, %s211
  $region4: #{cross_attention_forward.4} parent=0 // loop_header_branch
    %17 = sbr.rel (%p15) target = $region8
  $region5: #{cross_attention_forward.4} parent=0 // loop_body
    %s19 = ssub.s32 %s14, 1
    %s20 = ssub.s32 %s14, 2
    %s21 = sadd.s32 %s14, 1
    %s22 = ssub.s32 %s14, %s21
    %p23 = scmp.eq.s32.totalorder %s22, 0
    %s25 = sadd.s32 %s24, 1
    %s26 = scalar_select %p23, %s24, %s25
    %p29 = pneg %p23
    %p30 = scmp.eq.s32.totalorder %s14, 1
    %p31 = por %p29, %p30
    %p32 = scmp.ne.s32.totalorder %s24, %s27
    %p33 = scmp.eq.s32.totalorder %s14, 0
    %p34 = por %p32, %p33
    %p35 = scmp.ne.s32.totalorder %s24, %s27
    %p36 = scmp.eq.s32.totalorder %s19, 1
    %p37 = por %p35, %p36
    %p38 = scmp.ne.s32.totalorder %s27, %s28
    %p39 = scmp.eq.s32.totalorder %s19, 0
    %p40 = por %p38, %p39
    %p41 = scmp.ne.s32.totalorder %s27, %s28
    %p42 = scmp.eq.s32.totalorder %s20, 1
    %p43 = por %p41, %p42
    %p45 = scmp.ne.s32.totalorder %s28, %s44
    %p46 = scmp.eq.s32.totalorder %s20, 0
    %p47 = por %p45, %p46
    %s48 = ssub.s32 %s14, %s21
    %p49 = scmp.eq.s32.totalorder %s48, 0
    %s51 = sadd.s32 %s50, 1
    %s52 = scalar_select %p49, %s50, %s51
    %p55 = pneg %p49
    %p56 = scmp.eq.s32.totalorder %s14, 1
    %p57 = por %p55, %p56
    %p58 = scmp.ne.s32.totalorder %s50, %s53
    %p59 = scmp.eq.s32.totalorder %s14, 0
    %p60 = por %p58, %p59
    %p61 = scmp.ne.s32.totalorder %s50, %s53
    %p62 = scmp.eq.s32.totalorder %s19, 1
    %p63 = por %p61, %p62
    %p64 = scmp.ne.s32.totalorder %s53, %s54
    %p65 = scmp.eq.s32.totalorder %s19, 0
    %p66 = por %p64, %p65
    %p67 = scmp.ne.s32.totalorder %s53, %s54
    %p68 = scmp.eq.s32.totalorder %s20, 1
    %p69 = por %p67, %p68
    %p71 = scmp.ne.s32.totalorder %s54, %s70
    %p72 = scmp.eq.s32.totalorder %s20, 0
    %p73 = por %p71, %p72
    %s74 = ssub.s32 %s14, %s21
    %p75 = scmp.eq.s32.totalorder %s74, 0
    %s77 = sadd.s32 %s76, 1
    %s78 = scalar_select %p75, %s76, %s77
    %p81 = pneg %p75
    %p82 = scmp.eq.s32.totalorder %s14, 1
    %p83 = por %p81, %p82
    %p84 = scmp.ne.s32.totalorder %s76, %s79
    %p85 = scmp.eq.s32.totalorder %s14, 0
    %p86 = por %p84, %p85
    %p87 = scmp.ne.s32.totalorder %s76, %s79
    %p88 = scmp.eq.s32.totalorder %s19, 1
    %p89 = por %p87, %p88
    %p90 = scmp.ne.s32.totalorder %s79, %s80
    %p91 = scmp.eq.s32.totalorder %s19, 0
    %p92 = por %p90, %p91
    %p93 = scmp.ne.s32.totalorder %s79, %s80
    %p94 = scmp.eq.s32.totalorder %s20, 1
    %p95 = por %p93, %p94
    %p97 = scmp.ne.s32.totalorder %s80, %s96
    %p98 = scmp.eq.s32.totalorder %s20, 0
    %p99 = por %p97, %p98
    %s101 = sadd.s32 %s100, 1
    %p104 = scmp.eq.s32.totalorder %s14, 1
    %p105 = scmp.ne.s32.totalorder %s100, %s102
    %p106 = scmp.eq.s32.totalorder %s14, 0
    %p107 = por %p105, %p106
    %p108 = scmp.ne.s32.totalorder %s100, %s102
    %p109 = scmp.eq.s32.totalorder %s19, 1
    %p110 = por %p108, %p109
    %p111 = scmp.ne.s32.totalorder %s102, %s103
    %p112 = scmp.eq.s32.totalorder %s19, 0
    %p113 = por %p111, %p112
    %p114 = scmp.ne.s32.totalorder %s102, %s103
    %p115 = scmp.eq.s32.totalorder %s20, 1
    %p116 = por %p114, %p115
    %p118 = scmp.ne.s32.totalorder %s103, %s117
    %p119 = scmp.eq.s32.totalorder %s20, 0
    %p120 = por %p118, %p119
    %s122 = sadd.s32 %s121, 1
    %p125 = scmp.eq.s32.totalorder %s14, 1
    %p126 = scmp.ne.s32.totalorder %s121, %s123
    %p127 = scmp.eq.s32.totalorder %s14, 0
    %p128 = por %p126, %p127
    %p129 = scmp.ne.s32.totalorder %s121, %s123
    %p130 = scmp.eq.s32.totalorder %s19, 1
    %p131 = por %p129, %p130
    %p132 = scmp.ne.s32.totalorder %s123, %s124
    %p133 = scmp.eq.s32.totalorder %s19, 0
    %p134 = por %p132, %p133
    %p135 = scmp.ne.s32.totalorder %s123, %s124
    %p136 = scmp.eq.s32.totalorder %s20, 1
    %p137 = por %p135, %p136
    %p139 = scmp.ne.s32.totalorder %s124, %s138
    %p140 = scmp.eq.s32.totalorder %s20, 0
    %p141 = por %p139, %p140
    %s143 = sadd.s32 %s142, 1
    %p146 = scmp.eq.s32.totalorder %s14, 1
    %p147 = scmp.ne.s32.totalorder %s142, %s144
    %p148 = scmp.eq.s32.totalorder %s14, 0
    %p149 = por %p147, %p148
    %p150 = scmp.ne.s32.totalorder %s142, %s144
    %p151 = scmp.eq.s32.totalorder %s19, 1
    %p152 = por %p150, %p151
    %p153 = scmp.ne.s32.totalorder %s144, %s145
    %p154 = scmp.eq.s32.totalorder %s19, 0
    %p155 = por %p153, %p154
    %p156 = scmp.ne.s32.totalorder %s144, %s145
    %p157 = scmp.eq.s32.totalorder %s20, 1
    %p158 = por %p156, %p157
    %p160 = scmp.ne.s32.totalorder %s145, %s159
    %p161 = scmp.eq.s32.totalorder %s20, 0
    %p162 = por %p160, %p161
    %s164 = sadd.s32 %s163, 1
    %p167 = scmp.eq.s32.totalorder %s14, 1
    %p168 = scmp.ne.s32.totalorder %s163, %s165
    %p169 = scmp.eq.s32.totalorder %s14, 0
    %p170 = por %p168, %p169
    %p171 = scmp.ne.s32.totalorder %s163, %s165
    %p172 = scmp.eq.s32.totalorder %s19, 1
    %p173 = por %p171, %p172
    %p174 = scmp.ne.s32.totalorder %s165, %s166
    %p175 = scmp.eq.s32.totalorder %s19, 0
    %p176 = por %p174, %p175
    %p177 = scmp.ne.s32.totalorder %s165, %s166
    %p178 = scmp.eq.s32.totalorder %s20, 1
    %p179 = por %p177, %p178
    %p181 = scmp.ne.s32.totalorder %s166, %s180
    %p182 = scmp.eq.s32.totalorder %s20, 0
    %p183 = por %p181, %p182
    %s185 = sadd.s32 %s184, 1
    %p188 = scmp.eq.s32.totalorder %s14, 1
    %p189 = scmp.ne.s32.totalorder %s184, %s186
    %p190 = scmp.eq.s32.totalorder %s14, 0
    %p191 = por %p189, %p190
    %p192 = scmp.ne.s32.totalorder %s184, %s186
    %p193 = scmp.eq.s32.totalorder %s19, 1
    %p194 = por %p192, %p193
    %p195 = scmp.ne.s32.totalorder %s186, %s187
    %p196 = scmp.eq.s32.totalorder %s19, 0
    %p197 = por %p195, %p196
    %p198 = scmp.ne.s32.totalorder %s186, %s187
    %p199 = scmp.eq.s32.totalorder %s20, 1
    %p200 = por %p198, %p199
    %p202 = scmp.ne.s32.totalorder %s187, %s201
    %p203 = scmp.eq.s32.totalorder %s20, 0
    %p204 = por %p202, %p203
    %s205 = ssub.s32 %s14, %s21
    %p206 = scmp.eq.s32.totalorder %s205, 0
    %s208 = sadd.s32 %s207, 1
    %s209 = scalar_select %p206, %s207, %s208
    %p212 = pneg %p206
    %p213 = scmp.eq.s32.totalorder %s14, 1
    %p214 = por %p212, %p213
    %p215 = scmp.ne.s32.totalorder %s207, %s210
    %p216 = scmp.eq.s32.totalorder %s14, 0
    %p217 = por %p215, %p216
    %p218 = scmp.ne.s32.totalorder %s207, %s210
    %p219 = scmp.eq.s32.totalorder %s19, 1
    %p220 = por %p218, %p219
    %p221 = scmp.ne.s32.totalorder %s210, %s211
    %p222 = scmp.eq.s32.totalorder %s19, 0
    %p223 = por %p221, %p222
    %p224 = scmp.ne.s32.totalorder %s210, %s211
    %p225 = scmp.eq.s32.totalorder %s20, 1
    %p226 = por %p224, %p225
    %p228 = scmp.ne.s32.totalorder %s211, %s227
    %p229 = scmp.eq.s32.totalorder %s20, 0
    %p230 = por %p228, %p229
    %p231 = scmp.le.s32.totalorder 1, %s14
    %p232 = scmp.lt.s32.totalorder %s14, 3
    %p233 = pnand %p231, %p232
    %p234 = pneg %p233
    // Predicated region
    $region9: #{cross_attention_forward.4} parent=5 // pred_check
      _
    $region10: #{cross_attention_forward.4} parent=5 // pred_check_branch
      %236 = sbr.rel (%p233) target = $region12
    $region11: #{cross_attention_forward.4} parent=5 // pred_region
      %s237 = ssub.s32 %s14, 1
      // Predicated region
      $region13: #{cross_attention_forward.4} parent=11 // pred_check
        %p238 = pneg %p113
      $region14: #{cross_attention_forward.4} parent=11 // pred_check_branch
        %240 = sbr.rel (%p238) target = $region16
      $region15: #{cross_attention_forward.4} parent=11 // pred_region
        _
      $region16: #{cross_attention_forward.4} parent=11 // pred_fallthru
        _
      // Predicated region
      $region17: #{cross_attention_forward.4} parent=11 // pred_check
        %p241 = pneg %p134
      $region18: #{cross_attention_forward.4} parent=11 // pred_check_branch
        %243 = sbr.rel (%p241) target = $region20
      $region19: #{cross_attention_forward.4} parent=11 // pred_region
        _
      $region20: #{cross_attention_forward.4} parent=11 // pred_fallthru
        _
      // Predicated region
      $region21: #{cross_attention_forward.4} parent=11 // pred_check
        %p244 = pneg %p155
      $region22: #{cross_attention_forward.4} parent=11 // pred_check_branch
        %246 = sbr.rel (%p244) target = $region24
      $region23: #{cross_attention_forward.4} parent=11 // pred_region
        _
      $region24: #{cross_attention_forward.4} parent=11 // pred_fallthru
        _
      // Predicated region
      $region25: #{cross_attention_forward.4} parent=11 // pred_check
        %p247 = pneg %p176
      $region26: #{cross_attention_forward.4} parent=11 // pred_check_branch
        %249 = sbr.rel (%p247) target = $region28
      $region27: #{cross_attention_forward.4} parent=11 // pred_region
        _
      $region28: #{cross_attention_forward.4} parent=11 // pred_fallthru
        _
      // Predicated region
      $region29: #{cross_attention_forward.4} parent=11 // pred_check
        %p250 = pneg %p197
      $region30: #{cross_attention_forward.4} parent=11 // pred_check_branch
        %252 = sbr.rel (%p250) target = $region32
      $region31: #{cross_attention_forward.4} parent=11 // pred_region
        _
      $region32: #{cross_attention_forward.4} parent=11 // pred_fallthru
        _
    $region12: #{cross_attention_forward.4} parent=5 // pred_fallthru
      _
    %p253 = scmp.lt.s32.totalorder %s14, 2
    // Predicated region
    $region33: #{cross_attention_forward.4} parent=5 // pred_check
      %p254 = pneg %p253
    $region34: #{cross_attention_forward.4} parent=5 // pred_check_branch
      %256 = sbr.rel (%p254) target = $region36
    $region35: #{cross_attention_forward.4} parent=5 // pred_region
      // Predicated region
      $region37: #{cross_attention_forward.4} parent=35 // pred_check
        %p257 = pneg %p34
      $region38: #{cross_attention_forward.4} parent=35 // pred_check_branch
        %259 = sbr.rel (%p257) target = $region40
      $region39: #{cross_attention_forward.4} parent=35 // pred_region
        %p260 = scmp.lt.s32.totalorder %s14, 1
        %s261 = scalar_select %p260, %s14, 1
        %s262 = smul.addr %s261, 8
        %s263 = scalar_lea.vmem %s0, %s262
      $region40: #{cross_attention_forward.4} parent=35 // pred_fallthru
        _
      // Predicated region
      $region41: #{cross_attention_forward.4} parent=35 // pred_check
        %p264 = pneg %p60
      $region42: #{cross_attention_forward.4} parent=35 // pred_check_branch
        %266 = sbr.rel (%p264) target = $region44
      $region43: #{cross_attention_forward.4} parent=35 // pred_region
        %p267 = scmp.lt.s32.totalorder %s14, 1
        %s268 = scalar_select %p267, %s14, 1
        %s269 = smul.addr %s268, 8
        %s270 = scalar_lea.vmem %s1, %s269
      $region44: #{cross_attention_forward.4} parent=35 // pred_fallthru
        _
      // Predicated region
      $region45: #{cross_attention_forward.4} parent=35 // pred_check
        %p271 = pneg %p86
      $region46: #{cross_attention_forward.4} parent=35 // pred_check_branch
        %273 = sbr.rel (%p271) target = $region48
      $region47: #{cross_attention_forward.4} parent=35 // pred_region
        %p274 = scmp.lt.s32.totalorder %s14, 1
        %s275 = scalar_select %p274, %s14, 1
        %s276 = scalar_lea.vmem %s2, %s275
      $region48: #{cross_attention_forward.4} parent=35 // pred_fallthru
        _
    $region36: #{cross_attention_forward.4} parent=5 // pred_fallthru
      _
    %p277 = scmp.le.s32.totalorder 1, %s14
    %p278 = scmp.lt.s32.totalorder %s14, 3
    %p279 = pnand %p277, %p278
    %p280 = pneg %p279
    // Predicated region
    $region49: #{cross_attention_forward.4} parent=5 // pred_check
      _
    $region50: #{cross_attention_forward.4} parent=5 // pred_check_branch
      %282 = sbr.rel (%p279) target = $region52
    $region51: #{cross_attention_forward.4} parent=5 // pred_region
      %s283 = ssub.s32 %s14, 1
      %p284 = scmp.lt.s32.totalorder %s19, 1
      %s285 = scalar_select %p284, %s19, 1
      %s286 = smul.addr %s285, 8
      %s287 = scalar_lea.vmem %s0, %s286
      %p288 = pneg %p40
      %p289 = pneg %p37
      %p290 = scmp.lt.s32.totalorder %s19, 1
      %s291 = scalar_select %p290, %s19, 1
      %s292 = smul.addr %s291, 8
      %s293 = scalar_lea.vmem %s1, %s292
      %p294 = pneg %p66
      %p295 = pneg %p63
      %p296 = scmp.lt.s32.totalorder %s19, 1
      %s297 = scalar_select %p296, %s19, 1
      %s298 = scalar_lea.vmem %s2, %s297
      %p299 = pneg %p92
      %p300 = pneg %p89
      %p301 = pneg %p113
      %p302 = pneg %p110
      %p303 = pneg %p134
      %p304 = pneg %p131
      %p305 = pneg %p155
      %p306 = pneg %p152
      %p307 = pneg %p176
      %p308 = pneg %p173
      %p309 = pneg %p197
      %p310 = pneg %p194
      %p311 = pneg %p223
      %p312 = pneg %p220
      %p313 = scmp.lt.s32.totalorder %s19, 1
      %s314 = scalar_select %p313, %s19, 1
      %s315 = smul.addr %s314, 8
      %s316 = scalar_lea.vmem %s8, %s315
      %p317 = scmp.lt.s32.totalorder %s19, 1
      %s318 = scalar_select %p317, %s19, 1
      %s319 = smul.addr %s318, 8
      %s320 = scalar_lea.vmem %s0, %s319
      %p321 = scmp.lt.s32.totalorder %s19, 1
      %s322 = scalar_select %p321, %s19, 1
      %s323 = smul.addr %s322, 8
      %s324 = scalar_lea.vmem %s1, %s323
      %p325 = scmp.lt.s32.totalorder %s19, 1
      %s326 = scalar_select %p325, %s19, 1
      %s327 = scalar_lea.vmem %s2, %s326
      %p328 = scmp.lt.s32.totalorder %s19, 1
      %s329 = scalar_select %p328, %s19, 1
      %s330 = smul.addr %s329, 8
      %s331 = scalar_lea.vmem %s8, %s330
      %v333 = vld [vmem:[%s320] sm:$0xff]
      %v334 = vld [vmem:[%s324] sm:$0xff]
      %v335 = vadd.f32 %v333, %v334
      %v336 = vld [vmem:[%s327] sm:$0x1]
      %v337 = vld [vmem:[%s7] sm:$0x1]
      %v338 = vld [vmem:[%s7 + $0x1] sm:$0x1]
      %v339 = vld [vmem:[%s7 + $0x2] sm:$0x1]
      %v340 = vld [vmem:[%s7 + $0x3] sm:$0x1]
      %v341 = vld [vmem:[%s7 + $0x4] sm:$0x1]
      %v342 = vld [vmem:[%s7 + $0x5] sm:$0x1]
      %v343 = vpack.c.bf16 %v335, %v335
      %v344 = vld [vmem:[%s3] sm:$0xf]
      %v345 = vld [vmem:[%s3 + $0x4] sm:$0xf]
      %v346 = vld [vmem:[%s3 + $0x8] sm:$0xf]
      %v347 = vld [vmem:[%s3 + $0xc] sm:$0xf]
      %v348 = vlaneseq
      %v349 = vshrl.u32 %v348, 7
      %v350 = vsub.s32 0, %v349
      %v351 = vrot.slane %v337, %v350
      %v356 = vunpack.c.l.b16 %v344
      %v357 = vunpack.c.l.b16 %v345
      %v358 = vunpack.c.l.b16 %v346
      %v359 = vunpack.c.l.b16 %v347
      %v360 = vpack.c.b16 %v357, %v356
      %v361 = vpack.c.b16 %v359, %v358
      %vm364 = vcmask 261120
      %v366 = vsel %vm364, %v343, 0
      %368 = vmatprep.subr.bf16.mxu0 0
      %369 = vmatpush1.bf16.msra.mxu0 %v360
      %370 = vmatprep.subr.bf16.mxu0 0
      %371 = vmatpush1.bf16.msra.mxu0 %v361
      %372 = vmatprep.subr.bf16.mxu0 0
      %373 = vmatpush1.bf16.msra.mxu0 0
      %374 = vmatprep.subr.bf16.mxu0 0
      %375 = vmatpush1.bf16.msra.mxu0 0
      %376 = vmatprep.subr.bf16.mxu0 0
      %377 = vmatpush1.bf16.msra.mxu0 0
      %378 = vmatprep.subr.bf16.mxu0 0
      %379 = vmatpush1.bf16.msra.mxu0 0
      %380 = vmatprep.subr.bf16.mxu0 0
      %381 = vmatpush1.bf16.msra.mxu0 0
      %382 = vmatprep.subr.bf16.mxu0 0
      %383 = vmatpush1.bf16.msra.mxu0 0
      %384 = vmatprep.subr.bf16.mxu0 0
      %385 = vmatpush1.bf16.msra.mxu0 0
      %386 = vmatprep.subr.bf16.mxu0 0
      %387 = vmatpush1.bf16.msra.mxu0 0
      %388 = vmatprep.subr.bf16.mxu0 0
      %389 = vmatpush1.bf16.msra.mxu0 0
      %390 = vmatprep.subr.bf16.mxu0 0
      %391 = vmatpush1.bf16.msra.mxu0 0
      %392 = vmatprep.subr.bf16.mxu0 0
      %393 = vmatpush1.bf16.msra.mxu0 0
      %394 = vmatprep.subr.bf16.mxu0 0
      %395 = vmatpush1.bf16.msra.mxu0 0
      %396 = vmatprep.subr.bf16.mxu0 0
      %397 = vmatpush1.bf16.msra.mxu0 0
      %398 = vmatprep.subr.bf16.mxu0 0
      %399 = vmatpush1.bf16.msra.mxu0 0
      %400 = vmatprep.mubr.bf16.mxu0 0
      %401 = vmatmul.mubr.bf16.gmra.mrb[0].mxu0 %v366
      %v402 = vpop.f32.mrb[0].mxu0
      %v403 = vadd.f32 %v351, %v402
      %v404 = vpop.f32.mrb[0].mxu0
      %v405 = vpop.f32.mrb[0].mxu0
      %v406 = vpop.f32.mrb[0].mxu0
      %407 = vdwg.mxu0
      %v408 = vld [vmem:[%s4] sm:$0xf]
      %v409 = vld [vmem:[%s4 + $0x4] sm:$0xf]
      %v410 = vld [vmem:[%s4 + $0x8] sm:$0xf]
      %v411 = vld [vmem:[%s4 + $0xc] sm:$0xf]
      %v412 = vlaneseq
      %v413 = vshrl.u32 %v412, 7
      %v414 = vsub.s32 0, %v413
      %v415 = vrot.slane %v338, %v414
      %v420 = vunpack.c.l.b16 %v408
      %v421 = vunpack.c.l.b16 %v409
      %v422 = vunpack.c.l.b16 %v410
      %v423 = vunpack.c.l.b16 %v411
      %v424 = vpack.c.b16 %v421, %v420
      %v425 = vpack.c.b16 %v423, %v422
      %428 = vmatprep.subr.bf16.mxu0 0
      %429 = vmatpush1.bf16.msra.mxu0 %v424
      %430 = vmatprep.subr.bf16.mxu0 0
      %431 = vmatpush1.bf16.msra.mxu0 %v425
      %432 = vmatprep.subr.bf16.mxu0 0
      %433 = vmatpush1.bf16.msra.mxu0 0
      %434 = vmatprep.subr.bf16.mxu0 0
      %435 = vmatpush1.bf16.msra.mxu0 0
      %436 = vmatprep.subr.bf16.mxu0 0
      %437 = vmatpush1.bf16.msra.mxu0 0
      %438 = vmatprep.subr.bf16.mxu0 0
      %439 = vmatpush1.bf16.msra.mxu0 0
      %440 = vmatprep.subr.bf16.mxu0 0
      %441 = vmatpush1.bf16.msra.mxu0 0
      %442 = vmatprep.subr.bf16.mxu0 0
      %443 = vmatpush1.bf16.msra.mxu0 0
      %444 = vmatprep.subr.bf16.mxu0 0
      %445 = vmatpush1.bf16.msra.mxu0 0
      %446 = vmatprep.subr.bf16.mxu0 0
      %447 = vmatpush1.bf16.msra.mxu0 0
      %448 = vmatprep.subr.bf16.mxu0 0
      %449 = vmatpush1.bf16.msra.mxu0 0
      %450 = vmatprep.subr.bf16.mxu0 0
      %451 = vmatpush1.bf16.msra.mxu0 0
      %452 = vmatprep.subr.bf16.mxu0 0
      %453 = vmatpush1.bf16.msra.mxu0 0
      %454 = vmatprep.subr.bf16.mxu0 0
      %455 = vmatpush1.bf16.msra.mxu0 0
      %456 = vmatprep.subr.bf16.mxu0 0
      %457 = vmatpush1.bf16.msra.mxu0 0
      %458 = vmatprep.subr.bf16.mxu0 0
      %459 = vmatpush1.bf16.msra.mxu0 0
      %460 = vmatprep.mubr.bf16.mxu0 0
      %461 = vmatmul.mubr.bf16.gmra.mrb[0].mxu0 %v366
      %v462 = vpop.f32.mrb[0].mxu0
      %v463 = vadd.f32 %v415, %v462
      %v464 = vpop.f32.mrb[0].mxu0
      %v465 = vpop.f32.mrb[0].mxu0
      %v466 = vpop.f32.mrb[0].mxu0
      %467 = vdwg.mxu0
      %v468 = vpack.c.bf16 %v333, %v333
      %v469 = vld [vmem:[%s5] sm:$0xf]
      %v470 = vld [vmem:[%s5 + $0x4] sm:$0xf]
      %v471 = vld [vmem:[%s5 + $0x8] sm:$0xf]
      %v472 = vld [vmem:[%s5 + $0xc] sm:$0xf]
      %v473 = vlaneseq
      %v474 = vshrl.u32 %v473, 7
      %v475 = vsub.s32 0, %v474
      %v476 = vrot.slane %v339, %v475
      %v481 = vunpack.c.l.b16 %v469
      %v482 = vunpack.c.l.b16 %v470
      %v483 = vunpack.c.l.b16 %v471
      %v484 = vunpack.c.l.b16 %v472
      %v485 = vpack.c.b16 %v482, %v481
      %v486 = vpack.c.b16 %v484, %v483
      %v490 = vsel %vm364, %v468, 0
      %492 = vmatprep.subr.bf16.mxu0 0
      %493 = vmatpush1.bf16.msra.mxu0 %v485
      %494 = vmatprep.subr.bf16.mxu0 0
      %495 = vmatpush1.bf16.msra.mxu0 %v486
      %496 = vmatprep.subr.bf16.mxu0 0
      %497 = vmatpush1.bf16.msra.mxu0 0
      %498 = vmatprep.subr.bf16.mxu0 0
      %499 = vmatpush1.bf16.msra.mxu0 0
      %500 = vmatprep.subr.bf16.mxu0 0
      %501 = vmatpush1.bf16.msra.mxu0 0
      %502 = vmatprep.subr.bf16.mxu0 0
      %503 = vmatpush1.bf16.msra.mxu0 0
      %504 = vmatprep.subr.bf16.mxu0 0
      %505 = vmatpush1.bf16.msra.mxu0 0
      %506 = vmatprep.subr.bf16.mxu0 0
      %507 = vmatpush1.bf16.msra.mxu0 0
      %508 = vmatprep.subr.bf16.mxu0 0
      %509 = vmatpush1.bf16.msra.mxu0 0
      %510 = vmatprep.subr.bf16.mxu0 0
      %511 = vmatpush1.bf16.msra.mxu0 0
      %512 = vmatprep.subr.bf16.mxu0 0
      %513 = vmatpush1.bf16.msra.mxu0 0
      %514 = vmatprep.subr.bf16.mxu0 0
      %515 = vmatpush1.bf16.msra.mxu0 0
      %516 = vmatprep.subr.bf16.mxu0 0
      %517 = vmatpush1.bf16.msra.mxu0 0
      %518 = vmatprep.subr.bf16.mxu0 0
      %519 = vmatpush1.bf16.msra.mxu0 0
      %520 = vmatprep.subr.bf16.mxu0 0
      %521 = vmatpush1.bf16.msra.mxu0 0
      %522 = vmatprep.subr.bf16.mxu0 0
      %523 = vmatpush1.bf16.msra.mxu0 0
      %524 = vmatprep.mubr.bf16.mxu0 0
      %525 = vmatmul.mubr.bf16.gmra.mrb[0].mxu0 %v490
      %v526 = vpop.f32.mrb[0].mxu0
      %v527 = vadd.f32 %v476, %v526
      %v528 = vpop.f32.mrb[0].mxu0
      %v529 = vpop.f32.mrb[0].mxu0
      %v530 = vpop.f32.mrb[0].mxu0
      %531 = vdwg.mxu0
      %532 = vxpose.xlu0.b32.start [1/16] %v463, 128
      %533 = vxpose.xlu0.b32.cont [2/16] 0.0, 128
      %534 = vxpose.xlu0.b32.cont [3/16] 0.0, 128
      %535 = vxpose.xlu0.b32.cont [4/16] 0.0, 128
      %536 = vxpose.xlu0.b32.cont [5/16] 0.0, 128
      %537 = vxpose.xlu0.b32.cont [6/16] 0.0, 128
      %538 = vxpose.xlu0.b32.cont [7/16] 0.0, 128
      %539 = vxpose.xlu0.b32.cont [8/16] 0.0, 128
      %540 = vxpose.xlu0.b32.cont [9/16] 0.0, 128
      %541 = vxpose.xlu0.b32.cont [10/16] 0.0, 128
      %542 = vxpose.xlu0.b32.cont [11/16] 0.0, 128
      %543 = vxpose.xlu0.b32.cont [12/16] 0.0, 128
      %544 = vxpose.xlu0.b32.cont [13/16] 0.0, 128
      %545 = vxpose.xlu0.b32.cont [14/16] 0.0, 128
      %546 = vxpose.xlu0.b32.cont [15/16] 0.0, 128
      %547 = vxpose.xlu0.b32.end [16/16] 0.0, 128
      %v548 = vpop.trf.xlu0
      %v549 = vpop.trf.xlu0
      %v550 = vpop.trf.xlu0
      %v551 = vpop.trf.xlu0
      %v552 = vpop.trf.xlu0
      %v553 = vpop.trf.xlu0
      %v554 = vpop.trf.xlu0
      %v555 = vpop.trf.xlu0
      %v556 = vpop.trf.xlu0
      %v557 = vpop.trf.xlu0
      %v558 = vpop.trf.xlu0
      %v559 = vpop.trf.xlu0
      %v560 = vpop.trf.xlu0
      %v561 = vpop.trf.xlu0
      %v562 = vpop.trf.xlu0
      %v563 = vpop.trf.xlu0
      %v564 = vpack.c.bf16 %v403, %v403
      %v565 = vpack.c.bf16 %v548, %v548
      %v566 = vpack.c.bf16 %v527, %v527
      %v568 = vlaneseq
      %v569 = vshrl.u32 %v568, 7
      %v570 = vsub.s32 0, %v569
      %v571 = vrot.slane %v336, %v570
      %vm573 = vcmask 64512
      %v575 = vsel %vm573, %v564, 0
      %vm577 = vcmask 1043456
      %v579 = vsel %vm577, %v565, 0
      %581 = vmatprep.subr.bf16.mxu0 0
      %582 = vmatpush1.bf16.msra.mxu0 %v579
      %583 = vmatprep.subr.bf16.mxu0 0
      %584 = vmatpush1.bf16.msra.mxu0 0
      %585 = vmatprep.subr.bf16.mxu0 0
      %586 = vmatpush1.bf16.msra.mxu0 0
      %587 = vmatprep.subr.bf16.mxu0 0
      %588 = vmatpush1.bf16.msra.mxu0 0
      %589 = vmatprep.subr.bf16.mxu0 0
      %590 = vmatpush1.bf16.msra.mxu0 0
      %591 = vmatprep.subr.bf16.mxu0 0
      %592 = vmatpush1.bf16.msra.mxu0 0
      %593 = vmatprep.subr.bf16.mxu0 0
      %594 = vmatpush1.bf16.msra.mxu0 0
      %595 = vmatprep.subr.bf16.mxu0 0
      %596 = vmatpush1.bf16.msra.mxu0 0
      %597 = vmatprep.subr.bf16.mxu0 0
      %598 = vmatpush1.bf16.msra.mxu0 0
      %599 = vmatprep.subr.bf16.mxu0 0
      %600 = vmatpush1.bf16.msra.mxu0 0
      %601 = vmatprep.subr.bf16.mxu0 0
      %602 = vmatpush1.bf16.msra.mxu0 0
      %603 = vmatprep.subr.bf16.mxu0 0
      %604 = vmatpush1.bf16.msra.mxu0 0
      %605 = vmatprep.subr.bf16.mxu0 0
      %606 = vmatpush1.bf16.msra.mxu0 0
      %607 = vmatprep.subr.bf16.mxu0 0
      %608 = vmatpush1.bf16.msra.mxu0 0
      %609 = vmatprep.subr.bf16.mxu0 0
      %610 = vmatpush1.bf16.msra.mxu0 0
      %611 = vmatprep.subr.bf16.mxu0 0
      %612 = vmatpush1.bf16.msra.mxu0 0
      %613 = vmatprep.mubr.bf16.mxu0 0
      %614 = vmatmul.mubr.bf16.gmra.mrb[0].mxu0 %v575
      %v615 = vpop.f32.mrb[0].mxu0
      %v616 = vadd.f32 %v571, %v615
      %v617 = vpop.f32.mrb[0].mxu0
      %v618 = vpop.f32.mrb[0].mxu0
      %v619 = vpop.f32.mrb[0].mxu0
      %620 = vdwg.mxu0
      %v621 = vsel %vm573, %v616, -inf
      %622 = vmax.xlane.f32.xlu0 %v621
      %v623 = vpop.xlane.xlu0 %622
      %v624 = vsub.f32 %v616, %v623
      %v625 = vmul.f32 %v624, 1.442695
      %v626 = vpow.pop %v625
      %v627 = vsel %vm573, %v626, 0.0
      %628 = vadd.xlane.f32.xlu0 %v627
      %v629 = vpop.xlane.xlu0 %628
      %v630 = vrcp.pop %v629
      %v631 = vmul.f32 %v626, %v630
      %v632 = vpack.c.bf16 %v631, %v631
      %v634 = vsel %vm573, %v632, 0
      %v637 = vsel %vm577, %v566, 0
      %639 = vmatprep.subr.bf16.mxu0 0
      %640 = vmatpush1.bf16.msra.mxu0 %v637
      %641 = vmatprep.subr.bf16.mxu0 0
      %642 = vmatpush1.bf16.msra.mxu0 0
      %643 = vmatprep.subr.bf16.mxu0 0
      %644 = vmatpush1.bf16.msra.mxu0 0
      %645 = vmatprep.subr.bf16.mxu0 0
      %646 = vmatpush1.bf16.msra.mxu0 0
      %647 = vmatprep.subr.bf16.mxu0 0
      %648 = vmatpush1.bf16.msra.mxu0 0
      %649 = vmatprep.subr.bf16.mxu0 0
      %650 = vmatpush1.bf16.msra.mxu0 0
      %651 = vmatprep.subr.bf16.mxu0 0
      %652 = vmatpush1.bf16.msra.mxu0 0
      %653 = vmatprep.subr.bf16.mxu0 0
      %654 = vmatpush1.bf16.msra.mxu0 0
      %655 = vmatprep.subr.bf16.mxu0 0
      %656 = vmatpush1.bf16.msra.mxu0 0
      %657 = vmatprep.subr.bf16.mxu0 0
      %658 = vmatpush1.bf16.msra.mxu0 0
      %659 = vmatprep.subr.bf16.mxu0 0
      %660 = vmatpush1.bf16.msra.mxu0 0
      %661 = vmatprep.subr.bf16.mxu0 0
      %662 = vmatpush1.bf16.msra.mxu0 0
      %663 = vmatprep.subr.bf16.mxu0 0
      %664 = vmatpush1.bf16.msra.mxu0 0
      %665 = vmatprep.subr.bf16.mxu0 0
      %666 = vmatpush1.bf16.msra.mxu0 0
      %667 = vmatprep.subr.bf16.mxu0 0
      %668 = vmatpush1.bf16.msra.mxu0 0
      %669 = vmatprep.subr.bf16.mxu0 0
      %670 = vmatpush1.bf16.msra.mxu0 0
      %671 = vmatprep.mubr.bf16.mxu0 0
      %672 = vmatmul.mubr.bf16.gmra.mrb[0].mxu0 %v634
      %v673 = vpop.f32.mrb[0].mxu0
      %v674 = vadd.f32 0.0, %v673
      %v675 = vpop.f32.mrb[0].mxu0
      %v676 = vpop.f32.mrb[0].mxu0
      %v677 = vpop.f32.mrb[0].mxu0
      %678 = vdwg.mxu0
      %679 = vst.msk [vmem:[#allocation2] sm:$0xff] %vm573, %v674
      %v680 = vpack.c.bf16 %v549, %v549
      %682 = vrot.lane.b32.xlu0 %v564, 120
      %v683 = vpop.permute.xlu0 %682
      %v685 = vsel %vm573, %v683, 0
      %v688 = vsel %vm577, %v680, 0
      %690 = vmatprep.subr.bf16.mxu0 0
      %691 = vmatpush1.bf16.msra.mxu0 %v688
      %692 = vmatprep.subr.bf16.mxu0 0
      %693 = vmatpush1.bf16.msra.mxu0 0
      %694 = vmatprep.subr.bf16.mxu0 0
      %695 = vmatpush1.bf16.msra.mxu0 0
      %696 = vmatprep.subr.bf16.mxu0 0
      %697 = vmatpush1.bf16.msra.mxu0 0
      %698 = vmatprep.subr.bf16.mxu0 0
      %699 = vmatpush1.bf16.msra.mxu0 0
      %700 = vmatprep.subr.bf16.mxu0 0
      %701 = vmatpush1.bf16.msra.mxu0 0
      %702 = vmatprep.subr.bf16.mxu0 0
      %703 = vmatpush1.bf16.msra.mxu0 0
      %704 = vmatprep.subr.bf16.mxu0 0
      %705 = vmatpush1.bf16.msra.mxu0 0
      %706 = vmatprep.subr.bf16.mxu0 0
      %707 = vmatpush1.bf16.msra.mxu0 0
      %708 = vmatprep.subr.bf16.mxu0 0
      %709 = vmatpush1.bf16.msra.mxu0 0
      %710 = vmatprep.subr.bf16.mxu0 0
      %711 = vmatpush1.bf16.msra.mxu0 0
      %712 = vmatprep.subr.bf16.mxu0 0
      %713 = vmatpush1.bf16.msra.mxu0 0
      %714 = vmatprep.subr.bf16.mxu0 0
      %715 = vmatpush1.bf16.msra.mxu0 0
      %716 = vmatprep.subr.bf16.mxu0 0
      %717 = vmatpush1.bf16.msra.mxu0 0
      %718 = vmatprep.subr.bf16.mxu0 0
      %719 = vmatpush1.bf16.msra.mxu0 0
      %720 = vmatprep.subr.bf16.mxu0 0
      %721 = vmatpush1.bf16.msra.mxu0 0
      %722 = vmatprep.mubr.bf16.mxu0 0
      %723 = vmatmul.mubr.bf16.gmra.mrb[0].mxu0 %v685
      %v724 = vpop.f32.mrb[0].mxu0
      %v725 = vadd.f32 %v571, %v724
      %v726 = vpop.f32.mrb[0].mxu0
      %v727 = vpop.f32.mrb[0].mxu0
      %v728 = vpop.f32.mrb[0].mxu0
      %729 = vdwg.mxu0
      %v730 = vsel %vm573, %v725, -inf
      %731 = vmax.xlane.f32.xlu0 %v730
      %v732 = vpop.xlane.xlu0 %731
      %v733 = vsub.f32 %v725, %v732
      %v734 = vmul.f32 %v733, 1.442695
      %v735 = vpow.pop %v734
      %v736 = vsel %vm573, %v735, 0.0
      %737 = vadd.xlane.f32.xlu0 %v736
      %v738 = vpop.xlane.xlu0 %737
      %v739 = vrcp.pop %v738
      %v740 = vmul.f32 %v735, %v739
      %v741 = vpack.c.bf16 %v740, %v740
      %743 = vrot.lane.b32.xlu0 %v566, 120
      %v744 = vpop.permute.xlu0 %743
      %v746 = vsel %vm573, %v741, 0
      %v749 = vsel %vm577, %v744, 0
      %751 = vmatprep.subr.bf16.mxu0 0
      %752 = vmatpush1.bf16.msra.mxu0 %v749
      %753 = vmatprep.subr.bf16.mxu0 0
      %754 = vmatpush1.bf16.msra.mxu0 0
      %755 = vmatprep.subr.bf16.mxu0 0
      %756 = vmatpush1.bf16.msra.mxu0 0
      %757 = vmatprep.subr.bf16.mxu0 0
      %758 = vmatpush1.bf16.msra.mxu0 0
      %759 = vmatprep.subr.bf16.mxu0 0
      %760 = vmatpush1.bf16.msra.mxu0 0
      %761 = vmatprep.subr.bf16.mxu0 0
      %762 = vmatpush1.bf16.msra.mxu0 0
      %763 = vmatprep.subr.bf16.mxu0 0
      %764 = vmatpush1.bf16.msra.mxu0 0
      %765 = vmatprep.subr.bf16.mxu0 0
      %766 = vmatpush1.bf16.msra.mxu0 0
      %767 = vmatprep.subr.bf16.mxu0 0
      %768 = vmatpush1.bf16.msra.mxu0 0
      %769 = vmatprep.subr.bf16.mxu0 0
      %770 = vmatpush1.bf16.msra.mxu0 0
      %771 = vmatprep.subr.bf16.mxu0 0
      %772 = vmatpush1.bf16.msra.mxu0 0
      %773 = vmatprep.subr.bf16.mxu0 0
      %774 = vmatpush1.bf16.msra.mxu0 0
      %775 = vmatprep.subr.bf16.mxu0 0
      %776 = vmatpush1.bf16.msra.mxu0 0
      %777 = vmatprep.subr.bf16.mxu0 0
      %778 = vmatpush1.bf16.msra.mxu0 0
      %779 = vmatprep.subr.bf16.mxu0 0
      %780 = vmatpush1.bf16.msra.mxu0 0
      %781 = vmatprep.subr.bf16.mxu0 0
      %782 = vmatpush1.bf16.msra.mxu0 0
      %783 = vmatprep.mubr.bf16.mxu0 0
      %784 = vmatmul.mubr.bf16.gmra.mrb[0].mxu0 %v746
      %v785 = vpop.f32.mrb[0].mxu0
      %v786 = vadd.f32 0.0, %v785
      %v787 = vpop.f32.mrb[0].mxu0
      %v788 = vpop.f32.mrb[0].mxu0
      %v789 = vpop.f32.mrb[0].mxu0
      %790 = vdwg.mxu0
      %792 = vrot.lane.b32.xlu0 %v786, 8
      %v793 = vpop.permute.xlu0 %792
      %vm795 = vcmask 130112
      %796 = vst.msk [vmem:[#allocation2] sm:$0xff] %vm795, %v793
      %v797 = vpack.c.bf16 %v550, %v550
      %798 = vrot.lane.b32.xlu0 %v564, 112
      %v799 = vpop.permute.xlu0 %798
      %v801 = vsel %vm573, %v799, 0
      %v804 = vsel %vm577, %v797, 0
      %806 = vmatprep.subr.bf16.mxu0 0
      %807 = vmatpush1.bf16.msra.mxu0 %v804
      %808 = vmatprep.subr.bf16.mxu0 0
      %809 = vmatpush1.bf16.msra.mxu0 0
      %810 = vmatprep.subr.bf16.mxu0 0
      %811 = vmatpush1.bf16.msra.mxu0 0
      %812 = vmatprep.subr.bf16.mxu0 0
      %813 = vmatpush1.bf16.msra.mxu0 0
      %814 = vmatprep.subr.bf16.mxu0 0
      %815 = vmatpush1.bf16.msra.mxu0 0
      %816 = vmatprep.subr.bf16.mxu0 0
      %817 = vmatpush1.bf16.msra.mxu0 0
      %818 = vmatprep.subr.bf16.mxu0 0
      %819 = vmatpush1.bf16.msra.mxu0 0
      %820 = vmatprep.subr.bf16.mxu0 0
      %821 = vmatpush1.bf16.msra.mxu0 0
      %822 = vmatprep.subr.bf16.mxu0 0
      %823 = vmatpush1.bf16.msra.mxu0 0
      %824 = vmatprep.subr.bf16.mxu0 0
      %825 = vmatpush1.bf16.msra.mxu0 0
      %826 = vmatprep.subr.bf16.mxu0 0
      %827 = vmatpush1.bf16.msra.mxu0 0
      %828 = vmatprep.subr.bf16.mxu0 0
      %829 = vmatpush1.bf16.msra.mxu0 0
      %830 = vmatprep.subr.bf16.mxu0 0
      %831 = vmatpush1.bf16.msra.mxu0 0
      %832 = vmatprep.subr.bf16.mxu0 0
      %833 = vmatpush1.bf16.msra.mxu0 0
      %834 = vmatprep.subr.bf16.mxu0 0
      %835 = vmatpush1.bf16.msra.mxu0 0
      %836 = vmatprep.subr.bf16.mxu0 0
      %837 = vmatpush1.bf16.msra.mxu0 0
      %838 = vmatprep.mubr.bf16.mxu0 0
      %839 = vmatmul.mubr.bf16.gmra.mrb[0].mxu0 %v801
      %v840 = vpop.f32.mrb[0].mxu0
      %v841 = vadd.f32 %v571, %v840
      %v842 = vpop.f32.mrb[0].mxu0
      %v843 = vpop.f32.mrb[0].mxu0
      %v844 = vpop.f32.mrb[0].mxu0
      %845 = vdwg.mxu0
      %v846 = vsel %vm573, %v841, -inf
      %847 = vmax.xlane.f32.xlu0 %v846
      %v848 = vpop.xlane.xlu0 %847
      %v849 = vsub.f32 %v841, %v848
      %v850 = vmul.f32 %v849, 1.442695
      %v851 = vpow.pop %v850
      %v852 = vsel %vm573, %v851, 0.0
      %853 = vadd.xlane.f32.xlu0 %v852
      %v854 = vpop.xlane.xlu0 %853
      %v855 = vrcp.pop %v854
      %v856 = vmul.f32 %v851, %v855
      %v857 = vpack.c.bf16 %v856, %v856
      %858 = vrot.lane.b32.xlu0 %v566, 112
      %v859 = vpop.permute.xlu0 %858
      %v861 = vsel %vm573, %v857, 0
      %v864 = vsel %vm577, %v859, 0
      %866 = vmatprep.subr.bf16.mxu0 0
      %867 = vmatpush1.bf16.msra.mxu0 %v864
      %868 = vmatprep.subr.bf16.mxu0 0
      %869 = vmatpush1.bf16.msra.mxu0 0
      %870 = vmatprep.subr.bf16.mxu0 0
      %871 = vmatpush1.bf16.msra.mxu0 0
      %872 = vmatprep.subr.bf16.mxu0 0
      %873 = vmatpush1.bf16.msra.mxu0 0
      %874 = vmatprep.subr.bf16.mxu0 0
      %875 = vmatpush1.bf16.msra.mxu0 0
      %876 = vmatprep.subr.bf16.mxu0 0
      %877 = vmatpush1.bf16.msra.mxu0 0
      %878 = vmatprep.subr.bf16.mxu0 0
      %879 = vmatpush1.bf16.msra.mxu0 0
      %880 = vmatprep.subr.bf16.mxu0 0
      %881 = vmatpush1.bf16.msra.mxu0 0
      %882 = vmatprep.subr.bf16.mxu0 0
      %883 = vmatpush1.bf16.msra.mxu0 0
      %884 = vmatprep.subr.bf16.mxu0 0
      %885 = vmatpush1.bf16.msra.mxu0 0
      %886 = vmatprep.subr.bf16.mxu0 0
      %887 = vmatpush1.bf16.msra.mxu0 0
      %888 = vmatprep.subr.bf16.mxu0 0
      %889 = vmatpush1.bf16.msra.mxu0 0
      %890 = vmatprep.subr.bf16.mxu0 0
      %891 = vmatpush1.bf16.msra.mxu0 0
      %892 = vmatprep.subr.bf16.mxu0 0
      %893 = vmatpush1.bf16.msra.mxu0 0
      %894 = vmatprep.subr.bf16.mxu0 0
      %895 = vmatpush1.bf16.msra.mxu0 0
      %896 = vmatprep.subr.bf16.mxu0 0
      %897 = vmatpush1.bf16.msra.mxu0 0
      %898 = vmatprep.mubr.bf16.mxu0 0
      %899 = vmatmul.mubr.bf16.gmra.mrb[0].mxu0 %v861
      %v900 = vpop.f32.mrb[0].mxu0
      %v901 = vadd.f32 0.0, %v900
      %v902 = vpop.f32.mrb[0].mxu0
      %v903 = vpop.f32.mrb[0].mxu0
      %v904 = vpop.f32.mrb[0].mxu0
      %905 = vdwg.mxu0
      %907 = vrot.lane.b32.xlu0 %v901, 16
      %v908 = vpop.permute.xlu0 %907
      %vm910 = vcmask 195712
      %911 = vst.msk [vmem:[#allocation2] sm:$0xff] %vm910, %v908
      %v912 = vpack.c.bf16 %v551, %v551
      %913 = vrot.lane.b32.xlu0 %v564, 104
      %v914 = vpop.permute.xlu0 %913
      %v916 = vsel %vm573, %v914, 0
      %v919 = vsel %vm577, %v912, 0
      %921 = vmatprep.subr.bf16.mxu0 0
      %922 = vmatpush1.bf16.msra.mxu0 %v919
      %923 = vmatprep.subr.bf16.mxu0 0
      %924 = vmatpush1.bf16.msra.mxu0 0
      %925 = vmatprep.subr.bf16.mxu0 0
      %926 = vmatpush1.bf16.msra.mxu0 0
      %927 = vmatprep.subr.bf16.mxu0 0
      %928 = vmatpush1.bf16.msra.mxu0 0
      %929 = vmatprep.subr.bf16.mxu0 0
      %930 = vmatpush1.bf16.msra.mxu0 0
      %931 = vmatprep.subr.bf16.mxu0 0
      %932 = vmatpush1.bf16.msra.mxu0 0
      %933 = vmatprep.subr.bf16.mxu0 0
      %934 = vmatpush1.bf16.msra.mxu0 0
      %935 = vmatprep.subr.bf16.mxu0 0
      %936 = vmatpush1.bf16.msra.mxu0 0
      %937 = vmatprep.subr.bf16.mxu0 0
      %938 = vmatpush1.bf16.msra.mxu0 0
      %939 = vmatprep.subr.bf16.mxu0 0
      %940 = vmatpush1.bf16.msra.mxu0 0
      %941 = vmatprep.subr.bf16.mxu0 0
      %942 = vmatpush1.bf16.msra.mxu0 0
      %943 = vmatprep.subr.bf16.mxu0 0
      %944 = vmatpush1.bf16.msra.mxu0 0
      %945 = vmatprep.subr.bf16.mxu0 0
      %946 = vmatpush1.bf16.msra.mxu0 0
      %947 = vmatprep.subr.bf16.mxu0 0
      %948 = vmatpush1.bf16.msra.mxu0 0
      %949 = vmatprep.subr.bf16.mxu0 0
      %950 = vmatpush1.bf16.msra.mxu0 0
      %951 = vmatprep.subr.bf16.mxu0 0
      %952 = vmatpush1.bf16.msra.mxu0 0
      %953 = vmatprep.mubr.bf16.mxu0 0
      %954 = vmatmul.mubr.bf16.gmra.mrb[0].mxu0 %v916
      %v955 = vpop.f32.mrb[0].mxu0
      %v956 = vadd.f32 %v571, %v955
      %v957 = vpop.f32.mrb[0].mxu0
      %v958 = vpop.f32.mrb[0].mxu0
      %v959 = vpop.f32.mrb[0].mxu0
      %960 = vdwg.mxu0
      %v961 = vsel %vm573, %v956, -inf
      %962 = vmax.xlane.f32.xlu0 %v961
      %v963 = vpop.xlane.xlu0 %962
      %v964 = vsub.f32 %v956, %v963
      %v965 = vmul.f32 %v964, 1.442695
      %v966 = vpow.pop %v965
      %v967 = vsel %vm573, %v966, 0.0
      %968 = vadd.xlane.f32.xlu0 %v967
      %v969 = vpop.xlane.xlu0 %968
      %v970 = vrcp.pop %v969
      %v971 = vmul.f32 %v966, %v970
      %v972 = vpack.c.bf16 %v971, %v971
      %973 = vrot.lane.b32.xlu0 %v566, 104
      %v974 = vpop.permute.xlu0 %973
      %v976 = vsel %vm573, %v972, 0
      %v979 = vsel %vm577, %v974, 0
      %981 = vmatprep.subr.bf16.mxu0 0
      %982 = vmatpush1.bf16.msra.mxu0 %v979
      %983 = vmatprep.subr.bf16.mxu0 0
      %984 = vmatpush1.bf16.msra.mxu0 0
      %985 = vmatprep.subr.bf16.mxu0 0
      %986 = vmatpush1.bf16.msra.mxu0 0
      %987 = vmatprep.subr.bf16.mxu0 0
      %988 = vmatpush1.bf16.msra.mxu0 0
      %989 = vmatprep.subr.bf16.mxu0 0
      %990 = vmatpush1.bf16.msra.mxu0 0
      %991 = vmatprep.subr.bf16.mxu0 0
      %992 = vmatpush1.bf16.msra.mxu0 0
      %993 = vmatprep.subr.bf16.mxu0 0
      %994 = vmatpush1.bf16.msra.mxu0 0
      %995 = vmatprep.subr.bf16.mxu0 0
      %996 = vmatpush1.bf16.msra.mxu0 0
      %997 = vmatprep.subr.bf16.mxu0 0
      %998 = vmatpush1.bf16.msra.mxu0 0
      %999 = vmatprep.subr.bf16.mxu0 0
      %1000 = vmatpush1.bf16.msra.mxu0 0
      %1001 = vmatprep.subr.bf16.mxu0 0
      %1002 = vmatpush1.bf16.msra.mxu0 0
      %1003 = vmatprep.subr.bf16.mxu0 0
      %1004 = vmatpush1.bf16.msra.mxu0 0
      %1005 = vmatprep.subr.bf16.mxu0 0
      %1006 = vmatpush1.bf16.msra.mxu0 0
      %1007 = vmatprep.subr.bf16.mxu0 0
      %1008 = vmatpush1.bf16.msra.mxu0 0
      %1009 = vmatprep.subr.bf16.mxu0 0
      %1010 = vmatpush1.bf16.msra.mxu0 0
      %1011 = vmatprep.subr.bf16.mxu0 0
      %1012 = vmatpush1.bf16.msra.mxu0 0
      %1013 = vmatprep.mubr.bf16.mxu0 0
      %1014 = vmatmul.mubr.bf16.gmra.mrb[0].mxu0 %v976
      %v1015 = vpop.f32.mrb[0].mxu0
      %v1016 = vadd.f32 0.0, %v1015
      %v1017 = vpop.f32.mrb[0].mxu0
      %v1018 = vpop.f32.mrb[0].mxu0
      %v1019 = vpop.f32.mrb[0].mxu0
      %1020 = vdwg.mxu0
      %1022 = vrot.lane.b32.xlu0 %v1016, 24
      %v1023 = vpop.permute.xlu0 %1022
      %vm1025 = vcmask 261312
      %1026 = vst.msk [vmem:[#allocation2] sm:$0xff] %vm1025, %v1023
      %v1027 = vld [vmem:[#allocation2] sm:$0xff]
      %v1028 = vpack.c.bf16 %v1027, %v1027
      %v1029 = vld [vmem:[%s6] sm:$0xf]
      %v1030 = vld [vmem:[%s6 + $0x4] sm:$0xf]
      %v1031 = vld [vmem:[%s6 + $0x8] sm:$0xf]
      %v1032 = vld [vmem:[%s6 + $0xc] sm:$0xf]
      %v1033 = vlaneseq
      %v1034 = vshrl.u32 %v1033, 7
      %v1035 = vsub.s32 0, %v1034
      %v1036 = vrot.slane %v340, %v1035
      %v1041 = vunpack.c.l.b16 %v1029
      %v1042 = vunpack.c.l.b16 %v1030
      %v1043 = vunpack.c.l.b16 %v1031
      %v1044 = vunpack.c.l.b16 %v1032
      %v1045 = vpack.c.b16 %v1042, %v1041
      %v1046 = vpack.c.b16 %v1044, %v1043
      %v1050 = vsel %vm364, %v1028, 0
      %1052 = vmatprep.subr.bf16.mxu0 0
      %1053 = vmatpush1.bf16.msra.mxu0 %v1045
      %1054 = vmatprep.subr.bf16.mxu0 0
      %1055 = vmatpush1.bf16.msra.mxu0 %v1046
      %1056 = vmatprep.subr.bf16.mxu0 0
      %1057 = vmatpush1.bf16.msra.mxu0 0
      %1058 = vmatprep.subr.bf16.mxu0 0
      %1059 = vmatpush1.bf16.msra.mxu0 0
      %1060 = vmatprep.subr.bf16.mxu0 0
      %1061 = vmatpush1.bf16.msra.mxu0 0
      %1062 = vmatprep.subr.bf16.mxu0 0
      %1063 = vmatpush1.bf16.msra.mxu0 0
      %1064 = vmatprep.subr.bf16.mxu0 0
      %1065 = vmatpush1.bf16.msra.mxu0 0
      %1066 = vmatprep.subr.bf16.mxu0 0
      %1067 = vmatpush1.bf16.msra.mxu0 0
      %1068 = vmatprep.subr.bf16.mxu0 0
      %1069 = vmatpush1.bf16.msra.mxu0 0
      %1070 = vmatprep.subr.bf16.mxu0 0
      %1071 = vmatpush1.bf16.msra.mxu0 0
      %1072 = vmatprep.subr.bf16.mxu0 0
      %1073 = vmatpush1.bf16.msra.mxu0 0
      %1074 = vmatprep.subr.bf16.mxu0 0
      %1075 = vmatpush1.bf16.msra.mxu0 0
      %1076 = vmatprep.subr.bf16.mxu0 0
      %1077 = vmatpush1.bf16.msra.mxu0 0
      %1078 = vmatprep.subr.bf16.mxu0 0
      %1079 = vmatpush1.bf16.msra.mxu0 0
      %1080 = vmatprep.subr.bf16.mxu0 0
      %1081 = vmatpush1.bf16.msra.mxu0 0
      %1082 = vmatprep.subr.bf16.mxu0 0
      %1083 = vmatpush1.bf16.msra.mxu0 0
      %1084 = vmatprep.mubr.bf16.mxu0 0
      %1085 = vmatmul.mubr.bf16.gmra.mrb[0].mxu0 %v1050
      %v1086 = vpop.f32.mrb[0].mxu0
      %v1087 = vadd.f32 %v1036, %v1086
      %v1088 = vpop.f32.mrb[0].mxu0
      %v1089 = vpop.f32.mrb[0].mxu0
      %v1090 = vpop.f32.mrb[0].mxu0
      %1091 = vdwg.mxu0
      %v1092 = vadd.f32 %v333, %v1087
      %v1093 = vsel %vm364, %v1092, 0.0
      %1094 = vadd.xlane.f32.xlu0 %v1093
      %v1095 = vpop.xlane.xlu0 %1094
      %v1096 = vrcp.pop 32.0
      %v1097 = vmul.f32 %v1095, %v1096
      %v1098 = vsub.f32 %v1092, %v1097
      %v1099 = vmul.f32 %v1098, %v1098
      %v1100 = vsel %vm364, %v1099, 0.0
      %1101 = vadd.xlane.f32.xlu0 %v1100
      %v1102 = vpop.xlane.xlu0 %1101
      %v1103 = vmul.f32 %v1102, %v1096
      %v1104 = vadd.f32 %v1103, 1e-05
      %v1105 = vrsqrt.pop %v1104
      %v1106 = vmul.f32 %v1098, %v1105
      %v1107 = vlaneseq
      %v1108 = vshrl.u32 %v1107, 7
      %v1109 = vsub.s32 0, %v1108
      %v1110 = vrot.slane %v341, %v1109
      %v1111 = vmul.f32 %v1106, %v1110
      %v1112 = vlaneseq
      %v1113 = vshrl.u32 %v1112, 7
      %v1114 = vsub.s32 0, %v1113
      %v1115 = vrot.slane %v342, %v1114
      %v1116 = vadd.f32 %v1111, %v1115
      %1117 = vst.msk [vmem:[%s331] sm:$0xff] %vm364, %v1116
      %p1118 = scmp.lt.s32.totalorder %s19, 1
      %s1119 = scalar_select %p1118, %s19, 1
      %s1120 = smul.addr %s1119, 8
      %s1121 = scalar_lea.vmem %s8, %s1120
      // Predicated region
      $region53: #{cross_attention_forward.4} parent=51 // pred_check
        %p1122 = pneg %p220
      $region54: #{cross_attention_forward.4} parent=51 // pred_check_branch
        %1124 = sbr.rel (%p1122) target = $region56
      $region55: #{cross_attention_forward.4} parent=51 // pred_region
        _
      $region56: #{cross_attention_forward.4} parent=51 // pred_fallthru
        _
    $region52: #{cross_attention_forward.4} parent=5 // pred_fallthru
      _
    %p1125 = scmp.le.s32.totalorder 2, %s14
    // Predicated region
    $region57: #{cross_attention_forward.4} parent=5 // pred_check
      %p1126 = pneg %p1125
    $region58: #{cross_attention_forward.4} parent=5 // pred_check_branch
      %1128 = sbr.rel (%p1126) target = $region60
    $region59: #{cross_attention_forward.4} parent=5 // pred_region
      %s1129 = ssub.s32 %s14, 2
      // Predicated region
      $region61: #{cross_attention_forward.4} parent=59 // pred_check
        %p1130 = pneg %p226
      $region62: #{cross_attention_forward.4} parent=59 // pred_check_branch
        %1132 = sbr.rel (%p1130) target = $region64
      $region63: #{cross_attention_forward.4} parent=59 // pred_region
        %p1133 = scmp.lt.s32.totalorder %s20, 1
        %s1134 = scalar_select %p1133, %s20, 1
        %s1135 = smul.addr %s1134, 8
        %s1136 = scalar_lea.vmem %s8, %s1135
      $region64: #{cross_attention_forward.4} parent=59 // pred_fallthru
        _
    $region60: #{cross_attention_forward.4} parent=5 // pred_fallthru
      _
  $region6: #{cross_attention_forward.4} parent=0 // loop_footer
    %s18 = sadd.s32 1, %s14
  $region7: #{cross_attention_forward.4} parent=0 // loop_footer_branch
    %13 = sbr.rel target = $region3
  $region8: #{cross_attention_forward.4} parent=0 // loop_exit
    _

// kernel: cross_attention_forward.7
$region0: #{cross_attention_forward.7}
  #allocation0 [shape = 'u32[]', space=smem, size = 0x4, offset = 0x4, fixed_abs, tag = 'smem constant byte address 0x4 - core index']
  #allocation1 [shape = 'u32[144,128]{1,0:T(1,128)}', space=vmem, size = 0x12000, scoped, tag = 'internal scratch']
  #allocation2 [shape = 'f32[16,32]{1,0:T(8,128)}', space=vmem, size = 0x2000, scoped, tag = 'scratch operand']
  %s0 = inlined_call_operand.vmem [shape: f32[2,16,32], index: 0, kind: input, shape index: {}]
  %s1 = inlined_call_operand.vmem [shape: f32[2,16,32], index: 1, kind: input, shape index: {}]
  %s2 = inlined_call_operand.vmem [shape: f32[2,8,32], index: 2, kind: input, shape index: {}]
  %s3 = inlined_call_operand.vmem [shape: f32[2,8,32], index: 3, kind: input, shape index: {}]
  %s4 = inlined_call_operand.vmem [shape: f32[2,1,8], index: 4, kind: input, shape index: {}]
  %s5 = inlined_call_operand.vmem [shape: bf16[32,32], index: 5, kind: input, shape index: {}]
  %s6 = inlined_call_operand.vmem [shape: bf16[32,32], index: 6, kind: input, shape index: {}]
  %s7 = inlined_call_operand.vmem [shape: bf16[32,32], index: 7, kind: input, shape index: {}]
  %s8 = inlined_call_operand.vmem [shape: bf16[32,32], index: 8, kind: input, shape index: {}]
  %s9 = inlined_call_operand.vmem [shape: bf16[32,1024], index: 9, kind: input, shape index: {}]
  %s10 = inlined_call_operand.vmem [shape: bf16[1024,32], index: 10, kind: input, shape index: {}]
  %s11 = inlined_call_operand.vmem [shape: f32[1,1024], index: 11, kind: input, shape index: {}]
  %s12 = inlined_call_operand.vmem [shape: f32[9,32], index: 12, kind: input, shape index: {}]
  %s13 = inlined_call_operand.hbm [shape: f32[2,16,32], index: 13, kind: output, shape index: {}]
  %s14 = sld [smem:[#allocation0]]
  $region85: #{cross_attention_forward.7} parent=0
    _
  %s16 = ssub.s32 1, %s14
  %s17 = scalar_select 0, %s16, %s14
  $region1: #{cross_attention_forward.7} parent=0
    #allocation3 [shape = 'u8[16384]{0}', space=vmem, size = 0x4000, scoped, tag = 'output window, operand 0']
    #allocation4 [shape = 's32[2]{0}', space=sflag, size = 0x8, scoped, tag = 'scoped memory for cross_attention_forward.7']
    %18 = vsyncpa [#allocation4], 0
    %s19 = scalar_lea.sflag [#allocation4], 1
    %20 = vsyncpa %s19, 0
    loop: start=0, step=1, limit=4
    $region2: #{cross_attention_forward.7} parent=1 // loop_pre_header
      _
    $region3: #{cross_attention_forward.7} parent=1 // loop_header
      %s22 = sphi 0, %s26
      %p23 = scmp.ge.s32.totalorder %s22, 4
      %s32 = sphi 0, %s34
      %s35 = sphi 0, %s32
      %s36 = sphi 0, %s35
      %s52 = sphi 0, %s36
      %s58 = sphi 0, %s60
      %s61 = sphi 0, %s58
      %s62 = sphi 0, %s61
      %s78 = sphi 0, %s62
      %s84 = sphi 0, %s86
      %s87 = sphi 0, %s84
      %s88 = sphi 0, %s87
      %s104 = sphi 0, %s88
      %s110 = sphi 0, %s112
      %s113 = sphi 0, %s110
      %s114 = sphi 0, %s113
      %s130 = sphi 0, %s114
      %s136 = sphi 0, %s138
      %s139 = sphi 0, %s136
      %s140 = sphi 0, %s139
      %s156 = sphi 0, %s140
      %s160 = sphi 0, %s160
      %s162 = sphi 0, %s160
      %s163 = sphi 0, %s162
      %s177 = sphi 0, %s163
      %s181 = sphi 0, %s181
      %s183 = sphi 0, %s181
      %s184 = sphi 0, %s183
      %s198 = sphi 0, %s184
      %s202 = sphi 0, %s202
      %s204 = sphi 0, %s202
      %s205 = sphi 0, %s204
      %s219 = sphi 0, %s205
      %s223 = sphi 0, %s223
      %s225 = sphi 0, %s223
      %s226 = sphi 0, %s225
      %s240 = sphi 0, %s226
      %s244 = sphi 0, %s244
      %s246 = sphi 0, %s244
      %s247 = sphi 0, %s246
      %s261 = sphi 0, %s247
      %s265 = sphi 0, %s265
      %s267 = sphi 0, %s265
      %s268 = sphi 0, %s267
      %s282 = sphi 0, %s268
      %s286 = sphi 0, %s286
      %s288 = sphi 0, %s286
      %s289 = sphi 0, %s288
      %s303 = sphi 0, %s289
      %s307 = sphi 0, %s307
      %s309 = sphi 0, %s307
      %s310 = sphi 0, %s309
      %s324 = sphi 0, %s310
      %s330 = sphi 0, %s332
      %s333 = sphi 0, %s330
      %s334 = sphi 0, %s333
      %s350 = sphi 0, %s334
    $region4: #{cross_attention_forward.7} parent=1 // loop_header_branch
      %25 = sbr.rel (%p23) target = $region8
    $region5: #{cross_attention_forward.7} parent=1 // loop_body
      %s27 = ssub.s32 %s22, 1
      %s28 = ssub.s32 %s22, 2
      %s29 = sadd.s32 %s22, 1
      %s30 = ssub.s32 %s22, %s29
      %p31 = scmp.eq.s32.totalorder %s30, 0
      %s33 = sadd.s32 %s32, 1
      %s34 = scalar_select %p31, %s32, %s33
      %p37 = pneg %p31
      %p38 = scmp.eq.s32.totalorder %s22, 1
      %p39 = por %p37, %p38
      %p40 = scmp.ne.s32.totalorder %s32, %s35
      %p41 = scmp.eq.s32.totalorder %s22, 0
      %p42 = por %p40, %p41
      %p43 = scmp.ne.s32.totalorder %s32, %s35
      %p44 = scmp.eq.s32.totalorder %s27, 1
      %p45 = por %p43, %p44
      %p46 = scmp.ne.s32.totalorder %s35, %s36
      %p47 = scmp.eq.s32.totalorder %s27, 0
      %p48 = por %p46, %p47
      %p49 = scmp.ne.s32.totalorder %s35, %s36
      %p50 = scmp.eq.s32.totalorder %s28, 1
      %p51 = por %p49, %p50
      %p53 = scmp.ne.s32.totalorder %s36, %s52
      %p54 = scmp.eq.s32.totalorder %s28, 0
      %p55 = por %p53, %p54
      %s56 = ssub.s32 %s22, %s29
      %p57 = scmp.eq.s32.totalorder %s56, 0
      %s59 = sadd.s32 %s58, 1
      %s60 = scalar_select %p57, %s58, %s59
      %p63 = pneg %p57
      %p64 = scmp.eq.s32.totalorder %s22, 1
      %p65 = por %p63, %p64
      %p66 = scmp.ne.s32.totalorder %s58, %s61
      %p67 = scmp.eq.s32.totalorder %s22, 0
      %p68 = por %p66, %p67
      %p69 = scmp.ne.s32.totalorder %s58, %s61
      %p70 = scmp.eq.s32.totalorder %s27, 1
      %p71 = por %p69, %p70
      %p72 = scmp.ne.s32.totalorder %s61, %s62
      %p73 = scmp.eq.s32.totalorder %s27, 0
      %p74 = por %p72, %p73
      %p75 = scmp.ne.s32.totalorder %s61, %s62
      %p76 = scmp.eq.s32.totalorder %s28, 1
      %p77 = por %p75, %p76
      %p79 = scmp.ne.s32.totalorder %s62, %s78
      %p80 = scmp.eq.s32.totalorder %s28, 0
      %p81 = por %p79, %p80
      %s82 = ssub.s32 %s22, %s29
      %p83 = scmp.eq.s32.totalorder %s82, 0
      %s85 = sadd.s32 %s84, 1
      %s86 = scalar_select %p83, %s84, %s85
      %p89 = pneg %p83
      %p90 = scmp.eq.s32.totalorder %s22, 1
      %p91 = por %p89, %p90
      %p92 = scmp.ne.s32.totalorder %s84, %s87
      %p93 = scmp.eq.s32.totalorder %s22, 0
      %p94 = por %p92, %p93
      %p95 = scmp.ne.s32.totalorder %s84, %s87
      %p96 = scmp.eq.s32.totalorder %s27, 1
      %p97 = por %p95, %p96
      %p98 = scmp.ne.s32.totalorder %s87, %s88
      %p99 = scmp.eq.s32.totalorder %s27, 0
      %p100 = por %p98, %p99
      %p101 = scmp.ne.s32.totalorder %s87, %s88
      %p102 = scmp.eq.s32.totalorder %s28, 1
      %p103 = por %p101, %p102
      %p105 = scmp.ne.s32.totalorder %s88, %s104
      %p106 = scmp.eq.s32.totalorder %s28, 0
      %p107 = por %p105, %p106
      %s108 = ssub.s32 %s22, %s29
      %p109 = scmp.eq.s32.totalorder %s108, 0
      %s111 = sadd.s32 %s110, 1
      %s112 = scalar_select %p109, %s110, %s111
      %p115 = pneg %p109
      %p116 = scmp.eq.s32.totalorder %s22, 1
      %p117 = por %p115, %p116
      %p118 = scmp.ne.s32.totalorder %s110, %s113
      %p119 = scmp.eq.s32.totalorder %s22, 0
      %p120 = por %p118, %p119
      %p121 = scmp.ne.s32.totalorder %s110, %s113
      %p122 = scmp.eq.s32.totalorder %s27, 1
      %p123 = por %p121, %p122
      %p124 = scmp.ne.s32.totalorder %s113, %s114
      %p125 = scmp.eq.s32.totalorder %s27, 0
      %p126 = por %p124, %p125
      %p127 = scmp.ne.s32.totalorder %s113, %s114
      %p128 = scmp.eq.s32.totalorder %s28, 1
      %p129 = por %p127, %p128
      %p131 = scmp.ne.s32.totalorder %s114, %s130
      %p132 = scmp.eq.s32.totalorder %s28, 0
      %p133 = por %p131, %p132
      %s134 = ssub.s32 %s22, %s29
      %p135 = scmp.eq.s32.totalorder %s134, 0
      %s137 = sadd.s32 %s136, 1
      %s138 = scalar_select %p135, %s136, %s137
      %p141 = pneg %p135
      %p142 = scmp.eq.s32.totalorder %s22, 1
      %p143 = por %p141, %p142
      %p144 = scmp.ne.s32.totalorder %s136, %s139
      %p145 = scmp.eq.s32.totalorder %s22, 0
      %p146 = por %p144, %p145
      %p147 = scmp.ne.s32.totalorder %s136, %s139
      %p148 = scmp.eq.s32.totalorder %s27, 1
      %p149 = por %p147, %p148
      %p150 = scmp.ne.s32.totalorder %s139, %s140
      %p151 = scmp.eq.s32.totalorder %s27, 0
      %p152 = por %p150, %p151
      %p153 = scmp.ne.s32.totalorder %s139, %s140
      %p154 = scmp.eq.s32.totalorder %s28, 1
      %p155 = por %p153, %p154
      %p157 = scmp.ne.s32.totalorder %s140, %s156
      %p158 = scmp.eq.s32.totalorder %s28, 0
      %p159 = por %p157, %p158
      %s161 = sadd.s32 %s160, 1
      %p164 = scmp.eq.s32.totalorder %s22, 1
      %p165 = scmp.ne.s32.totalorder %s160, %s162
      %p166 = scmp.eq.s32.totalorder %s22, 0
      %p167 = por %p165, %p166
      %p168 = scmp.ne.s32.totalorder %s160, %s162
      %p169 = scmp.eq.s32.totalorder %s27, 1
      %p170 = por %p168, %p169
      %p171 = scmp.ne.s32.totalorder %s162, %s163
      %p172 = scmp.eq.s32.totalorder %s27, 0
      %p173 = por %p171, %p172
      %p174 = scmp.ne.s32.totalorder %s162, %s163
      %p175 = scmp.eq.s32.totalorder %s28, 1
      %p176 = por %p174, %p175
      %p178 = scmp.ne.s32.totalorder %s163, %s177
      %p179 = scmp.eq.s32.totalorder %s28, 0
      %p180 = por %p178, %p179
      %s182 = sadd.s32 %s181, 1
      %p185 = scmp.eq.s32.totalorder %s22, 1
      %p186 = scmp.ne.s32.totalorder %s181, %s183
      %p187 = scmp.eq.s32.totalorder %s22, 0
      %p188 = por %p186, %p187
      %p189 = scmp.ne.s32.totalorder %s181, %s183
      %p190 = scmp.eq.s32.totalorder %s27, 1
      %p191 = por %p189, %p190
      %p192 = scmp.ne.s32.totalorder %s183, %s184
      %p193 = scmp.eq.s32.totalorder %s27, 0
      %p194 = por %p192, %p193
      %p195 = scmp.ne.s32.totalorder %s183, %s184
      %p196 = scmp.eq.s32.totalorder %s28, 1
      %p197 = por %p195, %p196
      %p199 = scmp.ne.s32.totalorder %s184, %s198
      %p200 = scmp.eq.s32.totalorder %s28, 0
      %p201 = por %p199, %p200
      %s203 = sadd.s32 %s202, 1
      %p206 = scmp.eq.s32.totalorder %s22, 1
      %p207 = scmp.ne.s32.totalorder %s202, %s204
      %p208 = scmp.eq.s32.totalorder %s22, 0
      %p209 = por %p207, %p208
      %p210 = scmp.ne.s32.totalorder %s202, %s204
      %p211 = scmp.eq.s32.totalorder %s27, 1
      %p212 = por %p210, %p211
      %p213 = scmp.ne.s32.totalorder %s204, %s205
      %p214 = scmp.eq.s32.totalorder %s27, 0
      %p215 = por %p213, %p214
      %p216 = scmp.ne.s32.totalorder %s204, %s205
      %p217 = scmp.eq.s32.totalorder %s28, 1
      %p218 = por %p216, %p217
      %p220 = scmp.ne.s32.totalorder %s205, %s219
      %p221 = scmp.eq.s32.totalorder %s28, 0
      %p222 = por %p220, %p221
      %s224 = sadd.s32 %s223, 1
      %p227 = scmp.eq.s32.totalorder %s22, 1
      %p228 = scmp.ne.s32.totalorder %s223, %s225
      %p229 = scmp.eq.s32.totalorder %s22, 0
      %p230 = por %p228, %p229
      %p231 = scmp.ne.s32.totalorder %s223, %s225
      %p232 = scmp.eq.s32.totalorder %s27, 1
      %p233 = por %p231, %p232
      %p234 = scmp.ne.s32.totalorder %s225, %s226
      %p235 = scmp.eq.s32.totalorder %s27, 0
      %p236 = por %p234, %p235
      %p237 = scmp.ne.s32.totalorder %s225, %s226
      %p238 = scmp.eq.s32.totalorder %s28, 1
      %p239 = por %p237, %p238
      %p241 = scmp.ne.s32.totalorder %s226, %s240
      %p242 = scmp.eq.s32.totalorder %s28, 0
      %p243 = por %p241, %p242
      %s245 = sadd.s32 %s244, 1
      %p248 = scmp.eq.s32.totalorder %s22, 1
      %p249 = scmp.ne.s32.totalorder %s244, %s246
      %p250 = scmp.eq.s32.totalorder %s22, 0
      %p251 = por %p249, %p250
      %p252 = scmp.ne.s32.totalorder %s244, %s246
      %p253 = scmp.eq.s32.totalorder %s27, 1
      %p254 = por %p252, %p253
      %p255 = scmp.ne.s32.totalorder %s246, %s247
      %p256 = scmp.eq.s32.totalorder %s27, 0
      %p257 = por %p255, %p256
      %p258 = scmp.ne.s32.totalorder %s246, %s247
      %p259 = scmp.eq.s32.totalorder %s28, 1
      %p260 = por %p258, %p259
      %p262 = scmp.ne.s32.totalorder %s247, %s261
      %p263 = scmp.eq.s32.totalorder %s28, 0
      %p264 = por %p262, %p263
      %s266 = sadd.s32 %s265, 1
      %p269 = scmp.eq.s32.totalorder %s22, 1
      %p270 = scmp.ne.s32.totalorder %s265, %s267
      %p271 = scmp.eq.s32.totalorder %s22, 0
      %p272 = por %p270, %p271
      %p273 = scmp.ne.s32.totalorder %s265, %s267
      %p274 = scmp.eq.s32.totalorder %s27, 1
      %p275 = por %p273, %p274
      %p276 = scmp.ne.s32.totalorder %s267, %s268
      %p277 = scmp.eq.s32.totalorder %s27, 0
      %p278 = por %p276, %p277
      %p279 = scmp.ne.s32.totalorder %s267, %s268
      %p280 = scmp.eq.s32.totalorder %s28, 1
      %p281 = por %p279, %p280
      %p283 = scmp.ne.s32.totalorder %s268, %s282
      %p284 = scmp.eq.s32.totalorder %s28, 0
      %p285 = por %p283, %p284
      %s287 = sadd.s32 %s286, 1
      %p290 = scmp.eq.s32.totalorder %s22, 1
      %p291 = scmp.ne.s32.totalorder %s286, %s288
      %p292 = scmp.eq.s32.totalorder %s22, 0
      %p293 = por %p291, %p292
      %p294 = scmp.ne.s32.totalorder %s286, %s288
      %p295 = scmp.eq.s32.totalorder %s27, 1
      %p296 = por %p294, %p295
      %p297 = scmp.ne.s32.totalorder %s288, %s289
      %p298 = scmp.eq.s32.totalorder %s27, 0
      %p299 = por %p297, %p298
      %p300 = scmp.ne.s32.totalorder %s288, %s289
      %p301 = scmp.eq.s32.totalorder %s28, 1
      %p302 = por %p300, %p301
      %p304 = scmp.ne.s32.totalorder %s289, %s303
      %p305 = scmp.eq.s32.totalorder %s28, 0
      %p306 = por %p304, %p305
      %s308 = sadd.s32 %s307, 1
      %p311 = scmp.eq.s32.totalorder %s22, 1
      %p312 = scmp.ne.s32.totalorder %s307, %s309
      %p313 = scmp.eq.s32.totalorder %s22, 0
      %p314 = por %p312, %p313
      %p315 = scmp.ne.s32.totalorder %s307, %s309
      %p316 = scmp.eq.s32.totalorder %s27, 1
      %p317 = por %p315, %p316
      %p318 = scmp.ne.s32.totalorder %s309, %s310
      %p319 = scmp.eq.s32.totalorder %s27, 0
      %p320 = por %p318, %p319
      %p321 = scmp.ne.s32.totalorder %s309, %s310
      %p322 = scmp.eq.s32.totalorder %s28, 1
      %p323 = por %p321, %p322
      %p325 = scmp.ne.s32.totalorder %s310, %s324
      %p326 = scmp.eq.s32.totalorder %s28, 0
      %p327 = por %p325, %p326
      %s328 = ssub.s32 %s22, %s29
      %p329 = scmp.eq.s32.totalorder %s328, 0
      %s331 = sadd.s32 %s330, 1
      %s332 = scalar_select %p329, %s330, %s331
      %p335 = pneg %p329
      %p336 = scmp.eq.s32.totalorder %s22, 1
      %p337 = por %p335, %p336
      %p338 = scmp.ne.s32.totalorder %s330, %s333
      %p339 = scmp.eq.s32.totalorder %s22, 0
      %p340 = por %p338, %p339
      %p341 = scmp.ne.s32.totalorder %s330, %s333
      %p342 = scmp.eq.s32.totalorder %s27, 1
      %p343 = por %p341, %p342
      %p344 = scmp.ne.s32.totalorder %s333, %s334
      %p345 = scmp.eq.s32.totalorder %s27, 0
      %p346 = por %p344, %p345
      %p347 = scmp.ne.s32.totalorder %s333, %s334
      %p348 = scmp.eq.s32.totalorder %s28, 1
      %p349 = por %p347, %p348
      %p351 = scmp.ne.s32.totalorder %s334, %s350
      %p352 = scmp.eq.s32.totalorder %s28, 0
      %p353 = por %p351, %p352
      %p354 = scmp.le.s32.totalorder 1, %s22
      %p355 = scmp.lt.s32.totalorder %s22, 3
      %p356 = pnand %p354, %p355
      %p357 = pneg %p356
      // Predicated region
      $region9: #{cross_attention_forward.7} parent=5 // pred_check
        _
      $region10: #{cross_attention_forward.7} parent=5 // pred_check_branch
        %359 = sbr.rel (%p356) target = $region12
      $region11: #{cross_attention_forward.7} parent=5 // pred_region
        %s360 = ssub.s32 %s22, 1
        // Predicated region
        $region13: #{cross_attention_forward.7} parent=11 // pred_check
          %p361 = pneg %p173
        $region14: #{cross_attention_forward.7} parent=11 // pred_check_branch
          %363 = sbr.rel (%p361) target = $region16
        $region15: #{cross_attention_forward.7} parent=11 // pred_region
          _
        $region16: #{cross_attention_forward.7} parent=11 // pred_fallthru
          _
        // Predicated region
        $region17: #{cross_attention_forward.7} parent=11 // pred_check
          %p364 = pneg %p194
        $region18: #{cross_attention_forward.7} parent=11 // pred_check_branch
          %366 = sbr.rel (%p364) target = $region20
        $region19: #{cross_attention_forward.7} parent=11 // pred_region
          _
        $region20: #{cross_attention_forward.7} parent=11 // pred_fallthru
          _
        // Predicated region
        $region21: #{cross_attention_forward.7} parent=11 // pred_check
          %p367 = pneg %p215
        $region22: #{cross_attention_forward.7} parent=11 // pred_check_branch
          %369 = sbr.rel (%p367) target = $region24
        $region23: #{cross_attention_forward.7} parent=11 // pred_region
          _
        $region24: #{cross_attention_forward.7} parent=11 // pred_fallthru
          _
        // Predicated region
        $region25: #{cross_attention_forward.7} parent=11 // pred_check
          %p370 = pneg %p236
        $region26: #{cross_attention_forward.7} parent=11 // pred_check_branch
          %372 = sbr.rel (%p370) target = $region28
        $region27: #{cross_attention_forward.7} parent=11 // pred_region
          _
        $region28: #{cross_attention_forward.7} parent=11 // pred_fallthru
          _
        // Predicated region
        $region29: #{cross_attention_forward.7} parent=11 // pred_check
          %p373 = pneg %p257
        $region30: #{cross_attention_forward.7} parent=11 // pred_check_branch
          %375 = sbr.rel (%p373) target = $region32
        $region31: #{cross_attention_forward.7} parent=11 // pred_region
          _
        $region32: #{cross_attention_forward.7} parent=11 // pred_fallthru
          _
        // Predicated region
        $region33: #{cross_attention_forward.7} parent=11 // pred_check
          %p376 = pneg %p278
        $region34: #{cross_attention_forward.7} parent=11 // pred_check_branch
          %378 = sbr.rel (%p376) target = $region36
        $region35: #{cross_attention_forward.7} parent=11 // pred_region
          _
        $region36: #{cross_attention_forward.7} parent=11 // pred_fallthru
          _
        // Predicated region
        $region37: #{cross_attention_forward.7} parent=11 // pred_check
          %p379 = pneg %p299
        $region38: #{cross_attention_forward.7} parent=11 // pred_check_branch
          %381 = sbr.rel (%p379) target = $region40
        $region39: #{cross_attention_forward.7} parent=11 // pred_region
          _
        $region40: #{cross_attention_forward.7} parent=11 // pred_fallthru
          _
        // Predicated region
        $region41: #{cross_attention_forward.7} parent=11 // pred_check
          %p382 = pneg %p320
        $region42: #{cross_attention_forward.7} parent=11 // pred_check_branch
          %384 = sbr.rel (%p382) target = $region44
        $region43: #{cross_attention_forward.7} parent=11 // pred_region
          _
        $region44: #{cross_attention_forward.7} parent=11 // pred_fallthru
          _
      $region12: #{cross_attention_forward.7} parent=5 // pred_fallthru
        _
      %p385 = scmp.lt.s32.totalorder %s22, 2
      // Predicated region
      $region45: #{cross_attention_forward.7} parent=5 // pred_check
        %p386 = pneg %p385
      $region46: #{cross_attention_forward.7} parent=5 // pred_check_branch
        %388 = sbr.rel (%p386) target = $region48
      $region47: #{cross_attention_forward.7} parent=5 // pred_region
        // Predicated region
        $region49: #{cross_attention_forward.7} parent=47 // pred_check
          %p389 = pneg %p42
        $region50: #{cross_attention_forward.7} parent=47 // pred_check_branch
          %391 = sbr.rel (%p389) target = $region52
        $region51: #{cross_attention_forward.7} parent=47 // pred_region
          %p392 = scmp.lt.s32.totalorder %s22, 1
          %s393 = scalar_select %p392, %s22, 1
          %s394 = smul.addr %s393, 2
          %s395 = smul.addr %s394, 8
          %s396 = scalar_lea.vmem %s0, %s395
        $region52: #{cross_attention_forward.7} parent=47 // pred_fallthru
          _
        // Predicated region
        $region53: #{cross_attention_forward.7} parent=47 // pred_check
          %p397 = pneg %p68
        $region54: #{cross_attention_forward.7} parent=47 // pred_check_branch
          %399 = sbr.rel (%p397) target = $region56
        $region55: #{cross_attention_forward.7} parent=47 // pred_region
          %p400 = scmp.lt.s32.totalorder %s22, 1
          %s401 = scalar_select %p400, %s22, 1
          %s402 = smul.addr %s401, 2
          %s403 = smul.addr %s402, 8
          %s404 = scalar_lea.vmem %s1, %s403
        $region56: #{cross_attention_forward.7} parent=47 // pred_fallthru
          _
        // Predicated region
        $region57: #{cross_attention_forward.7} parent=47 // pred_check
          %p405 = pneg %p94
        $region58: #{cross_attention_forward.7} parent=47 // pred_check_branch
          %407 = sbr.rel (%p405) target = $region60
        $region59: #{cross_attention_forward.7} parent=47 // pred_region
          %p408 = scmp.lt.s32.totalorder %s22, 1
          %s409 = scalar_select %p408, %s22, 1
          %s410 = smul.addr %s409, 8
          %s411 = scalar_lea.vmem %s2, %s410
        $region60: #{cross_attention_forward.7} parent=47 // pred_fallthru
          _
        // Predicated region
        $region61: #{cross_attention_forward.7} parent=47 // pred_check
          %p412 = pneg %p120
        $region62: #{cross_attention_forward.7} parent=47 // pred_check_branch
          %414 = sbr.rel (%p412) target = $region64
        $region63: #{cross_attention_forward.7} parent=47 // pred_region
          %p415 = scmp.lt.s32.totalorder %s22, 1
          %s416 = scalar_select %p415, %s22, 1
          %s417 = smul.addr %s416, 8
          %s418 = scalar_lea.vmem %s3, %s417
        $region64: #{cross_attention_forward.7} parent=47 // pred_fallthru
          _
        // Predicated region
        $region65: #{cross_attention_forward.7} parent=47 // pred_check
          %p419 = pneg %p146
        $region66: #{cross_attention_forward.7} parent=47 // pred_check_branch
          %421 = sbr.rel (%p419) target = $region68
        $region67: #{cross_attention_forward.7} parent=47 // pred_region
          %p422 = scmp.lt.s32.totalorder %s22, 1
          %s423 = scalar_select %p422, %s22, 1
          %s424 = scalar_lea.vmem %s4, %s423
        $region68: #{cross_attention_forward.7} parent=47 // pred_fallthru
          _
      $region48: #{cross_attention_forward.7} parent=5 // pred_fallthru
        _
      %p425 = scmp.le.s32.totalorder 1, %s22
      %p426 = scmp.lt.s32.totalorder %s22, 3
      %p427 = pnand %p425, %p426
      %p428 = pneg %p427
      // Predicated region
      $region69: #{cross_attention_forward.7} parent=5 // pred_check
        _
      $region70: #{cross_attention_forward.7} parent=5 // pred_check_branch
        %430 = sbr.rel (%p427) target = $region72
      $region71: #{cross_attention_forward.7} parent=5 // pred_region
        %s431 = ssub.s32 %s22, 1
        %p432 = scmp.lt.s32.totalorder %s27, 1
        %s433 = scalar_select %p432, %s27, 1
        %s434 = smul.addr %s433, 2
        %s435 = smul.addr %s434, 8
        %s436 = scalar_lea.vmem %s0, %s435
        %p437 = pneg %p48
        %p438 = pneg %p45
        %p439 = scmp.lt.s32.totalorder %s27, 1
        %s440 = scalar_select %p439, %s27, 1
        %s441 = smul.addr %s440, 2
        %s442 = smul.addr %s441, 8
        %s443 = scalar_lea.vmem %s1, %s442
        %p444 = pneg %p74
        %p445 = pneg %p71
        %p446 = scmp.lt.s32.totalorder %s27, 1
        %s447 = scalar_select %p446, %s27, 1
        %s448 = smul.addr %s447, 8
        %s449 = scalar_lea.vmem %s2, %s448
        %p450 = pneg %p100
        %p451 = pneg %p97
        %p452 = scmp.lt.s32.totalorder %s27, 1
        %s453 = scalar_select %p452, %s27, 1
        %s454 = smul.addr %s453, 8
        %s455 = scalar_lea.vmem %s3, %s454
        %p456 = pneg %p126
        %p457 = pneg %p123
        %p458 = scmp.lt.s32.totalorder %s27, 1
        %s459 = scalar_select %p458, %s27, 1
        %s460 = scalar_lea.vmem %s4, %s459
        %p461 = pneg %p152
        %p462 = pneg %p149
        %p463 = pneg %p173
        %p464 = pneg %p170
        %p465 = pneg %p194
        %p466 = pneg %p191
        %p467 = pneg %p215
        %p468 = pneg %p212
        %p469 = pneg %p236
        %p470 = pneg %p233
        %p471 = pneg %p257
        %p472 = pneg %p254
        %p473 = pneg %p278
        %p474 = pneg %p275
        %p475 = pneg %p299
        %p476 = pneg %p296
        %p477 = pneg %p320
        %p478 = pneg %p317
        %p479 = pneg %p346
        %p480 = pneg %p343
        %s481 = sand.u32 %s333, 1
        %s482 = scalar_lea.sflag [#allocation4], %s481
        %s483 = sand.u32 %s333, 1
        %s484 = smul.addr %s483, 16
        %s485 = scalar_lea.vmem [#allocation3], %s484
        %p486 = scmp.lt.s32.totalorder %s27, 1
        %s487 = scalar_select %p486, %s27, 1
        %s488 = smul.addr %s487, 2
        %s489 = smul.addr %s488, 8
        %s490 = scalar_lea.vmem %s0, %s489
        %p491 = scmp.lt.s32.totalorder %s27, 1
        %s492 = scalar_select %p491, %s27, 1
        %s493 = smul.addr %s492, 2
        %s494 = smul.addr %s493, 8
        %s495 = scalar_lea.vmem %s1, %s494
        %p496 = scmp.lt.s32.totalorder %s27, 1
        %s497 = scalar_select %p496, %s27, 1
        %s498 = smul.addr %s497, 8
        %s499 = scalar_lea.vmem %s2, %s498
        %p500 = scmp.lt.s32.totalorder %s27, 1
        %s501 = scalar_select %p500, %s27, 1
        %s502 = smul.addr %s501, 8
        %s503 = scalar_lea.vmem %s3, %s502
        %p504 = scmp.lt.s32.totalorder %s27, 1
        %s505 = scalar_select %p504, %s27, 1
        %s506 = scalar_lea.vmem %s4, %s505
        %v508 = vld [vmem:[%s490] sm:$0xff]
        %v509 = vld [vmem:[%s490 + $0x8] sm:$0xff]
        %v510 = vld [vmem:[%s499] sm:$0xff]
        %v511 = vld [vmem:[%s495] sm:$0xff]
        %v512 = vld [vmem:[%s495 + $0x8] sm:$0xff]
        %v513 = vadd.f32 %v508, %v511
        %v514 = vadd.f32 %v509, %v512
        %v515 = vld [vmem:[%s503] sm:$0xff]
        %v516 = vadd.f32 %v510, %v515
        %v517 = vld [vmem:[%s506] sm:$0x1]
        %v518 = vld [vmem:[%s12] sm:$0x1]
        %v519 = vld [vmem:[%s12 + $0x1] sm:$0x1]
        %v520 = vld [vmem:[%s12 + $0x2] sm:$0x1]
        %v521 = vld [vmem:[%s12 + $0x3] sm:$0x1]
        %v522 = vld [vmem:[%s12 + $0x4] sm:$0x1]
        %v523 = vld [vmem:[%s12 + $0x5] sm:$0x1]
        %v524 = vld [vmem:[%s12 + $0x6] sm:$0x1]
        %v525 = vld [vmem:[%s12 + $0x7] sm:$0x1]
        %v526 = vld [vmem:[%s12 + $0x8] sm:$0x1]
        %v527 = vpack.c.bf16 %v514, %v513
        %v528 = vld [vmem:[%s5] sm:$0xf]
        %v529 = vld [vmem:[%s5 + $0x4] sm:$0xf]
        %v530 = vld [vmem:[%s5 + $0x8] sm:$0xf]
        %v531 = vld [vmem:[%s5 + $0xc] sm:$0xf]
        %v532 = vlaneseq
        %v533 = vshrl.u32 %v532, 7
        %v534 = vsub.s32 0, %v533
        %v535 = vrot.slane %v518, %v534
        %v540 = vunpack.c.l.b16 %v528
        %v541 = vunpack.c.l.b16 %v529
        %v542 = vunpack.c.l.b16 %v530
        %v543 = vunpack.c.l.b16 %v531
        %v544 = vpack.c.b16 %v541, %v540
        %v545 = vpack.c.b16 %v543, %v542
        %vm548 = vcmask 261120
        %v550 = vsel %vm548, %v527, 0
        %552 = vmatprep.subr.bf16.mxu0 0
        %553 = vmatpush1.bf16.msra.mxu0 %v544
        %554 = vmatprep.subr.bf16.mxu0 0
        %555 = vmatpush1.bf16.msra.mxu0 %v545
        %556 = vmatprep.subr.bf16.mxu0 0
        %557 = vmatpush1.bf16.msra.mxu0 0
        %558 = vmatprep.subr.bf16.mxu0 0
        %559 = vmatpush1.bf16.msra.mxu0 0
        %560 = vmatprep.subr.bf16.mxu0 0
        %561 = vmatpush1.bf16.msra.mxu0 0
        %562 = vmatprep.subr.bf16.mxu0 0
        %563 = vmatpush1.bf16.msra.mxu0 0
        %564 = vmatprep.subr.bf16.mxu0 0
        %565 = vmatpush1.bf16.msra.mxu0 0
        %566 = vmatprep.subr.bf16.mxu0 0
        %567 = vmatpush1.bf16.msra.mxu0 0
        %568 = vmatprep.subr.bf16.mxu0 0
        %569 = vmatpush1.bf16.msra.mxu0 0
        %570 = vmatprep.subr.bf16.mxu0 0
        %571 = vmatpush1.bf16.msra.mxu0 0
        %572 = vmatprep.subr.bf16.mxu0 0
        %573 = vmatpush1.bf16.msra.mxu0 0
        %574 = vmatprep.subr.bf16.mxu0 0
        %575 = vmatpush1.bf16.msra.mxu0 0
        %576 = vmatprep.subr.bf16.mxu0 0
        %577 = vmatpush1.bf16.msra.mxu0 0
        %578 = vmatprep.subr.bf16.mxu0 0
        %579 = vmatpush1.bf16.msra.mxu0 0
        %580 = vmatprep.subr.bf16.mxu0 0
        %581 = vmatpush1.bf16.msra.mxu0 0
        %582 = vmatprep.subr.bf16.mxu0 0
        %583 = vmatpush1.bf16.msra.mxu0 0
        %584 = vmatprep.mubr.bf16.mxu0 0
        %585 = vmatmul.mubr.bf16.gmra.mrb[0].mxu0 %v550
        %v586 = vpop.f32.mrb[0].mxu0
        %v587 = vadd.f32 %v535, %v586
        %v588 = vpop.f32.mrb[0].mxu0
        %v589 = vpop.f32.mrb[0].mxu0
        %v590 = vadd.f32 %v535, %v589
        %v591 = vpop.f32.mrb[0].mxu0
        %592 = vdwg.mxu0
        %v593 = vpack.c.bf16 %v516, %v516
        %v594 = vld [vmem:[%s6] sm:$0xf]
        %v595 = vld [vmem:[%s6 + $0x4] sm:$0xf]
        %v596 = vld [vmem:[%s6 + $0x8] sm:$0xf]
        %v597 = vld [vmem:[%s6 + $0xc] sm:$0xf]
        %v598 = vlaneseq
        %v599 = vshrl.u32 %v598, 7
        %v600 = vsub.s32 0, %v599
        %v601 = vrot.slane %v519, %v600
        %v606 = vunpack.c.l.b16 %v594
        %v607 = vunpack.c.l.b16 %v595
        %v608 = vunpack.c.l.b16 %v596
        %v609 = vunpack.c.l.b16 %v597
        %v610 = vpack.c.b16 %v607, %v606
        %v611 = vpack.c.b16 %v609, %v608
        %v615 = vsel %vm548, %v593, 0
        %617 = vmatprep.subr.bf16.mxu0 0
        %618 = vmatpush1.bf16.msra.mxu0 %v610
        %619 = vmatprep.subr.bf16.mxu0 0
        %620 = vmatpush1.bf16.msra.mxu0 %v611
        %621 = vmatprep.subr.bf16.mxu0 0
        %622 = vmatpush1.bf16.msra.mxu0 0
        %623 = vmatprep.subr.bf16.mxu0 0
        %624 = vmatpush1.bf16.msra.mxu0 0
        %625 = vmatprep.subr.bf16.mxu0 0
        %626 = vmatpush1.bf16.msra.mxu0 0
        %627 = vmatprep.subr.bf16.mxu0 0
        %628 = vmatpush1.bf16.msra.mxu0 0
        %629 = vmatprep.subr.bf16.mxu0 0
        %630 = vmatpush1.bf16.msra.mxu0 0
        %631 = vmatprep.subr.bf16.mxu0 0
        %632 = vmatpush1.bf16.msra.mxu0 0
        %633 = vmatprep.subr.bf16.mxu0 0
        %634 = vmatpush1.bf16.msra.mxu0 0
        %635 = vmatprep.subr.bf16.mxu0 0
        %636 = vmatpush1.bf16.msra.mxu0 0
        %637 = vmatprep.subr.bf16.mxu0 0
        %638 = vmatpush1.bf16.msra.mxu0 0
        %639 = vmatprep.subr.bf16.mxu0 0
        %640 = vmatpush1.bf16.msra.mxu0 0
        %641 = vmatprep.subr.bf16.mxu0 0
        %642 = vmatpush1.bf16.msra.mxu0 0
        %643 = vmatprep.subr.bf16.mxu0 0
        %644 = vmatpush1.bf16.msra.mxu0 0
        %645 = vmatprep.subr.bf16.mxu0 0
        %646 = vmatpush1.bf16.msra.mxu0 0
        %647 = vmatprep.subr.bf16.mxu0 0
        %648 = vmatpush1.bf16.msra.mxu0 0
        %649 = vmatprep.mubr.bf16.mxu0 0
        %650 = vmatmul.mubr.bf16.gmra.mrb[0].mxu0 %v615
        %v651 = vpop.f32.mrb[0].mxu0
        %v652 = vadd.f32 %v601, %v651
        %v653 = vpop.f32.mrb[0].mxu0
        %v654 = vpop.f32.mrb[0].mxu0
        %v655 = vpop.f32.mrb[0].mxu0
        %656 = vdwg.mxu0
        %v657 = vpack.c.bf16 %v510, %v510
        %v658 = vld [vmem:[%s7] sm:$0xf]
        %v659 = vld [vmem:[%s7 + $0x4] sm:$0xf]
        %v660 = vld [vmem:[%s7 + $0x8] sm:$0xf]
        %v661 = vld [vmem:[%s7 + $0xc] sm:$0xf]
        %v662 = vlaneseq
        %v663 = vshrl.u32 %v662, 7
        %v664 = vsub.s32 0, %v663
        %v665 = vrot.slane %v520, %v664
        %v670 = vunpack.c.l.b16 %v658
        %v671 = vunpack.c.l.b16 %v659
        %v672 = vunpack.c.l.b16 %v660
        %v673 = vunpack.c.l.b16 %v661
        %v674 = vpack.c.b16 %v671, %v670
        %v675 = vpack.c.b16 %v673, %v672
        %v679 = vsel %vm548, %v657, 0
        %681 = vmatprep.subr.bf16.mxu0 0
        %682 = vmatpush1.bf16.msra.mxu0 %v674
        %683 = vmatprep.subr.bf16.mxu0 0
        %684 = vmatpush1.bf16.msra.mxu0 %v675
        %685 = vmatprep.subr.bf16.mxu0 0
        %686 = vmatpush1.bf16.msra.mxu0 0
        %687 = vmatprep.subr.bf16.mxu0 0
        %688 = vmatpush1.bf16.msra.mxu0 0
        %689 = vmatprep.subr.bf16.mxu0 0
        %690 = vmatpush1.bf16.msra.mxu0 0
        %691 = vmatprep.subr.bf16.mxu0 0
        %692 = vmatpush1.bf16.msra.mxu0 0
        %693 = vmatprep.subr.bf16.mxu0 0
        %694 = vmatpush1.bf16.msra.mxu0 0
        %695 = vmatprep.subr.bf16.mxu0 0
        %696 = vmatpush1.bf16.msra.mxu0 0
        %697 = vmatprep.subr.bf16.mxu0 0
        %698 = vmatpush1.bf16.msra.mxu0 0
        %699 = vmatprep.subr.bf16.mxu0 0
        %700 = vmatpush1.bf16.msra.mxu0 0
        %701 = vmatprep.subr.bf16.mxu0 0
        %702 = vmatpush1.bf16.msra.mxu0 0
        %703 = vmatprep.subr.bf16.mxu0 0
        %704 = vmatpush1.bf16.msra.mxu0 0
        %705 = vmatprep.subr.bf16.mxu0 0
        %706 = vmatpush1.bf16.msra.mxu0 0
        %707 = vmatprep.subr.bf16.mxu0 0
        %708 = vmatpush1.bf16.msra.mxu0 0
        %709 = vmatprep.subr.bf16.mxu0 0
        %710 = vmatpush1.bf16.msra.mxu0 0
        %711 = vmatprep.subr.bf16.mxu0 0
        %712 = vmatpush1.bf16.msra.mxu0 0
        %713 = vmatprep.mubr.bf16.mxu0 0
        %714 = vmatmul.mubr.bf16.gmra.mrb[0].mxu0 %v679
        %v715 = vpop.f32.mrb[0].mxu0
        %v716 = vadd.f32 %v665, %v715
        %v717 = vpop.f32.mrb[0].mxu0
        %v718 = vpop.f32.mrb[0].mxu0
        %v719 = vpop.f32.mrb[0].mxu0
        %720 = vdwg.mxu0
        %721 = vxpose.xlu0.b32.start [1/16] %v652, 128
        %722 = vxpose.xlu0.b32.cont [2/16] 0.0, 128
        %723 = vxpose.xlu0.b32.cont [3/16] 0.0, 128
        %724 = vxpose.xlu0.b32.cont [4/16] 0.0, 128
        %725 = vxpose.xlu0.b32.cont [5/16] 0.0, 128
        %726 = vxpose.xlu0.b32.cont [6/16] 0.0, 128
        %727 = vxpose.xlu0.b32.cont [7/16] 0.0, 128
        %728 = vxpose.xlu0.b32.cont [8/16] 0.0, 128
        %729 = vxpose.xlu0.b32.cont [9/16] 0.0, 128
        %730 = vxpose.xlu0.b32.cont [10/16] 0.0, 128
        %731 = vxpose.xlu0.b32.cont [11/16] 0.0, 128
        %732 = vxpose.xlu0.b32.cont [12/16] 0.0, 128
        %733 = vxpose.xlu0.b32.cont [13/16] 0.0, 128
        %734 = vxpose.xlu0.b32.cont [14/16] 0.0, 128
        %735 = vxpose.xlu0.b32.cont [15/16] 0.0, 128
        %736 = vxpose.xlu0.b32.end [16/16] 0.0, 128
        %v737 = vpop.trf.xlu0
        %v738 = vpop.trf.xlu0
        %v739 = vpop.trf.xlu0
        %v740 = vpop.trf.xlu0
        %v741 = vpop.trf.xlu0
        %v742 = vpop.trf.xlu0
        %v743 = vpop.trf.xlu0
        %v744 = vpop.trf.xlu0
        %v745 = vpop.trf.xlu0
        %v746 = vpop.trf.xlu0
        %v747 = vpop.trf.xlu0
        %v748 = vpop.trf.xlu0
        %v749 = vpop.trf.xlu0
        %v750 = vpop.trf.xlu0
        %v751 = vpop.trf.xlu0
        %v752 = vpop.trf.xlu0
        %v753 = vpack.c.bf16 %v590, %v587
        %v754 = vpack.c.bf16 %v737, %v737
        %v755 = vpack.c.bf16 %v716, %v716
        %v757 = vlaneseq
        %v758 = vshrl.u32 %v757, 7
        %v759 = vsub.s32 0, %v758
        %v760 = vrot.slane %v517, %v759
        %vm762 = vcmask 64512
        %v764 = vsel %vm762, %v753, 0
        %vm766 = vcmask 1043456
        %v768 = vsel %vm766, %v754, 0
        %770 = vmatprep.subr.bf16.mxu0 0
        %771 = vmatpush1.bf16.msra.mxu0 %v768
        %772 = vmatprep.subr.bf16.mxu0 0
        %773 = vmatpush1.bf16.msra.mxu0 0
        %774 = vmatprep.subr.bf16.mxu0 0
        %775 = vmatpush1.bf16.msra.mxu0 0
        %776 = vmatprep.subr.bf16.mxu0 0
        %777 = vmatpush1.bf16.msra.mxu0 0
        %778 = vmatprep.subr.bf16.mxu0 0
        %779 = vmatpush1.bf16.msra.mxu0 0
        %780 = vmatprep.subr.bf16.mxu0 0
        %781 = vmatpush1.bf16.msra.mxu0 0
        %782 = vmatprep.subr.bf16.mxu0 0
        %783 = vmatpush1.bf16.msra.mxu0 0
        %784 = vmatprep.subr.bf16.mxu0 0
        %785 = vmatpush1.bf16.msra.mxu0 0
        %786 = vmatprep.subr.bf16.mxu0 0
        %787 = vmatpush1.bf16.msra.mxu0 0
        %788 = vmatprep.subr.bf16.mxu0 0
        %789 = vmatpush1.bf16.msra.mxu0 0
        %790 = vmatprep.subr.bf16.mxu0 0
        %791 = vmatpush1.bf16.msra.mxu0 0
        %792 = vmatprep.subr.bf16.mxu0 0
        %793 = vmatpush1.bf16.msra.mxu0 0
        %794 = vmatprep.subr.bf16.mxu0 0
        %795 = vmatpush1.bf16.msra.mxu0 0
        %796 = vmatprep.subr.bf16.mxu0 0
        %797 = vmatpush1.bf16.msra.mxu0 0
        %798 = vmatprep.subr.bf16.mxu0 0
        %799 = vmatpush1.bf16.msra.mxu0 0
        %800 = vmatprep.subr.bf16.mxu0 0
        %801 = vmatpush1.bf16.msra.mxu0 0
        %802 = vmatprep.mubr.bf16.mxu0 0
        %803 = vmatmul.mubr.bf16.gmra.mrb[0].mxu0 %v764
        %v804 = vpop.f32.mrb[0].mxu0
        %v805 = vadd.f32 %v760, %v804
        %v806 = vpop.f32.mrb[0].mxu0
        %v807 = vpop.f32.mrb[0].mxu0
        %v808 = vadd.f32 %v760, %v807
        %v809 = vpop.f32.mrb[0].mxu0
        %810 = vdwg.mxu0
        %v811 = vsel %vm762, %v805, -inf
        %812 = vmax.xlane.f32.xlu0 %v811
        %v813 = vpop.xlane.xlu0 %812
        %v814 = vsel %vm762, %v808, -inf
        %815 = vmax.xlane.f32.xlu0 %v814
        %v816 = vpop.xlane.xlu0 %815
        %v817 = vsub.f32 %v805, %v813
        %v818 = vsub.f32 %v808, %v816
        %v819 = vmul.f32 %v817, 1.442695
        %v820 = vpow.pop %v819
        %v821 = vmul.f32 %v818, 1.442695
        %v822 = vpow.pop %v821
        %v823 = vsel %vm762, %v820, 0.0
        %824 = vadd.xlane.f32.xlu0 %v823
        %v825 = vpop.xlane.xlu0 %824
        %v826 = vsel %vm762, %v822, 0.0
        %827 = vadd.xlane.f32.xlu0 %v826
        %v828 = vpop.xlane.xlu0 %827
        %v829 = vrcp.pop %v825
        %v830 = vrcp.pop %v828
        %v831 = vmul.f32 %v820, %v829
        %v832 = vmul.f32 %v822, %v830
        %v833 = vpack.c.bf16 %v832, %v831
        %v835 = vsel %vm762, %v833, 0
        %v838 = vsel %vm766, %v755, 0
        %840 = vmatprep.subr.bf16.mxu0 0
        %841 = vmatpush1.bf16.msra.mxu0 %v838
        %842 = vmatprep.subr.bf16.mxu0 0
        %843 = vmatpush1.bf16.msra.mxu0 0
        %844 = vmatprep.subr.bf16.mxu0 0
        %845 = vmatpush1.bf16.msra.mxu0 0
        %846 = vmatprep.subr.bf16.mxu0 0
        %847 = vmatpush1.bf16.msra.mxu0 0
        %848 = vmatprep.subr.bf16.mxu0 0
        %849 = vmatpush1.bf16.msra.mxu0 0
        %850 = vmatprep.subr.bf16.mxu0 0
        %851 = vmatpush1.bf16.msra.mxu0 0
        %852 = vmatprep.subr.bf16.mxu0 0
        %853 = vmatpush1.bf16.msra.mxu0 0
        %854 = vmatprep.subr.bf16.mxu0 0
        %855 = vmatpush1.bf16.msra.mxu0 0
        %856 = vmatprep.subr.bf16.mxu0 0
        %857 = vmatpush1.bf16.msra.mxu0 0
        %858 = vmatprep.subr.bf16.mxu0 0
        %859 = vmatpush1.bf16.msra.mxu0 0
        %860 = vmatprep.subr.bf16.mxu0 0
        %861 = vmatpush1.bf16.msra.mxu0 0
        %862 = vmatprep.subr.bf16.mxu0 0
        %863 = vmatpush1.bf16.msra.mxu0 0
        %864 = vmatprep.subr.bf16.mxu0 0
        %865 = vmatpush1.bf16.msra.mxu0 0
        %866 = vmatprep.subr.bf16.mxu0 0
        %867 = vmatpush1.bf16.msra.mxu0 0
        %868 = vmatprep.subr.bf16.mxu0 0
        %869 = vmatpush1.bf16.msra.mxu0 0
        %870 = vmatprep.subr.bf16.mxu0 0
        %871 = vmatpush1.bf16.msra.mxu0 0
        %872 = vmatprep.mubr.bf16.mxu0 0
        %873 = vmatmul.mubr.bf16.gmra.mrb[0].mxu0 %v835
        %v874 = vpop.f32.mrb[0].mxu0
        %v875 = vadd.f32 0.0, %v874
        %v876 = vpop.f32.mrb[0].mxu0
        %v877 = vpop.f32.mrb[0].mxu0
        %v878 = vadd.f32 0.0, %v877
        %v879 = vpop.f32.mrb[0].mxu0
        %880 = vdwg.mxu0
        %881 = vst.msk [vmem:[#allocation2] sm:$0xff] %vm762, %v875
        %882 = vst.msk [vmem:[#allocation2 + $0x8] sm:$0xff] %vm762, %v878
        %v883 = vpack.c.bf16 %v738, %v738
        %885 = vrot.lane.b32.xlu0 %v753, 120
        %v886 = vpop.permute.xlu0 %885
        %v888 = vsel %vm762, %v886, 0
        %v891 = vsel %vm766, %v883, 0
        %893 = vmatprep.subr.bf16.mxu0 0
        %894 = vmatpush1.bf16.msra.mxu0 %v891
        %895 = vmatprep.subr.bf16.mxu0 0
        %896 = vmatpush1.bf16.msra.mxu0 0
        %897 = vmatprep.subr.bf16.mxu0 0
        %898 = vmatpush1.bf16.msra.mxu0 0
        %899 = vmatprep.subr.bf16.mxu0 0
        %900 = vmatpush1.bf16.msra.mxu0 0
        %901 = vmatprep.subr.bf16.mxu0 0
        %902 = vmatpush1.bf16.msra.mxu0 0
        %903 = vmatprep.subr.bf16.mxu0 0
        %904 = vmatpush1.bf16.msra.mxu0 0
        %905 = vmatprep.subr.bf16.mxu0 0
        %906 = vmatpush1.bf16.msra.mxu0 0
        %907 = vmatprep.subr.bf16.mxu0 0
        %908 = vmatpush1.bf16.msra.mxu0 0
        %909 = vmatprep.subr.bf16.mxu0 0
        %910 = vmatpush1.bf16.msra.mxu0 0
        %911 = vmatprep.subr.bf16.mxu0 0
        %912 = vmatpush1.bf16.msra.mxu0 0
        %913 = vmatprep.subr.bf16.mxu0 0
        %914 = vmatpush1.bf16.msra.mxu0 0
        %915 = vmatprep.subr.bf16.mxu0 0
        %916 = vmatpush1.bf16.msra.mxu0 0
        %917 = vmatprep.subr.bf16.mxu0 0
        %918 = vmatpush1.bf16.msra.mxu0 0
        %919 = vmatprep.subr.bf16.mxu0 0
        %920 = vmatpush1.bf16.msra.mxu0 0
        %921 = vmatprep.subr.bf16.mxu0 0
        %922 = vmatpush1.bf16.msra.mxu0 0
        %923 = vmatprep.subr.bf16.mxu0 0
        %924 = vmatpush1.bf16.msra.mxu0 0
        %925 = vmatprep.mubr.bf16.mxu0 0
        %926 = vmatmul.mubr.bf16.gmra.mrb[0].mxu0 %v888
        %v927 = vpop.f32.mrb[0].mxu0
        %v928 = vadd.f32 %v760, %v927
        %v929 = vpop.f32.mrb[0].mxu0
        %v930 = vpop.f32.mrb[0].mxu0
        %v931 = vadd.f32 %v760, %v930
        %v932 = vpop.f32.mrb[0].mxu0
        %933 = vdwg.mxu0
        %v934 = vsel %vm762, %v928, -inf
        %935 = vmax.xlane.f32.xlu0 %v934
        %v936 = vpop.xlane.xlu0 %935
        %v937 = vsel %vm762, %v931, -inf
        %938 = vmax.xlane.f32.xlu0 %v937
        %v939 = vpop.xlane.xlu0 %938
        %v940 = vsub.f32 %v928, %v936
        %v941 = vsub.f32 %v931, %v939
        %v942 = vmul.f32 %v940, 1.442695
        %v943 = vpow.pop %v942
        %v944 = vmul.f32 %v941, 1.442695
        %v945 = vpow.pop %v944
        %v946 = vsel %vm762, %v943, 0.0
        %947 = vadd.xlane.f32.xlu0 %v946
        %v948 = vpop.xlane.xlu0 %947
        %v949 = vsel %vm762, %v945, 0.0
        %950 = vadd.xlane.f32.xlu0 %v949
        %v951 = vpop.xlane.xlu0 %950
        %v952 = vrcp.pop %v948
        %v953 = vrcp.pop %v951
        %v954 = vmul.f32 %v943, %v952
        %v955 = vmul.f32 %v945, %v953
        %v956 = vpack.c.bf16 %v955, %v954
        %958 = vrot.lane.b32.xlu0 %v755, 120
        %v959 = vpop.permute.xlu0 %958
        %v961 = vsel %vm762, %v956, 0
        %v964 = vsel %vm766, %v959, 0
        %966 = vmatprep.subr.bf16.mxu0 0
        %967 = vmatpush1.bf16.msra.mxu0 %v964
        %968 = vmatprep.subr.bf16.mxu0 0
        %969 = vmatpush1.bf16.msra.mxu0 0
        %970 = vmatprep.subr.bf16.mxu0 0
        %971 = vmatpush1.bf16.msra.mxu0 0
        %972 = vmatprep.subr.bf16.mxu0 0
        %973 = vmatpush1.bf16.msra.mxu0 0
        %974 = vmatprep.subr.bf16.mxu0 0
        %975 = vmatpush1.bf16.msra.mxu0 0
        %976 = vmatprep.subr.bf16.mxu0 0
        %977 = vmatpush1.bf16.msra.mxu0 0
        %978 = vmatprep.subr.bf16.mxu0 0
        %979 = vmatpush1.bf16.msra.mxu0 0
        %980 = vmatprep.subr.bf16.mxu0 0
        %981 = vmatpush1.bf16.msra.mxu0 0
        %982 = vmatprep.subr.bf16.mxu0 0
        %983 = vmatpush1.bf16.msra.mxu0 0
        %984 = vmatprep.subr.bf16.mxu0 0
        %985 = vmatpush1.bf16.msra.mxu0 0
        %986 = vmatprep.subr.bf16.mxu0 0
        %987 = vmatpush1.bf16.msra.mxu0 0
        %988 = vmatprep.subr.bf16.mxu0 0
        %989 = vmatpush1.bf16.msra.mxu0 0
        %990 = vmatprep.subr.bf16.mxu0 0
        %991 = vmatpush1.bf16.msra.mxu0 0
        %992 = vmatprep.subr.bf16.mxu0 0
        %993 = vmatpush1.bf16.msra.mxu0 0
        %994 = vmatprep.subr.bf16.mxu0 0
        %995 = vmatpush1.bf16.msra.mxu0 0
        %996 = vmatprep.subr.bf16.mxu0 0
        %997 = vmatpush1.bf16.msra.mxu0 0
        %998 = vmatprep.mubr.bf16.mxu0 0
        %999 = vmatmul.mubr.bf16.gmra.mrb[0].mxu0 %v961
        %v1000 = vpop.f32.mrb[0].mxu0
        %v1001 = vadd.f32 0.0, %v1000
        %v1002 = vpop.f32.mrb[0].mxu0
        %v1003 = vpop.f32.mrb[0].mxu0
        %v1004 = vadd.f32 0.0, %v1003
        %v1005 = vpop.f32.mrb[0].mxu0
        %1006 = vdwg.mxu0
        %1009 = vrot.lane.b32.xlu0 %v1001, 8
        %v1010 = vpop.permute.xlu0 %1009
        %1011 = vrot.lane.b32.xlu0 %v1004, 8
        %v1012 = vpop.permute.xlu0 %1011
        %vm1015 = vcmask 130112
        %1016 = vst.msk [vmem:[#allocation2] sm:$0xff] %vm1015, %v1010
        %1017 = vst.msk [vmem:[#allocation2 + $0x8] sm:$0xff] %vm1015, %v1012
        %v1018 = vpack.c.bf16 %v739, %v739
        %1019 = vrot.lane.b32.xlu0 %v753, 112
        %v1020 = vpop.permute.xlu0 %1019
        %v1022 = vsel %vm762, %v1020, 0
        %v1025 = vsel %vm766, %v1018, 0
        %1027 = vmatprep.subr.bf16.mxu0 0
        %1028 = vmatpush1.bf16.msra.mxu0 %v1025
        %1029 = vmatprep.subr.bf16.mxu0 0
        %1030 = vmatpush1.bf16.msra.mxu0 0
        %1031 = vmatprep.subr.bf16.mxu0 0
        %1032 = vmatpush1.bf16.msra.mxu0 0
        %1033 = vmatprep.subr.bf16.mxu0 0
        %1034 = vmatpush1.bf16.msra.mxu0 0
        %1035 = vmatprep.subr.bf16.mxu0 0
        %1036 = vmatpush1.bf16.msra.mxu0 0
        %1037 = vmatprep.subr.bf16.mxu0 0
        %1038 = vmatpush1.bf16.msra.mxu0 0
        %1039 = vmatprep.subr.bf16.mxu0 0
        %1040 = vmatpush1.bf16.msra.mxu0 0
        %1041 = vmatprep.subr.bf16.mxu0 0
        %1042 = vmatpush1.bf16.msra.mxu0 0
        %1043 = vmatprep.subr.bf16.mxu0 0
        %1044 = vmatpush1.bf16.msra.mxu0 0
        %1045 = vmatprep.subr.bf16.mxu0 0
        %1046 = vmatpush1.bf16.msra.mxu0 0
        %1047 = vmatprep.subr.bf16.mxu0 0
        %1048 = vmatpush1.bf16.msra.mxu0 0
        %1049 = vmatprep.subr.bf16.mxu0 0
        %1050 = vmatpush1.bf16.msra.mxu0 0
        %1051 = vmatprep.subr.bf16.mxu0 0
        %1052 = vmatpush1.bf16.msra.mxu0 0
        %1053 = vmatprep.subr.bf16.mxu0 0
        %1054 = vmatpush1.bf16.msra.mxu0 0
        %1055 = vmatprep.subr.bf16.mxu0 0
        %1056 = vmatpush1.bf16.msra.mxu0 0
        %1057 = vmatprep.subr.bf16.mxu0 0
        %1058 = vmatpush1.bf16.msra.mxu0 0
        %1059 = vmatprep.mubr.bf16.mxu0 0
        %1060 = vmatmul.mubr.bf16.gmra.mrb[0].mxu0 %v1022
        %v1061 = vpop.f32.mrb[0].mxu0
        %v1062 = vadd.f32 %v760, %v1061
        %v1063 = vpop.f32.mrb[0].mxu0
        %v1064 = vpop.f32.mrb[0].mxu0
        %v1065 = vadd.f32 %v760, %v1064
        %v1066 = vpop.f32.mrb[0].mxu0
        %1067 = vdwg.mxu0
        %v1068 = vsel %vm762, %v1062, -inf
        %1069 = vmax.xlane.f32.xlu0 %v1068
        %v1070 = vpop.xlane.xlu0 %1069
        %v1071 = vsel %vm762, %v1065, -inf
        %1072 = vmax.xlane.f32.xlu0 %v1071
        %v1073 = vpop.xlane.xlu0 %1072
        %v1074 = vsub.f32 %v1062, %v1070
        %v1075 = vsub.f32 %v1065, %v1073
        %v1076 = vmul.f32 %v1074, 1.442695
        %v1077 = vpow.pop %v1076
        %v1078 = vmul.f32 %v1075, 1.442695
        %v1079 = vpow.pop %v1078
        %v1080 = vsel %vm762, %v1077, 0.0
        %1081 = vadd.xlane.f32.xlu0 %v1080
        %v1082 = vpop.xlane.xlu0 %1081
        %v1083 = vsel %vm762, %v1079, 0.0
        %1084 = vadd.xlane.f32.xlu0 %v1083
        %v1085 = vpop.xlane.xlu0 %1084
        %v1086 = vrcp.pop %v1082
        %v1087 = vrcp.pop %v1085
        %v1088 = vmul.f32 %v1077, %v1086
        %v1089 = vmul.f32 %v1079, %v1087
        %v1090 = vpack.c.bf16 %v1089, %v1088
        %1091 = vrot.lane.b32.xlu0 %v755, 112
        %v1092 = vpop.permute.xlu0 %1091
        %v1094 = vsel %vm762, %v1090, 0
        %v1097 = vsel %vm766, %v1092, 0
        %1099 = vmatprep.subr.bf16.mxu0 0
        %1100 = vmatpush1.bf16.msra.mxu0 %v1097
        %1101 = vmatprep.subr.bf16.mxu0 0
        %1102 = vmatpush1.bf16.msra.mxu0 0
        %1103 = vmatprep.subr.bf16.mxu0 0
        %1104 = vmatpush1.bf16.msra.mxu0 0
        %1105 = vmatprep.subr.bf16.mxu0 0
        %1106 = vmatpush1.bf16.msra.mxu0 0
        %1107 = vmatprep.subr.bf16.mxu0 0
        %1108 = vmatpush1.bf16.msra.mxu0 0
        %1109 = vmatprep.subr.bf16.mxu0 0
        %1110 = vmatpush1.bf16.msra.mxu0 0
        %1111 = vmatprep.subr.bf16.mxu0 0
        %1112 = vmatpush1.bf16.msra.mxu0 0
        %1113 = vmatprep.subr.bf16.mxu0 0
        %1114 = vmatpush1.bf16.msra.mxu0 0
        %1115 = vmatprep.subr.bf16.mxu0 0
        %1116 = vmatpush1.bf16.msra.mxu0 0
        %1117 = vmatprep.subr.bf16.mxu0 0
        %1118 = vmatpush1.bf16.msra.mxu0 0
        %1119 = vmatprep.subr.bf16.mxu0 0
        %1120 = vmatpush1.bf16.msra.mxu0 0
        %1121 = vmatprep.subr.bf16.mxu0 0
        %1122 = vmatpush1.bf16.msra.mxu0 0
        %1123 = vmatprep.subr.bf16.mxu0 0
        %1124 = vmatpush1.bf16.msra.mxu0 0
        %1125 = vmatprep.subr.bf16.mxu0 0
        %1126 = vmatpush1.bf16.msra.mxu0 0
        %1127 = vmatprep.subr.bf16.mxu0 0
        %1128 = vmatpush1.bf16.msra.mxu0 0
        %1129 = vmatprep.subr.bf16.mxu0 0
        %1130 = vmatpush1.bf16.msra.mxu0 0
        %1131 = vmatprep.mubr.bf16.mxu0 0
        %1132 = vmatmul.mubr.bf16.gmra.mrb[0].mxu0 %v1094
        %v1133 = vpop.f32.mrb[0].mxu0
        %v1134 = vadd.f32 0.0, %v1133
        %v1135 = vpop.f32.mrb[0].mxu0
        %v1136 = vpop.f32.mrb[0].mxu0
        %v1137 = vadd.f32 0.0, %v1136
        %v1138 = vpop.f32.mrb[0].mxu0
        %1139 = vdwg.mxu0
        %1142 = vrot.lane.b32.xlu0 %v1134, 16
        %v1143 = vpop.permute.xlu0 %1142
        %1144 = vrot.lane.b32.xlu0 %v1137, 16
        %v1145 = vpop.permute.xlu0 %1144
        %vm1148 = vcmask 195712
        %1149 = vst.msk [vmem:[#allocation2] sm:$0xff] %vm1148, %v1143
        %1150 = vst.msk [vmem:[#allocation2 + $0x8] sm:$0xff] %vm1148, %v1145
        %v1151 = vpack.c.bf16 %v740, %v740
        %1152 = vrot.lane.b32.xlu0 %v753, 104
        %v1153 = vpop.permute.xlu0 %1152
        %v1155 = vsel %vm762, %v1153, 0
        %v1158 = vsel %vm766, %v1151, 0
        %1160 = vmatprep.subr.bf16.mxu0 0
        %1161 = vmatpush1.bf16.msra.mxu0 %v1158
        %1162 = vmatprep.subr.bf16.mxu0 0
        %1163 = vmatpush1.bf16.msra.mxu0 0
        %1164 = vmatprep.subr.bf16.mxu0 0
        %1165 = vmatpush1.bf16.msra.mxu0 0
        %1166 = vmatprep.subr.bf16.mxu0 0
        %1167 = vmatpush1.bf16.msra.mxu0 0
        %1168 = vmatprep.subr.bf16.mxu0 0
        %1169 = vmatpush1.bf16.msra.mxu0 0
        %1170 = vmatprep.subr.bf16.mxu0 0
        %1171 = vmatpush1.bf16.msra.mxu0 0
        %1172 = vmatprep.subr.bf16.mxu0 0
        %1173 = vmatpush1.bf16.msra.mxu0 0
        %1174 = vmatprep.subr.bf16.mxu0 0
        %1175 = vmatpush1.bf16.msra.mxu0 0
        %1176 = vmatprep.subr.bf16.mxu0 0
        %1177 = vmatpush1.bf16.msra.mxu0 0
        %1178 = vmatprep.subr.bf16.mxu0 0
        %1179 = vmatpush1.bf16.msra.mxu0 0
        %1180 = vmatprep.subr.bf16.mxu0 0
        %1181 = vmatpush1.bf16.msra.mxu0 0
        %1182 = vmatprep.subr.bf16.mxu0 0
        %1183 = vmatpush1.bf16.msra.mxu0 0
        %1184 = vmatprep.subr.bf16.mxu0 0
        %1185 = vmatpush1.bf16.msra.mxu0 0
        %1186 = vmatprep.subr.bf16.mxu0 0
        %1187 = vmatpush1.bf16.msra.mxu0 0
        %1188 = vmatprep.subr.bf16.mxu0 0
        %1189 = vmatpush1.bf16.msra.mxu0 0
        %1190 = vmatprep.subr.bf16.mxu0 0
        %1191 = vmatpush1.bf16.msra.mxu0 0
        %1192 = vmatprep.mubr.bf16.mxu0 0
        %1193 = vmatmul.mubr.bf16.gmra.mrb[0].mxu0 %v1155
        %v1194 = vpop.f32.mrb[0].mxu0
        %v1195 = vadd.f32 %v760, %v1194
        %v1196 = vpop.f32.mrb[0].mxu0
        %v1197 = vpop.f32.mrb[0].mxu0
        %v1198 = vadd.f32 %v760, %v1197
        %v1199 = vpop.f32.mrb[0].mxu0
        %1200 = vdwg.mxu0
        %v1201 = vsel %vm762, %v1195, -inf
        %1202 = vmax.xlane.f32.xlu0 %v1201
        %v1203 = vpop.xlane.xlu0 %1202
        %v1204 = vsel %vm762, %v1198, -inf
        %1205 = vmax.xlane.f32.xlu0 %v1204
        %v1206 = vpop.xlane.xlu0 %1205
        %v1207 = vsub.f32 %v1195, %v1203
        %v1208 = vsub.f32 %v1198, %v1206
        %v1209 = vmul.f32 %v1207, 1.442695
        %v1210 = vpow.pop %v1209
        %v1211 = vmul.f32 %v1208, 1.442695
        %v1212 = vpow.pop %v1211
        %v1213 = vsel %vm762, %v1210, 0.0
        %1214 = vadd.xlane.f32.xlu0 %v1213
        %v1215 = vpop.xlane.xlu0 %1214
        %v1216 = vsel %vm762, %v1212, 0.0
        %1217 = vadd.xlane.f32.xlu0 %v1216
        %v1218 = vpop.xlane.xlu0 %1217
        %v1219 = vrcp.pop %v1215
        %v1220 = vrcp.pop %v1218
        %v1221 = vmul.f32 %v1210, %v1219
        %v1222 = vmul.f32 %v1212, %v1220
        %v1223 = vpack.c.bf16 %v1222, %v1221
        %1224 = vrot.lane.b32.xlu0 %v755, 104
        %v1225 = vpop.permute.xlu0 %1224
        %v1227 = vsel %vm762, %v1223, 0
        %v1230 = vsel %vm766, %v1225, 0
        %1232 = vmatprep.subr.bf16.mxu0 0
        %1233 = vmatpush1.bf16.msra.mxu0 %v1230
        %1234 = vmatprep.subr.bf16.mxu0 0
        %1235 = vmatpush1.bf16.msra.mxu0 0
        %1236 = vmatprep.subr.bf16.mxu0 0
        %1237 = vmatpush1.bf16.msra.mxu0 0
        %1238 = vmatprep.subr.bf16.mxu0 0
        %1239 = vmatpush1.bf16.msra.mxu0 0
        %1240 = vmatprep.subr.bf16.mxu0 0
        %1241 = vmatpush1.bf16.msra.mxu0 0
        %1242 = vmatprep.subr.bf16.mxu0 0
        %1243 = vmatpush1.bf16.msra.mxu0 0
        %1244 = vmatprep.subr.bf16.mxu0 0
        %1245 = vmatpush1.bf16.msra.mxu0 0
        %1246 = vmatprep.subr.bf16.mxu0 0
        %1247 = vmatpush1.bf16.msra.mxu0 0
        %1248 = vmatprep.subr.bf16.mxu0 0
        %1249 = vmatpush1.bf16.msra.mxu0 0
        %1250 = vmatprep.subr.bf16.mxu0 0
        %1251 = vmatpush1.bf16.msra.mxu0 0
        %1252 = vmatprep.subr.bf16.mxu0 0
        %1253 = vmatpush1.bf16.msra.mxu0 0
        %1254 = vmatprep.subr.bf16.mxu0 0
        %1255 = vmatpush1.bf16.msra.mxu0 0
        %1256 = vmatprep.subr.bf16.mxu0 0
        %1257 = vmatpush1.bf16.msra.mxu0 0
        %1258 = vmatprep.subr.bf16.mxu0 0
        %1259 = vmatpush1.bf16.msra.mxu0 0
        %1260 = vmatprep.subr.bf16.mxu0 0
        %1261 = vmatpush1.bf16.msra.mxu0 0
        %1262 = vmatprep.subr.bf16.mxu0 0
        %1263 = vmatpush1.bf16.msra.mxu0 0
        %1264 = vmatprep.mubr.bf16.mxu0 0
        %1265 = vmatmul.mubr.bf16.gmra.mrb[0].mxu0 %v1227
        %v1266 = vpop.f32.mrb[0].mxu0
        %v1267 = vadd.f32 0.0, %v1266
        %v1268 = vpop.f32.mrb[0].mxu0
        %v1269 = vpop.f32.mrb[0].mxu0
        %v1270 = vadd.f32 0.0, %v1269
        %v1271 = vpop.f32.mrb[0].mxu0
        %1272 = vdwg.mxu0
        %1275 = vrot.lane.b32.xlu0 %v1267, 24
        %v1276 = vpop.permute.xlu0 %1275
        %1277 = vrot.lane.b32.xlu0 %v1270, 24
        %v1278 = vpop.permute.xlu0 %1277
        %vm1281 = vcmask 261312
        %1282 = vst.msk [vmem:[#allocation2] sm:$0xff] %vm1281, %v1276
        %1283 = vst.msk [vmem:[#allocation2 + $0x8] sm:$0xff] %vm1281, %v1278
        %v1284 = vld [vmem:[#allocation2] sm:$0xff]
        %v1285 = vld [vmem:[#allocation2 + $0x8] sm:$0xff]
        %v1286 = vpack.c.bf16 %v1285, %v1284
        %v1287 = vld [vmem:[%s8] sm:$0xf]
        %v1288 = vld [vmem:[%s8 + $0x4] sm:$0xf]
        %v1289 = vld [vmem:[%s8 + $0x8] sm:$0xf]
        %v1290 = vld [vmem:[%s8 + $0xc] sm:$0xf]
        %v1291 = vlaneseq
        %v1292 = vshrl.u32 %v1291, 7
        %v1293 = vsub.s32 0, %v1292
        %v1294 = vrot.slane %v521, %v1293
        %v1299 = vunpack.c.l.b16 %v1287
        %v1300 = vunpack.c.l.b16 %v1288
        %v1301 = vunpack.c.l.b16 %v1289
        %v1302 = vunpack.c.l.b16 %v1290
        %v1303 = vpack.c.b16 %v1300, %v1299
        %v1304 = vpack.c.b16 %v1302, %v1301
        %v1308 = vsel %vm548, %v1286, 0
        %1310 = vmatprep.subr.bf16.mxu0 0
        %1311 = vmatpush1.bf16.msra.mxu0 %v1303
        %1312 = vmatprep.subr.bf16.mxu0 0
        %1313 = vmatpush1.bf16.msra.mxu0 %v1304
        %1314 = vmatprep.subr.bf16.mxu0 0
        %1315 = vmatpush1.bf16.msra.mxu0 0
        %1316 = vmatprep.subr.bf16.mxu0 0
        %1317 = vmatpush1.bf16.msra.mxu0 0
        %1318 = vmatprep.subr.bf16.mxu0 0
        %1319 = vmatpush1.bf16.msra.mxu0 0
        %1320 = vmatprep.subr.bf16.mxu0 0
        %1321 = vmatpush1.bf16.msra.mxu0 0
        %1322 = vmatprep.subr.bf16.mxu0 0
        %1323 = vmatpush1.bf16.msra.mxu0 0
        %1324 = vmatprep.subr.bf16.mxu0 0
        %1325 = vmatpush1.bf16.msra.mxu0 0
        %1326 = vmatprep.subr.bf16.mxu0 0
        %1327 = vmatpush1.bf16.msra.mxu0 0
        %1328 = vmatprep.subr.bf16.mxu0 0
        %1329 = vmatpush1.bf16.msra.mxu0 0
        %1330 = vmatprep.subr.bf16.mxu0 0
        %1331 = vmatpush1.bf16.msra.mxu0 0
        %1332 = vmatprep.subr.bf16.mxu0 0
        %1333 = vmatpush1.bf16.msra.mxu0 0
        %1334 = vmatprep.subr.bf16.mxu0 0
        %1335 = vmatpush1.bf16.msra.mxu0 0
        %1336 = vmatprep.subr.bf16.mxu0 0
        %1337 = vmatpush1.bf16.msra.mxu0 0
        %1338 = vmatprep.subr.bf16.mxu0 0
        %1339 = vmatpush1.bf16.msra.mxu0 0
        %1340 = vmatprep.subr.bf16.mxu0 0
        %1341 = vmatpush1.bf16.msra.mxu0 0
        %1342 = vmatprep.mubr.bf16.mxu0 0
        %1343 = vmatmul.mubr.bf16.gmra.mrb[0].mxu0 %v1308
        %v1344 = vpop.f32.mrb[0].mxu0
        %v1345 = vadd.f32 %v1294, %v1344
        %v1346 = vpop.f32.mrb[0].mxu0
        %v1347 = vpop.f32.mrb[0].mxu0
        %v1348 = vadd.f32 %v1294, %v1347
        %v1349 = vpop.f32.mrb[0].mxu0
        %1350 = vdwg.mxu0
        %v1351 = vadd.f32 %v508, %v1345
        %v1352 = vadd.f32 %v509, %v1348
        %v1353 = vsel %vm548, %v1351, 0.0
        %1354 = vadd.xlane.f32.xlu0 %v1353
        %v1355 = vpop.xlane.xlu0 %1354
        %v1356 = vsel %vm548, %v1352, 0.0
        %1357 = vadd.xlane.f32.xlu0 %v1356
        %v1358 = vpop.xlane.xlu0 %1357
        %v1359 = vrcp.pop 32.0
        %v1360 = vmul.f32 %v1355, %v1359
        %v1361 = vmul.f32 %v1358, %v1359
        %v1362 = vsub.f32 %v1351, %v1360
        %v1363 = vsub.f32 %v1352, %v1361
        %v1364 = vmul.f32 %v1362, %v1362
        %v1365 = vmul.f32 %v1363, %v1363
        %v1366 = vsel %vm548, %v1364, 0.0
        %1367 = vadd.xlane.f32.xlu0 %v1366
        %v1368 = vpop.xlane.xlu0 %1367
        %v1369 = vsel %vm548, %v1365, 0.0
        %1370 = vadd.xlane.f32.xlu0 %v1369
        %v1371 = vpop.xlane.xlu0 %1370
        %v1372 = vmul.f32 %v1368, %v1359
        %v1373 = vmul.f32 %v1371, %v1359
        %v1374 = vadd.f32 %v1372, 1e-05
        %v1375 = vadd.f32 %v1373, 1e-05
        %v1376 = vrsqrt.pop %v1374
        %v1377 = vrsqrt.pop %v1375
        %v1378 = vmul.f32 %v1362, %v1376
        %v1379 = vmul.f32 %v1363, %v1377
        %v1380 = vlaneseq
        %v1381 = vshrl.u32 %v1380, 7
        %v1382 = vsub.s32 0, %v1381
        %v1383 = vrot.slane %v522, %v1382
        %v1384 = vmul.f32 %v1378, %v1383
        %v1385 = vmul.f32 %v1379, %v1383
        %v1386 = vlaneseq
        %v1387 = vshrl.u32 %v1386, 7
        %v1388 = vsub.s32 0, %v1387
        %v1389 = vrot.slane %v523, %v1388
        %v1390 = vadd.f32 %v1384, %v1389
        %v1391 = vadd.f32 %v1385, %v1389
        %v1392 = vpack.c.bf16 %v1391, %v1390
        %v1393 = vld [vmem:[%s9] sm:$0xff]
        %v1394 = vld [vmem:[%s9 + $0x8] sm:$0xff]
        %v1395 = vld [vmem:[%s9 + $0x10] sm:$0xff]
        %v1396 = vld [vmem:[%s9 + $0x18] sm:$0xff]
        %v1397 = vld [vmem:[%s9 + $0x20] sm:$0xff]
        %v1398 = vld [vmem:[%s9 + $0x28] sm:$0xff]
        %v1399 = vld [vmem:[%s9 + $0x30] sm:$0xff]
        %v1400 = vld [vmem:[%s9 + $0x38] sm:$0xff]
        %v1401 = vld [vmem:[%s9 + $0x40] sm:$0xff]
        %v1402 = vld [vmem:[%s9 + $0x48] sm:$0xff]
        %v1403 = vld [vmem:[%s9 + $0x50] sm:$0xff]
        %v1404 = vld [vmem:[%s9 + $0x58] sm:$0xff]
        %v1405 = vld [vmem:[%s9 + $0x60] sm:$0xff]
        %v1406 = vld [vmem:[%s9 + $0x68] sm:$0xff]
        %v1407 = vld [vmem:[%s9 + $0x70] sm:$0xff]
        %v1408 = vld [vmem:[%s9 + $0x78] sm:$0xff]
        %v1409 = vld [vmem:[%s11] sm:$0xff]
        %v1411 = vlaneseq
        %v1412 = vshrl.u32 %v1411, 7
        %v1413 = vsub.s32 0, %v1412
        %v1414 = vrot.slane %v1409, %v1413
        %v1415 = vlaneseq
        %v1416 = vshrl.u32 %v1415, 7
        %v1417 = vsub.s32 1, %v1416
        %v1418 = vrot.slane %v1409, %v1417
        %v1419 = vlaneseq
        %v1420 = vshrl.u32 %v1419, 7
        %v1421 = vsub.s32 2, %v1420
        %v1422 = vrot.slane %v1409, %v1421
        %v1423 = vlaneseq
        %v1424 = vshrl.u32 %v1423, 7
        %v1425 = vsub.s32 3, %v1424
        %v1426 = vrot.slane %v1409, %v1425
        %v1427 = vlaneseq
        %v1428 = vshrl.u32 %v1427, 7
        %v1429 = vsub.s32 4, %v1428
        %v1430 = vrot.slane %v1409, %v1429
        %v1431 = vlaneseq
        %v1432 = vshrl.u32 %v1431, 7
        %v1433 = vsub.s32 5, %v1432
        %v1434 = vrot.slane %v1409, %v1433
        %v1435 = vlaneseq
        %v1436 = vshrl.u32 %v1435, 7
        %v1437 = vsub.s32 6, %v1436
        %v1438 = vrot.slane %v1409, %v1437
        %v1439 = vlaneseq
        %v1440 = vshrl.u32 %v1439, 7
        %v1441 = vsub.s32 7, %v1440
        %v1442 = vrot.slane %v1409, %v1441
        %v1467 = vunpack.c.l.b16 %v1393
        %v1468 = vunpack.c.h.b16 %v1393
        %v1469 = vunpack.c.l.b16 %v1394
        %v1470 = vunpack.c.h.b16 %v1394
        %v1471 = vunpack.c.l.b16 %v1395
        %v1472 = vunpack.c.h.b16 %v1395
        %v1473 = vunpack.c.l.b16 %v1396
        %v1474 = vunpack.c.h.b16 %v1396
        %v1475 = vunpack.c.l.b16 %v1397
        %v1476 = vunpack.c.h.b16 %v1397
        %v1477 = vunpack.c.l.b16 %v1398
        %v1478 = vunpack.c.h.b16 %v1398
        %v1479 = vunpack.c.l.b16 %v1399
        %v1480 = vunpack.c.h.b16 %v1399
        %v1481 = vunpack.c.l.b16 %v1400
        %v1482 = vunpack.c.h.b16 %v1400
        %v1483 = vunpack.c.l.b16 %v1401
        %v1484 = vunpack.c.h.b16 %v1401
        %v1485 = vunpack.c.l.b16 %v1402
        %v1486 = vunpack.c.h.b16 %v1402
        %v1487 = vunpack.c.l.b16 %v1403
        %v1488 = vunpack.c.h.b16 %v1403
        %v1489 = vunpack.c.l.b16 %v1404
        %v1490 = vunpack.c.h.b16 %v1404
        %v1491 = vunpack.c.l.b16 %v1405
        %v1492 = vunpack.c.h.b16 %v1405
        %v1493 = vunpack.c.l.b16 %v1406
        %v1494 = vunpack.c.h.b16 %v1406
        %v1495 = vunpack.c.l.b16 %v1407
        %v1496 = vunpack.c.h.b16 %v1407
        %v1497 = vunpack.c.l.b16 %v1408
        %v1498 = vunpack.c.h.b16 %v1408
        %v1499 = vpack.c.b16 %v1475, %v1467
        %v1500 = vpack.c.b16 %v1476, %v1468
        %v1501 = vpack.c.b16 %v1477, %v1469
        %v1502 = vpack.c.b16 %v1478, %v1470
        %v1503 = vpack.c.b16 %v1479, %v1471
        %v1504 = vpack.c.b16 %v1480, %v1472
        %v1505 = vpack.c.b16 %v1481, %v1473
        %v1506 = vpack.c.b16 %v1482, %v1474
        %v1507 = vpack.c.b16 %v1491, %v1483
        %v1508 = vpack.c.b16 %v1492, %v1484
        %v1509 = vpack.c.b16 %v1493, %v1485
        %v1510 = vpack.c.b16 %v1494, %v1486
        %v1511 = vpack.c.b16 %v1495, %v1487
        %v1512 = vpack.c.b16 %v1496, %v1488
        %v1513 = vpack.c.b16 %v1497, %v1489
        %v1514 = vpack.c.b16 %v1498, %v1490
        %v1532 = vsel %vm548, %v1392, 0
        %1534 = vmatprep.subr.bf16.mxu0 %v1500
        %1535 = vmatpush1.bf16.msra.mxu0 %v1499
        %1536 = vmatprep.subr.bf16.mxu0 %v1508
        %1537 = vmatpush1.bf16.msra.mxu0 %v1507
        %1538 = vmatprep.subr.bf16.mxu0 0
        %1539 = vmatpush1.bf16.msra.mxu0 0
        %1540 = vmatprep.subr.bf16.mxu0 0
        %1541 = vmatpush1.bf16.msra.mxu0 0
        %1542 = vmatprep.subr.bf16.mxu0 0
        %1543 = vmatpush1.bf16.msra.mxu0 0
        %1544 = vmatprep.subr.bf16.mxu0 0
        %1545 = vmatpush1.bf16.msra.mxu0 0
        %1546 = vmatprep.subr.bf16.mxu0 0
        %1547 = vmatpush1.bf16.msra.mxu0 0
        %1548 = vmatprep.subr.bf16.mxu0 0
        %1549 = vmatpush1.bf16.msra.mxu0 0
        %1550 = vmatprep.subr.bf16.mxu0 0
        %1551 = vmatpush1.bf16.msra.mxu0 0
        %1552 = vmatprep.subr.bf16.mxu0 0
        %1553 = vmatpush1.bf16.msra.mxu0 0
        %1554 = vmatprep.subr.bf16.mxu0 0
        %1555 = vmatpush1.bf16.msra.mxu0 0
        %1556 = vmatprep.subr.bf16.mxu0 0
        %1557 = vmatpush1.bf16.msra.mxu0 0
        %1558 = vmatprep.subr.bf16.mxu0 0
        %1559 = vmatpush1.bf16.msra.mxu0 0
        %1560 = vmatprep.subr.bf16.mxu0 0
        %1561 = vmatpush1.bf16.msra.mxu0 0
        %1562 = vmatprep.subr.bf16.mxu0 0
        %1563 = vmatpush1.bf16.msra.mxu0 0
        %1564 = vmatprep.subr.bf16.mxu0 0
        %1565 = vmatpush1.bf16.msra.mxu0 0
        %1566 = vmatprep.mubr.bf16.mxu0 0
        %1567 = vmatmul.mubr.bf16.gmra.mrb[0].mxu0 %v1532
        %v1568 = vpop.f32.mrb[0].mxu0
        %v1569 = vadd.f32 %v1414, %v1568
        %v1570 = vpop.f32.mrb[0].mxu0
        %v1571 = vadd.f32 %v1418, %v1570
        %v1572 = vpop.f32.mrb[0].mxu0
        %v1573 = vadd.f32 %v1414, %v1572
        %v1574 = vpop.f32.mrb[0].mxu0
        %v1575 = vadd.f32 %v1418, %v1574
        %1576 = vdwg.mxu0
        %1577 = vmatprep.subr.bf16.mxu0 %v1502
        %1578 = vmatpush1.bf16.msra.mxu0 %v1501
        %1579 = vmatprep.subr.bf16.mxu0 %v1510
        %1580 = vmatpush1.bf16.msra.mxu0 %v1509
        %1581 = vmatprep.subr.bf16.mxu0 0
        %1582 = vmatpush1.bf16.msra.mxu0 0
        %1583 = vmatprep.subr.bf16.mxu0 0
        %1584 = vmatpush1.bf16.msra.mxu0 0
        %1585 = vmatprep.subr.bf16.mxu0 0
        %1586 = vmatpush1.bf16.msra.mxu0 0
        %1587 = vmatprep.subr.bf16.mxu0 0
        %1588 = vmatpush1.bf16.msra.mxu0 0
        %1589 = vmatprep.subr.bf16.mxu0 0
        %1590 = vmatpush1.bf16.msra.mxu0 0
        %1591 = vmatprep.subr.bf16.mxu0 0
        %1592 = vmatpush1.bf16.msra.mxu0 0
        %1593 = vmatprep.subr.bf16.mxu0 0
        %1594 = vmatpush1.bf16.msra.mxu0 0
        %1595 = vmatprep.subr.bf16.mxu0 0
        %1596 = vmatpush1.bf16.msra.mxu0 0
        %1597 = vmatprep.subr.bf16.mxu0 0
        %1598 = vmatpush1.bf16.msra.mxu0 0
        %1599 = vmatprep.subr.bf16.mxu0 0
        %1600 = vmatpush1.bf16.msra.mxu0 0
        %1601 = vmatprep.subr.bf16.mxu0 0
        %1602 = vmatpush1.bf16.msra.mxu0 0
        %1603 = vmatprep.subr.bf16.mxu0 0
        %1604 = vmatpush1.bf16.msra.mxu0 0
        %1605 = vmatprep.subr.bf16.mxu0 0
        %1606 = vmatpush1.bf16.msra.mxu0 0
        %1607 = vmatprep.subr.bf16.mxu0 0
        %1608 = vmatpush1.bf16.msra.mxu0 0
        %1609 = vmatprep.mubr.bf16.mxu0 0
        %1610 = vmatmul.mubr.bf16.gmra.mrb[0].mxu0 %v1532
        %v1611 = vpop.f32.mrb[0].mxu0
        %v1612 = vadd.f32 %v1422, %v1611
        %v1613 = vpop.f32.mrb[0].mxu0
        %v1614 = vadd.f32 %v1426, %v1613
        %v1615 = vpop.f32.mrb[0].mxu0
        %v1616 = vadd.f32 %v1422, %v1615
        %v1617 = vpop.f32.mrb[0].mxu0
        %v1618 = vadd.f32 %v1426, %v1617
        %1619 = vdwg.mxu0
        %1620 = vmatprep.subr.bf16.mxu0 %v1504
        %1621 = vmatpush1.bf16.msra.mxu0 %v1503
        %1622 = vmatprep.subr.bf16.mxu0 %v1512
        %1623 = vmatpush1.bf16.msra.mxu0 %v1511
        %1624 = vmatprep.subr.bf16.mxu0 0
        %1625 = vmatpush1.bf16.msra.mxu0 0
        %1626 = vmatprep.subr.bf16.mxu0 0
        %1627 = vmatpush1.bf16.msra.mxu0 0
        %1628 = vmatprep.subr.bf16.mxu0 0
        %1629 = vmatpush1.bf16.msra.mxu0 0
        %1630 = vmatprep.subr.bf16.mxu0 0
        %1631 = vmatpush1.bf16.msra.mxu0 0
        %1632 = vmatprep.subr.bf16.mxu0 0
        %1633 = vmatpush1.bf16.msra.mxu0 0
        %1634 = vmatprep.subr.bf16.mxu0 0
        %1635 = vmatpush1.bf16.msra.mxu0 0
        %1636 = vmatprep.subr.bf16.mxu0 0
        %1637 = vmatpush1.bf16.msra.mxu0 0
        %1638 = vmatprep.subr.bf16.mxu0 0
        %1639 = vmatpush1.bf16.msra.mxu0 0
        %1640 = vmatprep.subr.bf16.mxu0 0
        %1641 = vmatpush1.bf16.msra.mxu0 0
        %1642 = vmatprep.subr.bf16.mxu0 0
        %1643 = vmatpush1.bf16.msra.mxu0 0
        %1644 = vmatprep.subr.bf16.mxu0 0
        %1645 = vmatpush1.bf16.msra.mxu0 0
        %1646 = vmatprep.subr.bf16.mxu0 0
        %1647 = vmatpush1.bf16.msra.mxu0 0
        %1648 = vmatprep.subr.bf16.mxu0 0
        %1649 = vmatpush1.bf16.msra.mxu0 0
        %1650 = vmatprep.subr.bf16.mxu0 0
        %1651 = vmatpush1.bf16.msra.mxu0 0
        %1652 = vmatprep.mubr.bf16.mxu0 0
        %1653 = vmatmul.mubr.bf16.gmra.mrb[0].mxu0 %v1532
        %v1654 = vpop.f32.mrb[0].mxu0
        %v1655 = vadd.f32 %v1430, %v1654
        %v1656 = vpop.f32.mrb[0].mxu0
        %v1657 = vadd.f32 %v1434, %v1656
        %v1658 = vpop.f32.mrb[0].mxu0
        %v1659 = vadd.f32 %v1430, %v1658
        %v1660 = vpop.f32.mrb[0].mxu0
        %v1661 = vadd.f32 %v1434, %v1660
        %1662 = vdwg.mxu0
        %1663 = vmatprep.subr.bf16.mxu0 %v1506
        %1664 = vmatpush1.bf16.msra.mxu0 %v1505
        %1665 = vmatprep.subr.bf16.mxu0 %v1514
        %1666 = vmatpush1.bf16.msra.mxu0 %v1513
        %1667 = vmatprep.subr.bf16.mxu0 0
        %1668 = vmatpush1.bf16.msra.mxu0 0
        %1669 = vmatprep.subr.bf16.mxu0 0
        %1670 = vmatpush1.bf16.msra.mxu0 0
        %1671 = vmatprep.subr.bf16.mxu0 0
        %1672 = vmatpush1.bf16.msra.mxu0 0
        %1673 = vmatprep.subr.bf16.mxu0 0
        %1674 = vmatpush1.bf16.msra.mxu0 0
        %1675 = vmatprep.subr.bf16.mxu0 0
        %1676 = vmatpush1.bf16.msra.mxu0 0
        %1677 = vmatprep.subr.bf16.mxu0 0
        %1678 = vmatpush1.bf16.msra.mxu0 0
        %1679 = vmatprep.subr.bf16.mxu0 0
        %1680 = vmatpush1.bf16.msra.mxu0 0
        %1681 = vmatprep.subr.bf16.mxu0 0
        %1682 = vmatpush1.bf16.msra.mxu0 0
        %1683 = vmatprep.subr.bf16.mxu0 0
        %1684 = vmatpush1.bf16.msra.mxu0 0
        %1685 = vmatprep.subr.bf16.mxu0 0
        %1686 = vmatpush1.bf16.msra.mxu0 0
        %1687 = vmatprep.subr.bf16.mxu0 0
        %1688 = vmatpush1.bf16.msra.mxu0 0
        %1689 = vmatprep.subr.bf16.mxu0 0
        %1690 = vmatpush1.bf16.msra.mxu0 0
        %1691 = vmatprep.subr.bf16.mxu0 0
        %1692 = vmatpush1.bf16.msra.mxu0 0
        %1693 = vmatprep.subr.bf16.mxu0 0
        %1694 = vmatpush1.bf16.msra.mxu0 0
        %1695 = vmatprep.mubr.bf16.mxu0 0
        %1696 = vmatmul.mubr.bf16.gmra.mrb[0].mxu0 %v1532
        %v1697 = vpop.f32.mrb[0].mxu0
        %v1698 = vadd.f32 %v1438, %v1697
        %v1699 = vpop.f32.mrb[0].mxu0
        %v1700 = vadd.f32 %v1442, %v1699
        %v1701 = vpop.f32.mrb[0].mxu0
        %v1702 = vadd.f32 %v1438, %v1701
        %v1703 = vpop.f32.mrb[0].mxu0
        %v1704 = vadd.f32 %v1442, %v1703
        %1705 = vdwg.mxu0
        %v1706 = vmax.f32 %v1569, 0.0
        %v1707 = vmax.f32 %v1571, 0.0
        %v1708 = vmax.f32 %v1612, 0.0
        %v1709 = vmax.f32 %v1614, 0.0
        %v1710 = vmax.f32 %v1655, 0.0
        %v1711 = vmax.f32 %v1657, 0.0
        %v1712 = vmax.f32 %v1698, 0.0
        %v1713 = vmax.f32 %v1700, 0.0
        %v1714 = vmax.f32 %v1573, 0.0
        %v1715 = vmax.f32 %v1575, 0.0
        %v1716 = vmax.f32 %v1616, 0.0
        %v1717 = vmax.f32 %v1618, 0.0
        %v1718 = vmax.f32 %v1659, 0.0
        %v1719 = vmax.f32 %v1661, 0.0
        %v1720 = vmax.f32 %v1702, 0.0
        %v1721 = vmax.f32 %v1704, 0.0
        %v1722 = vpack.c.bf16 %v1714, %v1706
        %v1723 = vpack.c.bf16 %v1715, %v1707
        %v1724 = vpack.c.bf16 %v1716, %v1708
        %v1725 = vpack.c.bf16 %v1717, %v1709
        %v1726 = vpack.c.bf16 %v1718, %v1710
        %v1727 = vpack.c.bf16 %v1719, %v1711
        %v1728 = vpack.c.bf16 %v1720, %v1712
        %v1729 = vpack.c.bf16 %v1721, %v1713
        %v1730 = vld [vmem:[%s10] sm:$0xf]
        %v1731 = vld [vmem:[%s10 + $0x4] sm:$0xf]
        %v1732 = vld [vmem:[%s10 + $0x8] sm:$0xf]
        %v1733 = vld [vmem:[%s10 + $0xc] sm:$0xf]
        %v1734 = vld [vmem:[%s10 + $0x10] sm:$0xf]
        %v1735 = vld [vmem:[%s10 + $0x14] sm:$0xf]
        %v1736 = vld [vmem:[%s10 + $0x18] sm:$0xf]
        %v1737 = vld [vmem:[%s10 + $0x1c] sm:$0xf]
        %v1738 = vld [vmem:[%s10 + $0x20] sm:$0xf]
        %v1739 = vld [vmem:[%s10 + $0x24] sm:$0xf]
        %v1740 = vld [vmem:[%s10 + $0x28] sm:$0xf]
        %v1741 = vld [vmem:[%s10 + $0x2c] sm:$0xf]
        %v1742 = vld [vmem:[%s10 + $0x30] sm:$0xf]
        %v1743 = vld [vmem:[%s10 + $0x34] sm:$0xf]
        %v1744 = vld [vmem:[%s10 + $0x38] sm:$0xf]
        %v1745 = vld [vmem:[%s10 + $0x3c] sm:$0xf]
        %v1746 = vld [vmem:[%s10 + $0x40] sm:$0xf]
        %v1747 = vld [vmem:[%s10 + $0x44] sm:$0xf]
        %v1748 = vld [vmem:[%s10 + $0x48] sm:$0xf]
        %v1749 = vld [vmem:[%s10 + $0x4c] sm:$0xf]
        %v1750 = vld [vmem:[%s10 + $0x50] sm:$0xf]
        %v1751 = vld [vmem:[%s10 + $0x54] sm:$0xf]
        %v1752 = vld [vmem:[%s10 + $0x58] sm:$0xf]
        %v1753 = vld [vmem:[%s10 + $0x5c] sm:$0xf]
        %v1754 = vld [vmem:[%s10 + $0x60] sm:$0xf]
        %v1755 = vld [vmem:[%s10 + $0x64] sm:$0xf]
        %v1756 = vld [vmem:[%s10 + $0x68] sm:$0xf]
        %v1757 = vld [vmem:[%s10 + $0x6c] sm:$0xf]
        %v1758 = vld [vmem:[%s10 + $0x70] sm:$0xf]
        %v1759 = vld [vmem:[%s10 + $0x74] sm:$0xf]
        %v1760 = vld [vmem:[%s10 + $0x78] sm:$0xf]
        %v1761 = vld [vmem:[%s10 + $0x7c] sm:$0xf]
        %v1762 = vld [vmem:[%s10 + $0x80] sm:$0xf]
        %v1763 = vld [vmem:[%s10 + $0x84] sm:$0xf]
        %v1764 = vld [vmem:[%s10 + $0x88] sm:$0xf]
        %v1765 = vld [vmem:[%s10 + $0x8c] sm:$0xf]
        %v1766 = vld [vmem:[%s10 + $0x90] sm:$0xf]
        %v1767 = vld [vmem:[%s10 + $0x94] sm:$0xf]
        %v1768 = vld [vmem:[%s10 + $0x98] sm:$0xf]
        %v1769 = vld [vmem:[%s10 + $0x9c] sm:$0xf]
        %v1770 = vld [vmem:[%s10 + $0xa0] sm:$0xf]
        %v1771 = vld [vmem:[%s10 + $0xa4] sm:$0xf]
        %v1772 = vld [vmem:[%s10 + $0xa8] sm:$0xf]
        %v1773 = vld [vmem:[%s10 + $0xac] sm:$0xf]
        %v1774 = vld [vmem:[%s10 + $0xb0] sm:$0xf]
        %v1775 = vld [vmem:[%s10 + $0xb4] sm:$0xf]
        %v1776 = vld [vmem:[%s10 + $0xb8] sm:$0xf]
        %v1777 = vld [vmem:[%s10 + $0xbc] sm:$0xf]
        %v1778 = vld [vmem:[%s10 + $0xc0] sm:$0xf]
        %v1779 = vld [vmem:[%s10 + $0xc4] sm:$0xf]
        %v1780 = vld [vmem:[%s10 + $0xc8] sm:$0xf]
        %v1781 = vld [vmem:[%s10 + $0xcc] sm:$0xf]
        %v1782 = vld [vmem:[%s10 + $0xd0] sm:$0xf]
        %v1783 = vld [vmem:[%s10 + $0xd4] sm:$0xf]
        %v1784 = vld [vmem:[%s10 + $0xd8] sm:$0xf]
        %v1785 = vld [vmem:[%s10 + $0xdc] sm:$0xf]
        %v1786 = vld [vmem:[%s10 + $0xe0] sm:$0xf]
        %v1787 = vld [vmem:[%s10 + $0xe4] sm:$0xf]
        %v1788 = vld [vmem:[%s10 + $0xe8] sm:$0xf]
        %v1789 = vld [vmem:[%s10 + $0xec] sm:$0xf]
        %v1790 = vld [vmem:[%s10 + $0xf0] sm:$0xf]
        %v1791 = vld [vmem:[%s10 + $0xf4] sm:$0xf]
        %v1792 = vld [vmem:[%s10 + $0xf8] sm:$0xf]
        %v1793 = vld [vmem:[%s10 + $0xfc] sm:$0xf]
        %v1794 = vld [vmem:[%s10 + $0x100] sm:$0xf]
        %v1795 = vld [vmem:[%s10 + $0x104] sm:$0xf]
        %v1796 = vld [vmem:[%s10 + $0x108] sm:$0xf]
        %v1797 = vld [vmem:[%s10 + $0x10c] sm:$0xf]
        %v1798 = vld [vmem:[%s10 + $0x110] sm:$0xf]
        %v1799 = vld [vmem:[%s10 + $0x114] sm:$0xf]
        %v1800 = vld [vmem:[%s10 + $0x118] sm:$0xf]
        %v1801 = vld [vmem:[%s10 + $0x11c] sm:$0xf]
        %v1802 = vld [vmem:[%s10 + $0x120] sm:$0xf]
        %v1803 = vld [vmem:[%s10 + $0x124] sm:$0xf]
        %v1804 = vld [vmem:[%s10 + $0x128] sm:$0xf]
        %v1805 = vld [vmem:[%s10 + $0x12c] sm:$0xf]
        %v1806 = vld [vmem:[%s10 + $0x130] sm:$0xf]
        %v1807 = vld [vmem:[%s10 + $0x134] sm:$0xf]
        %v1808 = vld [vmem:[%s10 + $0x138] sm:$0xf]
        %v1809 = vld [vmem:[%s10 + $0x13c] sm:$0xf]
        %v1810 = vld [vmem:[%s10 + $0x140] sm:$0xf]
        %v1811 = vld [vmem:[%s10 + $0x144] sm:$0xf]
        %v1812 = vld [vmem:[%s10 + $0x148] sm:$0xf]
        %v1813 = vld [vmem:[%s10 + $0x14c] sm:$0xf]
        %v1814 = vld [vmem:[%s10 + $0x150] sm:$0xf]
        %v1815 = vld [vmem:[%s10 + $0x154] sm:$0xf]
        %v1816 = vld [vmem:[%s10 + $0x158] sm:$0xf]
        %v1817 = vld [vmem:[%s10 + $0x15c] sm:$0xf]
        %v1818 = vld [vmem:[%s10 + $0x160] sm:$0xf]
        %v1819 = vld [vmem:[%s10 + $0x164] sm:$0xf]
        %v1820 = vld [vmem:[%s10 + $0x168] sm:$0xf]
        %v1821 = vld [vmem:[%s10 + $0x16c] sm:$0xf]
        %v1822 = vld [vmem:[%s10 + $0x170] sm:$0xf]
        %v1823 = vld [vmem:[%s10 + $0x174] sm:$0xf]
        %v1824 = vld [vmem:[%s10 + $0x178] sm:$0xf]
        %v1825 = vld [vmem:[%s10 + $0x17c] sm:$0xf]
        %v1826 = vld [vmem:[%s10 + $0x180] sm:$0xf]
        %v1827 = vld [vmem:[%s10 + $0x184] sm:$0xf]
        %v1828 = vld [vmem:[%s10 + $0x188] sm:$0xf]
        %v1829 = vld [vmem:[%s10 + $0x18c] sm:$0xf]
        %v1830 = vld [vmem:[%s10 + $0x190] sm:$0xf]
        %v1831 = vld [vmem:[%s10 + $0x194] sm:$0xf]
        %v1832 = vld [vmem:[%s10 + $0x198] sm:$0xf]
        %v1833 = vld [vmem:[%s10 + $0x19c] sm:$0xf]
        %v1834 = vld [vmem:[%s10 + $0x1a0] sm:$0xf]
        %v1835 = vld [vmem:[%s10 + $0x1a4] sm:$0xf]
        %v1836 = vld [vmem:[%s10 + $0x1a8] sm:$0xf]
        %v1837 = vld [vmem:[%s10 + $0x1ac] sm:$0xf]
        %v1838 = vld [vmem:[%s10 + $0x1b0] sm:$0xf]
        %v1839 = vld [vmem:[%s10 + $0x1b4] sm:$0xf]
        %v1840 = vld [vmem:[%s10 + $0x1b8] sm:$0xf]
        %v1841 = vld [vmem:[%s10 + $0x1bc] sm:$0xf]
        %v1842 = vld [vmem:[%s10 + $0x1c0] sm:$0xf]
        %v1843 = vld [vmem:[%s10 + $0x1c4] sm:$0xf]
        %v1844 = vld [vmem:[%s10 + $0x1c8] sm:$0xf]
        %v1845 = vld [vmem:[%s10 + $0x1cc] sm:$0xf]
        %v1846 = vld [vmem:[%s10 + $0x1d0] sm:$0xf]
        %v1847 = vld [vmem:[%s10 + $0x1d4] sm:$0xf]
        %v1848 = vld [vmem:[%s10 + $0x1d8] sm:$0xf]
        %v1849 = vld [vmem:[%s10 + $0x1dc] sm:$0xf]
        %v1850 = vld [vmem:[%s10 + $0x1e0] sm:$0xf]
        %v1851 = vld [vmem:[%s10 + $0x1e4] sm:$0xf]
        %v1852 = vld [vmem:[%s10 + $0x1e8] sm:$0xf]
        %v1853 = vld [vmem:[%s10 + $0x1ec] sm:$0xf]
        %v1854 = vld [vmem:[%s10 + $0x1f0] sm:$0xf]
        %v1855 = vld [vmem:[%s10 + $0x1f4] sm:$0xf]
        %v1856 = vld [vmem:[%s10 + $0x1f8] sm:$0xf]
        %v1857 = vld [vmem:[%s10 + $0x1fc] sm:$0xf]
        %v1858 = vlaneseq
        %v1859 = vshrl.u32 %v1858, 7
        %v1860 = vsub.s32 0, %v1859
        %v1861 = vrot.slane %v524, %v1860
        %v1990 = vunpack.c.l.b16 %v1730
        %v1991 = vunpack.c.l.b16 %v1731
        %v1992 = vunpack.c.l.b16 %v1732
        %v1993 = vunpack.c.l.b16 %v1733
        %v1994 = vunpack.c.l.b16 %v1734
        %v1995 = vunpack.c.l.b16 %v1735
        %v1996 = vunpack.c.l.b16 %v1736
        %v1997 = vunpack.c.l.b16 %v1737
        %v1998 = vunpack.c.l.b16 %v1738
        %v1999 = vunpack.c.l.b16 %v1739
        %v2000 = vunpack.c.l.b16 %v1740
        %v2001 = vunpack.c.l.b16 %v1741
        %v2002 = vunpack.c.l.b16 %v1742
        %v2003 = vunpack.c.l.b16 %v1743
        %v2004 = vunpack.c.l.b16 %v1744
        %v2005 = vunpack.c.l.b16 %v1745
        %v2006 = vunpack.c.l.b16 %v1746
        %v2007 = vunpack.c.l.b16 %v1747
        %v2008 = vunpack.c.l.b16 %v1748
        %v2009 = vunpack.c.l.b16 %v1749
        %v2010 = vunpack.c.l.b16 %v1750
        %v2011 = vunpack.c.l.b16 %v1751
        %v2012 = vunpack.c.l.b16 %v1752
        %v2013 = vunpack.c.l.b16 %v1753
        %v2014 = vunpack.c.l.b16 %v1754
        %v2015 = vunpack.c.l.b16 %v1755
        %v2016 = vunpack.c.l.b16 %v1756
        %v2017 = vunpack.c.l.b16 %v1757
        %v2018 = vunpack.c.l.b16 %v1758
        %v2019 = vunpack.c.l.b16 %v1759
        %v2020 = vunpack.c.l.b16 %v1760
        %v2021 = vunpack.c.l.b16 %v1761
        %v2022 = vunpack.c.l.b16 %v1762
        %v2023 = vunpack.c.l.b16 %v1763
        %v2024 = vunpack.c.l.b16 %v1764
        %v2025 = vunpack.c.l.b16 %v1765
        %v2026 = vunpack.c.l.b16 %v1766
        %v2027 = vunpack.c.l.b16 %v1767
        %v2028 = vunpack.c.l.b16 %v1768
        %v2029 = vunpack.c.l.b16 %v1769
        %v2030 = vunpack.c.l.b16 %v1770
        %v2031 = vunpack.c.l.b16 %v1771
        %v2032 = vunpack.c.l.b16 %v1772
        %v2033 = vunpack.c.l.b16 %v1773
        %v2034 = vunpack.c.l.b16 %v1774
        %v2035 = vunpack.c.l.b16 %v1775
        %v2036 = vunpack.c.l.b16 %v1776
        %v2037 = vunpack.c.l.b16 %v1777
        %v2038 = vunpack.c.l.b16 %v1778
        %v2039 = vunpack.c.l.b16 %v1779
        %v2040 = vunpack.c.l.b16 %v1780
        %v2041 = vunpack.c.l.b16 %v1781
        %v2042 = vunpack.c.l.b16 %v1782
        %v2043 = vunpack.c.l.b16 %v1783
        %v2044 = vunpack.c.l.b16 %v1784
        %v2045 = vunpack.c.l.b16 %v1785
        %v2046 = vunpack.c.l.b16 %v1786
        %v2047 = vunpack.c.l.b16 %v1787
        %v2048 = vunpack.c.l.b16 %v1788
        %v2049 = vunpack.c.l.b16 %v1789
        %v2050 = vunpack.c.l.b16 %v1790
        %v2051 = vunpack.c.l.b16 %v1791
        %v2052 = vunpack.c.l.b16 %v1792
        %v2053 = vunpack.c.l.b16 %v1793
        %v2054 = vunpack.c.l.b16 %v1794
        %v2055 = vunpack.c.l.b16 %v1795
        %v2056 = vunpack.c.l.b16 %v1796
        %v2057 = vunpack.c.l.b16 %v1797
        %v2058 = vunpack.c.l.b16 %v1798
        %v2059 = vunpack.c.l.b16 %v1799
        %v2060 = vunpack.c.l.b16 %v1800
        %v2061 = vunpack.c.l.b16 %v1801
        %v2062 = vunpack.c.l.b16 %v1802
        %v2063 = vunpack.c.l.b16 %v1803
        %v2064 = vunpack.c.l.b16 %v1804
        %v2065 = vunpack.c.l.b16 %v1805
        %v2066 = vunpack.c.l.b16 %v1806
        %v2067 = vunpack.c.l.b16 %v1807
        %v2068 = vunpack.c.l.b16 %v1808
        %v2069 = vunpack.c.l.b16 %v1809
        %v2070 = vunpack.c.l.b16 %v1810
        %v2071 = vunpack.c.l.b16 %v1811
        %v2072 = vunpack.c.l.b16 %v1812
        %v2073 = vunpack.c.l.b16 %v1813
        %v2074 = vunpack.c.l.b16 %v1814
        %v2075 = vunpack.c.l.b16 %v1815
        %v2076 = vunpack.c.l.b16 %v1816
        %v2077 = vunpack.c.l.b16 %v1817
        %v2078 = vunpack.c.l.b16 %v1818
        %v2079 = vunpack.c.l.b16 %v1819
        %v2080 = vunpack.c.l.b16 %v1820
        %v2081 = vunpack.c.l.b16 %v1821
        %v2082 = vunpack.c.l.b16 %v1822
        %v2083 = vunpack.c.l.b16 %v1823
        %v2084 = vunpack.c.l.b16 %v1824
        %v2085 = vunpack.c.l.b16 %v1825
        %v2086 = vunpack.c.l.b16 %v1826
        %v2087 = vunpack.c.l.b16 %v1827
        %v2088 = vunpack.c.l.b16 %v1828
        %v2089 = vunpack.c.l.b16 %v1829
        %v2090 = vunpack.c.l.b16 %v1830
        %v2091 = vunpack.c.l.b16 %v1831
        %v2092 = vunpack.c.l.b16 %v1832
        %v2093 = vunpack.c.l.b16 %v1833
        %v2094 = vunpack.c.l.b16 %v1834
        %v2095 = vunpack.c.l.b16 %v1835
        %v2096 = vunpack.c.l.b16 %v1836
        %v2097 = vunpack.c.l.b16 %v1837
        %v2098 = vunpack.c.l.b16 %v1838
        %v2099 = vunpack.c.l.b16 %v1839
        %v2100 = vunpack.c.l.b16 %v1840
        %v2101 = vunpack.c.l.b16 %v1841
        %v2102 = vunpack.c.l.b16 %v1842
        %v2103 = vunpack.c.l.b16 %v1843
        %v2104 = vunpack.c.l.b16 %v1844
        %v2105 = vunpack.c.l.b16 %v1845
        %v2106 = vunpack.c.l.b16 %v1846
        %v2107 = vunpack.c.l.b16 %v1847
        %v2108 = vunpack.c.l.b16 %v1848
        %v2109 = vunpack.c.l.b16 %v1849
        %v2110 = vunpack.c.l.b16 %v1850
        %v2111 = vunpack.c.l.b16 %v1851
        %v2112 = vunpack.c.l.b16 %v1852
        %v2113 = vunpack.c.l.b16 %v1853
        %v2114 = vunpack.c.l.b16 %v1854
        %v2115 = vunpack.c.l.b16 %v1855
        %v2116 = vunpack.c.l.b16 %v1856
        %v2117 = vunpack.c.l.b16 %v1857
        %v2118 = vpack.c.b16 %v1991, %v1990
        %v2119 = vpack.c.b16 %v1993, %v1992
        %v2120 = vpack.c.b16 %v1995, %v1994
        %v2121 = vpack.c.b16 %v1997, %v1996
        %v2122 = vpack.c.b16 %v1999, %v1998
        %v2123 = vpack.c.b16 %v2001, %v2000
        %v2124 = vpack.c.b16 %v2003, %v2002
        %v2125 = vpack.c.b16 %v2005, %v2004
        %v2126 = vpack.c.b16 %v2007, %v2006
        %v2127 = vpack.c.b16 %v2009, %v2008
        %v2128 = vpack.c.b16 %v2011, %v2010
        %v2129 = vpack.c.b16 %v2013, %v2012
        %v2130 = vpack.c.b16 %v2015, %v2014
        %v2131 = vpack.c.b16 %v2017, %v2016
        %v2132 = vpack.c.b16 %v2019, %v2018
        %v2133 = vpack.c.b16 %v2021, %v2020
        %v2134 = vpack.c.b16 %v2023, %v2022
        %v2135 = vpack.c.b16 %v2025, %v2024
        %v2136 = vpack.c.b16 %v2027, %v2026
        %v2137 = vpack.c.b16 %v2029, %v2028
        %v2138 = vpack.c.b16 %v2031, %v2030
        %v2139 = vpack.c.b16 %v2033, %v2032
        %v2140 = vpack.c.b16 %v2035, %v2034
        %v2141 = vpack.c.b16 %v2037, %v2036
        %v2142 = vpack.c.b16 %v2039, %v2038
        %v2143 = vpack.c.b16 %v2041, %v2040
        %v2144 = vpack.c.b16 %v2043, %v2042
        %v2145 = vpack.c.b16 %v2045, %v2044
        %v2146 = vpack.c.b16 %v2047, %v2046
        %v2147 = vpack.c.b16 %v2049, %v2048
        %v2148 = vpack.c.b16 %v2051, %v2050
        %v2149 = vpack.c.b16 %v2053, %v2052
        %v2150 = vpack.c.b16 %v2055, %v2054
        %v2151 = vpack.c.b16 %v2057, %v2056
        %v2152 = vpack.c.b16 %v2059, %v2058
        %v2153 = vpack.c.b16 %v2061, %v2060
        %v2154 = vpack.c.b16 %v2063, %v2062
        %v2155 = vpack.c.b16 %v2065, %v2064
        %v2156 = vpack.c.b16 %v2067, %v2066
        %v2157 = vpack.c.b16 %v2069, %v2068
        %v2158 = vpack.c.b16 %v2071, %v2070
        %v2159 = vpack.c.b16 %v2073, %v2072
        %v2160 = vpack.c.b16 %v2075, %v2074
        %v2161 = vpack.c.b16 %v2077, %v2076
        %v2162 = vpack.c.b16 %v2079, %v2078
        %v2163 = vpack.c.b16 %v2081, %v2080
        %v2164 = vpack.c.b16 %v2083, %v2082
        %v2165 = vpack.c.b16 %v2085, %v2084
        %v2166 = vpack.c.b16 %v2087, %v2086
        %v2167 = vpack.c.b16 %v2089, %v2088
        %v2168 = vpack.c.b16 %v2091, %v2090
        %v2169 = vpack.c.b16 %v2093, %v2092
        %v2170 = vpack.c.b16 %v2095, %v2094
        %v2171 = vpack.c.b16 %v2097, %v2096
        %v2172 = vpack.c.b16 %v2099, %v2098
        %v2173 = vpack.c.b16 %v2101, %v2100
        %v2174 = vpack.c.b16 %v2103, %v2102
        %v2175 = vpack.c.b16 %v2105, %v2104
        %v2176 = vpack.c.b16 %v2107, %v2106
        %v2177 = vpack.c.b16 %v2109, %v2108
        %v2178 = vpack.c.b16 %v2111, %v2110
        %v2179 = vpack.c.b16 %v2113, %v2112
        %v2180 = vpack.c.b16 %v2115, %v2114
        %v2181 = vpack.c.b16 %v2117, %v2116
        %2246 = vmatprep.subr.bf16.mxu0 0
        %2247 = vmatpush1.bf16.msra.mxu0 %v2118
        %2248 = vmatprep.subr.bf16.mxu0 0
        %2249 = vmatpush1.bf16.msra.mxu0 %v2119
        %2250 = vmatprep.subr.bf16.mxu0 0
        %2251 = vmatpush1.bf16.msra.mxu0 %v2120
        %2252 = vmatprep.subr.bf16.mxu0 0
        %2253 = vmatpush1.bf16.msra.mxu0 %v2121
        %2254 = vmatprep.subr.bf16.mxu0 0
        %2255 = vmatpush1.bf16.msra.mxu0 %v2122
        %2256 = vmatprep.subr.bf16.mxu0 0
        %2257 = vmatpush1.bf16.msra.mxu0 %v2123
        %2258 = vmatprep.subr.bf16.mxu0 0
        %2259 = vmatpush1.bf16.msra.mxu0 %v2124
        %2260 = vmatprep.subr.bf16.mxu0 0
        %2261 = vmatpush1.bf16.msra.mxu0 %v2125
        %2262 = vmatprep.subr.bf16.mxu0 0
        %2263 = vmatpush1.bf16.msra.mxu0 %v2126
        %2264 = vmatprep.subr.bf16.mxu0 0
        %2265 = vmatpush1.bf16.msra.mxu0 %v2127
        %2266 = vmatprep.subr.bf16.mxu0 0
        %2267 = vmatpush1.bf16.msra.mxu0 %v2128
        %2268 = vmatprep.subr.bf16.mxu0 0
        %2269 = vmatpush1.bf16.msra.mxu0 %v2129
        %2270 = vmatprep.subr.bf16.mxu0 0
        %2271 = vmatpush1.bf16.msra.mxu0 %v2130
        %2272 = vmatprep.subr.bf16.mxu0 0
        %2273 = vmatpush1.bf16.msra.mxu0 %v2131
        %2274 = vmatprep.subr.bf16.mxu0 0
        %2275 = vmatpush1.bf16.msra.mxu0 %v2132
        %2276 = vmatprep.subr.bf16.mxu0 0
        %2277 = vmatpush1.bf16.msra.mxu0 %v2133
        %2278 = vmatprep.mubr.bf16.mxu0 %v1723
        %2279 = vmatmul.mubr.bf16.gmra.mrb[0].mxu0 %v1722
        %v2280 = vpop.f32.mrb[0].mxu0
        %v2281 = vadd.f32 %v1861, %v2280
        %v2282 = vpop.f32.mrb[0].mxu0
        %v2283 = vpop.f32.mrb[0].mxu0
        %v2284 = vadd.f32 %v1861, %v2283
        %v2285 = vpop.f32.mrb[0].mxu0
        %2286 = vdwg.mxu0
        %2287 = vmatprep.subr.bf16.mxu0 0
        %2288 = vmatpush1.bf16.msra.mxu0 %v2134
        %2289 = vmatprep.subr.bf16.mxu0 0
        %2290 = vmatpush1.bf16.msra.mxu0 %v2135
        %2291 = vmatprep.subr.bf16.mxu0 0
        %2292 = vmatpush1.bf16.msra.mxu0 %v2136
        %2293 = vmatprep.subr.bf16.mxu0 0
        %2294 = vmatpush1.bf16.msra.mxu0 %v2137
        %2295 = vmatprep.subr.bf16.mxu0 0
        %2296 = vmatpush1.bf16.msra.mxu0 %v2138
        %2297 = vmatprep.subr.bf16.mxu0 0
        %2298 = vmatpush1.bf16.msra.mxu0 %v2139
        %2299 = vmatprep.subr.bf16.mxu0 0
        %2300 = vmatpush1.bf16.msra.mxu0 %v2140
        %2301 = vmatprep.subr.bf16.mxu0 0
        %2302 = vmatpush1.bf16.msra.mxu0 %v2141
        %2303 = vmatprep.subr.bf16.mxu0 0
        %2304 = vmatpush1.bf16.msra.mxu0 %v2142
        %2305 = vmatprep.subr.bf16.mxu0 0
        %2306 = vmatpush1.bf16.msra.mxu0 %v2143
        %2307 = vmatprep.subr.bf16.mxu0 0
        %2308 = vmatpush1.bf16.msra.mxu0 %v2144
        %2309 = vmatprep.subr.bf16.mxu0 0
        %2310 = vmatpush1.bf16.msra.mxu0 %v2145
        %2311 = vmatprep.subr.bf16.mxu0 0
        %2312 = vmatpush1.bf16.msra.mxu0 %v2146
        %2313 = vmatprep.subr.bf16.mxu0 0
        %2314 = vmatpush1.bf16.msra.mxu0 %v2147
        %2315 = vmatprep.subr.bf16.mxu0 0
        %2316 = vmatpush1.bf16.msra.mxu0 %v2148
        %2317 = vmatprep.subr.bf16.mxu0 0
        %2318 = vmatpush1.bf16.msra.mxu0 %v2149
        %2319 = vmatprep.mubr.bf16.mxu0 %v1725
        %2320 = vmatmul.mubr.bf16.gmra.mrb[0].mxu0 %v1724
        %v2321 = vpop.f32.mrb[0].mxu0
        %v2322 = vadd.f32 %v2281, %v2321
        %v2323 = vpop.f32.mrb[0].mxu0
        %v2324 = vpop.f32.mrb[0].mxu0
        %v2325 = vadd.f32 %v2284, %v2324
        %v2326 = vpop.f32.mrb[0].mxu0
        %2327 = vdwg.mxu0
        %2328 = vmatprep.subr.bf16.mxu0 0
        %2329 = vmatpush1.bf16.msra.mxu0 %v2150
        %2330 = vmatprep.subr.bf16.mxu0 0
        %2331 = vmatpush1.bf16.msra.mxu0 %v2151
        %2332 = vmatprep.subr.bf16.mxu0 0
        %2333 = vmatpush1.bf16.msra.mxu0 %v2152
        %2334 = vmatprep.subr.bf16.mxu0 0
        %2335 = vmatpush1.bf16.msra.mxu0 %v2153
        %2336 = vmatprep.subr.bf16.mxu0 0
        %2337 = vmatpush1.bf16.msra.mxu0 %v2154
        %2338 = vmatprep.subr.bf16.mxu0 0
        %2339 = vmatpush1.bf16.msra.mxu0 %v2155
        %2340 = vmatprep.subr.bf16.mxu0 0
        %2341 = vmatpush1.bf16.msra.mxu0 %v2156
        %2342 = vmatprep.subr.bf16.mxu0 0
        %2343 = vmatpush1.bf16.msra.mxu0 %v2157
        %2344 = vmatprep.subr.bf16.mxu0 0
        %2345 = vmatpush1.bf16.msra.mxu0 %v2158
        %2346 = vmatprep.subr.bf16.mxu0 0
        %2347 = vmatpush1.bf16.msra.mxu0 %v2159
        %2348 = vmatprep.subr.bf16.mxu0 0
        %2349 = vmatpush1.bf16.msra.mxu0 %v2160
        %2350 = vmatprep.subr.bf16.mxu0 0
        %2351 = vmatpush1.bf16.msra.mxu0 %v2161
        %2352 = vmatprep.subr.bf16.mxu0 0
        %2353 = vmatpush1.bf16.msra.mxu0 %v2162
        %2354 = vmatprep.subr.bf16.mxu0 0
        %2355 = vmatpush1.bf16.msra.mxu0 %v2163
        %2356 = vmatprep.subr.bf16.mxu0 0
        %2357 = vmatpush1.bf16.msra.mxu0 %v2164
        %2358 = vmatprep.subr.bf16.mxu0 0
        %2359 = vmatpush1.bf16.msra.mxu0 %v2165
        %2360 = vmatprep.mubr.bf16.mxu0 %v1727
        %2361 = vmatmul.mubr.bf16.gmra.mrb[0].mxu0 %v1726
        %v2362 = vpop.f32.mrb[0].mxu0
        %v2363 = vadd.f32 %v2322, %v2362
        %v2364 = vpop.f32.mrb[0].mxu0
        %v2365 = vpop.f32.mrb[0].mxu0
        %v2366 = vadd.f32 %v2325, %v2365
        %v2367 = vpop.f32.mrb[0].mxu0
        %2368 = vdwg.mxu0
        %2369 = vmatprep.subr.bf16.mxu0 0
        %2370 = vmatpush1.bf16.msra.mxu0 %v2166
        %2371 = vmatprep.subr.bf16.mxu0 0
        %2372 = vmatpush1.bf16.msra.mxu0 %v2167
        %2373 = vmatprep.subr.bf16.mxu0 0
        %2374 = vmatpush1.bf16.msra.mxu0 %v2168
        %2375 = vmatprep.subr.bf16.mxu0 0
        %2376 = vmatpush1.bf16.msra.mxu0 %v2169
        %2377 = vmatprep.subr.bf16.mxu0 0
        %2378 = vmatpush1.bf16.msra.mxu0 %v2170
        %2379 = vmatprep.subr.bf16.mxu0 0
        %2380 = vmatpush1.bf16.msra.mxu0 %v2171
        %2381 = vmatprep.subr.bf16.mxu0 0
        %2382 = vmatpush1.bf16.msra.mxu0 %v2172
        %2383 = vmatprep.subr.bf16.mxu0 0
        %2384 = vmatpush1.bf16.msra.mxu0 %v2173
        %2385 = vmatprep.subr.bf16.mxu0 0
        %2386 = vmatpush1.bf16.msra.mxu0 %v2174
        %2387 = vmatprep.subr.bf16.mxu0 0
        %2388 = vmatpush1.bf16.msra.mxu0 %v2175
        %2389 = vmatprep.subr.bf16.mxu0 0
        %2390 = vmatpush1.bf16.msra.mxu0 %v2176
        %2391 = vmatprep.subr.bf16.mxu0 0
        %2392 = vmatpush1.bf16.msra.mxu0 %v2177
        %2393 = vmatprep.subr.bf16.mxu0 0
        %2394 = vmatpush1.bf16.msra.mxu0 %v2178
        %2395 = vmatprep.subr.bf16.mxu0 0
        %2396 = vmatpush1.bf16.msra.mxu0 %v2179
        %2397 = vmatprep.subr.bf16.mxu0 0
        %2398 = vmatpush1.bf16.msra.mxu0 %v2180
        %2399 = vmatprep.subr.bf16.mxu0 0
        %2400 = vmatpush1.bf16.msra.mxu0 %v2181
        %2401 = vmatprep.mubr.bf16.mxu0 %v1729
        %2402 = vmatmul.mubr.bf16.gmra.mrb[0].mxu0 %v1728
        %v2403 = vpop.f32.mrb[0].mxu0
        %v2404 = vadd.f32 %v2363, %v2403
        %v2405 = vpop.f32.mrb[0].mxu0
        %v2406 = vpop.f32.mrb[0].mxu0
        %v2407 = vadd.f32 %v2366, %v2406
        %v2408 = vpop.f32.mrb[0].mxu0
        %2409 = vdwg.mxu0
        %v2410 = vadd.f32 %v1390, %v2404
        %v2411 = vadd.f32 %v1391, %v2407
        %v2412 = vsel %vm548, %v2410, 0.0
        %2413 = vadd.xlane.f32.xlu0 %v2412
        %v2414 = vpop.xlane.xlu0 %2413
        %v2415 = vsel %vm548, %v2411, 0.0
        %2416 = vadd.xlane.f32.xlu0 %v2415
        %v2417 = vpop.xlane.xlu0 %2416
        %v2418 = vmul.f32 %v2414, %v1359
        %v2419 = vmul.f32 %v2417, %v1359
        %v2420 = vsub.f32 %v2410, %v2418
        %v2421 = vsub.f32 %v2411, %v2419
        %v2422 = vmul.f32 %v2420, %v2420
        %v2423 = vmul.f32 %v2421, %v2421
        %v2424 = vsel %vm548, %v2422, 0.0
        %2425 = vadd.xlane.f32.xlu0 %v2424
        %v2426 = vpop.xlane.xlu0 %2425
        %v2427 = vsel %vm548, %v2423, 0.0
        %2428 = vadd.xlane.f32.xlu0 %v2427
        %v2429 = vpop.xlane.xlu0 %2428
        %v2430 = vmul.f32 %v2426, %v1359
        %v2431 = vmul.f32 %v2429, %v1359
        %v2432 = vadd.f32 %v2430, 1e-05
        %v2433 = vadd.f32 %v2431, 1e-05
        %v2434 = vrsqrt.pop %v2432
        %v2435 = vrsqrt.pop %v2433
        %v2436 = vmul.f32 %v2420, %v2434
        %v2437 = vmul.f32 %v2421, %v2435
        %v2438 = vlaneseq
        %v2439 = vshrl.u32 %v2438, 7
        %v2440 = vsub.s32 0, %v2439
        %v2441 = vrot.slane %v525, %v2440
        %v2442 = vmul.f32 %v2436, %v2441
        %v2443 = vmul.f32 %v2437, %v2441
        %v2444 = vlaneseq
        %v2445 = vshrl.u32 %v2444, 7
        %v2446 = vsub.s32 0, %v2445
        %v2447 = vrot.slane %v526, %v2446
        %v2448 = vadd.f32 %v2442, %v2447
        %v2449 = vadd.f32 %v2443, %v2447
        %2450 = vst.msk [vmem:[%s485] sm:$0xff] %vm548, %v2448
        %2451 = vst.msk [vmem:[%s485 + $0x8] sm:$0xff] %vm548, %v2449
        %s2452 = sand.u32 %s333, 1
        %s2453 = scalar_lea.sflag [#allocation4], %s2452
        %s2454 = sand.u32 %s333, 1
        %s2455 = smul.addr %s2454, 16
        %s2456 = scalar_lea.vmem [#allocation3], %s2455
        // Predicated region
        $region73: #{cross_attention_forward.7} parent=71 // pred_check
          %p2457 = pneg %p343
        $region74: #{cross_attention_forward.7} parent=71 // pred_check_branch
          %2459 = sbr.rel (%p2457) target = $region76
        $region75: #{cross_attention_forward.7} parent=71 // pred_region
          %s2461 = ssub.s32 256, 256
          %2462 = vsyncadd %s2453, %s2461
          %s2463 = smul.addr %s27, 2
          %s2464 = smul.addr %s2463, 128
          %s2465 = scalar_lea.hbm %s13, %s2464
          %s2466 = sshll.u32 %s2456, 4
          %s2467 = int_to_ptr.vmem [resolvable:$true] %s2466
          %2472 = dma.vmem_to_hbm [thread:$0]  %s2467, 256, %s2465, %s2453, 128, 128, 8
        $region76: #{cross_attention_forward.7} parent=71 // pred_fallthru
          _
      $region72: #{cross_attention_forward.7} parent=5 // pred_fallthru
        _
      %p2473 = scmp.le.s32.totalorder 2, %s22
      // Predicated region
      $region77: #{cross_attention_forward.7} parent=5 // pred_check
        %p2474 = pneg %p2473
      $region78: #{cross_attention_forward.7} parent=5 // pred_check_branch
        %2476 = sbr.rel (%p2474) target = $region80
      $region79: #{cross_attention_forward.7} parent=5 // pred_region
        %s2477 = ssub.s32 %s22, 2
        // Predicated region
        $region81: #{cross_attention_forward.7} parent=79 // pred_check
          %p2478 = pneg %p349
        $region82: #{cross_attention_forward.7} parent=79 // pred_check_branch
          %2480 = sbr.rel (%p2478) target = $region84
        $region83: #{cross_attention_forward.7} parent=79 // pred_region
          %s2481 = sand.u32 %s334, 1
          %s2482 = scalar_lea.sflag [#allocation4], %s2481
          %s2483 = sand.u32 %s334, 1
          %s2484 = smul.addr %s2483, 16
          %s2485 = scalar_lea.vmem [#allocation3], %s2484
          %2486 = dma.done %s2482, 256
        $region84: #{cross_attention_forward.7} parent=79 // pred_fallthru
          _
      $region80: #{cross_attention_forward.7} parent=5 // pred_fallthru
        _
    $region6: #{cross_attention_forward.7} parent=1 // loop_footer
      %s26 = sadd.s32 1, %s22
    $region7: #{cross_attention_forward.7} parent=1 // loop_footer_branch
      %21 = sbr.rel target = $region3
    $region8: #{cross_attention_forward.7} parent=1 // loop_exit
      _
    %2487 = vsyncpa [#allocation4], 1
    %s2488 = scalar_lea.sflag [#allocation4], 1
    %2489 = vsyncpa %s2488, 1

// kernel: cross_attention_forward.6
$region0: #{cross_attention_forward.6}
  #allocation0 [shape = 'u32[]', space=smem, size = 0x4, offset = 0x4, fixed_abs, tag = 'smem constant byte address 0x4 - core index']
  #allocation1 [shape = 'u32[144,128]{1,0:T(1,128)}', space=vmem, size = 0x12000, scoped, tag = 'internal scratch']
  #allocation2 [shape = 'f32[8,32]{1,0:T(8,128)}', space=vmem, size = 0x1000, scoped, tag = 'scratch operand']
  %s0 = inlined_call_operand.vmem [shape: f32[2,8,32], index: 0, kind: input, shape index: {}]
  %s1 = inlined_call_operand.vmem [shape: f32[2,8,32], index: 1, kind: input, shape index: {}]
  %s2 = inlined_call_operand.vmem [shape: f32[2,16,32], index: 2, kind: input, shape index: {}]
  %s3 = inlined_call_operand.vmem [shape: f32[2,16,32], index: 3, kind: input, shape index: {}]
  %s4 = inlined_call_operand.vmem [shape: f32[2,1,16], index: 4, kind: input, shape index: {}]
  %s5 = inlined_call_operand.vmem [shape: bf16[32,32], index: 5, kind: input, shape index: {}]
  %s6 = inlined_call_operand.vmem [shape: bf16[32,32], index: 6, kind: input, shape index: {}]
  %s7 = inlined_call_operand.vmem [shape: bf16[32,32], index: 7, kind: input, shape index: {}]
  %s8 = inlined_call_operand.vmem [shape: bf16[32,32], index: 8, kind: input, shape index: {}]
  %s9 = inlined_call_operand.vmem [shape: bf16[32,1024], index: 9, kind: input, shape index: {}]
  %s10 = inlined_call_operand.vmem [shape: bf16[1024,32], index: 10, kind: input, shape index: {}]
  %s11 = inlined_call_operand.vmem [shape: f32[1,1024], index: 11, kind: input, shape index: {}]
  %s12 = inlined_call_operand.vmem [shape: f32[9,32], index: 12, kind: input, shape index: {}]
  %s13 = inlined_call_operand.hbm [shape: f32[2,8,32], index: 13, kind: output, shape index: {}]
  %s14 = sld [smem:[#allocation0]]
  $region85: #{cross_attention_forward.6} parent=0
    _
  %s16 = ssub.s32 1, %s14
  %s17 = scalar_select 0, %s16, %s14
  $region1: #{cross_attention_forward.6} parent=0
    #allocation3 [shape = 'u8[8192]{0}', space=vmem, size = 0x2000, scoped, tag = 'output window, operand 0']
    #allocation4 [shape = 's32[2]{0}', space=sflag, size = 0x8, scoped, tag = 'scoped memory for cross_attention_forward.6']
    %18 = vsyncpa [#allocation4], 0
    %s19 = scalar_lea.sflag [#allocation4], 1
    %20 = vsyncpa %s19, 0
    loop: start=0, step=1, limit=4
    $region2: #{cross_attention_forward.6} parent=1 // loop_pre_header
      _
    $region3: #{cross_attention_forward.6} parent=1 // loop_header
      %s22 = sphi 0, %s26
      %p23 = scmp.ge.s32.totalorder %s22, 4
      %s32 = sphi 0, %s34
      %s35 = sphi 0, %s32
      %s36 = sphi 0, %s35
      %s52 = sphi 0, %s36
      %s58 = sphi 0, %s60
      %s61 = sphi 0, %s58
      %s62 = sphi 0, %s61
      %s78 = sphi 0, %s62
      %s84 = sphi 0, %s86
      %s87 = sphi 0, %s84
      %s88 = sphi 0, %s87
      %s104 = sphi 0, %s88
      %s110 = sphi 0, %s112
      %s113 = sphi 0, %s110
      %s114 = sphi 0, %s113
      %s130 = sphi 0, %s114
      %s136 = sphi 0, %s138
      %s139 = sphi 0, %s136
      %s140 = sphi 0, %s139
      %s156 = sphi 0, %s140
      %s160 = sphi 0, %s160
      %s162 = sphi 0, %s160
      %s163 = sphi 0, %s162
      %s177 = sphi 0, %s163
      %s181 = sphi 0, %s181
      %s183 = sphi 0, %s181
      %s184 = sphi 0, %s183
      %s198 = sphi 0, %s184
      %s202 = sphi 0, %s202
      %s204 = sphi 0, %s202
      %s205 = sphi 0, %s204
      %s219 = sphi 0, %s205
      %s223 = sphi 0, %s223
      %s225 = sphi 0, %s223
      %s226 = sphi 0, %s225
      %s240 = sphi 0, %s226
      %s244 = sphi 0, %s244
      %s246 = sphi 0, %s244
      %s247 = sphi 0, %s246
      %s261 = sphi 0, %s247
      %s265 = sphi 0, %s265
      %s267 = sphi 0, %s265
      %s268 = sphi 0, %s267
      %s282 = sphi 0, %s268
      %s286 = sphi 0, %s286
      %s288 = sphi 0, %s286
      %s289 = sphi 0, %s288
      %s303 = sphi 0, %s289
      %s307 = sphi 0, %s307
      %s309 = sphi 0, %s307
      %s310 = sphi 0, %s309
      %s324 = sphi 0, %s310
      %s330 = sphi 0, %s332
      %s333 = sphi 0, %s330
      %s334 = sphi 0, %s333
      %s350 = sphi 0, %s334
    $region4: #{cross_attention_forward.6} parent=1 // loop_header_branch
      %25 = sbr.rel (%p23) target = $region8
    $region5: #{cross_attention_forward.6} parent=1 // loop_body
      %s27 = ssub.s32 %s22, 1
      %s28 = ssub.s32 %s22, 2
      %s29 = sadd.s32 %s22, 1
      %s30 = ssub.s32 %s22, %s29
      %p31 = scmp.eq.s32.totalorder %s30, 0
      %s33 = sadd.s32 %s32, 1
      %s34 = scalar_select %p31, %s32, %s33
      %p37 = pneg %p31
      %p38 = scmp.eq.s32.totalorder %s22, 1
      %p39 = por %p37, %p38
      %p40 = scmp.ne.s32.totalorder %s32, %s35
      %p41 = scmp.eq.s32.totalorder %s22, 0
      %p42 = por %p40, %p41
      %p43 = scmp.ne.s32.totalorder %s32, %s35
      %p44 = scmp.eq.s32.totalorder %s27, 1
      %p45 = por %p43, %p44
      %p46 = scmp.ne.s32.totalorder %s35, %s36
      %p47 = scmp.eq.s32.totalorder %s27, 0
      %p48 = por %p46, %p47
      %p49 = scmp.ne.s32.totalorder %s35, %s36
      %p50 = scmp.eq.s32.totalorder %s28, 1
      %p51 = por %p49, %p50
      %p53 = scmp.ne.s32.totalorder %s36, %s52
      %p54 = scmp.eq.s32.totalorder %s28, 0
      %p55 = por %p53, %p54
      %s56 = ssub.s32 %s22, %s29
      %p57 = scmp.eq.s32.totalorder %s56, 0
      %s59 = sadd.s32 %s58, 1
      %s60 = scalar_select %p57, %s58, %s59
      %p63 = pneg %p57
      %p64 = scmp.eq.s32.totalorder %s22, 1
      %p65 = por %p63, %p64
      %p66 = scmp.ne.s32.totalorder %s58, %s61
      %p67 = scmp.eq.s32.totalorder %s22, 0
      %p68 = por %p66, %p67
      %p69 = scmp.ne.s32.totalorder %s58, %s61
      %p70 = scmp.eq.s32.totalorder %s27, 1
      %p71 = por %p69, %p70
      %p72 = scmp.ne.s32.totalorder %s61, %s62
      %p73 = scmp.eq.s32.totalorder %s27, 0
      %p74 = por %p72, %p73
      %p75 = scmp.ne.s32.totalorder %s61, %s62
      %p76 = scmp.eq.s32.totalorder %s28, 1
      %p77 = por %p75, %p76
      %p79 = scmp.ne.s32.totalorder %s62, %s78
      %p80 = scmp.eq.s32.totalorder %s28, 0
      %p81 = por %p79, %p80
      %s82 = ssub.s32 %s22, %s29
      %p83 = scmp.eq.s32.totalorder %s82, 0
      %s85 = sadd.s32 %s84, 1
      %s86 = scalar_select %p83, %s84, %s85
      %p89 = pneg %p83
      %p90 = scmp.eq.s32.totalorder %s22, 1
      %p91 = por %p89, %p90
      %p92 = scmp.ne.s32.totalorder %s84, %s87
      %p93 = scmp.eq.s32.totalorder %s22, 0
      %p94 = por %p92, %p93
      %p95 = scmp.ne.s32.totalorder %s84, %s87
      %p96 = scmp.eq.s32.totalorder %s27, 1
      %p97 = por %p95, %p96
      %p98 = scmp.ne.s32.totalorder %s87, %s88
      %p99 = scmp.eq.s32.totalorder %s27, 0
      %p100 = por %p98, %p99
      %p101 = scmp.ne.s32.totalorder %s87, %s88
      %p102 = scmp.eq.s32.totalorder %s28, 1
      %p103 = por %p101, %p102
      %p105 = scmp.ne.s32.totalorder %s88, %s104
      %p106 = scmp.eq.s32.totalorder %s28, 0
      %p107 = por %p105, %p106
      %s108 = ssub.s32 %s22, %s29
      %p109 = scmp.eq.s32.totalorder %s108, 0
      %s111 = sadd.s32 %s110, 1
      %s112 = scalar_select %p109, %s110, %s111
      %p115 = pneg %p109
      %p116 = scmp.eq.s32.totalorder %s22, 1
      %p117 = por %p115, %p116
      %p118 = scmp.ne.s32.totalorder %s110, %s113
      %p119 = scmp.eq.s32.totalorder %s22, 0
      %p120 = por %p118, %p119
      %p121 = scmp.ne.s32.totalorder %s110, %s113
      %p122 = scmp.eq.s32.totalorder %s27, 1
      %p123 = por %p121, %p122
      %p124 = scmp.ne.s32.totalorder %s113, %s114
      %p125 = scmp.eq.s32.totalorder %s27, 0
      %p126 = por %p124, %p125
      %p127 = scmp.ne.s32.totalorder %s113, %s114
      %p128 = scmp.eq.s32.totalorder %s28, 1
      %p129 = por %p127, %p128
      %p131 = scmp.ne.s32.totalorder %s114, %s130
      %p132 = scmp.eq.s32.totalorder %s28, 0
      %p133 = por %p131, %p132
      %s134 = ssub.s32 %s22, %s29
      %p135 = scmp.eq.s32.totalorder %s134, 0
      %s137 = sadd.s32 %s136, 1
      %s138 = scalar_select %p135, %s136, %s137
      %p141 = pneg %p135
      %p142 = scmp.eq.s32.totalorder %s22, 1
      %p143 = por %p141, %p142
      %p144 = scmp.ne.s32.totalorder %s136, %s139
      %p145 = scmp.eq.s32.totalorder %s22, 0
      %p146 = por %p144, %p145
      %p147 = scmp.ne.s32.totalorder %s136, %s139
      %p148 = scmp.eq.s32.totalorder %s27, 1
      %p149 = por %p147, %p148
      %p150 = scmp.ne.s32.totalorder %s139, %s140
      %p151 = scmp.eq.s32.totalorder %s27, 0
      %p152 = por %p150, %p151
      %p153 = scmp.ne.s32.totalorder %s139, %s140
      %p154 = scmp.eq.s32.totalorder %s28, 1
      %p155 = por %p153, %p154
      %p157 = scmp.ne.s32.totalorder %s140, %s156
      %p158 = scmp.eq.s32.totalorder %s28, 0
      %p159 = por %p157, %p158
      %s161 = sadd.s32 %s160, 1
      %p164 = scmp.eq.s32.totalorder %s22, 1
      %p165 = scmp.ne.s32.totalorder %s160, %s162
      %p166 = scmp.eq.s32.totalorder %s22, 0
      %p167 = por %p165, %p166
      %p168 = scmp.ne.s32.totalorder %s160, %s162
      %p169 = scmp.eq.s32.totalorder %s27, 1
      %p170 = por %p168, %p169
      %p171 = scmp.ne.s32.totalorder %s162, %s163
      %p172 = scmp.eq.s32.totalorder %s27, 0
      %p173 = por %p171, %p172
      %p174 = scmp.ne.s32.totalorder %s162, %s163
      %p175 = scmp.eq.s32.totalorder %s28, 1
      %p176 = por %p174, %p175
      %p178 = scmp.ne.s32.totalorder %s163, %s177
      %p179 = scmp.eq.s32.totalorder %s28, 0
      %p180 = por %p178, %p179
      %s182 = sadd.s32 %s181, 1
      %p185 = scmp.eq.s32.totalorder %s22, 1
      %p186 = scmp.ne.s32.totalorder %s181, %s183
      %p187 = scmp.eq.s32.totalorder %s22, 0
      %p188 = por %p186, %p187
      %p189 = scmp.ne.s32.totalorder %s181, %s183
      %p190 = scmp.eq.s32.totalorder %s27, 1
      %p191 = por %p189, %p190
      %p192 = scmp.ne.s32.totalorder %s183, %s184
      %p193 = scmp.eq.s32.totalorder %s27, 0
      %p194 = por %p192, %p193
      %p195 = scmp.ne.s32.totalorder %s183, %s184
      %p196 = scmp.eq.s32.totalorder %s28, 1
      %p197 = por %p195, %p196
      %p199 = scmp.ne.s32.totalorder %s184, %s198
      %p200 = scmp.eq.s32.totalorder %s28, 0
      %p201 = por %p199, %p200
      %s203 = sadd.s32 %s202, 1
      %p206 = scmp.eq.s32.totalorder %s22, 1
      %p207 = scmp.ne.s32.totalorder %s202, %s204
      %p208 = scmp.eq.s32.totalorder %s22, 0
      %p209 = por %p207, %p208
      %p210 = scmp.ne.s32.totalorder %s202, %s204
      %p211 = scmp.eq.s32.totalorder %s27, 1
      %p212 = por %p210, %p211
      %p213 = scmp.ne.s32.totalorder %s204, %s205
      %p214 = scmp.eq.s32.totalorder %s27, 0
      %p215 = por %p213, %p214
      %p216 = scmp.ne.s32.totalorder %s204, %s205
      %p217 = scmp.eq.s32.totalorder %s28, 1
      %p218 = por %p216, %p217
      %p220 = scmp.ne.s32.totalorder %s205, %s219
      %p221 = scmp.eq.s32.totalorder %s28, 0
      %p222 = por %p220, %p221
      %s224 = sadd.s32 %s223, 1
      %p227 = scmp.eq.s32.totalorder %s22, 1
      %p228 = scmp.ne.s32.totalorder %s223, %s225
      %p229 = scmp.eq.s32.totalorder %s22, 0
      %p230 = por %p228, %p229
      %p231 = scmp.ne.s32.totalorder %s223, %s225
      %p232 = scmp.eq.s32.totalorder %s27, 1
      %p233 = por %p231, %p232
      %p234 = scmp.ne.s32.totalorder %s225, %s226
      %p235 = scmp.eq.s32.totalorder %s27, 0
      %p236 = por %p234, %p235
      %p237 = scmp.ne.s32.totalorder %s225, %s226
      %p238 = scmp.eq.s32.totalorder %s28, 1
      %p239 = por %p237, %p238
      %p241 = scmp.ne.s32.totalorder %s226, %s240
      %p242 = scmp.eq.s32.totalorder %s28, 0
      %p243 = por %p241, %p242
      %s245 = sadd.s32 %s244, 1
      %p248 = scmp.eq.s32.totalorder %s22, 1
      %p249 = scmp.ne.s32.totalorder %s244, %s246
      %p250 = scmp.eq.s32.totalorder %s22, 0
      %p251 = por %p249, %p250
      %p252 = scmp.ne.s32.totalorder %s244, %s246
      %p253 = scmp.eq.s32.totalorder %s27, 1
      %p254 = por %p252, %p253
      %p255 = scmp.ne.s32.totalorder %s246, %s247
      %p256 = scmp.eq.s32.totalorder %s27, 0
      %p257 = por %p255, %p256
      %p258 = scmp.ne.s32.totalorder %s246, %s247
      %p259 = scmp.eq.s32.totalorder %s28, 1
      %p260 = por %p258, %p259
      %p262 = scmp.ne.s32.totalorder %s247, %s261
      %p263 = scmp.eq.s32.totalorder %s28, 0
      %p264 = por %p262, %p263
      %s266 = sadd.s32 %s265, 1
      %p269 = scmp.eq.s32.totalorder %s22, 1
      %p270 = scmp.ne.s32.totalorder %s265, %s267
      %p271 = scmp.eq.s32.totalorder %s22, 0
      %p272 = por %p270, %p271
      %p273 = scmp.ne.s32.totalorder %s265, %s267
      %p274 = scmp.eq.s32.totalorder %s27, 1
      %p275 = por %p273, %p274
      %p276 = scmp.ne.s32.totalorder %s267, %s268
      %p277 = scmp.eq.s32.totalorder %s27, 0
      %p278 = por %p276, %p277
      %p279 = scmp.ne.s32.totalorder %s267, %s268
      %p280 = scmp.eq.s32.totalorder %s28, 1
      %p281 = por %p279, %p280
      %p283 = scmp.ne.s32.totalorder %s268, %s282
      %p284 = scmp.eq.s32.totalorder %s28, 0
      %p285 = por %p283, %p284
      %s287 = sadd.s32 %s286, 1
      %p290 = scmp.eq.s32.totalorder %s22, 1
      %p291 = scmp.ne.s32.totalorder %s286, %s288
      %p292 = scmp.eq.s32.totalorder %s22, 0
      %p293 = por %p291, %p292
      %p294 = scmp.ne.s32.totalorder %s286, %s288
      %p295 = scmp.eq.s32.totalorder %s27, 1
      %p296 = por %p294, %p295
      %p297 = scmp.ne.s32.totalorder %s288, %s289
      %p298 = scmp.eq.s32.totalorder %s27, 0
      %p299 = por %p297, %p298
      %p300 = scmp.ne.s32.totalorder %s288, %s289
      %p301 = scmp.eq.s32.totalorder %s28, 1
      %p302 = por %p300, %p301
      %p304 = scmp.ne.s32.totalorder %s289, %s303
      %p305 = scmp.eq.s32.totalorder %s28, 0
      %p306 = por %p304, %p305
      %s308 = sadd.s32 %s307, 1
      %p311 = scmp.eq.s32.totalorder %s22, 1
      %p312 = scmp.ne.s32.totalorder %s307, %s309
      %p313 = scmp.eq.s32.totalorder %s22, 0
      %p314 = por %p312, %p313
      %p315 = scmp.ne.s32.totalorder %s307, %s309
      %p316 = scmp.eq.s32.totalorder %s27, 1
      %p317 = por %p315, %p316
      %p318 = scmp.ne.s32.totalorder %s309, %s310
      %p319 = scmp.eq.s32.totalorder %s27, 0
      %p320 = por %p318, %p319
      %p321 = scmp.ne.s32.totalorder %s309, %s310
      %p322 = scmp.eq.s32.totalorder %s28, 1
      %p323 = por %p321, %p322
      %p325 = scmp.ne.s32.totalorder %s310, %s324
      %p326 = scmp.eq.s32.totalorder %s28, 0
      %p327 = por %p325, %p326
      %s328 = ssub.s32 %s22, %s29
      %p329 = scmp.eq.s32.totalorder %s328, 0
      %s331 = sadd.s32 %s330, 1
      %s332 = scalar_select %p329, %s330, %s331
      %p335 = pneg %p329
      %p336 = scmp.eq.s32.totalorder %s22, 1
      %p337 = por %p335, %p336
      %p338 = scmp.ne.s32.totalorder %s330, %s333
      %p339 = scmp.eq.s32.totalorder %s22, 0
      %p340 = por %p338, %p339
      %p341 = scmp.ne.s32.totalorder %s330, %s333
      %p342 = scmp.eq.s32.totalorder %s27, 1
      %p343 = por %p341, %p342
      %p344 = scmp.ne.s32.totalorder %s333, %s334
      %p345 = scmp.eq.s32.totalorder %s27, 0
      %p346 = por %p344, %p345
      %p347 = scmp.ne.s32.totalorder %s333, %s334
      %p348 = scmp.eq.s32.totalorder %s28, 1
      %p349 = por %p347, %p348
      %p351 = scmp.ne.s32.totalorder %s334, %s350
      %p352 = scmp.eq.s32.totalorder %s28, 0
      %p353 = por %p351, %p352
      %p354 = scmp.le.s32.totalorder 1, %s22
      %p355 = scmp.lt.s32.totalorder %s22, 3
      %p356 = pnand %p354, %p355
      %p357 = pneg %p356
      // Predicated region
      $region9: #{cross_attention_forward.6} parent=5 // pred_check
        _
      $region10: #{cross_attention_forward.6} parent=5 // pred_check_branch
        %359 = sbr.rel (%p356) target = $region12
      $region11: #{cross_attention_forward.6} parent=5 // pred_region
        %s360 = ssub.s32 %s22, 1
        // Predicated region
        $region13: #{cross_attention_forward.6} parent=11 // pred_check
          %p361 = pneg %p173
        $region14: #{cross_attention_forward.6} parent=11 // pred_check_branch
          %363 = sbr.rel (%p361) target = $region16
        $region15: #{cross_attention_forward.6} parent=11 // pred_region
          _
        $region16: #{cross_attention_forward.6} parent=11 // pred_fallthru
          _
        // Predicated region
        $region17: #{cross_attention_forward.6} parent=11 // pred_check
          %p364 = pneg %p194
        $region18: #{cross_attention_forward.6} parent=11 // pred_check_branch
          %366 = sbr.rel (%p364) target = $region20
        $region19: #{cross_attention_forward.6} parent=11 // pred_region
          _
        $region20: #{cross_attention_forward.6} parent=11 // pred_fallthru
          _
        // Predicated region
        $region21: #{cross_attention_forward.6} parent=11 // pred_check
          %p367 = pneg %p215
        $region22: #{cross_attention_forward.6} parent=11 // pred_check_branch
          %369 = sbr.rel (%p367) target = $region24
        $region23: #{cross_attention_forward.6} parent=11 // pred_region
          _
        $region24: #{cross_attention_forward.6} parent=11 // pred_fallthru
          _
        // Predicated region
        $region25: #{cross_attention_forward.6} parent=11 // pred_check
          %p370 = pneg %p236
        $region26: #{cross_attention_forward.6} parent=11 // pred_check_branch
          %372 = sbr.rel (%p370) target = $region28
        $region27: #{cross_attention_forward.6} parent=11 // pred_region
          _
        $region28: #{cross_attention_forward.6} parent=11 // pred_fallthru
          _
        // Predicated region
        $region29: #{cross_attention_forward.6} parent=11 // pred_check
          %p373 = pneg %p257
        $region30: #{cross_attention_forward.6} parent=11 // pred_check_branch
          %375 = sbr.rel (%p373) target = $region32
        $region31: #{cross_attention_forward.6} parent=11 // pred_region
          _
        $region32: #{cross_attention_forward.6} parent=11 // pred_fallthru
          _
        // Predicated region
        $region33: #{cross_attention_forward.6} parent=11 // pred_check
          %p376 = pneg %p278
        $region34: #{cross_attention_forward.6} parent=11 // pred_check_branch
          %378 = sbr.rel (%p376) target = $region36
        $region35: #{cross_attention_forward.6} parent=11 // pred_region
          _
        $region36: #{cross_attention_forward.6} parent=11 // pred_fallthru
          _
        // Predicated region
        $region37: #{cross_attention_forward.6} parent=11 // pred_check
          %p379 = pneg %p299
        $region38: #{cross_attention_forward.6} parent=11 // pred_check_branch
          %381 = sbr.rel (%p379) target = $region40
        $region39: #{cross_attention_forward.6} parent=11 // pred_region
          _
        $region40: #{cross_attention_forward.6} parent=11 // pred_fallthru
          _
        // Predicated region
        $region41: #{cross_attention_forward.6} parent=11 // pred_check
          %p382 = pneg %p320
        $region42: #{cross_attention_forward.6} parent=11 // pred_check_branch
          %384 = sbr.rel (%p382) target = $region44
        $region43: #{cross_attention_forward.6} parent=11 // pred_region
          _
        $region44: #{cross_attention_forward.6} parent=11 // pred_fallthru
          _
      $region12: #{cross_attention_forward.6} parent=5 // pred_fallthru
        _
      %p385 = scmp.lt.s32.totalorder %s22, 2
      // Predicated region
      $region45: #{cross_attention_forward.6} parent=5 // pred_check
        %p386 = pneg %p385
      $region46: #{cross_attention_forward.6} parent=5 // pred_check_branch
        %388 = sbr.rel (%p386) target = $region48
      $region47: #{cross_attention_forward.6} parent=5 // pred_region
        // Predicated region
        $region49: #{cross_attention_forward.6} parent=47 // pred_check
          %p389 = pneg %p42
        $region50: #{cross_attention_forward.6} parent=47 // pred_check_branch
          %391 = sbr.rel (%p389) target = $region52
        $region51: #{cross_attention_forward.6} parent=47 // pred_region
          %p392 = scmp.lt.s32.totalorder %s22, 1
          %s393 = scalar_select %p392, %s22, 1
          %s394 = smul.addr %s393, 8
          %s395 = scalar_lea.vmem %s0, %s394
        $region52: #{cross_attention_forward.6} parent=47 // pred_fallthru
          _
        // Predicated region
        $region53: #{cross_attention_forward.6} parent=47 // pred_check
          %p396 = pneg %p68
        $region54: #{cross_attention_forward.6} parent=47 // pred_check_branch
          %398 = sbr.rel (%p396) target = $region56
        $region55: #{cross_attention_forward.6} parent=47 // pred_region
          %p399 = scmp.lt.s32.totalorder %s22, 1
          %s400 = scalar_select %p399, %s22, 1
          %s401 = smul.addr %s400, 8
          %s402 = scalar_lea.vmem %s1, %s401
        $region56: #{cross_attention_forward.6} parent=47 // pred_fallthru
          _
        // Predicated region
        $region57: #{cross_attention_forward.6} parent=47 // pred_check
          %p403 = pneg %p94
        $region58: #{cross_attention_forward.6} parent=47 // pred_check_branch
          %405 = sbr.rel (%p403) target = $region60
        $region59: #{cross_attention_forward.6} parent=47 // pred_region
          %p406 = scmp.lt.s32.totalorder %s22, 1
          %s407 = scalar_select %p406, %s22, 1
          %s408 = smul.addr %s407, 2
          %s409 = smul.addr %s408, 8
          %s410 = scalar_lea.vmem %s2, %s409
        $region60: #{cross_attention_forward.6} parent=47 // pred_fallthru
          _
        // Predicated region
        $region61: #{cross_attention_forward.6} parent=47 // pred_check
          %p411 = pneg %p120
        $region62: #{cross_attention_forward.6} parent=47 // pred_check_branch
          %413 = sbr.rel (%p411) target = $region64
        $region63: #{cross_attention_forward.6} parent=47 // pred_region
          %p414 = scmp.lt.s32.totalorder %s22, 1
          %s415 = scalar_select %p414, %s22, 1
          %s416 = smul.addr %s415, 2
          %s417 = smul.addr %s416, 8
          %s418 = scalar_lea.vmem %s3, %s417
        $region64: #{cross_attention_forward.6} parent=47 // pred_fallthru
          _
        // Predicated region
        $region65: #{cross_attention_forward.6} parent=47 // pred_check
          %p419 = pneg %p146
        $region66: #{cross_attention_forward.6} parent=47 // pred_check_branch
          %421 = sbr.rel (%p419) target = $region68
        $region67: #{cross_attention_forward.6} parent=47 // pred_region
          %p422 = scmp.lt.s32.totalorder %s22, 1
          %s423 = scalar_select %p422, %s22, 1
          %s424 = scalar_lea.vmem %s4, %s423
        $region68: #{cross_attention_forward.6} parent=47 // pred_fallthru
          _
      $region48: #{cross_attention_forward.6} parent=5 // pred_fallthru
        _
      %p425 = scmp.le.s32.totalorder 1, %s22
      %p426 = scmp.lt.s32.totalorder %s22, 3
      %p427 = pnand %p425, %p426
      %p428 = pneg %p427
      // Predicated region
      $region69: #{cross_attention_forward.6} parent=5 // pred_check
        _
      $region70: #{cross_attention_forward.6} parent=5 // pred_check_branch
        %430 = sbr.rel (%p427) target = $region72
      $region71: #{cross_attention_forward.6} parent=5 // pred_region
        %s431 = ssub.s32 %s22, 1
        %p432 = scmp.lt.s32.totalorder %s27, 1
        %s433 = scalar_select %p432, %s27, 1
        %s434 = smul.addr %s433, 8
        %s435 = scalar_lea.vmem %s0, %s434
        %p436 = pneg %p48
        %p437 = pneg %p45
        %p438 = scmp.lt.s32.totalorder %s27, 1
        %s439 = scalar_select %p438, %s27, 1
        %s440 = smul.addr %s439, 8
        %s441 = scalar_lea.vmem %s1, %s440
        %p442 = pneg %p74
        %p443 = pneg %p71
        %p444 = scmp.lt.s32.totalorder %s27, 1
        %s445 = scalar_select %p444, %s27, 1
        %s446 = smul.addr %s445, 2
        %s447 = smul.addr %s446, 8
        %s448 = scalar_lea.vmem %s2, %s447
        %p449 = pneg %p100
        %p450 = pneg %p97
        %p451 = scmp.lt.s32.totalorder %s27, 1
        %s452 = scalar_select %p451, %s27, 1
        %s453 = smul.addr %s452, 2
        %s454 = smul.addr %s453, 8
        %s455 = scalar_lea.vmem %s3, %s454
        %p456 = pneg %p126
        %p457 = pneg %p123
        %p458 = scmp.lt.s32.totalorder %s27, 1
        %s459 = scalar_select %p458, %s27, 1
        %s460 = scalar_lea.vmem %s4, %s459
        %p461 = pneg %p152
        %p462 = pneg %p149
        %p463 = pneg %p173
        %p464 = pneg %p170
        %p465 = pneg %p194
        %p466 = pneg %p191
        %p467 = pneg %p215
        %p468 = pneg %p212
        %p469 = pneg %p236
        %p470 = pneg %p233
        %p471 = pneg %p257
        %p472 = pneg %p254
        %p473 = pneg %p278
        %p474 = pneg %p275
        %p475 = pneg %p299
        %p476 = pneg %p296
        %p477 = pneg %p320
        %p478 = pneg %p317
        %p479 = pneg %p346
        %p480 = pneg %p343
        %s481 = sand.u32 %s333, 1
        %s482 = scalar_lea.sflag [#allocation4], %s481
        %s483 = sand.u32 %s333, 1
        %s484 = smul.addr %s483, 8
        %s485 = scalar_lea.vmem [#allocation3], %s484
        %p486 = scmp.lt.s32.totalorder %s27, 1
        %s487 = scalar_select %p486, %s27, 1
        %s488 = smul.addr %s487, 8
        %s489 = scalar_lea.vmem %s0, %s488
        %p490 = scmp.lt.s32.totalorder %s27, 1
        %s491 = scalar_select %p490, %s27, 1
        %s492 = smul.addr %s491, 8
        %s493 = scalar_lea.vmem %s1, %s492
        %p494 = scmp.lt.s32.totalorder %s27, 1
        %s495 = scalar_select %p494, %s27, 1
        %s496 = smul.addr %s495, 2
        %s497 = smul.addr %s496, 8
        %s498 = scalar_lea.vmem %s2, %s497
        %p499 = scmp.lt.s32.totalorder %s27, 1
        %s500 = scalar_select %p499, %s27, 1
        %s501 = smul.addr %s500, 2
        %s502 = smul.addr %s501, 8
        %s503 = scalar_lea.vmem %s3, %s502
        %p504 = scmp.lt.s32.totalorder %s27, 1
        %s505 = scalar_select %p504, %s27, 1
        %s506 = scalar_lea.vmem %s4, %s505
        %v508 = vld [vmem:[%s489] sm:$0xff]
        %v509 = vld [vmem:[%s498] sm:$0xff]
        %v510 = vld [vmem:[%s498 + $0x8] sm:$0xff]
        %v511 = vld [vmem:[%s493] sm:$0xff]
        %v512 = vadd.f32 %v508, %v511
        %v513 = vld [vmem:[%s503] sm:$0xff]
        %v514 = vld [vmem:[%s503 + $0x8] sm:$0xff]
        %v515 = vadd.f32 %v509, %v513
        %v516 = vadd.f32 %v510, %v514
        %v517 = vld [vmem:[%s506] sm:$0x1]
        %v518 = vld [vmem:[%s12] sm:$0x1]
        %v519 = vld [vmem:[%s12 + $0x1] sm:$0x1]
        %v520 = vld [vmem:[%s12 + $0x2] sm:$0x1]
        %v521 = vld [vmem:[%s12 + $0x3] sm:$0x1]
        %v522 = vld [vmem:[%s12 + $0x4] sm:$0x1]
        %v523 = vld [vmem:[%s12 + $0x5] sm:$0x1]
        %v524 = vld [vmem:[%s12 + $0x6] sm:$0x1]
        %v525 = vld [vmem:[%s12 + $0x7] sm:$0x1]
        %v526 = vld [vmem:[%s12 + $0x8] sm:$0x1]
        %v527 = vpack.c.bf16 %v512, %v512
        %v528 = vld [vmem:[%s5] sm:$0xf]
        %v529 = vld [vmem:[%s5 + $0x4] sm:$0xf]
        %v530 = vld [vmem:[%s5 + $0x8] sm:$0xf]
        %v531 = vld [vmem:[%s5 + $0xc] sm:$0xf]
        %v532 = vlaneseq
        %v533 = vshrl.u32 %v532, 7
        %v534 = vsub.s32 0, %v533
        %v535 = vrot.slane %v518, %v534
        %v540 = vunpack.c.l.b16 %v528
        %v541 = vunpack.c.l.b16 %v529
        %v542 = vunpack.c.l.b16 %v530
        %v543 = vunpack.c.l.b16 %v531
        %v544 = vpack.c.b16 %v541, %v540
        %v545 = vpack.c.b16 %v543, %v542
        %vm548 = vcmask 261120
        %v550 = vsel %vm548, %v527, 0
        %552 = vmatprep.subr.bf16.mxu0 0
        %553 = vmatpush1.bf16.msra.mxu0 %v544
        %554 = vmatprep.subr.bf16.mxu0 0
        %555 = vmatpush1.bf16.msra.mxu0 %v545
        %556 = vmatprep.subr.bf16.mxu0 0
        %557 = vmatpush1.bf16.msra.mxu0 0
        %558 = vmatprep.subr.bf16.mxu0 0
        %559 = vmatpush1.bf16.msra.mxu0 0
        %560 = vmatprep.subr.bf16.mxu0 0
        %561 = vmatpush1.bf16.msra.mxu0 0
        %562 = vmatprep.subr.bf16.mxu0 0
        %563 = vmatpush1.bf16.msra.mxu0 0
        %564 = vmatprep.subr.bf16.mxu0 0
        %565 = vmatpush1.bf16.msra.mxu0 0
        %566 = vmatprep.subr.bf16.mxu0 0
        %567 = vmatpush1.bf16.msra.mxu0 0
        %568 = vmatprep.subr.bf16.mxu0 0
        %569 = vmatpush1.bf16.msra.mxu0 0
        %570 = vmatprep.subr.bf16.mxu0 0
        %571 = vmatpush1.bf16.msra.mxu0 0
        %572 = vmatprep.subr.bf16.mxu0 0
        %573 = vmatpush1.bf16.msra.mxu0 0
        %574 = vmatprep.subr.bf16.mxu0 0
        %575 = vmatpush1.bf16.msra.mxu0 0
        %576 = vmatprep.subr.bf16.mxu0 0
        %577 = vmatpush1.bf16.msra.mxu0 0
        %578 = vmatprep.subr.bf16.mxu0 0
        %579 = vmatpush1.bf16.msra.mxu0 0
        %580 = vmatprep.subr.bf16.mxu0 0
        %581 = vmatpush1.bf16.msra.mxu0 0
        %582 = vmatprep.subr.bf16.mxu0 0
        %583 = vmatpush1.bf16.msra.mxu0 0
        %584 = vmatprep.mubr.bf16.mxu0 0
        %585 = vmatmul.mubr.bf16.gmra.mrb[0].mxu0 %v550
        %v586 = vpop.f32.mrb[0].mxu0
        %v587 = vadd.f32 %v535, %v586
        %v588 = vpop.f32.mrb[0].mxu0
        %v589 = vpop.f32.mrb[0].mxu0
        %v590 = vpop.f32.mrb[0].mxu0
        %591 = vdwg.mxu0
        %v592 = vpack.c.bf16 %v516, %v515
        %v593 = vld [vmem:[%s6] sm:$0xf]
        %v594 = vld [vmem:[%s6 + $0x4] sm:$0xf]
        %v595 = vld [vmem:[%s6 + $0x8] sm:$0xf]
        %v596 = vld [vmem:[%s6 + $0xc] sm:$0xf]
        %v597 = vlaneseq
        %v598 = vshrl.u32 %v597, 7
        %v599 = vsub.s32 0, %v598
        %v600 = vrot.slane %v519, %v599
        %v605 = vunpack.c.l.b16 %v593
        %v606 = vunpack.c.l.b16 %v594
        %v607 = vunpack.c.l.b16 %v595
        %v608 = vunpack.c.l.b16 %v596
        %v609 = vpack.c.b16 %v606, %v605
        %v610 = vpack.c.b16 %v608, %v607
        %v614 = vsel %vm548, %v592, 0
        %616 = vmatprep.subr.bf16.mxu0 0
        %617 = vmatpush1.bf16.msra.mxu0 %v609
        %618 = vmatprep.subr.bf16.mxu0 0
        %619 = vmatpush1.bf16.msra.mxu0 %v610
        %620 = vmatprep.subr.bf16.mxu0 0
        %621 = vmatpush1.bf16.msra.mxu0 0
        %622 = vmatprep.subr.bf16.mxu0 0
        %623 = vmatpush1.bf16.msra.mxu0 0
        %624 = vmatprep.subr.bf16.mxu0 0
        %625 = vmatpush1.bf16.msra.mxu0 0
        %626 = vmatprep.subr.bf16.mxu0 0
        %627 = vmatpush1.bf16.msra.mxu0 0
        %628 = vmatprep.subr.bf16.mxu0 0
        %629 = vmatpush1.bf16.msra.mxu0 0
        %630 = vmatprep.subr.bf16.mxu0 0
        %631 = vmatpush1.bf16.msra.mxu0 0
        %632 = vmatprep.subr.bf16.mxu0 0
        %633 = vmatpush1.bf16.msra.mxu0 0
        %634 = vmatprep.subr.bf16.mxu0 0
        %635 = vmatpush1.bf16.msra.mxu0 0
        %636 = vmatprep.subr.bf16.mxu0 0
        %637 = vmatpush1.bf16.msra.mxu0 0
        %638 = vmatprep.subr.bf16.mxu0 0
        %639 = vmatpush1.bf16.msra.mxu0 0
        %640 = vmatprep.subr.bf16.mxu0 0
        %641 = vmatpush1.bf16.msra.mxu0 0
        %642 = vmatprep.subr.bf16.mxu0 0
        %643 = vmatpush1.bf16.msra.mxu0 0
        %644 = vmatprep.subr.bf16.mxu0 0
        %645 = vmatpush1.bf16.msra.mxu0 0
        %646 = vmatprep.subr.bf16.mxu0 0
        %647 = vmatpush1.bf16.msra.mxu0 0
        %648 = vmatprep.mubr.bf16.mxu0 0
        %649 = vmatmul.mubr.bf16.gmra.mrb[0].mxu0 %v614
        %v650 = vpop.f32.mrb[0].mxu0
        %v651 = vadd.f32 %v600, %v650
        %v652 = vpop.f32.mrb[0].mxu0
        %v653 = vpop.f32.mrb[0].mxu0
        %v654 = vadd.f32 %v600, %v653
        %v655 = vpop.f32.mrb[0].mxu0
        %656 = vdwg.mxu0
        %v657 = vpack.c.bf16 %v510, %v509
        %v658 = vld [vmem:[%s7] sm:$0xf]
        %v659 = vld [vmem:[%s7 + $0x4] sm:$0xf]
        %v660 = vld [vmem:[%s7 + $0x8] sm:$0xf]
        %v661 = vld [vmem:[%s7 + $0xc] sm:$0xf]
        %v662 = vlaneseq
        %v663 = vshrl.u32 %v662, 7
        %v664 = vsub.s32 0, %v663
        %v665 = vrot.slane %v520, %v664
        %v670 = vunpack.c.l.b16 %v658
        %v671 = vunpack.c.l.b16 %v659
        %v672 = vunpack.c.l.b16 %v660
        %v673 = vunpack.c.l.b16 %v661
        %v674 = vpack.c.b16 %v671, %v670
        %v675 = vpack.c.b16 %v673, %v672
        %v679 = vsel %vm548, %v657, 0
        %681 = vmatprep.subr.bf16.mxu0 0
        %682 = vmatpush1.bf16.msra.mxu0 %v674
        %683 = vmatprep.subr.bf16.mxu0 0
        %684 = vmatpush1.bf16.msra.mxu0 %v675
        %685 = vmatprep.subr.bf16.mxu0 0
        %686 = vmatpush1.bf16.msra.mxu0 0
        %687 = vmatprep.subr.bf16.mxu0 0
        %688 = vmatpush1.bf16.msra.mxu0 0
        %689 = vmatprep.subr.bf16.mxu0 0
        %690 = vmatpush1.bf16.msra.mxu0 0
        %691 = vmatprep.subr.bf16.mxu0 0
        %692 = vmatpush1.bf16.msra.mxu0 0
        %693 = vmatprep.subr.bf16.mxu0 0
        %694 = vmatpush1.bf16.msra.mxu0 0
        %695 = vmatprep.subr.bf16.mxu0 0
        %696 = vmatpush1.bf16.msra.mxu0 0
        %697 = vmatprep.subr.bf16.mxu0 0
        %698 = vmatpush1.bf16.msra.mxu0 0
        %699 = vmatprep.subr.bf16.mxu0 0
        %700 = vmatpush1.bf16.msra.mxu0 0
        %701 = vmatprep.subr.bf16.mxu0 0
        %702 = vmatpush1.bf16.msra.mxu0 0
        %703 = vmatprep.subr.bf16.mxu0 0
        %704 = vmatpush1.bf16.msra.mxu0 0
        %705 = vmatprep.subr.bf16.mxu0 0
        %706 = vmatpush1.bf16.msra.mxu0 0
        %707 = vmatprep.subr.bf16.mxu0 0
        %708 = vmatpush1.bf16.msra.mxu0 0
        %709 = vmatprep.subr.bf16.mxu0 0
        %710 = vmatpush1.bf16.msra.mxu0 0
        %711 = vmatprep.subr.bf16.mxu0 0
        %712 = vmatpush1.bf16.msra.mxu0 0
        %713 = vmatprep.mubr.bf16.mxu0 0
        %714 = vmatmul.mubr.bf16.gmra.mrb[0].mxu0 %v679
        %v715 = vpop.f32.mrb[0].mxu0
        %v716 = vadd.f32 %v665, %v715
        %v717 = vpop.f32.mrb[0].mxu0
        %v718 = vpop.f32.mrb[0].mxu0
        %v719 = vadd.f32 %v665, %v718
        %v720 = vpop.f32.mrb[0].mxu0
        %721 = vdwg.mxu0
        %722 = vxpose.xlu0.b32.start [1/16] %v651, 128
        %723 = vxpose.xlu0.b32.cont [2/16] %v654, 128
        %724 = vxpose.xlu0.b32.cont [3/16] 0.0, 128
        %725 = vxpose.xlu0.b32.cont [4/16] 0.0, 128
        %726 = vxpose.xlu0.b32.cont [5/16] 0.0, 128
        %727 = vxpose.xlu0.b32.cont [6/16] 0.0, 128
        %728 = vxpose.xlu0.b32.cont [7/16] 0.0, 128
        %729 = vxpose.xlu0.b32.cont [8/16] 0.0, 128
        %730 = vxpose.xlu0.b32.cont [9/16] 0.0, 128
        %731 = vxpose.xlu0.b32.cont [10/16] 0.0, 128
        %732 = vxpose.xlu0.b32.cont [11/16] 0.0, 128
        %733 = vxpose.xlu0.b32.cont [12/16] 0.0, 128
        %734 = vxpose.xlu0.b32.cont [13/16] 0.0, 128
        %735 = vxpose.xlu0.b32.cont [14/16] 0.0, 128
        %736 = vxpose.xlu0.b32.cont [15/16] 0.0, 128
        %737 = vxpose.xlu0.b32.end [16/16] 0.0, 128
        %v738 = vpop.trf.xlu0
        %v739 = vpop.trf.xlu0
        %v740 = vpop.trf.xlu0
        %v741 = vpop.trf.xlu0
        %v742 = vpop.trf.xlu0
        %v743 = vpop.trf.xlu0
        %v744 = vpop.trf.xlu0
        %v745 = vpop.trf.xlu0
        %v746 = vpop.trf.xlu0
        %v747 = vpop.trf.xlu0
        %v748 = vpop.trf.xlu0
        %v749 = vpop.trf.xlu0
        %v750 = vpop.trf.xlu0
        %v751 = vpop.trf.xlu0
        %v752 = vpop.trf.xlu0
        %v753 = vpop.trf.xlu0
        %v754 = vpack.c.bf16 %v587, %v587
        %v755 = vpack.c.bf16 %v738, %v738
        %v756 = vpack.c.bf16 %v719, %v716
        %v758 = vlaneseq
        %v759 = vshrl.u32 %v758, 7
        %v760 = vsub.s32 0, %v759
        %v761 = vrot.slane %v517, %v760
        %vm763 = vcmask 64512
        %v765 = vsel %vm763, %v754, 0
        %vm767 = vcmask 1043456
        %v769 = vsel %vm767, %v755, 0
        %771 = vmatprep.subr.bf16.mxu0 0
        %772 = vmatpush1.bf16.msra.mxu0 %v769
        %773 = vmatprep.subr.bf16.mxu0 0
        %774 = vmatpush1.bf16.msra.mxu0 0
        %775 = vmatprep.subr.bf16.mxu0 0
        %776 = vmatpush1.bf16.msra.mxu0 0
        %777 = vmatprep.subr.bf16.mxu0 0
        %778 = vmatpush1.bf16.msra.mxu0 0
        %779 = vmatprep.subr.bf16.mxu0 0
        %780 = vmatpush1.bf16.msra.mxu0 0
        %781 = vmatprep.subr.bf16.mxu0 0
        %782 = vmatpush1.bf16.msra.mxu0 0
        %783 = vmatprep.subr.bf16.mxu0 0
        %784 = vmatpush1.bf16.msra.mxu0 0
        %785 = vmatprep.subr.bf16.mxu0 0
        %786 = vmatpush1.bf16.msra.mxu0 0
        %787 = vmatprep.subr.bf16.mxu0 0
        %788 = vmatpush1.bf16.msra.mxu0 0
        %789 = vmatprep.subr.bf16.mxu0 0
        %790 = vmatpush1.bf16.msra.mxu0 0
        %791 = vmatprep.subr.bf16.mxu0 0
        %792 = vmatpush1.bf16.msra.mxu0 0
        %793 = vmatprep.subr.bf16.mxu0 0
        %794 = vmatpush1.bf16.msra.mxu0 0
        %795 = vmatprep.subr.bf16.mxu0 0
        %796 = vmatpush1.bf16.msra.mxu0 0
        %797 = vmatprep.subr.bf16.mxu0 0
        %798 = vmatpush1.bf16.msra.mxu0 0
        %799 = vmatprep.subr.bf16.mxu0 0
        %800 = vmatpush1.bf16.msra.mxu0 0
        %801 = vmatprep.subr.bf16.mxu0 0
        %802 = vmatpush1.bf16.msra.mxu0 0
        %803 = vmatprep.mubr.bf16.mxu0 0
        %804 = vmatmul.mubr.bf16.gmra.mrb[0].mxu0 %v765
        %v805 = vpop.f32.mrb[0].mxu0
        %v806 = vadd.f32 %v761, %v805
        %v807 = vpop.f32.mrb[0].mxu0
        %v808 = vpop.f32.mrb[0].mxu0
        %v809 = vpop.f32.mrb[0].mxu0
        %810 = vdwg.mxu0
        %vm811 = vcmask 130048
        %v812 = vsel %vm811, %v806, -inf
        %813 = vmax.xlane.f32.xlu0 %v812
        %v814 = vpop.xlane.xlu0 %813
        %v815 = vsub.f32 %v806, %v814
        %v816 = vmul.f32 %v815, 1.442695
        %v817 = vpow.pop %v816
        %v818 = vsel %vm811, %v817, 0.0
        %819 = vadd.xlane.f32.xlu0 %v818
        %v820 = vpop.xlane.xlu0 %819
        %v821 = vrcp.pop %v820
        %v822 = vmul.f32 %v817, %v821
        %v823 = vpack.c.bf16 %v822, %v822
        %v825 = vsel %vm811, %v823, 0
        %827 = vmatprep.subr.bf16.mxu0 0
        %828 = vmatpush1.bf16.msra.mxu0 %v756
        %829 = vmatprep.subr.bf16.mxu0 0
        %830 = vmatpush1.bf16.msra.mxu0 0
        %831 = vmatprep.subr.bf16.mxu0 0
        %832 = vmatpush1.bf16.msra.mxu0 0
        %833 = vmatprep.subr.bf16.mxu0 0
        %834 = vmatpush1.bf16.msra.mxu0 0
        %835 = vmatprep.subr.bf16.mxu0 0
        %836 = vmatpush1.bf16.msra.mxu0 0
        %837 = vmatprep.subr.bf16.mxu0 0
        %838 = vmatpush1.bf16.msra.mxu0 0
        %839 = vmatprep.subr.bf16.mxu0 0
        %840 = vmatpush1.bf16.msra.mxu0 0
        %841 = vmatprep.subr.bf16.mxu0 0
        %842 = vmatpush1.bf16.msra.mxu0 0
        %843 = vmatprep.subr.bf16.mxu0 0
        %844 = vmatpush1.bf16.msra.mxu0 0
        %845 = vmatprep.subr.bf16.mxu0 0
        %846 = vmatpush1.bf16.msra.mxu0 0
        %847 = vmatprep.subr.bf16.mxu0 0
        %848 = vmatpush1.bf16.msra.mxu0 0
        %849 = vmatprep.subr.bf16.mxu0 0
        %850 = vmatpush1.bf16.msra.mxu0 0
        %851 = vmatprep.subr.bf16.mxu0 0
        %852 = vmatpush1.bf16.msra.mxu0 0
        %853 = vmatprep.subr.bf16.mxu0 0
        %854 = vmatpush1.bf16.msra.mxu0 0
        %855 = vmatprep.subr.bf16.mxu0 0
        %856 = vmatpush1.bf16.msra.mxu0 0
        %857 = vmatprep.subr.bf16.mxu0 0
        %858 = vmatpush1.bf16.msra.mxu0 0
        %859 = vmatprep.mubr.bf16.mxu0 0
        %860 = vmatmul.mubr.bf16.gmra.mrb[0].mxu0 %v825
        %v861 = vpop.f32.mrb[0].mxu0
        %v862 = vadd.f32 0.0, %v861
        %v863 = vpop.f32.mrb[0].mxu0
        %v864 = vpop.f32.mrb[0].mxu0
        %v865 = vpop.f32.mrb[0].mxu0
        %866 = vdwg.mxu0
        %867 = vst.msk [vmem:[#allocation2] sm:$0xff] %vm763, %v862
        %v868 = vpack.c.bf16 %v739, %v739
        %870 = vrot.lane.b32.xlu0 %v754, 120
        %v871 = vpop.permute.xlu0 %870
        %v873 = vsel %vm763, %v871, 0
        %v876 = vsel %vm767, %v868, 0
        %878 = vmatprep.subr.bf16.mxu0 0
        %879 = vmatpush1.bf16.msra.mxu0 %v876
        %880 = vmatprep.subr.bf16.mxu0 0
        %881 = vmatpush1.bf16.msra.mxu0 0
        %882 = vmatprep.subr.bf16.mxu0 0
        %883 = vmatpush1.bf16.msra.mxu0 0
        %884 = vmatprep.subr.bf16.mxu0 0
        %885 = vmatpush1.bf16.msra.mxu0 0
        %886 = vmatprep.subr.bf16.mxu0 0
        %887 = vmatpush1.bf16.msra.mxu0 0
        %888 = vmatprep.subr.bf16.mxu0 0
        %889 = vmatpush1.bf16.msra.mxu0 0
        %890 = vmatprep.subr.bf16.mxu0 0
        %891 = vmatpush1.bf16.msra.mxu0 0
        %892 = vmatprep.subr.bf16.mxu0 0
        %893 = vmatpush1.bf16.msra.mxu0 0
        %894 = vmatprep.subr.bf16.mxu0 0
        %895 = vmatpush1.bf16.msra.mxu0 0
        %896 = vmatprep.subr.bf16.mxu0 0
        %897 = vmatpush1.bf16.msra.mxu0 0
        %898 = vmatprep.subr.bf16.mxu0 0
        %899 = vmatpush1.bf16.msra.mxu0 0
        %900 = vmatprep.subr.bf16.mxu0 0
        %901 = vmatpush1.bf16.msra.mxu0 0
        %902 = vmatprep.subr.bf16.mxu0 0
        %903 = vmatpush1.bf16.msra.mxu0 0
        %904 = vmatprep.subr.bf16.mxu0 0
        %905 = vmatpush1.bf16.msra.mxu0 0
        %906 = vmatprep.subr.bf16.mxu0 0
        %907 = vmatpush1.bf16.msra.mxu0 0
        %908 = vmatprep.subr.bf16.mxu0 0
        %909 = vmatpush1.bf16.msra.mxu0 0
        %910 = vmatprep.mubr.bf16.mxu0 0
        %911 = vmatmul.mubr.bf16.gmra.mrb[0].mxu0 %v873
        %v912 = vpop.f32.mrb[0].mxu0
        %v913 = vadd.f32 %v761, %v912
        %v914 = vpop.f32.mrb[0].mxu0
        %v915 = vpop.f32.mrb[0].mxu0
        %v916 = vpop.f32.mrb[0].mxu0
        %917 = vdwg.mxu0
        %v918 = vsel %vm811, %v913, -inf
        %919 = vmax.xlane.f32.xlu0 %v918
        %v920 = vpop.xlane.xlu0 %919
        %v921 = vsub.f32 %v913, %v920
        %v922 = vmul.f32 %v921, 1.442695
        %v923 = vpow.pop %v922
        %v924 = vsel %vm811, %v923, 0.0
        %925 = vadd.xlane.f32.xlu0 %v924
        %v926 = vpop.xlane.xlu0 %925
        %v927 = vrcp.pop %v926
        %v928 = vmul.f32 %v923, %v927
        %v929 = vpack.c.bf16 %v928, %v928
        %931 = vrot.lane.b32.xlu0 %v756, 120
        %v932 = vpop.permute.xlu0 %931
        %v935 = vsel %vm811, %v929, 0
        %937 = vmatprep.subr.bf16.mxu0 0
        %938 = vmatpush1.bf16.msra.mxu0 %v932
        %939 = vmatprep.subr.bf16.mxu0 0
        %940 = vmatpush1.bf16.msra.mxu0 0
        %941 = vmatprep.subr.bf16.mxu0 0
        %942 = vmatpush1.bf16.msra.mxu0 0
        %943 = vmatprep.subr.bf16.mxu0 0
        %944 = vmatpush1.bf16.msra.mxu0 0
        %945 = vmatprep.subr.bf16.mxu0 0
        %946 = vmatpush1.bf16.msra.mxu0 0
        %947 = vmatprep.subr.bf16.mxu0 0
        %948 = vmatpush1.bf16.msra.mxu0 0
        %949 = vmatprep.subr.bf16.mxu0 0
        %950 = vmatpush1.bf16.msra.mxu0 0
        %951 = vmatprep.subr.bf16.mxu0 0
        %952 = vmatpush1.bf16.msra.mxu0 0
        %953 = vmatprep.subr.bf16.mxu0 0
        %954 = vmatpush1.bf16.msra.mxu0 0
        %955 = vmatprep.subr.bf16.mxu0 0
        %956 = vmatpush1.bf16.msra.mxu0 0
        %957 = vmatprep.subr.bf16.mxu0 0
        %958 = vmatpush1.bf16.msra.mxu0 0
        %959 = vmatprep.subr.bf16.mxu0 0
        %960 = vmatpush1.bf16.msra.mxu0 0
        %961 = vmatprep.subr.bf16.mxu0 0
        %962 = vmatpush1.bf16.msra.mxu0 0
        %963 = vmatprep.subr.bf16.mxu0 0
        %964 = vmatpush1.bf16.msra.mxu0 0
        %965 = vmatprep.subr.bf16.mxu0 0
        %966 = vmatpush1.bf16.msra.mxu0 0
        %967 = vmatprep.subr.bf16.mxu0 0
        %968 = vmatpush1.bf16.msra.mxu0 0
        %969 = vmatprep.mubr.bf16.mxu0 0
        %970 = vmatmul.mubr.bf16.gmra.mrb[0].mxu0 %v935
        %v971 = vpop.f32.mrb[0].mxu0
        %v972 = vadd.f32 0.0, %v971
        %v973 = vpop.f32.mrb[0].mxu0
        %v974 = vpop.f32.mrb[0].mxu0
        %v975 = vpop.f32.mrb[0].mxu0
        %976 = vdwg.mxu0
        %978 = vrot.lane.b32.xlu0 %v972, 8
        %v979 = vpop.permute.xlu0 %978
        %vm981 = vcmask 130112
        %982 = vst.msk [vmem:[#allocation2] sm:$0xff] %vm981, %v979
        %v983 = vpack.c.bf16 %v740, %v740
        %984 = vrot.lane.b32.xlu0 %v754, 112
        %v985 = vpop.permute.xlu0 %984
        %v987 = vsel %vm763, %v985, 0
        %v990 = vsel %vm767, %v983, 0
        %992 = vmatprep.subr.bf16.mxu0 0
        %993 = vmatpush1.bf16.msra.mxu0 %v990
        %994 = vmatprep.subr.bf16.mxu0 0
        %995 = vmatpush1.bf16.msra.mxu0 0
        %996 = vmatprep.subr.bf16.mxu0 0
        %997 = vmatpush1.bf16.msra.mxu0 0
        %998 = vmatprep.subr.bf16.mxu0 0
        %999 = vmatpush1.bf16.msra.mxu0 0
        %1000 = vmatprep.subr.bf16.mxu0 0
        %1001 = vmatpush1.bf16.msra.mxu0 0
        %1002 = vmatprep.subr.bf16.mxu0 0
        %1003 = vmatpush1.bf16.msra.mxu0 0
        %1004 = vmatprep.subr.bf16.mxu0 0
        %1005 = vmatpush1.bf16.msra.mxu0 0
        %1006 = vmatprep.subr.bf16.mxu0 0
        %1007 = vmatpush1.bf16.msra.mxu0 0
        %1008 = vmatprep.subr.bf16.mxu0 0
        %1009 = vmatpush1.bf16.msra.mxu0 0
        %1010 = vmatprep.subr.bf16.mxu0 0
        %1011 = vmatpush1.bf16.msra.mxu0 0
        %1012 = vmatprep.subr.bf16.mxu0 0
        %1013 = vmatpush1.bf16.msra.mxu0 0
        %1014 = vmatprep.subr.bf16.mxu0 0
        %1015 = vmatpush1.bf16.msra.mxu0 0
        %1016 = vmatprep.subr.bf16.mxu0 0
        %1017 = vmatpush1.bf16.msra.mxu0 0
        %1018 = vmatprep.subr.bf16.mxu0 0
        %1019 = vmatpush1.bf16.msra.mxu0 0
        %1020 = vmatprep.subr.bf16.mxu0 0
        %1021 = vmatpush1.bf16.msra.mxu0 0
        %1022 = vmatprep.subr.bf16.mxu0 0
        %1023 = vmatpush1.bf16.msra.mxu0 0
        %1024 = vmatprep.mubr.bf16.mxu0 0
        %1025 = vmatmul.mubr.bf16.gmra.mrb[0].mxu0 %v987
        %v1026 = vpop.f32.mrb[0].mxu0
        %v1027 = vadd.f32 %v761, %v1026
        %v1028 = vpop.f32.mrb[0].mxu0
        %v1029 = vpop.f32.mrb[0].mxu0
        %v1030 = vpop.f32.mrb[0].mxu0
        %1031 = vdwg.mxu0
        %v1032 = vsel %vm811, %v1027, -inf
        %1033 = vmax.xlane.f32.xlu0 %v1032
        %v1034 = vpop.xlane.xlu0 %1033
        %v1035 = vsub.f32 %v1027, %v1034
        %v1036 = vmul.f32 %v1035, 1.442695
        %v1037 = vpow.pop %v1036
        %v1038 = vsel %vm811, %v1037, 0.0
        %1039 = vadd.xlane.f32.xlu0 %v1038
        %v1040 = vpop.xlane.xlu0 %1039
        %v1041 = vrcp.pop %v1040
        %v1042 = vmul.f32 %v1037, %v1041
        %v1043 = vpack.c.bf16 %v1042, %v1042
        %1044 = vrot.lane.b32.xlu0 %v756, 112
        %v1045 = vpop.permute.xlu0 %1044
        %v1048 = vsel %vm811, %v1043, 0
        %1050 = vmatprep.subr.bf16.mxu0 0
        %1051 = vmatpush1.bf16.msra.mxu0 %v1045
        %1052 = vmatprep.subr.bf16.mxu0 0
        %1053 = vmatpush1.bf16.msra.mxu0 0
        %1054 = vmatprep.subr.bf16.mxu0 0
        %1055 = vmatpush1.bf16.msra.mxu0 0
        %1056 = vmatprep.subr.bf16.mxu0 0
        %1057 = vmatpush1.bf16.msra.mxu0 0
        %1058 = vmatprep.subr.bf16.mxu0 0
        %1059 = vmatpush1.bf16.msra.mxu0 0
        %1060 = vmatprep.subr.bf16.mxu0 0
        %1061 = vmatpush1.bf16.msra.mxu0 0
        %1062 = vmatprep.subr.bf16.mxu0 0
        %1063 = vmatpush1.bf16.msra.mxu0 0
        %1064 = vmatprep.subr.bf16.mxu0 0
        %1065 = vmatpush1.bf16.msra.mxu0 0
        %1066 = vmatprep.subr.bf16.mxu0 0
        %1067 = vmatpush1.bf16.msra.mxu0 0
        %1068 = vmatprep.subr.bf16.mxu0 0
        %1069 = vmatpush1.bf16.msra.mxu0 0
        %1070 = vmatprep.subr.bf16.mxu0 0
        %1071 = vmatpush1.bf16.msra.mxu0 0
        %1072 = vmatprep.subr.bf16.mxu0 0
        %1073 = vmatpush1.bf16.msra.mxu0 0
        %1074 = vmatprep.subr.bf16.mxu0 0
        %1075 = vmatpush1.bf16.msra.mxu0 0
        %1076 = vmatprep.subr.bf16.mxu0 0
        %1077 = vmatpush1.bf16.msra.mxu0 0
        %1078 = vmatprep.subr.bf16.mxu0 0
        %1079 = vmatpush1.bf16.msra.mxu0 0
        %1080 = vmatprep.subr.bf16.mxu0 0
        %1081 = vmatpush1.bf16.msra.mxu0 0
        %1082 = vmatprep.mubr.bf16.mxu0 0
        %1083 = vmatmul.mubr.bf16.gmra.mrb[0].mxu0 %v1048
        %v1084 = vpop.f32.mrb[0].mxu0
        %v1085 = vadd.f32 0.0, %v1084
        %v1086 = vpop.f32.mrb[0].mxu0
        %v1087 = vpop.f32.mrb[0].mxu0
        %v1088 = vpop.f32.mrb[0].mxu0
        %1089 = vdwg.mxu0
        %1091 = vrot.lane.b32.xlu0 %v1085, 16
        %v1092 = vpop.permute.xlu0 %1091
        %vm1094 = vcmask 195712
        %1095 = vst.msk [vmem:[#allocation2] sm:$0xff] %vm1094, %v1092
        %v1096 = vpack.c.bf16 %v741, %v741
        %1097 = vrot.lane.b32.xlu0 %v754, 104
        %v1098 = vpop.permute.xlu0 %1097
        %v1100 = vsel %vm763, %v1098, 0
        %v1103 = vsel %vm767, %v1096, 0
        %1105 = vmatprep.subr.bf16.mxu0 0
        %1106 = vmatpush1.bf16.msra.mxu0 %v1103
        %1107 = vmatprep.subr.bf16.mxu0 0
        %1108 = vmatpush1.bf16.msra.mxu0 0
        %1109 = vmatprep.subr.bf16.mxu0 0
        %1110 = vmatpush1.bf16.msra.mxu0 0
        %1111 = vmatprep.subr.bf16.mxu0 0
        %1112 = vmatpush1.bf16.msra.mxu0 0
        %1113 = vmatprep.subr.bf16.mxu0 0
        %1114 = vmatpush1.bf16.msra.mxu0 0
        %1115 = vmatprep.subr.bf16.mxu0 0
        %1116 = vmatpush1.bf16.msra.mxu0 0
        %1117 = vmatprep.subr.bf16.mxu0 0
        %1118 = vmatpush1.bf16.msra.mxu0 0
        %1119 = vmatprep.subr.bf16.mxu0 0
        %1120 = vmatpush1.bf16.msra.mxu0 0
        %1121 = vmatprep.subr.bf16.mxu0 0
        %1122 = vmatpush1.bf16.msra.mxu0 0
        %1123 = vmatprep.subr.bf16.mxu0 0
        %1124 = vmatpush1.bf16.msra.mxu0 0
        %1125 = vmatprep.subr.bf16.mxu0 0
        %1126 = vmatpush1.bf16.msra.mxu0 0
        %1127 = vmatprep.subr.bf16.mxu0 0
        %1128 = vmatpush1.bf16.msra.mxu0 0
        %1129 = vmatprep.subr.bf16.mxu0 0
        %1130 = vmatpush1.bf16.msra.mxu0 0
        %1131 = vmatprep.subr.bf16.mxu0 0
        %1132 = vmatpush1.bf16.msra.mxu0 0
        %1133 = vmatprep.subr.bf16.mxu0 0
        %1134 = vmatpush1.bf16.msra.mxu0 0
        %1135 = vmatprep.subr.bf16.mxu0 0
        %1136 = vmatpush1.bf16.msra.mxu0 0
        %1137 = vmatprep.mubr.bf16.mxu0 0
        %1138 = vmatmul.mubr.bf16.gmra.mrb[0].mxu0 %v1100
        %v1139 = vpop.f32.mrb[0].mxu0
        %v1140 = vadd.f32 %v761, %v1139
        %v1141 = vpop.f32.mrb[0].mxu0
        %v1142 = vpop.f32.mrb[0].mxu0
        %v1143 = vpop.f32.mrb[0].mxu0
        %1144 = vdwg.mxu0
        %v1145 = vsel %vm811, %v1140, -inf
        %1146 = vmax.xlane.f32.xlu0 %v1145
        %v1147 = vpop.xlane.xlu0 %1146
        %v1148 = vsub.f32 %v1140, %v1147
        %v1149 = vmul.f32 %v1148, 1.442695
        %v1150 = vpow.pop %v1149
        %v1151 = vsel %vm811, %v1150, 0.0
        %1152 = vadd.xlane.f32.xlu0 %v1151
        %v1153 = vpop.xlane.xlu0 %1152
        %v1154 = vrcp.pop %v1153
        %v1155 = vmul.f32 %v1150, %v1154
        %v1156 = vpack.c.bf16 %v1155, %v1155
        %1157 = vrot.lane.b32.xlu0 %v756, 104
        %v1158 = vpop.permute.xlu0 %1157
        %v1161 = vsel %vm811, %v1156, 0
        %1163 = vmatprep.subr.bf16.mxu0 0
        %1164 = vmatpush1.bf16.msra.mxu0 %v1158
        %1165 = vmatprep.subr.bf16.mxu0 0
        %1166 = vmatpush1.bf16.msra.mxu0 0
        %1167 = vmatprep.subr.bf16.mxu0 0
        %1168 = vmatpush1.bf16.msra.mxu0 0
        %1169 = vmatprep.subr.bf16.mxu0 0
        %1170 = vmatpush1.bf16.msra.mxu0 0
        %1171 = vmatprep.subr.bf16.mxu0 0
        %1172 = vmatpush1.bf16.msra.mxu0 0
        %1173 = vmatprep.subr.bf16.mxu0 0
        %1174 = vmatpush1.bf16.msra.mxu0 0
        %1175 = vmatprep.subr.bf16.mxu0 0
        %1176 = vmatpush1.bf16.msra.mxu0 0
        %1177 = vmatprep.subr.bf16.mxu0 0
        %1178 = vmatpush1.bf16.msra.mxu0 0
        %1179 = vmatprep.subr.bf16.mxu0 0
        %1180 = vmatpush1.bf16.msra.mxu0 0
        %1181 = vmatprep.subr.bf16.mxu0 0
        %1182 = vmatpush1.bf16.msra.mxu0 0
        %1183 = vmatprep.subr.bf16.mxu0 0
        %1184 = vmatpush1.bf16.msra.mxu0 0
        %1185 = vmatprep.subr.bf16.mxu0 0
        %1186 = vmatpush1.bf16.msra.mxu0 0
        %1187 = vmatprep.subr.bf16.mxu0 0
        %1188 = vmatpush1.bf16.msra.mxu0 0
        %1189 = vmatprep.subr.bf16.mxu0 0
        %1190 = vmatpush1.bf16.msra.mxu0 0
        %1191 = vmatprep.subr.bf16.mxu0 0
        %1192 = vmatpush1.bf16.msra.mxu0 0
        %1193 = vmatprep.subr.bf16.mxu0 0
        %1194 = vmatpush1.bf16.msra.mxu0 0
        %1195 = vmatprep.mubr.bf16.mxu0 0
        %1196 = vmatmul.mubr.bf16.gmra.mrb[0].mxu0 %v1161
        %v1197 = vpop.f32.mrb[0].mxu0
        %v1198 = vadd.f32 0.0, %v1197
        %v1199 = vpop.f32.mrb[0].mxu0
        %v1200 = vpop.f32.mrb[0].mxu0
        %v1201 = vpop.f32.mrb[0].mxu0
        %1202 = vdwg.mxu0
        %1204 = vrot.lane.b32.xlu0 %v1198, 24
        %v1205 = vpop.permute.xlu0 %1204
        %vm1207 = vcmask 261312
        %1208 = vst.msk [vmem:[#allocation2] sm:$0xff] %vm1207, %v1205
        %v1209 = vld [vmem:[#allocation2] sm:$0xff]
        %v1210 = vpack.c.bf16 %v1209, %v1209
        %v1211 = vld [vmem:[%s8] sm:$0xf]
        %v1212 = vld [vmem:[%s8 + $0x4] sm:$0xf]
        %v1213 = vld [vmem:[%s8 + $0x8] sm:$0xf]
        %v1214 = vld [vmem:[%s8 + $0xc] sm:$0xf]
        %v1215 = vlaneseq
        %v1216 = vshrl.u32 %v1215, 7
        %v1217 = vsub.s32 0, %v1216
        %v1218 = vrot.slane %v521, %v1217
        %v1223 = vunpack.c.l.b16 %v1211
        %v1224 = vunpack.c.l.b16 %v1212
        %v1225 = vunpack.c.l.b16 %v1213
        %v1226 = vunpack.c.l.b16 %v1214
        %v1227 = vpack.c.b16 %v1224, %v1223
        %v1228 = vpack.c.b16 %v1226, %v1225
        %v1232 = vsel %vm548, %v1210, 0
        %1234 = vmatprep.subr.bf16.mxu0 0
        %1235 = vmatpush1.bf16.msra.mxu0 %v1227
        %1236 = vmatprep.subr.bf16.mxu0 0
        %1237 = vmatpush1.bf16.msra.mxu0 %v1228
        %1238 = vmatprep.subr.bf16.mxu0 0
        %1239 = vmatpush1.bf16.msra.mxu0 0
        %1240 = vmatprep.subr.bf16.mxu0 0
        %1241 = vmatpush1.bf16.msra.mxu0 0
        %1242 = vmatprep.subr.bf16.mxu0 0
        %1243 = vmatpush1.bf16.msra.mxu0 0
        %1244 = vmatprep.subr.bf16.mxu0 0
        %1245 = vmatpush1.bf16.msra.mxu0 0
        %1246 = vmatprep.subr.bf16.mxu0 0
        %1247 = vmatpush1.bf16.msra.mxu0 0
        %1248 = vmatprep.subr.bf16.mxu0 0
        %1249 = vmatpush1.bf16.msra.mxu0 0
        %1250 = vmatprep.subr.bf16.mxu0 0
        %1251 = vmatpush1.bf16.msra.mxu0 0
        %1252 = vmatprep.subr.bf16.mxu0 0
        %1253 = vmatpush1.bf16.msra.mxu0 0
        %1254 = vmatprep.subr.bf16.mxu0 0
        %1255 = vmatpush1.bf16.msra.mxu0 0
        %1256 = vmatprep.subr.bf16.mxu0 0
        %1257 = vmatpush1.bf16.msra.mxu0 0
        %1258 = vmatprep.subr.bf16.mxu0 0
        %1259 = vmatpush1.bf16.msra.mxu0 0
        %1260 = vmatprep.subr.bf16.mxu0 0
        %1261 = vmatpush1.bf16.msra.mxu0 0
        %1262 = vmatprep.subr.bf16.mxu0 0
        %1263 = vmatpush1.bf16.msra.mxu0 0
        %1264 = vmatprep.subr.bf16.mxu0 0
        %1265 = vmatpush1.bf16.msra.mxu0 0
        %1266 = vmatprep.mubr.bf16.mxu0 0
        %1267 = vmatmul.mubr.bf16.gmra.mrb[0].mxu0 %v1232
        %v1268 = vpop.f32.mrb[0].mxu0
        %v1269 = vadd.f32 %v1218, %v1268
        %v1270 = vpop.f32.mrb[0].mxu0
        %v1271 = vpop.f32.mrb[0].mxu0
        %v1272 = vpop.f32.mrb[0].mxu0
        %1273 = vdwg.mxu0
        %v1274 = vadd.f32 %v508, %v1269
        %v1275 = vsel %vm548, %v1274, 0.0
        %1276 = vadd.xlane.f32.xlu0 %v1275
        %v1277 = vpop.xlane.xlu0 %1276
        %v1278 = vrcp.pop 32.0
        %v1279 = vmul.f32 %v1277, %v1278
        %v1280 = vsub.f32 %v1274, %v1279
        %v1281 = vmul.f32 %v1280, %v1280
        %v1282 = vsel %vm548, %v1281, 0.0
        %1283 = vadd.xlane.f32.xlu0 %v1282
        %v1284 = vpop.xlane.xlu0 %1283
        %v1285 = vmul.f32 %v1284, %v1278
        %v1286 = vadd.f32 %v1285, 1e-05
        %v1287 = vrsqrt.pop %v1286
        %v1288 = vmul.f32 %v1280, %v1287
        %v1289 = vlaneseq
        %v1290 = vshrl.u32 %v1289, 7
        %v1291 = vsub.s32 0, %v1290
        %v1292 = vrot.slane %v522, %v1291
        %v1293 = vmul.f32 %v1288, %v1292
        %v1294 = vlaneseq
        %v1295 = vshrl.u32 %v1294, 7
        %v1296 = vsub.s32 0, %v1295
        %v1297 = vrot.slane %v523, %v1296
        %v1298 = vadd.f32 %v1293, %v1297
        %v1299 = vpack.c.bf16 %v1298, %v1298
        %v1300 = vld [vmem:[%s9] sm:$0xff]
        %v1301 = vld [vmem:[%s9 + $0x8] sm:$0xff]
        %v1302 = vld [vmem:[%s9 + $0x10] sm:$0xff]
        %v1303 = vld [vmem:[%s9 + $0x18] sm:$0xff]
        %v1304 = vld [vmem:[%s9 + $0x20] sm:$0xff]
        %v1305 = vld [vmem:[%s9 + $0x28] sm:$0xff]
        %v1306 = vld [vmem:[%s9 + $0x30] sm:$0xff]
        %v1307 = vld [vmem:[%s9 + $0x38] sm:$0xff]
        %v1308 = vld [vmem:[%s9 + $0x40] sm:$0xff]
        %v1309 = vld [vmem:[%s9 + $0x48] sm:$0xff]
        %v1310 = vld [vmem:[%s9 + $0x50] sm:$0xff]
        %v1311 = vld [vmem:[%s9 + $0x58] sm:$0xff]
        %v1312 = vld [vmem:[%s9 + $0x60] sm:$0xff]
        %v1313 = vld [vmem:[%s9 + $0x68] sm:$0xff]
        %v1314 = vld [vmem:[%s9 + $0x70] sm:$0xff]
        %v1315 = vld [vmem:[%s9 + $0x78] sm:$0xff]
        %v1316 = vld [vmem:[%s11] sm:$0xff]
        %v1318 = vlaneseq
        %v1319 = vshrl.u32 %v1318, 7
        %v1320 = vsub.s32 0, %v1319
        %v1321 = vrot.slane %v1316, %v1320
        %v1322 = vlaneseq
        %v1323 = vshrl.u32 %v1322, 7
        %v1324 = vsub.s32 1, %v1323
        %v1325 = vrot.slane %v1316, %v1324
        %v1326 = vlaneseq
        %v1327 = vshrl.u32 %v1326, 7
        %v1328 = vsub.s32 2, %v1327
        %v1329 = vrot.slane %v1316, %v1328
        %v1330 = vlaneseq
        %v1331 = vshrl.u32 %v1330, 7
        %v1332 = vsub.s32 3, %v1331
        %v1333 = vrot.slane %v1316, %v1332
        %v1334 = vlaneseq
        %v1335 = vshrl.u32 %v1334, 7
        %v1336 = vsub.s32 4, %v1335
        %v1337 = vrot.slane %v1316, %v1336
        %v1338 = vlaneseq
        %v1339 = vshrl.u32 %v1338, 7
        %v1340 = vsub.s32 5, %v1339
        %v1341 = vrot.slane %v1316, %v1340
        %v1342 = vlaneseq
        %v1343 = vshrl.u32 %v1342, 7
        %v1344 = vsub.s32 6, %v1343
        %v1345 = vrot.slane %v1316, %v1344
        %v1346 = vlaneseq
        %v1347 = vshrl.u32 %v1346, 7
        %v1348 = vsub.s32 7, %v1347
        %v1349 = vrot.slane %v1316, %v1348
        %v1374 = vunpack.c.l.b16 %v1300
        %v1375 = vunpack.c.h.b16 %v1300
        %v1376 = vunpack.c.l.b16 %v1301
        %v1377 = vunpack.c.h.b16 %v1301
        %v1378 = vunpack.c.l.b16 %v1302
        %v1379 = vunpack.c.h.b16 %v1302
        %v1380 = vunpack.c.l.b16 %v1303
        %v1381 = vunpack.c.h.b16 %v1303
        %v1382 = vunpack.c.l.b16 %v1304
        %v1383 = vunpack.c.h.b16 %v1304
        %v1384 = vunpack.c.l.b16 %v1305
        %v1385 = vunpack.c.h.b16 %v1305
        %v1386 = vunpack.c.l.b16 %v1306
        %v1387 = vunpack.c.h.b16 %v1306
        %v1388 = vunpack.c.l.b16 %v1307
        %v1389 = vunpack.c.h.b16 %v1307
        %v1390 = vunpack.c.l.b16 %v1308
        %v1391 = vunpack.c.h.b16 %v1308
        %v1392 = vunpack.c.l.b16 %v1309
        %v1393 = vunpack.c.h.b16 %v1309
        %v1394 = vunpack.c.l.b16 %v1310
        %v1395 = vunpack.c.h.b16 %v1310
        %v1396 = vunpack.c.l.b16 %v1311
        %v1397 = vunpack.c.h.b16 %v1311
        %v1398 = vunpack.c.l.b16 %v1312
        %v1399 = vunpack.c.h.b16 %v1312
        %v1400 = vunpack.c.l.b16 %v1313
        %v1401 = vunpack.c.h.b16 %v1313
        %v1402 = vunpack.c.l.b16 %v1314
        %v1403 = vunpack.c.h.b16 %v1314
        %v1404 = vunpack.c.l.b16 %v1315
        %v1405 = vunpack.c.h.b16 %v1315
        %v1406 = vpack.c.b16 %v1382, %v1374
        %v1407 = vpack.c.b16 %v1383, %v1375
        %v1408 = vpack.c.b16 %v1384, %v1376
        %v1409 = vpack.c.b16 %v1385, %v1377
        %v1410 = vpack.c.b16 %v1386, %v1378
        %v1411 = vpack.c.b16 %v1387, %v1379
        %v1412 = vpack.c.b16 %v1388, %v1380
        %v1413 = vpack.c.b16 %v1389, %v1381
        %v1414 = vpack.c.b16 %v1398, %v1390
        %v1415 = vpack.c.b16 %v1399, %v1391
        %v1416 = vpack.c.b16 %v1400, %v1392
        %v1417 = vpack.c.b16 %v1401, %v1393
        %v1418 = vpack.c.b16 %v1402, %v1394
        %v1419 = vpack.c.b16 %v1403, %v1395
        %v1420 = vpack.c.b16 %v1404, %v1396
        %v1421 = vpack.c.b16 %v1405, %v1397
        %v1439 = vsel %vm548, %v1299, 0
        %1441 = vmatprep.subr.bf16.mxu0 %v1407
        %1442 = vmatpush1.bf16.msra.mxu0 %v1406
        %1443 = vmatprep.subr.bf16.mxu0 %v1415
        %1444 = vmatpush1.bf16.msra.mxu0 %v1414
        %1445 = vmatprep.subr.bf16.mxu0 0
        %1446 = vmatpush1.bf16.msra.mxu0 0
        %1447 = vmatprep.subr.bf16.mxu0 0
        %1448 = vmatpush1.bf16.msra.mxu0 0
        %1449 = vmatprep.subr.bf16.mxu0 0
        %1450 = vmatpush1.bf16.msra.mxu0 0
        %1451 = vmatprep.subr.bf16.mxu0 0
        %1452 = vmatpush1.bf16.msra.mxu0 0
        %1453 = vmatprep.subr.bf16.mxu0 0
        %1454 = vmatpush1.bf16.msra.mxu0 0
        %1455 = vmatprep.subr.bf16.mxu0 0
        %1456 = vmatpush1.bf16.msra.mxu0 0
        %1457 = vmatprep.subr.bf16.mxu0 0
        %1458 = vmatpush1.bf16.msra.mxu0 0
        %1459 = vmatprep.subr.bf16.mxu0 0
        %1460 = vmatpush1.bf16.msra.mxu0 0
        %1461 = vmatprep.subr.bf16.mxu0 0
        %1462 = vmatpush1.bf16.msra.mxu0 0
        %1463 = vmatprep.subr.bf16.mxu0 0
        %1464 = vmatpush1.bf16.msra.mxu0 0
        %1465 = vmatprep.subr.bf16.mxu0 0
        %1466 = vmatpush1.bf16.msra.mxu0 0
        %1467 = vmatprep.subr.bf16.mxu0 0
        %1468 = vmatpush1.bf16.msra.mxu0 0
        %1469 = vmatprep.subr.bf16.mxu0 0
        %1470 = vmatpush1.bf16.msra.mxu0 0
        %1471 = vmatprep.subr.bf16.mxu0 0
        %1472 = vmatpush1.bf16.msra.mxu0 0
        %1473 = vmatprep.mubr.bf16.mxu0 0
        %1474 = vmatmul.mubr.bf16.gmra.mrb[0].mxu0 %v1439
        %v1475 = vpop.f32.mrb[0].mxu0
        %v1476 = vadd.f32 %v1321, %v1475
        %v1477 = vpop.f32.mrb[0].mxu0
        %v1478 = vadd.f32 %v1325, %v1477
        %v1479 = vpop.f32.mrb[0].mxu0
        %v1480 = vpop.f32.mrb[0].mxu0
        %1481 = vdwg.mxu0
        %1482 = vmatprep.subr.bf16.mxu0 %v1409
        %1483 = vmatpush1.bf16.msra.mxu0 %v1408
        %1484 = vmatprep.subr.bf16.mxu0 %v1417
        %1485 = vmatpush1.bf16.msra.mxu0 %v1416
        %1486 = vmatprep.subr.bf16.mxu0 0
        %1487 = vmatpush1.bf16.msra.mxu0 0
        %1488 = vmatprep.subr.bf16.mxu0 0
        %1489 = vmatpush1.bf16.msra.mxu0 0
        %1490 = vmatprep.subr.bf16.mxu0 0
        %1491 = vmatpush1.bf16.msra.mxu0 0
        %1492 = vmatprep.subr.bf16.mxu0 0
        %1493 = vmatpush1.bf16.msra.mxu0 0
        %1494 = vmatprep.subr.bf16.mxu0 0
        %1495 = vmatpush1.bf16.msra.mxu0 0
        %1496 = vmatprep.subr.bf16.mxu0 0
        %1497 = vmatpush1.bf16.msra.mxu0 0
        %1498 = vmatprep.subr.bf16.mxu0 0
        %1499 = vmatpush1.bf16.msra.mxu0 0
        %1500 = vmatprep.subr.bf16.mxu0 0
        %1501 = vmatpush1.bf16.msra.mxu0 0
        %1502 = vmatprep.subr.bf16.mxu0 0
        %1503 = vmatpush1.bf16.msra.mxu0 0
        %1504 = vmatprep.subr.bf16.mxu0 0
        %1505 = vmatpush1.bf16.msra.mxu0 0
        %1506 = vmatprep.subr.bf16.mxu0 0
        %1507 = vmatpush1.bf16.msra.mxu0 0
        %1508 = vmatprep.subr.bf16.mxu0 0
        %1509 = vmatpush1.bf16.msra.mxu0 0
        %1510 = vmatprep.subr.bf16.mxu0 0
        %1511 = vmatpush1.bf16.msra.mxu0 0
        %1512 = vmatprep.subr.bf16.mxu0 0
        %1513 = vmatpush1.bf16.msra.mxu0 0
        %1514 = vmatprep.mubr.bf16.mxu0 0
        %1515 = vmatmul.mubr.bf16.gmra.mrb[0].mxu0 %v1439
        %v1516 = vpop.f32.mrb[0].mxu0
        %v1517 = vadd.f32 %v1329, %v1516
        %v1518 = vpop.f32.mrb[0].mxu0
        %v1519 = vadd.f32 %v1333, %v1518
        %v1520 = vpop.f32.mrb[0].mxu0
        %v1521 = vpop.f32.mrb[0].mxu0
        %1522 = vdwg.mxu0
        %1523 = vmatprep.subr.bf16.mxu0 %v1411
        %1524 = vmatpush1.bf16.msra.mxu0 %v1410
        %1525 = vmatprep.subr.bf16.mxu0 %v1419
        %1526 = vmatpush1.bf16.msra.mxu0 %v1418
        %1527 = vmatprep.subr.bf16.mxu0 0
        %1528 = vmatpush1.bf16.msra.mxu0 0
        %1529 = vmatprep.subr.bf16.mxu0 0
        %1530 = vmatpush1.bf16.msra.mxu0 0
        %1531 = vmatprep.subr.bf16.mxu0 0
        %1532 = vmatpush1.bf16.msra.mxu0 0
        %1533 = vmatprep.subr.bf16.mxu0 0
        %1534 = vmatpush1.bf16.msra.mxu0 0
        %1535 = vmatprep.subr.bf16.mxu0 0
        %1536 = vmatpush1.bf16.msra.mxu0 0
        %1537 = vmatprep.subr.bf16.mxu0 0
        %1538 = vmatpush1.bf16.msra.mxu0 0
        %1539 = vmatprep.subr.bf16.mxu0 0
        %1540 = vmatpush1.bf16.msra.mxu0 0
        %1541 = vmatprep.subr.bf16.mxu0 0
        %1542 = vmatpush1.bf16.msra.mxu0 0
        %1543 = vmatprep.subr.bf16.mxu0 0
        %1544 = vmatpush1.bf16.msra.mxu0 0
        %1545 = vmatprep.subr.bf16.mxu0 0
        %1546 = vmatpush1.bf16.msra.mxu0 0
        %1547 = vmatprep.subr.bf16.mxu0 0
        %1548 = vmatpush1.bf16.msra.mxu0 0
        %1549 = vmatprep.subr.bf16.mxu0 0
        %1550 = vmatpush1.bf16.msra.mxu0 0
        %1551 = vmatprep.subr.bf16.mxu0 0
        %1552 = vmatpush1.bf16.msra.mxu0 0
        %1553 = vmatprep.subr.bf16.mxu0 0
        %1554 = vmatpush1.bf16.msra.mxu0 0
        %1555 = vmatprep.mubr.bf16.mxu0 0
        %1556 = vmatmul.mubr.bf16.gmra.mrb[0].mxu0 %v1439
        %v1557 = vpop.f32.mrb[0].mxu0
        %v1558 = vadd.f32 %v1337, %v1557
        %v1559 = vpop.f32.mrb[0].mxu0
        %v1560 = vadd.f32 %v1341, %v1559
        %v1561 = vpop.f32.mrb[0].mxu0
        %v1562 = vpop.f32.mrb[0].mxu0
        %1563 = vdwg.mxu0
        %1564 = vmatprep.subr.bf16.mxu0 %v1413
        %1565 = vmatpush1.bf16.msra.mxu0 %v1412
        %1566 = vmatprep.subr.bf16.mxu0 %v1421
        %1567 = vmatpush1.bf16.msra.mxu0 %v1420
        %1568 = vmatprep.subr.bf16.mxu0 0
        %1569 = vmatpush1.bf16.msra.mxu0 0
        %1570 = vmatprep.subr.bf16.mxu0 0
        %1571 = vmatpush1.bf16.msra.mxu0 0
        %1572 = vmatprep.subr.bf16.mxu0 0
        %1573 = vmatpush1.bf16.msra.mxu0 0
        %1574 = vmatprep.subr.bf16.mxu0 0
        %1575 = vmatpush1.bf16.msra.mxu0 0
        %1576 = vmatprep.subr.bf16.mxu0 0
        %1577 = vmatpush1.bf16.msra.mxu0 0
        %1578 = vmatprep.subr.bf16.mxu0 0
        %1579 = vmatpush1.bf16.msra.mxu0 0
        %1580 = vmatprep.subr.bf16.mxu0 0
        %1581 = vmatpush1.bf16.msra.mxu0 0
        %1582 = vmatprep.subr.bf16.mxu0 0
        %1583 = vmatpush1.bf16.msra.mxu0 0
        %1584 = vmatprep.subr.bf16.mxu0 0
        %1585 = vmatpush1.bf16.msra.mxu0 0
        %1586 = vmatprep.subr.bf16.mxu0 0
        %1587 = vmatpush1.bf16.msra.mxu0 0
        %1588 = vmatprep.subr.bf16.mxu0 0
        %1589 = vmatpush1.bf16.msra.mxu0 0
        %1590 = vmatprep.subr.bf16.mxu0 0
        %1591 = vmatpush1.bf16.msra.mxu0 0
        %1592 = vmatprep.subr.bf16.mxu0 0
        %1593 = vmatpush1.bf16.msra.mxu0 0
        %1594 = vmatprep.subr.bf16.mxu0 0
        %1595 = vmatpush1.bf16.msra.mxu0 0
        %1596 = vmatprep.mubr.bf16.mxu0 0
        %1597 = vmatmul.mubr.bf16.gmra.mrb[0].mxu0 %v1439
        %v1598 = vpop.f32.mrb[0].mxu0
        %v1599 = vadd.f32 %v1345, %v1598
        %v1600 = vpop.f32.mrb[0].mxu0
        %v1601 = vadd.f32 %v1349, %v1600
        %v1602 = vpop.f32.mrb[0].mxu0
        %v1603 = vpop.f32.mrb[0].mxu0
        %1604 = vdwg.mxu0
        %v1605 = vmax.f32 %v1476, 0.0
        %v1606 = vmax.f32 %v1478, 0.0
        %v1607 = vmax.f32 %v1517, 0.0
        %v1608 = vmax.f32 %v1519, 0.0
        %v1609 = vmax.f32 %v1558, 0.0
        %v1610 = vmax.f32 %v1560, 0.0
        %v1611 = vmax.f32 %v1599, 0.0
        %v1612 = vmax.f32 %v1601, 0.0
        %v1613 = vpack.c.bf16 %v1605, %v1605
        %v1614 = vpack.c.bf16 %v1606, %v1606
        %v1615 = vpack.c.bf16 %v1607, %v1607
        %v1616 = vpack.c.bf16 %v1608, %v1608
        %v1617 = vpack.c.bf16 %v1609, %v1609
        %v1618 = vpack.c.bf16 %v1610, %v1610
        %v1619 = vpack.c.bf16 %v1611, %v1611
        %v1620 = vpack.c.bf16 %v1612, %v1612
        %v1621 = vld [vmem:[%s10] sm:$0xf]
        %v1622 = vld [vmem:[%s10 + $0x4] sm:$0xf]
        %v1623 = vld [vmem:[%s10 + $0x8] sm:$0xf]
        %v1624 = vld [vmem:[%s10 + $0xc] sm:$0xf]
        %v1625 = vld [vmem:[%s10 + $0x10] sm:$0xf]
        %v1626 = vld [vmem:[%s10 + $0x14] sm:$0xf]
        %v1627 = vld [vmem:[%s10 + $0x18] sm:$0xf]
        %v1628 = vld [vmem:[%s10 + $0x1c] sm:$0xf]
        %v1629 = vld [vmem:[%s10 + $0x20] sm:$0xf]
        %v1630 = vld [vmem:[%s10 + $0x24] sm:$0xf]
        %v1631 = vld [vmem:[%s10 + $0x28] sm:$0xf]
        %v1632 = vld [vmem:[%s10 + $0x2c] sm:$0xf]
        %v1633 = vld [vmem:[%s10 + $0x30] sm:$0xf]
        %v1634 = vld [vmem:[%s10 + $0x34] sm:$0xf]
        %v1635 = vld [vmem:[%s10 + $0x38] sm:$0xf]
        %v1636 = vld [vmem:[%s10 + $0x3c] sm:$0xf]
        %v1637 = vld [vmem:[%s10 + $0x40] sm:$0xf]
        %v1638 = vld [vmem:[%s10 + $0x44] sm:$0xf]
        %v1639 = vld [vmem:[%s10 + $0x48] sm:$0xf]
        %v1640 = vld [vmem:[%s10 + $0x4c] sm:$0xf]
        %v1641 = vld [vmem:[%s10 + $0x50] sm:$0xf]
        %v1642 = vld [vmem:[%s10 + $0x54] sm:$0xf]
        %v1643 = vld [vmem:[%s10 + $0x58] sm:$0xf]
        %v1644 = vld [vmem:[%s10 + $0x5c] sm:$0xf]
        %v1645 = vld [vmem:[%s10 + $0x60] sm:$0xf]
        %v1646 = vld [vmem:[%s10 + $0x64] sm:$0xf]
        %v1647 = vld [vmem:[%s10 + $0x68] sm:$0xf]
        %v1648 = vld [vmem:[%s10 + $0x6c] sm:$0xf]
        %v1649 = vld [vmem:[%s10 + $0x70] sm:$0xf]
        %v1650 = vld [vmem:[%s10 + $0x74] sm:$0xf]
        %v1651 = vld [vmem:[%s10 + $0x78] sm:$0xf]
        %v1652 = vld [vmem:[%s10 + $0x7c] sm:$0xf]
        %v1653 = vld [vmem:[%s10 + $0x80] sm:$0xf]
        %v1654 = vld [vmem:[%s10 + $0x84] sm:$0xf]
        %v1655 = vld [vmem:[%s10 + $0x88] sm:$0xf]
        %v1656 = vld [vmem:[%s10 + $0x8c] sm:$0xf]
        %v1657 = vld [vmem:[%s10 + $0x90] sm:$0xf]
        %v1658 = vld [vmem:[%s10 + $0x94] sm:$0xf]
        %v1659 = vld [vmem:[%s10 + $0x98] sm:$0xf]
        %v1660 = vld [vmem:[%s10 + $0x9c] sm:$0xf]
        %v1661 = vld [vmem:[%s10 + $0xa0] sm:$0xf]
        %v1662 = vld [vmem:[%s10 + $0xa4] sm:$0xf]
        %v1663 = vld [vmem:[%s10 + $0xa8] sm:$0xf]
        %v1664 = vld [vmem:[%s10 + $0xac] sm:$0xf]
        %v1665 = vld [vmem:[%s10 + $0xb0] sm:$0xf]
        %v1666 = vld [vmem:[%s10 + $0xb4] sm:$0xf]
        %v1667 = vld [vmem:[%s10 + $0xb8] sm:$0xf]
        %v1668 = vld [vmem:[%s10 + $0xbc] sm:$0xf]
        %v1669 = vld [vmem:[%s10 + $0xc0] sm:$0xf]
        %v1670 = vld [vmem:[%s10 + $0xc4] sm:$0xf]
        %v1671 = vld [vmem:[%s10 + $0xc8] sm:$0xf]
        %v1672 = vld [vmem:[%s10 + $0xcc] sm:$0xf]
        %v1673 = vld [vmem:[%s10 + $0xd0] sm:$0xf]
        %v1674 = vld [vmem:[%s10 + $0xd4] sm:$0xf]
        %v1675 = vld [vmem:[%s10 + $0xd8] sm:$0xf]
        %v1676 = vld [vmem:[%s10 + $0xdc] sm:$0xf]
        %v1677 = vld [vmem:[%s10 + $0xe0] sm:$0xf]
        %v1678 = vld [vmem:[%s10 + $0xe4] sm:$0xf]
        %v1679 = vld [vmem:[%s10 + $0xe8] sm:$0xf]
        %v1680 = vld [vmem:[%s10 + $0xec] sm:$0xf]
        %v1681 = vld [vmem:[%s10 + $0xf0] sm:$0xf]
        %v1682 = vld [vmem:[%s10 + $0xf4] sm:$0xf]
        %v1683 = vld [vmem:[%s10 + $0xf8] sm:$0xf]
        %v1684 = vld [vmem:[%s10 + $0xfc] sm:$0xf]
        %v1685 = vld [vmem:[%s10 + $0x100] sm:$0xf]
        %v1686 = vld [vmem:[%s10 + $0x104] sm:$0xf]
        %v1687 = vld [vmem:[%s10 + $0x108] sm:$0xf]
        %v1688 = vld [vmem:[%s10 + $0x10c] sm:$0xf]
        %v1689 = vld [vmem:[%s10 + $0x110] sm:$0xf]
        %v1690 = vld [vmem:[%s10 + $0x114] sm:$0xf]
        %v1691 = vld [vmem:[%s10 + $0x118] sm:$0xf]
        %v1692 = vld [vmem:[%s10 + $0x11c] sm:$0xf]
        %v1693 = vld [vmem:[%s10 + $0x120] sm:$0xf]
        %v1694 = vld [vmem:[%s10 + $0x124] sm:$0xf]
        %v1695 = vld [vmem:[%s10 + $0x128] sm:$0xf]
        %v1696 = vld [vmem:[%s10 + $0x12c] sm:$0xf]
        %v1697 = vld [vmem:[%s10 + $0x130] sm:$0xf]
        %v1698 = vld [vmem:[%s10 + $0x134] sm:$0xf]
        %v1699 = vld [vmem:[%s10 + $0x138] sm:$0xf]
        %v1700 = vld [vmem:[%s10 + $0x13c] sm:$0xf]
        %v1701 = vld [vmem:[%s10 + $0x140] sm:$0xf]
        %v1702 = vld [vmem:[%s10 + $0x144] sm:$0xf]
        %v1703 = vld [vmem:[%s10 + $0x148] sm:$0xf]
        %v1704 = vld [vmem:[%s10 + $0x14c] sm:$0xf]
        %v1705 = vld [vmem:[%s10 + $0x150] sm:$0xf]
        %v1706 = vld [vmem:[%s10 + $0x154] sm:$0xf]
        %v1707 = vld [vmem:[%s10 + $0x158] sm:$0xf]
        %v1708 = vld [vmem:[%s10 + $0x15c] sm:$0xf]
        %v1709 = vld [vmem:[%s10 + $0x160] sm:$0xf]
        %v1710 = vld [vmem:[%s10 + $0x164] sm:$0xf]
        %v1711 = vld [vmem:[%s10 + $0x168] sm:$0xf]
        %v1712 = vld [vmem:[%s10 + $0x16c] sm:$0xf]
        %v1713 = vld [vmem:[%s10 + $0x170] sm:$0xf]
        %v1714 = vld [vmem:[%s10 + $0x174] sm:$0xf]
        %v1715 = vld [vmem:[%s10 + $0x178] sm:$0xf]
        %v1716 = vld [vmem:[%s10 + $0x17c] sm:$0xf]
        %v1717 = vld [vmem:[%s10 + $0x180] sm:$0xf]
        %v1718 = vld [vmem:[%s10 + $0x184] sm:$0xf]
        %v1719 = vld [vmem:[%s10 + $0x188] sm:$0xf]
        %v1720 = vld [vmem:[%s10 + $0x18c] sm:$0xf]
        %v1721 = vld [vmem:[%s10 + $0x190] sm:$0xf]
        %v1722 = vld [vmem:[%s10 + $0x194] sm:$0xf]
        %v1723 = vld [vmem:[%s10 + $0x198] sm:$0xf]
        %v1724 = vld [vmem:[%s10 + $0x19c] sm:$0xf]
        %v1725 = vld [vmem:[%s10 + $0x1a0] sm:$0xf]
        %v1726 = vld [vmem:[%s10 + $0x1a4] sm:$0xf]
        %v1727 = vld [vmem:[%s10 + $0x1a8] sm:$0xf]
        %v1728 = vld [vmem:[%s10 + $0x1ac] sm:$0xf]
        %v1729 = vld [vmem:[%s10 + $0x1b0] sm:$0xf]
        %v1730 = vld [vmem:[%s10 + $0x1b4] sm:$0xf]
        %v1731 = vld [vmem:[%s10 + $0x1b8] sm:$0xf]
        %v1732 = vld [vmem:[%s10 + $0x1bc] sm:$0xf]
        %v1733 = vld [vmem:[%s10 + $0x1c0] sm:$0xf]
        %v1734 = vld [vmem:[%s10 + $0x1c4] sm:$0xf]
        %v1735 = vld [vmem:[%s10 + $0x1c8] sm:$0xf]
        %v1736 = vld [vmem:[%s10 + $0x1cc] sm:$0xf]
        %v1737 = vld [vmem:[%s10 + $0x1d0] sm:$0xf]
        %v1738 = vld [vmem:[%s10 + $0x1d4] sm:$0xf]
        %v1739 = vld [vmem:[%s10 + $0x1d8] sm:$0xf]
        %v1740 = vld [vmem:[%s10 + $0x1dc] sm:$0xf]
        %v1741 = vld [vmem:[%s10 + $0x1e0] sm:$0xf]
        %v1742 = vld [vmem:[%s10 + $0x1e4] sm:$0xf]
        %v1743 = vld [vmem:[%s10 + $0x1e8] sm:$0xf]
        %v1744 = vld [vmem:[%s10 + $0x1ec] sm:$0xf]
        %v1745 = vld [vmem:[%s10 + $0x1f0] sm:$0xf]
        %v1746 = vld [vmem:[%s10 + $0x1f4] sm:$0xf]
        %v1747 = vld [vmem:[%s10 + $0x1f8] sm:$0xf]
        %v1748 = vld [vmem:[%s10 + $0x1fc] sm:$0xf]
        %v1749 = vlaneseq
        %v1750 = vshrl.u32 %v1749, 7
        %v1751 = vsub.s32 0, %v1750
        %v1752 = vrot.slane %v524, %v1751
        %v1881 = vunpack.c.l.b16 %v1621
        %v1882 = vunpack.c.l.b16 %v1622
        %v1883 = vunpack.c.l.b16 %v1623
        %v1884 = vunpack.c.l.b16 %v1624
        %v1885 = vunpack.c.l.b16 %v1625
        %v1886 = vunpack.c.l.b16 %v1626
        %v1887 = vunpack.c.l.b16 %v1627
        %v1888 = vunpack.c.l.b16 %v1628
        %v1889 = vunpack.c.l.b16 %v1629
        %v1890 = vunpack.c.l.b16 %v1630
        %v1891 = vunpack.c.l.b16 %v1631
        %v1892 = vunpack.c.l.b16 %v1632
        %v1893 = vunpack.c.l.b16 %v1633
        %v1894 = vunpack.c.l.b16 %v1634
        %v1895 = vunpack.c.l.b16 %v1635
        %v1896 = vunpack.c.l.b16 %v1636
        %v1897 = vunpack.c.l.b16 %v1637
        %v1898 = vunpack.c.l.b16 %v1638
        %v1899 = vunpack.c.l.b16 %v1639
        %v1900 = vunpack.c.l.b16 %v1640
        %v1901 = vunpack.c.l.b16 %v1641
        %v1902 = vunpack.c.l.b16 %v1642
        %v1903 = vunpack.c.l.b16 %v1643
        %v1904 = vunpack.c.l.b16 %v1644
        %v1905 = vunpack.c.l.b16 %v1645
        %v1906 = vunpack.c.l.b16 %v1646
        %v1907 = vunpack.c.l.b16 %v1647
        %v1908 = vunpack.c.l.b16 %v1648
        %v1909 = vunpack.c.l.b16 %v1649
        %v1910 = vunpack.c.l.b16 %v1650
        %v1911 = vunpack.c.l.b16 %v1651
        %v1912 = vunpack.c.l.b16 %v1652
        %v1913 = vunpack.c.l.b16 %v1653
        %v1914 = vunpack.c.l.b16 %v1654
        %v1915 = vunpack.c.l.b16 %v1655
        %v1916 = vunpack.c.l.b16 %v1656
        %v1917 = vunpack.c.l.b16 %v1657
        %v1918 = vunpack.c.l.b16 %v1658
        %v1919 = vunpack.c.l.b16 %v1659
        %v1920 = vunpack.c.l.b16 %v1660
        %v1921 = vunpack.c.l.b16 %v1661
        %v1922 = vunpack.c.l.b16 %v1662
        %v1923 = vunpack.c.l.b16 %v1663
        %v1924 = vunpack.c.l.b16 %v1664
        %v1925 = vunpack.c.l.b16 %v1665
        %v1926 = vunpack.c.l.b16 %v1666
        %v1927 = vunpack.c.l.b16 %v1667
        %v1928 = vunpack.c.l.b16 %v1668
        %v1929 = vunpack.c.l.b16 %v1669
        %v1930 = vunpack.c.l.b16 %v1670
        %v1931 = vunpack.c.l.b16 %v1671
        %v1932 = vunpack.c.l.b16 %v1672
        %v1933 = vunpack.c.l.b16 %v1673
        %v1934 = vunpack.c.l.b16 %v1674
        %v1935 = vunpack.c.l.b16 %v1675
        %v1936 = vunpack.c.l.b16 %v1676
        %v1937 = vunpack.c.l.b16 %v1677
        %v1938 = vunpack.c.l.b16 %v1678
        %v1939 = vunpack.c.l.b16 %v1679
        %v1940 = vunpack.c.l.b16 %v1680
        %v1941 = vunpack.c.l.b16 %v1681
        %v1942 = vunpack.c.l.b16 %v1682
        %v1943 = vunpack.c.l.b16 %v1683
        %v1944 = vunpack.c.l.b16 %v1684
        %v1945 = vunpack.c.l.b16 %v1685
        %v1946 = vunpack.c.l.b16 %v1686
        %v1947 = vunpack.c.l.b16 %v1687
        %v1948 = vunpack.c.l.b16 %v1688
        %v1949 = vunpack.c.l.b16 %v1689
        %v1950 = vunpack.c.l.b16 %v1690
        %v1951 = vunpack.c.l.b16 %v1691
        %v1952 = vunpack.c.l.b16 %v1692
        %v1953 = vunpack.c.l.b16 %v1693
        %v1954 = vunpack.c.l.b16 %v1694
        %v1955 = vunpack.c.l.b16 %v1695
        %v1956 = vunpack.c.l.b16 %v1696
        %v1957 = vunpack.c.l.b16 %v1697
        %v1958 = vunpack.c.l.b16 %v1698
        %v1959 = vunpack.c.l.b16 %v1699
        %v1960 = vunpack.c.l.b16 %v1700
        %v1961 = vunpack.c.l.b16 %v1701
        %v1962 = vunpack.c.l.b16 %v1702
        %v1963 = vunpack.c.l.b16 %v1703
        %v1964 = vunpack.c.l.b16 %v1704
        %v1965 = vunpack.c.l.b16 %v1705
        %v1966 = vunpack.c.l.b16 %v1706
        %v1967 = vunpack.c.l.b16 %v1707
        %v1968 = vunpack.c.l.b16 %v1708
        %v1969 = vunpack.c.l.b16 %v1709
        %v1970 = vunpack.c.l.b16 %v1710
        %v1971 = vunpack.c.l.b16 %v1711
        %v1972 = vunpack.c.l.b16 %v1712
        %v1973 = vunpack.c.l.b16 %v1713
        %v1974 = vunpack.c.l.b16 %v1714
        %v1975 = vunpack.c.l.b16 %v1715
        %v1976 = vunpack.c.l.b16 %v1716
        %v1977 = vunpack.c.l.b16 %v1717
        %v1978 = vunpack.c.l.b16 %v1718
        %v1979 = vunpack.c.l.b16 %v1719
        %v1980 = vunpack.c.l.b16 %v1720
        %v1981 = vunpack.c.l.b16 %v1721
        %v1982 = vunpack.c.l.b16 %v1722
        %v1983 = vunpack.c.l.b16 %v1723
        %v1984 = vunpack.c.l.b16 %v1724
        %v1985 = vunpack.c.l.b16 %v1725
        %v1986 = vunpack.c.l.b16 %v1726
        %v1987 = vunpack.c.l.b16 %v1727
        %v1988 = vunpack.c.l.b16 %v1728
        %v1989 = vunpack.c.l.b16 %v1729
        %v1990 = vunpack.c.l.b16 %v1730
        %v1991 = vunpack.c.l.b16 %v1731
        %v1992 = vunpack.c.l.b16 %v1732
        %v1993 = vunpack.c.l.b16 %v1733
        %v1994 = vunpack.c.l.b16 %v1734
        %v1995 = vunpack.c.l.b16 %v1735
        %v1996 = vunpack.c.l.b16 %v1736
        %v1997 = vunpack.c.l.b16 %v1737
        %v1998 = vunpack.c.l.b16 %v1738
        %v1999 = vunpack.c.l.b16 %v1739
        %v2000 = vunpack.c.l.b16 %v1740
        %v2001 = vunpack.c.l.b16 %v1741
        %v2002 = vunpack.c.l.b16 %v1742
        %v2003 = vunpack.c.l.b16 %v1743
        %v2004 = vunpack.c.l.b16 %v1744
        %v2005 = vunpack.c.l.b16 %v1745
        %v2006 = vunpack.c.l.b16 %v1746
        %v2007 = vunpack.c.l.b16 %v1747
        %v2008 = vunpack.c.l.b16 %v1748
        %v2009 = vpack.c.b16 %v1882, %v1881
        %v2010 = vpack.c.b16 %v1884, %v1883
        %v2011 = vpack.c.b16 %v1886, %v1885
        %v2012 = vpack.c.b16 %v1888, %v1887
        %v2013 = vpack.c.b16 %v1890, %v1889
        %v2014 = vpack.c.b16 %v1892, %v1891
        %v2015 = vpack.c.b16 %v1894, %v1893
        %v2016 = vpack.c.b16 %v1896, %v1895
        %v2017 = vpack.c.b16 %v1898, %v1897
        %v2018 = vpack.c.b16 %v1900, %v1899
        %v2019 = vpack.c.b16 %v1902, %v1901
        %v2020 = vpack.c.b16 %v1904, %v1903
        %v2021 = vpack.c.b16 %v1906, %v1905
        %v2022 = vpack.c.b16 %v1908, %v1907
        %v2023 = vpack.c.b16 %v1910, %v1909
        %v2024 = vpack.c.b16 %v1912, %v1911
        %v2025 = vpack.c.b16 %v1914, %v1913
        %v2026 = vpack.c.b16 %v1916, %v1915
        %v2027 = vpack.c.b16 %v1918, %v1917
        %v2028 = vpack.c.b16 %v1920, %v1919
        %v2029 = vpack.c.b16 %v1922, %v1921
        %v2030 = vpack.c.b16 %v1924, %v1923
        %v2031 = vpack.c.b16 %v1926, %v1925
        %v2032 = vpack.c.b16 %v1928, %v1927
        %v2033 = vpack.c.b16 %v1930, %v1929
        %v2034 = vpack.c.b16 %v1932, %v1931
        %v2035 = vpack.c.b16 %v1934, %v1933
        %v2036 = vpack.c.b16 %v1936, %v1935
        %v2037 = vpack.c.b16 %v1938, %v1937
        %v2038 = vpack.c.b16 %v1940, %v1939
        %v2039 = vpack.c.b16 %v1942, %v1941
        %v2040 = vpack.c.b16 %v1944, %v1943
        %v2041 = vpack.c.b16 %v1946, %v1945
        %v2042 = vpack.c.b16 %v1948, %v1947
        %v2043 = vpack.c.b16 %v1950, %v1949
        %v2044 = vpack.c.b16 %v1952, %v1951
        %v2045 = vpack.c.b16 %v1954, %v1953
        %v2046 = vpack.c.b16 %v1956, %v1955
        %v2047 = vpack.c.b16 %v1958, %v1957
        %v2048 = vpack.c.b16 %v1960, %v1959
        %v2049 = vpack.c.b16 %v1962, %v1961
        %v2050 = vpack.c.b16 %v1964, %v1963
        %v2051 = vpack.c.b16 %v1966, %v1965
        %v2052 = vpack.c.b16 %v1968, %v1967
        %v2053 = vpack.c.b16 %v1970, %v1969
        %v2054 = vpack.c.b16 %v1972, %v1971
        %v2055 = vpack.c.b16 %v1974, %v1973
        %v2056 = vpack.c.b16 %v1976, %v1975
        %v2057 = vpack.c.b16 %v1978, %v1977
        %v2058 = vpack.c.b16 %v1980, %v1979
        %v2059 = vpack.c.b16 %v1982, %v1981
        %v2060 = vpack.c.b16 %v1984, %v1983
        %v2061 = vpack.c.b16 %v1986, %v1985
        %v2062 = vpack.c.b16 %v1988, %v1987
        %v2063 = vpack.c.b16 %v1990, %v1989
        %v2064 = vpack.c.b16 %v1992, %v1991
        %v2065 = vpack.c.b16 %v1994, %v1993
        %v2066 = vpack.c.b16 %v1996, %v1995
        %v2067 = vpack.c.b16 %v1998, %v1997
        %v2068 = vpack.c.b16 %v2000, %v1999
        %v2069 = vpack.c.b16 %v2002, %v2001
        %v2070 = vpack.c.b16 %v2004, %v2003
        %v2071 = vpack.c.b16 %v2006, %v2005
        %v2072 = vpack.c.b16 %v2008, %v2007
        %2137 = vmatprep.subr.bf16.mxu0 0
        %2138 = vmatpush1.bf16.msra.mxu0 %v2009
        %2139 = vmatprep.subr.bf16.mxu0 0
        %2140 = vmatpush1.bf16.msra.mxu0 %v2010
        %2141 = vmatprep.subr.bf16.mxu0 0
        %2142 = vmatpush1.bf16.msra.mxu0 %v2011
        %2143 = vmatprep.subr.bf16.mxu0 0
        %2144 = vmatpush1.bf16.msra.mxu0 %v2012
        %2145 = vmatprep.subr.bf16.mxu0 0
        %2146 = vmatpush1.bf16.msra.mxu0 %v2013
        %2147 = vmatprep.subr.bf16.mxu0 0
        %2148 = vmatpush1.bf16.msra.mxu0 %v2014
        %2149 = vmatprep.subr.bf16.mxu0 0
        %2150 = vmatpush1.bf16.msra.mxu0 %v2015
        %2151 = vmatprep.subr.bf16.mxu0 0
        %2152 = vmatpush1.bf16.msra.mxu0 %v2016
        %2153 = vmatprep.subr.bf16.mxu0 0
        %2154 = vmatpush1.bf16.msra.mxu0 %v2017
        %2155 = vmatprep.subr.bf16.mxu0 0
        %2156 = vmatpush1.bf16.msra.mxu0 %v2018
        %2157 = vmatprep.subr.bf16.mxu0 0
        %2158 = vmatpush1.bf16.msra.mxu0 %v2019
        %2159 = vmatprep.subr.bf16.mxu0 0
        %2160 = vmatpush1.bf16.msra.mxu0 %v2020
        %2161 = vmatprep.subr.bf16.mxu0 0
        %2162 = vmatpush1.bf16.msra.mxu0 %v2021
        %2163 = vmatprep.subr.bf16.mxu0 0
        %2164 = vmatpush1.bf16.msra.mxu0 %v2022
        %2165 = vmatprep.subr.bf16.mxu0 0
        %2166 = vmatpush1.bf16.msra.mxu0 %v2023
        %2167 = vmatprep.subr.bf16.mxu0 0
        %2168 = vmatpush1.bf16.msra.mxu0 %v2024
        %2169 = vmatprep.mubr.bf16.mxu0 %v1614
        %2170 = vmatmul.mubr.bf16.gmra.mrb[0].mxu0 %v1613
        %v2171 = vpop.f32.mrb[0].mxu0
        %v2172 = vadd.f32 %v1752, %v2171
        %v2173 = vpop.f32.mrb[0].mxu0
        %v2174 = vpop.f32.mrb[0].mxu0
        %v2175 = vpop.f32.mrb[0].mxu0
        %2176 = vdwg.mxu0
        %2177 = vmatprep.subr.bf16.mxu0 0
        %2178 = vmatpush1.bf16.msra.mxu0 %v2025
        %2179 = vmatprep.subr.bf16.mxu0 0
        %2180 = vmatpush1.bf16.msra.mxu0 %v2026
        %2181 = vmatprep.subr.bf16.mxu0 0
        %2182 = vmatpush1.bf16.msra.mxu0 %v2027
        %2183 = vmatprep.subr.bf16.mxu0 0
        %2184 = vmatpush1.bf16.msra.mxu0 %v2028
        %2185 = vmatprep.subr.bf16.mxu0 0
        %2186 = vmatpush1.bf16.msra.mxu0 %v2029
        %2187 = vmatprep.subr.bf16.mxu0 0
        %2188 = vmatpush1.bf16.msra.mxu0 %v2030
        %2189 = vmatprep.subr.bf16.mxu0 0
        %2190 = vmatpush1.bf16.msra.mxu0 %v2031
        %2191 = vmatprep.subr.bf16.mxu0 0
        %2192 = vmatpush1.bf16.msra.mxu0 %v2032
        %2193 = vmatprep.subr.bf16.mxu0 0
        %2194 = vmatpush1.bf16.msra.mxu0 %v2033
        %2195 = vmatprep.subr.bf16.mxu0 0
        %2196 = vmatpush1.bf16.msra.mxu0 %v2034
        %2197 = vmatprep.subr.bf16.mxu0 0
        %2198 = vmatpush1.bf16.msra.mxu0 %v2035
        %2199 = vmatprep.subr.bf16.mxu0 0
        %2200 = vmatpush1.bf16.msra.mxu0 %v2036
        %2201 = vmatprep.subr.bf16.mxu0 0
        %2202 = vmatpush1.bf16.msra.mxu0 %v2037
        %2203 = vmatprep.subr.bf16.mxu0 0
        %2204 = vmatpush1.bf16.msra.mxu0 %v2038
        %2205 = vmatprep.subr.bf16.mxu0 0
        %2206 = vmatpush1.bf16.msra.mxu0 %v2039
        %2207 = vmatprep.subr.bf16.mxu0 0
        %2208 = vmatpush1.bf16.msra.mxu0 %v2040
        %2209 = vmatprep.mubr.bf16.mxu0 %v1616
        %2210 = vmatmul.mubr.bf16.gmra.mrb[0].mxu0 %v1615
        %v2211 = vpop.f32.mrb[0].mxu0
        %v2212 = vadd.f32 %v2172, %v2211
        %v2213 = vpop.f32.mrb[0].mxu0
        %v2214 = vpop.f32.mrb[0].mxu0
        %v2215 = vpop.f32.mrb[0].mxu0
        %2216 = vdwg.mxu0
        %2217 = vmatprep.subr.bf16.mxu0 0
        %2218 = vmatpush1.bf16.msra.mxu0 %v2041
        %2219 = vmatprep.subr.bf16.mxu0 0
        %2220 = vmatpush1.bf16.msra.mxu0 %v2042
        %2221 = vmatprep.subr.bf16.mxu0 0
        %2222 = vmatpush1.bf16.msra.mxu0 %v2043
        %2223 = vmatprep.subr.bf16.mxu0 0
        %2224 = vmatpush1.bf16.msra.mxu0 %v2044
        %2225 = vmatprep.subr.bf16.mxu0 0
        %2226 = vmatpush1.bf16.msra.mxu0 %v2045
        %2227 = vmatprep.subr.bf16.mxu0 0
        %2228 = vmatpush1.bf16.msra.mxu0 %v2046
        %2229 = vmatprep.subr.bf16.mxu0 0
        %2230 = vmatpush1.bf16.msra.mxu0 %v2047
        %2231 = vmatprep.subr.bf16.mxu0 0
        %2232 = vmatpush1.bf16.msra.mxu0 %v2048
        %2233 = vmatprep.subr.bf16.mxu0 0
        %2234 = vmatpush1.bf16.msra.mxu0 %v2049
        %2235 = vmatprep.subr.bf16.mxu0 0
        %2236 = vmatpush1.bf16.msra.mxu0 %v2050
        %2237 = vmatprep.subr.bf16.mxu0 0
        %2238 = vmatpush1.bf16.msra.mxu0 %v2051
        %2239 = vmatprep.subr.bf16.mxu0 0
        %2240 = vmatpush1.bf16.msra.mxu0 %v2052
        %2241 = vmatprep.subr.bf16.mxu0 0
        %2242 = vmatpush1.bf16.msra.mxu0 %v2053
        %2243 = vmatprep.subr.bf16.mxu0 0
        %2244 = vmatpush1.bf16.msra.mxu0 %v2054
        %2245 = vmatprep.subr.bf16.mxu0 0
        %2246 = vmatpush1.bf16.msra.mxu0 %v2055
        %2247 = vmatprep.subr.bf16.mxu0 0
        %2248 = vmatpush1.bf16.msra.mxu0 %v2056
        %2249 = vmatprep.mubr.bf16.mxu0 %v1618
        %2250 = vmatmul.mubr.bf16.gmra.mrb[0].mxu0 %v1617
        %v2251 = vpop.f32.mrb[0].mxu0
        %v2252 = vadd.f32 %v2212, %v2251
        %v2253 = vpop.f32.mrb[0].mxu0
        %v2254 = vpop.f32.mrb[0].mxu0
        %v2255 = vpop.f32.mrb[0].mxu0
        %2256 = vdwg.mxu0
        %2257 = vmatprep.subr.bf16.mxu0 0
        %2258 = vmatpush1.bf16.msra.mxu0 %v2057
        %2259 = vmatprep.subr.bf16.mxu0 0
        %2260 = vmatpush1.bf16.msra.mxu0 %v2058
        %2261 = vmatprep.subr.bf16.mxu0 0
        %2262 = vmatpush1.bf16.msra.mxu0 %v2059
        %2263 = vmatprep.subr.bf16.mxu0 0
        %2264 = vmatpush1.bf16.msra.mxu0 %v2060
        %2265 = vmatprep.subr.bf16.mxu0 0
        %2266 = vmatpush1.bf16.msra.mxu0 %v2061
        %2267 = vmatprep.subr.bf16.mxu0 0
        %2268 = vmatpush1.bf16.msra.mxu0 %v2062
        %2269 = vmatprep.subr.bf16.mxu0 0
        %2270 = vmatpush1.bf16.msra.mxu0 %v2063
        %2271 = vmatprep.subr.bf16.mxu0 0
        %2272 = vmatpush1.bf16.msra.mxu0 %v2064
        %2273 = vmatprep.subr.bf16.mxu0 0
        %2274 = vmatpush1.bf16.msra.mxu0 %v2065
        %2275 = vmatprep.subr.bf16.mxu0 0
        %2276 = vmatpush1.bf16.msra.mxu0 %v2066
        %2277 = vmatprep.subr.bf16.mxu0 0
        %2278 = vmatpush1.bf16.msra.mxu0 %v2067
        %2279 = vmatprep.subr.bf16.mxu0 0
        %2280 = vmatpush1.bf16.msra.mxu0 %v2068
        %2281 = vmatprep.subr.bf16.mxu0 0
        %2282 = vmatpush1.bf16.msra.mxu0 %v2069
        %2283 = vmatprep.subr.bf16.mxu0 0
        %2284 = vmatpush1.bf16.msra.mxu0 %v2070
        %2285 = vmatprep.subr.bf16.mxu0 0
        %2286 = vmatpush1.bf16.msra.mxu0 %v2071
        %2287 = vmatprep.subr.bf16.mxu0 0
        %2288 = vmatpush1.bf16.msra.mxu0 %v2072
        %2289 = vmatprep.mubr.bf16.mxu0 %v1620
        %2290 = vmatmul.mubr.bf16.gmra.mrb[0].mxu0 %v1619
        %v2291 = vpop.f32.mrb[0].mxu0
        %v2292 = vadd.f32 %v2252, %v2291
        %v2293 = vpop.f32.mrb[0].mxu0
        %v2294 = vpop.f32.mrb[0].mxu0
        %v2295 = vpop.f32.mrb[0].mxu0
        %2296 = vdwg.mxu0
        %v2297 = vadd.f32 %v1298, %v2292
        %v2298 = vsel %vm548, %v2297, 0.0
        %2299 = vadd.xlane.f32.xlu0 %v2298
        %v2300 = vpop.xlane.xlu0 %2299
        %v2301 = vmul.f32 %v2300, %v1278
        %v2302 = vsub.f32 %v2297, %v2301
        %v2303 = vmul.f32 %v2302, %v2302
        %v2304 = vsel %vm548, %v2303, 0.0
        %2305 = vadd.xlane.f32.xlu0 %v2304
        %v2306 = vpop.xlane.xlu0 %2305
        %v2307 = vmul.f32 %v2306, %v1278
        %v2308 = vadd.f32 %v2307, 1e-05
        %v2309 = vrsqrt.pop %v2308
        %v2310 = vmul.f32 %v2302, %v2309
        %v2311 = vlaneseq
        %v2312 = vshrl.u32 %v2311, 7
        %v2313 = vsub.s32 0, %v2312
        %v2314 = vrot.slane %v525, %v2313
        %v2315 = vmul.f32 %v2310, %v2314
        %v2316 = vlaneseq
        %v2317 = vshrl.u32 %v2316, 7
        %v2318 = vsub.s32 0, %v2317
        %v2319 = vrot.slane %v526, %v2318
        %v2320 = vadd.f32 %v2315, %v2319
        %2321 = vst.msk [vmem:[%s485] sm:$0xff] %vm548, %v2320
        %s2322 = sand.u32 %s333, 1
        %s2323 = scalar_lea.sflag [#allocation4], %s2322
        %s2324 = sand.u32 %s333, 1
        %s2325 = smul.addr %s2324, 8
        %s2326 = scalar_lea.vmem [#allocation3], %s2325
        // Predicated region
        $region73: #{cross_attention_forward.6} parent=71 // pred_check
          %p2327 = pneg %p343
        $region74: #{cross_attention_forward.6} parent=71 // pred_check_branch
          %2329 = sbr.rel (%p2327) target = $region76
        $region75: #{cross_attention_forward.6} parent=71 // pred_region
          %s2331 = ssub.s32 128, 128
          %2332 = vsyncadd %s2323, %s2331
          %s2333 = smul.addr %s27, 128
          %s2334 = scalar_lea.hbm %s13, %s2333
          %s2336 = sshll.u32 %s2326, 4
          %s2337 = int_to_ptr.vmem [resolvable:$true] %s2336
          %2339 = dma.vmem_to_hbm [thread:$0]  %s2337, 128, %s2334, %s2323
        $region76: #{cross_attention_forward.6} parent=71 // pred_fallthru
          _
      $region72: #{cross_attention_forward.6} parent=5 // pred_fallthru
        _
      %p2340 = scmp.le.s32.totalorder 2, %s22
      // Predicated region
      $region77: #{cross_attention_forward.6} parent=5 // pred_check
        %p2341 = pneg %p2340
      $region78: #{cross_attention_forward.6} parent=5 // pred_check_branch
        %2343 = sbr.rel (%p2341) target = $region80
      $region79: #{cross_attention_forward.6} parent=5 // pred_region
        %s2344 = ssub.s32 %s22, 2
        // Predicated region
        $region81: #{cross_attention_forward.6} parent=79 // pred_check
          %p2345 = pneg %p349
        $region82: #{cross_attention_forward.6} parent=79 // pred_check_branch
          %2347 = sbr.rel (%p2345) target = $region84
        $region83: #{cross_attention_forward.6} parent=79 // pred_region
          %s2348 = sand.u32 %s334, 1
          %s2349 = scalar_lea.sflag [#allocation4], %s2348
          %s2350 = sand.u32 %s334, 1
          %s2351 = smul.addr %s2350, 8
          %s2352 = scalar_lea.vmem [#allocation3], %s2351
          %2353 = dma.done %s2349, 128
        $region84: #{cross_attention_forward.6} parent=79 // pred_fallthru
          _
      $region80: #{cross_attention_forward.6} parent=5 // pred_fallthru
        _
    $region6: #{cross_attention_forward.6} parent=1 // loop_footer
      %s26 = sadd.s32 1, %s22
    $region7: #{cross_attention_forward.6} parent=1 // loop_footer_branch
      %21 = sbr.rel target = $region3
    $region8: #{cross_attention_forward.6} parent=1 // loop_exit
      _
    %2354 = vsyncpa [#allocation4], 1
    %s2355 = scalar_lea.sflag [#allocation4], 1
    %2356 = vsyncpa %s2355, 1

</llo_original>
